<compile_context>
chip_gen: v5e
topology: v5e:2x2
jax: 0.10.0
libtpu: 0.0.40
codegen_flags: <defaults>
</compile_context>

<pallas_src>
import numpy as np
import jax
import jax.numpy as jnp
from jax.experimental import pallas as pl
from jax.experimental.pallas import tpu as pltpu

# Fixed geometry implied by the module (Linear(192) forces a 28x28 MNIST-style input).
_S = 28                      # flat row stride used by every stage
_T_IN = 28 * 28              # 784
# flat lengths per stage: T = _S*(H_valid-1) + W_valid  (valid data at y*_S + x)
_T_C1, _T_P1 = 668, 581      # conv1 -> 24x24, pool1 (k=4,s=1) -> 21x21
_T_C2, _T_P2 = 465, 378      # conv2 -> 17x17, pool2 (k=4,s=1) -> 14x14
_T_C3, _T_P3 = 262, 175      # conv3 -> 10x10, pool3 stride-1 part -> 7x7


# ----------------------------------------------------------------------------
# In-kernel building blocks (operate on flat (C, T) values, row stride _S)
# ----------------------------------------------------------------------------
def _conv_relu(a, w_ref, b_ref, k, t_out):
    """Implicit-GEMM valid conv + bias + ReLU.

    a:     (Cin, T_in) flattened-spatial activation
    w_ref: (k*k, Cout, Cin) -- w_ref[di*k+dj] is the (Cout, Cin) tap at (di, dj)
    b_ref: (Cout, 1)
    Garbage "wrap" columns never contaminate valid positions (valid outputs only
    read valid inputs); they are masked out by zero weights at the head.
    """
    acc = None
    for di in range(k):
        for dj in range(k):
            off = di * _S + dj
            xs = a[:, off:off + t_out]                       # (Cin, t_out)
            wdd = w_ref[di * k + dj]                         # (Cout, Cin)
            if a.shape[0] == 1:
                term = wdd * xs                              # Cin==1: outer product on VPU
            else:
                term = jnp.dot(wdd, xs, preferred_element_type=jnp.float32)
            acc = term if acc is None else acc + term
    return jnp.maximum(acc + b_ref[...], 0.0)


def _maxpool_s1(a, k, t_out):
    """k x k stride-1 max-pool in the flat (C, T) layout (16 shifted maxima)."""
    out = a[:, 0:t_out]
    for di in range(k):
        for dj in range(k):
            if di == 0 and dj == 0:
                continue
            off = di * _S + dj
            out = jnp.maximum(out, a[:, off:off + t_out])
    return out


# ----------------------------------------------------------------------------
# The single fused kernel (one grid step == one sample)
# ----------------------------------------------------------------------------
def _convnet_kernel(x_ref, w1_ref, b1_ref, w2_ref, b2_ref, w3_ref, b3_ref,
                    w4_ref, b4_ref, w5_ref, b5_ref, w6_ref, b6_ref, o_ref):
    a = x_ref[0]                                   # (1, 784)  flat 28x28 image
    a = _conv_relu(a, w1_ref, b1_ref, 5, _T_C1)    # (3, 668)
    a = _maxpool_s1(a, 4, _T_P1)                   # (3, 581)
    a = _conv_relu(a, w2_ref, b2_ref, 5, _T_C2)    # (6, 465)
    a = _maxpool_s1(a, 4, _T_P2)                   # (6, 378)
    a = _conv_relu(a, w3_ref, b3_ref, 5, _T_C3)    # (12, 262)
    a = _maxpool_s1(a, 4, _T_P3)                   # (12, 175) stride-1 pool; the
    # k=4/stride=2 subsample + NCHW flatten are folded into w4 (see _prep_lin4_w).

    acc = None                                     # linear4: sum_c (1,175)@(175,100)
    for c in range(12):
        t = jnp.dot(a[c:c + 1, :], w4_ref[c], preferred_element_type=jnp.float32)
        acc = t if acc is None else acc + t
    h = jnp.maximum(acc + b4_ref[...], 0.0)        # (1, 100)
    # TODO(synk): dropout4/dropout5 (p=0.5) applied as identity (inference/eval mode).
    h = jnp.maximum(
        jnp.dot(h, w5_ref[...], preferred_element_type=jnp.float32) + b5_ref[...], 0.0)
    logits = jnp.dot(h, w6_ref[...], preferred_element_type=jnp.float32) + b6_ref[...]
    m = jnp.max(logits, axis=-1, keepdims=True)    # numerically stable softmax (dim=1)
    e = jnp.exp(logits - m)
    o_ref[0] = e / jnp.sum(e, axis=-1, keepdims=True)


# ----------------------------------------------------------------------------
# One-time weight layout prep (outside the hot path)
# ----------------------------------------------------------------------------
def _prep_conv_w(w):
    """(Cout, Cin, k, k) -> (k*k, Cout, Cin) so index di*k+dj gives W[:, :, di, dj]."""
    cout, cin, k, _ = w.shape
    return jnp.transpose(w, (2, 3, 0, 1)).reshape(k * k, cout, cin)


def _prep_lin4_w(w4):
    """Fold pool3's stride-2 subsample + the (12,4,4) flatten into the lin4 weight.

    w4: (192, 100) with input index c*16 + py*4 + px (PyTorch flatten order).
    Returns (12, 175, 100): row (2*py)*28 + 2*px of channel c carries the original
    weight row, all other (garbage / non-strided) positions are zero.
    """
    out_f = w4.shape[1]
    idx = np.empty((192,), np.int32)
    for c in range(12):
        for py in range(4):
            for px in range(4):
                idx[c * 16 + py * 4 + px] = c * _T_P3 + (2 * py) * _S + 2 * px
    flat = jnp.zeros((12 * _T_P3, out_f), w4.dtype).at[jnp.asarray(idx)].set(w4)
    return flat.reshape(12, _T_P3, out_f)


def prepare_params(params):
    """Kernel-ready operands, in the kernel's argument order (after x)."""
    (w1, b1), (w2, b2), (w3, b3) = params["conv1"], params["conv2"], params["conv3"]
    (w4, b4), (w5, b5), (w6, b6) = params["lin4"], params["lin5"], params["lin6"]
    return (
        _prep_conv_w(w1), b1.reshape(-1, 1),
        _prep_conv_w(w2), b2.reshape(-1, 1),
        _prep_conv_w(w3), b3.reshape(-1, 1),
        _prep_lin4_w(w4), b4.reshape(1, -1),
        w5, b5.reshape(1, -1),
        w6, b6.reshape(1, -1),
    )


def _full_spec(arr):
    return pl.BlockSpec(arr.shape, lambda i, _n=arr.ndim: (0,) * _n)


@jax.jit
def convnet_forward(prepped, x):
    n = x.shape[0]
    assert x.shape[1:] == (1, 28, 28), x.shape
    x_flat = x.reshape(n, 1, _T_IN)                # free metadata reshape of NCHW
    out = pl.pallas_call(
        _convnet_kernel,
        out_shape=jax.ShapeDtypeStruct((n, 1, 10), jnp.float32),
        grid=(n,),
        in_specs=[pl.BlockSpec((1, 1, _T_IN), lambda i: (i, 0, 0))]
                 + [_full_spec(p) for p in prepped],
        out_specs=pl.BlockSpec((1, 1, 10), lambda i: (i, 0, 0)),
        compiler_params=pltpu.CompilerParams(dimension_semantics=("parallel",)),
    )(x_flat, *prepped)
    return out.reshape(n, 10)


# ----------------------------------------------------------------------------
# Parameter init (PyTorch-style U(-1/sqrt(fan_in), 1/sqrt(fan_in)))
# ----------------------------------------------------------------------------
def init_conv(key, cout, cin, k):
    k1, k2 = jax.random.split(key)
    bound = 1.0 / (cin * k * k) ** 0.5
    w = jax.random.uniform(k1, (cout, cin, k, k), jnp.float32, -bound, bound)
    b = jax.random.uniform(k2, (cout,), jnp.float32, -bound, bound)
    return w, b


def init_linear(key, in_f, out_f):
    k1, k2 = jax.random.split(key)
    bound = 1.0 / in_f ** 0.5
    w = jax.random.uniform(k1, (in_f, out_f), jnp.float32, -bound, bound)
    b = jax.random.uniform(k2, (out_f,), jnp.float32, -bound, bound)
    return w, b


def init_params(key):
    ks = jax.random.split(key, 6)
    return {
        "conv1": init_conv(ks[0], 3, 1, 5),
        "conv2": init_conv(ks[1], 6, 3, 5),
        "conv3": init_conv(ks[2], 12, 6, 5),
        "lin4": init_linear(ks[3], 192, 100),
        "lin5": init_linear(ks[4], 100, 50),
        "lin6": init_linear(ks[5], 50, 10),
    }


# ----------------------------------------------------------------------------
# Pure-JAX reference (for correctness check only)
# ----------------------------------------------------------------------------
def reference_forward(params, x):
    def conv(z, w, b):
        y = jax.lax.conv_general_dilated(z, w, (1, 1), "VALID",
                                         dimension_numbers=("NCHW", "OIHW", "NCHW"))
        return jax.nn.relu(y + b.reshape(1, -1, 1, 1))

    def pool(z, k, s):
        return jax.lax.reduce_window(z, -jnp.inf, jax.lax.max,
                                     (1, 1, k, k), (1, 1, s, s), "VALID")

    z = pool(conv(x, *params["conv1"]), 4, 1)
    z = pool(conv(z, *params["conv2"]), 4, 1)
    z = pool(conv(z, *params["conv3"]), 4, 2)
    z = z.reshape(z.shape[0], -1)
    z = jax.nn.relu(z @ params["lin4"][0] + params["lin4"][1])
    z = jax.nn.relu(z @ params["lin5"][0] + params["lin5"][1])
    z = z @ params["lin6"][0] + params["lin6"][1]
    return jax.nn.softmax(z, axis=1)


if __name__ == "__main__":
    key = jax.random.PRNGKey(0)
    k_param, k_x = jax.random.split(key)
    params = init_params(k_param)
    prepped = prepare_params(params)
    # The module's Linear(192) forces a 28x28 spatial input (MNIST-like).
    x = jax.random.normal(k_x, (2, 1, 28, 28), jnp.float32)

    out = jax.block_until_ready(convnet_forward(prepped, x))

    assert out.shape == (2, 10), out.shape
    # softmax rows must sum to 1 (exact fp32 division in-kernel)
    assert bool(jnp.all(jnp.abs(jnp.sum(out, axis=1) - 1.0) < 1e-5))
    # match the pure-JAX reference
    ref = reference_forward(params, x)
    assert bool(jnp.allclose(out, ref, atol=1e-4, rtol=1e-4)), \
        float(jnp.max(jnp.abs(out - ref)))
    print("KERNEL_OK")
</pallas_src>

<mosaic_0001>
module attributes {stable_mosaic.version = 11 : i64} {
  func.func @_convnet_kernel(%arg0: i32, %arg1: memref<1x1x784xf32, #tpu.memory_space<vmem>>, %arg2: memref<25x3x1xf32, #tpu.memory_space<vmem>>, %arg3: memref<3x1xf32, #tpu.memory_space<vmem>>, %arg4: memref<25x6x3xf32, #tpu.memory_space<vmem>>, %arg5: memref<6x1xf32, #tpu.memory_space<vmem>>, %arg6: memref<25x12x6xf32, #tpu.memory_space<vmem>>, %arg7: memref<12x1xf32, #tpu.memory_space<vmem>>, %arg8: memref<12x175x100xf32, #tpu.memory_space<vmem>>, %arg9: memref<1x100xf32, #tpu.memory_space<vmem>>, %arg10: memref<100x50xf32, #tpu.memory_space<vmem>>, %arg11: memref<1x50xf32, #tpu.memory_space<vmem>>, %arg12: memref<50x10xf32, #tpu.memory_space<vmem>>, %arg13: memref<1x10xf32, #tpu.memory_space<vmem>>, %arg14: memref<1x1x10xf32, #tpu.memory_space<vmem>>) attributes {dimension_semantics = [#tpu.dimension_semantics<parallel>], iteration_bounds = array<i64: 2>, scalar_prefetch = 0 : i64, scratch_operands = 0 : i64, tpu.core_type = #tpu.core_type<tc>, window_params = [{transform_indices = @transform_0, window_bounds = array<i64: 1, 1, 784>}, {pipeline_mode = #tpu.pipeline_mode<synchronous>, transform_indices = @transform_1, window_bounds = array<i64: 25, 3, 1>}, {pipeline_mode = #tpu.pipeline_mode<synchronous>, transform_indices = @transform_2, window_bounds = array<i64: 3, 1>}, {pipeline_mode = #tpu.pipeline_mode<synchronous>, transform_indices = @transform_3, window_bounds = array<i64: 25, 6, 3>}, {pipeline_mode = #tpu.pipeline_mode<synchronous>, transform_indices = @transform_4, window_bounds = array<i64: 6, 1>}, {pipeline_mode = #tpu.pipeline_mode<synchronous>, transform_indices = @transform_5, window_bounds = array<i64: 25, 12, 6>}, {pipeline_mode = #tpu.pipeline_mode<synchronous>, transform_indices = @transform_6, window_bounds = array<i64: 12, 1>}, {pipeline_mode = #tpu.pipeline_mode<synchronous>, transform_indices = @transform_7, window_bounds = array<i64: 12, 175, 100>}, {pipeline_mode = #tpu.pipeline_mode<synchronous>, transform_indices = @transform_8, window_bounds = array<i64: 1, 100>}, {pipeline_mode = #tpu.pipeline_mode<synchronous>, transform_indices = @transform_9, window_bounds = array<i64: 100, 50>}, {pipeline_mode = #tpu.pipeline_mode<synchronous>, transform_indices = @transform_10, window_bounds = array<i64: 1, 50>}, {pipeline_mode = #tpu.pipeline_mode<synchronous>, transform_indices = @transform_11, window_bounds = array<i64: 50, 10>}, {pipeline_mode = #tpu.pipeline_mode<synchronous>, transform_indices = @transform_12, window_bounds = array<i64: 1, 10>}, {transform_indices = @transform_13, window_bounds = array<i64: 1, 1, 10>}]} {
    %c0 = arith.constant 0 : index
    %c0_0 = arith.constant 0 : index
    %c0_1 = arith.constant 0 : index
    %0 = vector.load %arg1[%c0, %c0_0, %c0_1] : memref<1x1x784xf32, #tpu.memory_space<vmem>>, vector<1x1x784xf32>
    %1 = vector.shape_cast %0 : vector<1x1x784xf32> to vector<1x784xf32>
    %2 = vector.extract_strided_slice %1 {offsets = [0, 0], sizes = [1, 668], strides = [1, 1]} : vector<1x784xf32> to vector<1x668xf32>
    %c0_2 = arith.constant 0 : index
    %c0_3 = arith.constant 0 : index
    %c0_4 = arith.constant 0 : index
    %3 = vector.load %arg2[%c0_2, %c0_3, %c0_4] : memref<25x3x1xf32, #tpu.memory_space<vmem>>, vector<1x3x1xf32>
    %4 = vector.shape_cast %3 : vector<1x3x1xf32> to vector<3x1xf32>
    %5 = vector.broadcast %4 : vector<3x1xf32> to vector<3x668xf32>
    %6 = vector.broadcast %2 : vector<1x668xf32> to vector<3x668xf32>
    %7 = arith.mulf %5, %6 : vector<3x668xf32>
    %8 = vector.extract_strided_slice %1 {offsets = [0, 1], sizes = [1, 668], strides = [1, 1]} : vector<1x784xf32> to vector<1x668xf32>
    %c1 = arith.constant 1 : index
    %c0_5 = arith.constant 0 : index
    %c0_6 = arith.constant 0 : index
    %9 = vector.load %arg2[%c1, %c0_5, %c0_6] : memref<25x3x1xf32, #tpu.memory_space<vmem>>, vector<1x3x1xf32>
    %10 = vector.shape_cast %9 : vector<1x3x1xf32> to vector<3x1xf32>
    %11 = vector.broadcast %10 : vector<3x1xf32> to vector<3x668xf32>
    %12 = vector.broadcast %8 : vector<1x668xf32> to vector<3x668xf32>
    %13 = arith.mulf %11, %12 : vector<3x668xf32>
    %14 = arith.addf %7, %13 : vector<3x668xf32>
    %15 = vector.extract_strided_slice %1 {offsets = [0, 2], sizes = [1, 668], strides = [1, 1]} : vector<1x784xf32> to vector<1x668xf32>
    %c2 = arith.constant 2 : index
    %c0_7 = arith.constant 0 : index
    %c0_8 = arith.constant 0 : index
    %16 = vector.load %arg2[%c2, %c0_7, %c0_8] : memref<25x3x1xf32, #tpu.memory_space<vmem>>, vector<1x3x1xf32>
    %17 = vector.shape_cast %16 : vector<1x3x1xf32> to vector<3x1xf32>
    %18 = vector.broadcast %17 : vector<3x1xf32> to vector<3x668xf32>
    %19 = vector.broadcast %15 : vector<1x668xf32> to vector<3x668xf32>
    %20 = arith.mulf %18, %19 : vector<3x668xf32>
    %21 = arith.addf %14, %20 : vector<3x668xf32>
    %22 = vector.extract_strided_slice %1 {offsets = [0, 3], sizes = [1, 668], strides = [1, 1]} : vector<1x784xf32> to vector<1x668xf32>
    %c3 = arith.constant 3 : index
    %c0_9 = arith.constant 0 : index
    %c0_10 = arith.constant 0 : index
    %23 = vector.load %arg2[%c3, %c0_9, %c0_10] : memref<25x3x1xf32, #tpu.memory_space<vmem>>, vector<1x3x1xf32>
    %24 = vector.shape_cast %23 : vector<1x3x1xf32> to vector<3x1xf32>
    %25 = vector.broadcast %24 : vector<3x1xf32> to vector<3x668xf32>
    %26 = vector.broadcast %22 : vector<1x668xf32> to vector<3x668xf32>
    %27 = arith.mulf %25, %26 : vector<3x668xf32>
    %28 = arith.addf %21, %27 : vector<3x668xf32>
    %29 = vector.extract_strided_slice %1 {offsets = [0, 4], sizes = [1, 668], strides = [1, 1]} : vector<1x784xf32> to vector<1x668xf32>
    %c4 = arith.constant 4 : index
    %c0_11 = arith.constant 0 : index
    %c0_12 = arith.constant 0 : index
    %30 = vector.load %arg2[%c4, %c0_11, %c0_12] : memref<25x3x1xf32, #tpu.memory_space<vmem>>, vector<1x3x1xf32>
    %31 = vector.shape_cast %30 : vector<1x3x1xf32> to vector<3x1xf32>
    %32 = vector.broadcast %31 : vector<3x1xf32> to vector<3x668xf32>
    %33 = vector.broadcast %29 : vector<1x668xf32> to vector<3x668xf32>
    %34 = arith.mulf %32, %33 : vector<3x668xf32>
    %35 = arith.addf %28, %34 : vector<3x668xf32>
    %36 = vector.extract_strided_slice %1 {offsets = [0, 28], sizes = [1, 668], strides = [1, 1]} : vector<1x784xf32> to vector<1x668xf32>
    %c5 = arith.constant 5 : index
    %c0_13 = arith.constant 0 : index
    %c0_14 = arith.constant 0 : index
    %37 = vector.load %arg2[%c5, %c0_13, %c0_14] : memref<25x3x1xf32, #tpu.memory_space<vmem>>, vector<1x3x1xf32>
    %38 = vector.shape_cast %37 : vector<1x3x1xf32> to vector<3x1xf32>
    %39 = vector.broadcast %38 : vector<3x1xf32> to vector<3x668xf32>
    %40 = vector.broadcast %36 : vector<1x668xf32> to vector<3x668xf32>
    %41 = arith.mulf %39, %40 : vector<3x668xf32>
    %42 = arith.addf %35, %41 : vector<3x668xf32>
    %43 = vector.extract_strided_slice %1 {offsets = [0, 29], sizes = [1, 668], strides = [1, 1]} : vector<1x784xf32> to vector<1x668xf32>
    %c6 = arith.constant 6 : index
    %c0_15 = arith.constant 0 : index
    %c0_16 = arith.constant 0 : index
    %44 = vector.load %arg2[%c6, %c0_15, %c0_16] : memref<25x3x1xf32, #tpu.memory_space<vmem>>, vector<1x3x1xf32>
    %45 = vector.shape_cast %44 : vector<1x3x1xf32> to vector<3x1xf32>
    %46 = vector.broadcast %45 : vector<3x1xf32> to vector<3x668xf32>
    %47 = vector.broadcast %43 : vector<1x668xf32> to vector<3x668xf32>
    %48 = arith.mulf %46, %47 : vector<3x668xf32>
    %49 = arith.addf %42, %48 : vector<3x668xf32>
    %50 = vector.extract_strided_slice %1 {offsets = [0, 30], sizes = [1, 668], strides = [1, 1]} : vector<1x784xf32> to vector<1x668xf32>
    %c7 = arith.constant 7 : index
    %c0_17 = arith.constant 0 : index
    %c0_18 = arith.constant 0 : index
    %51 = vector.load %arg2[%c7, %c0_17, %c0_18] : memref<25x3x1xf32, #tpu.memory_space<vmem>>, vector<1x3x1xf32>
    %52 = vector.shape_cast %51 : vector<1x3x1xf32> to vector<3x1xf32>
    %53 = vector.broadcast %52 : vector<3x1xf32> to vector<3x668xf32>
    %54 = vector.broadcast %50 : vector<1x668xf32> to vector<3x668xf32>
    %55 = arith.mulf %53, %54 : vector<3x668xf32>
    %56 = arith.addf %49, %55 : vector<3x668xf32>
    %57 = vector.extract_strided_slice %1 {offsets = [0, 31], sizes = [1, 668], strides = [1, 1]} : vector<1x784xf32> to vector<1x668xf32>
    %c8 = arith.constant 8 : index
    %c0_19 = arith.constant 0 : index
    %c0_20 = arith.constant 0 : index
    %58 = vector.load %arg2[%c8, %c0_19, %c0_20] : memref<25x3x1xf32, #tpu.memory_space<vmem>>, vector<1x3x1xf32>
    %59 = vector.shape_cast %58 : vector<1x3x1xf32> to vector<3x1xf32>
    %60 = vector.broadcast %59 : vector<3x1xf32> to vector<3x668xf32>
    %61 = vector.broadcast %57 : vector<1x668xf32> to vector<3x668xf32>
    %62 = arith.mulf %60, %61 : vector<3x668xf32>
    %63 = arith.addf %56, %62 : vector<3x668xf32>
    %64 = vector.extract_strided_slice %1 {offsets = [0, 32], sizes = [1, 668], strides = [1, 1]} : vector<1x784xf32> to vector<1x668xf32>
    %c9 = arith.constant 9 : index
    %c0_21 = arith.constant 0 : index
    %c0_22 = arith.constant 0 : index
    %65 = vector.load %arg2[%c9, %c0_21, %c0_22] : memref<25x3x1xf32, #tpu.memory_space<vmem>>, vector<1x3x1xf32>
    %66 = vector.shape_cast %65 : vector<1x3x1xf32> to vector<3x1xf32>
    %67 = vector.broadcast %66 : vector<3x1xf32> to vector<3x668xf32>
    %68 = vector.broadcast %64 : vector<1x668xf32> to vector<3x668xf32>
    %69 = arith.mulf %67, %68 : vector<3x668xf32>
    %70 = arith.addf %63, %69 : vector<3x668xf32>
    %71 = vector.extract_strided_slice %1 {offsets = [0, 56], sizes = [1, 668], strides = [1, 1]} : vector<1x784xf32> to vector<1x668xf32>
    %c10 = arith.constant 10 : index
    %c0_23 = arith.constant 0 : index
    %c0_24 = arith.constant 0 : index
    %72 = vector.load %arg2[%c10, %c0_23, %c0_24] : memref<25x3x1xf32, #tpu.memory_space<vmem>>, vector<1x3x1xf32>
    %73 = vector.shape_cast %72 : vector<1x3x1xf32> to vector<3x1xf32>
    %74 = vector.broadcast %73 : vector<3x1xf32> to vector<3x668xf32>
    %75 = vector.broadcast %71 : vector<1x668xf32> to vector<3x668xf32>
    %76 = arith.mulf %74, %75 : vector<3x668xf32>
    %77 = arith.addf %70, %76 : vector<3x668xf32>
    %78 = vector.extract_strided_slice %1 {offsets = [0, 57], sizes = [1, 668], strides = [1, 1]} : vector<1x784xf32> to vector<1x668xf32>
    %c11 = arith.constant 11 : index
    %c0_25 = arith.constant 0 : index
    %c0_26 = arith.constant 0 : index
    %79 = vector.load %arg2[%c11, %c0_25, %c0_26] : memref<25x3x1xf32, #tpu.memory_space<vmem>>, vector<1x3x1xf32>
    %80 = vector.shape_cast %79 : vector<1x3x1xf32> to vector<3x1xf32>
    %81 = vector.broadcast %80 : vector<3x1xf32> to vector<3x668xf32>
    %82 = vector.broadcast %78 : vector<1x668xf32> to vector<3x668xf32>
    %83 = arith.mulf %81, %82 : vector<3x668xf32>
    %84 = arith.addf %77, %83 : vector<3x668xf32>
    %85 = vector.extract_strided_slice %1 {offsets = [0, 58], sizes = [1, 668], strides = [1, 1]} : vector<1x784xf32> to vector<1x668xf32>
    %c12 = arith.constant 12 : index
    %c0_27 = arith.constant 0 : index
    %c0_28 = arith.constant 0 : index
    %86 = vector.load %arg2[%c12, %c0_27, %c0_28] : memref<25x3x1xf32, #tpu.memory_space<vmem>>, vector<1x3x1xf32>
    %87 = vector.shape_cast %86 : vector<1x3x1xf32> to vector<3x1xf32>
    %88 = vector.broadcast %87 : vector<3x1xf32> to vector<3x668xf32>
    %89 = vector.broadcast %85 : vector<1x668xf32> to vector<3x668xf32>
    %90 = arith.mulf %88, %89 : vector<3x668xf32>
    %91 = arith.addf %84, %90 : vector<3x668xf32>
    %92 = vector.extract_strided_slice %1 {offsets = [0, 59], sizes = [1, 668], strides = [1, 1]} : vector<1x784xf32> to vector<1x668xf32>
    %c13 = arith.constant 13 : index
    %c0_29 = arith.constant 0 : index
    %c0_30 = arith.constant 0 : index
    %93 = vector.load %arg2[%c13, %c0_29, %c0_30] : memref<25x3x1xf32, #tpu.memory_space<vmem>>, vector<1x3x1xf32>
    %94 = vector.shape_cast %93 : vector<1x3x1xf32> to vector<3x1xf32>
    %95 = vector.broadcast %94 : vector<3x1xf32> to vector<3x668xf32>
    %96 = vector.broadcast %92 : vector<1x668xf32> to vector<3x668xf32>
    %97 = arith.mulf %95, %96 : vector<3x668xf32>
    %98 = arith.addf %91, %97 : vector<3x668xf32>
    %99 = vector.extract_strided_slice %1 {offsets = [0, 60], sizes = [1, 668], strides = [1, 1]} : vector<1x784xf32> to vector<1x668xf32>
    %c14 = arith.constant 14 : index
    %c0_31 = arith.constant 0 : index
    %c0_32 = arith.constant 0 : index
    %100 = vector.load %arg2[%c14, %c0_31, %c0_32] : memref<25x3x1xf32, #tpu.memory_space<vmem>>, vector<1x3x1xf32>
    %101 = vector.shape_cast %100 : vector<1x3x1xf32> to vector<3x1xf32>
    %102 = vector.broadcast %101 : vector<3x1xf32> to vector<3x668xf32>
    %103 = vector.broadcast %99 : vector<1x668xf32> to vector<3x668xf32>
    %104 = arith.mulf %102, %103 : vector<3x668xf32>
    %105 = arith.addf %98, %104 : vector<3x668xf32>
    %106 = vector.extract_strided_slice %1 {offsets = [0, 84], sizes = [1, 668], strides = [1, 1]} : vector<1x784xf32> to vector<1x668xf32>
    %c15 = arith.constant 15 : index
    %c0_33 = arith.constant 0 : index
    %c0_34 = arith.constant 0 : index
    %107 = vector.load %arg2[%c15, %c0_33, %c0_34] : memref<25x3x1xf32, #tpu.memory_space<vmem>>, vector<1x3x1xf32>
    %108 = vector.shape_cast %107 : vector<1x3x1xf32> to vector<3x1xf32>
    %109 = vector.broadcast %108 : vector<3x1xf32> to vector<3x668xf32>
    %110 = vector.broadcast %106 : vector<1x668xf32> to vector<3x668xf32>
    %111 = arith.mulf %109, %110 : vector<3x668xf32>
    %112 = arith.addf %105, %111 : vector<3x668xf32>
    %113 = vector.extract_strided_slice %1 {offsets = [0, 85], sizes = [1, 668], strides = [1, 1]} : vector<1x784xf32> to vector<1x668xf32>
    %c16 = arith.constant 16 : index
    %c0_35 = arith.constant 0 : index
    %c0_36 = arith.constant 0 : index
    %114 = vector.load %arg2[%c16, %c0_35, %c0_36] : memref<25x3x1xf32, #tpu.memory_space<vmem>>, vector<1x3x1xf32>
    %115 = vector.shape_cast %114 : vector<1x3x1xf32> to vector<3x1xf32>
    %116 = vector.broadcast %115 : vector<3x1xf32> to vector<3x668xf32>
    %117 = vector.broadcast %113 : vector<1x668xf32> to vector<3x668xf32>
    %118 = arith.mulf %116, %117 : vector<3x668xf32>
    %119 = arith.addf %112, %118 : vector<3x668xf32>
    %120 = vector.extract_strided_slice %1 {offsets = [0, 86], sizes = [1, 668], strides = [1, 1]} : vector<1x784xf32> to vector<1x668xf32>
    %c17 = arith.constant 17 : index
    %c0_37 = arith.constant 0 : index
    %c0_38 = arith.constant 0 : index
    %121 = vector.load %arg2[%c17, %c0_37, %c0_38] : memref<25x3x1xf32, #tpu.memory_space<vmem>>, vector<1x3x1xf32>
    %122 = vector.shape_cast %121 : vector<1x3x1xf32> to vector<3x1xf32>
    %123 = vector.broadcast %122 : vector<3x1xf32> to vector<3x668xf32>
    %124 = vector.broadcast %120 : vector<1x668xf32> to vector<3x668xf32>
    %125 = arith.mulf %123, %124 : vector<3x668xf32>
    %126 = arith.addf %119, %125 : vector<3x668xf32>
    %127 = vector.extract_strided_slice %1 {offsets = [0, 87], sizes = [1, 668], strides = [1, 1]} : vector<1x784xf32> to vector<1x668xf32>
    %c18 = arith.constant 18 : index
    %c0_39 = arith.constant 0 : index
    %c0_40 = arith.constant 0 : index
    %128 = vector.load %arg2[%c18, %c0_39, %c0_40] : memref<25x3x1xf32, #tpu.memory_space<vmem>>, vector<1x3x1xf32>
    %129 = vector.shape_cast %128 : vector<1x3x1xf32> to vector<3x1xf32>
    %130 = vector.broadcast %129 : vector<3x1xf32> to vector<3x668xf32>
    %131 = vector.broadcast %127 : vector<1x668xf32> to vector<3x668xf32>
    %132 = arith.mulf %130, %131 : vector<3x668xf32>
    %133 = arith.addf %126, %132 : vector<3x668xf32>
    %134 = vector.extract_strided_slice %1 {offsets = [0, 88], sizes = [1, 668], strides = [1, 1]} : vector<1x784xf32> to vector<1x668xf32>
    %c19 = arith.constant 19 : index
    %c0_41 = arith.constant 0 : index
    %c0_42 = arith.constant 0 : index
    %135 = vector.load %arg2[%c19, %c0_41, %c0_42] : memref<25x3x1xf32, #tpu.memory_space<vmem>>, vector<1x3x1xf32>
    %136 = vector.shape_cast %135 : vector<1x3x1xf32> to vector<3x1xf32>
    %137 = vector.broadcast %136 : vector<3x1xf32> to vector<3x668xf32>
    %138 = vector.broadcast %134 : vector<1x668xf32> to vector<3x668xf32>
    %139 = arith.mulf %137, %138 : vector<3x668xf32>
    %140 = arith.addf %133, %139 : vector<3x668xf32>
    %141 = vector.extract_strided_slice %1 {offsets = [0, 112], sizes = [1, 668], strides = [1, 1]} : vector<1x784xf32> to vector<1x668xf32>
    %c20 = arith.constant 20 : index
    %c0_43 = arith.constant 0 : index
    %c0_44 = arith.constant 0 : index
    %142 = vector.load %arg2[%c20, %c0_43, %c0_44] : memref<25x3x1xf32, #tpu.memory_space<vmem>>, vector<1x3x1xf32>
    %143 = vector.shape_cast %142 : vector<1x3x1xf32> to vector<3x1xf32>
    %144 = vector.broadcast %143 : vector<3x1xf32> to vector<3x668xf32>
    %145 = vector.broadcast %141 : vector<1x668xf32> to vector<3x668xf32>
    %146 = arith.mulf %144, %145 : vector<3x668xf32>
    %147 = arith.addf %140, %146 : vector<3x668xf32>
    %148 = vector.extract_strided_slice %1 {offsets = [0, 113], sizes = [1, 668], strides = [1, 1]} : vector<1x784xf32> to vector<1x668xf32>
    %c21 = arith.constant 21 : index
    %c0_45 = arith.constant 0 : index
    %c0_46 = arith.constant 0 : index
    %149 = vector.load %arg2[%c21, %c0_45, %c0_46] : memref<25x3x1xf32, #tpu.memory_space<vmem>>, vector<1x3x1xf32>
    %150 = vector.shape_cast %149 : vector<1x3x1xf32> to vector<3x1xf32>
    %151 = vector.broadcast %150 : vector<3x1xf32> to vector<3x668xf32>
    %152 = vector.broadcast %148 : vector<1x668xf32> to vector<3x668xf32>
    %153 = arith.mulf %151, %152 : vector<3x668xf32>
    %154 = arith.addf %147, %153 : vector<3x668xf32>
    %155 = vector.extract_strided_slice %1 {offsets = [0, 114], sizes = [1, 668], strides = [1, 1]} : vector<1x784xf32> to vector<1x668xf32>
    %c22 = arith.constant 22 : index
    %c0_47 = arith.constant 0 : index
    %c0_48 = arith.constant 0 : index
    %156 = vector.load %arg2[%c22, %c0_47, %c0_48] : memref<25x3x1xf32, #tpu.memory_space<vmem>>, vector<1x3x1xf32>
    %157 = vector.shape_cast %156 : vector<1x3x1xf32> to vector<3x1xf32>
    %158 = vector.broadcast %157 : vector<3x1xf32> to vector<3x668xf32>
    %159 = vector.broadcast %155 : vector<1x668xf32> to vector<3x668xf32>
    %160 = arith.mulf %158, %159 : vector<3x668xf32>
    %161 = arith.addf %154, %160 : vector<3x668xf32>
    %162 = vector.extract_strided_slice %1 {offsets = [0, 115], sizes = [1, 668], strides = [1, 1]} : vector<1x784xf32> to vector<1x668xf32>
    %c23 = arith.constant 23 : index
    %c0_49 = arith.constant 0 : index
    %c0_50 = arith.constant 0 : index
    %163 = vector.load %arg2[%c23, %c0_49, %c0_50] : memref<25x3x1xf32, #tpu.memory_space<vmem>>, vector<1x3x1xf32>
    %164 = vector.shape_cast %163 : vector<1x3x1xf32> to vector<3x1xf32>
    %165 = vector.broadcast %164 : vector<3x1xf32> to vector<3x668xf32>
    %166 = vector.broadcast %162 : vector<1x668xf32> to vector<3x668xf32>
    %167 = arith.mulf %165, %166 : vector<3x668xf32>
    %168 = arith.addf %161, %167 : vector<3x668xf32>
    %169 = vector.extract_strided_slice %1 {offsets = [0, 116], sizes = [1, 668], strides = [1, 1]} : vector<1x784xf32> to vector<1x668xf32>
    %c24 = arith.constant 24 : index
    %c0_51 = arith.constant 0 : index
    %c0_52 = arith.constant 0 : index
    %170 = vector.load %arg2[%c24, %c0_51, %c0_52] : memref<25x3x1xf32, #tpu.memory_space<vmem>>, vector<1x3x1xf32>
    %171 = vector.shape_cast %170 : vector<1x3x1xf32> to vector<3x1xf32>
    %172 = vector.broadcast %171 : vector<3x1xf32> to vector<3x668xf32>
    %173 = vector.broadcast %169 : vector<1x668xf32> to vector<3x668xf32>
    %174 = arith.mulf %172, %173 : vector<3x668xf32>
    %175 = arith.addf %168, %174 : vector<3x668xf32>
    %c0_53 = arith.constant 0 : index
    %c0_54 = arith.constant 0 : index
    %176 = vector.load %arg3[%c0_53, %c0_54] : memref<3x1xf32, #tpu.memory_space<vmem>>, vector<3x1xf32>
    %177 = vector.broadcast %176 : vector<3x1xf32> to vector<3x668xf32>
    %178 = arith.addf %175, %177 : vector<3x668xf32>
    %cst = arith.constant 0.000000e+00 : f32
    %179 = vector.broadcast %cst : f32 to vector<3x668xf32>
    %180 = arith.maximumf %178, %179 : vector<3x668xf32>
    %181 = vector.extract_strided_slice %180 {offsets = [0, 0], sizes = [3, 581], strides = [1, 1]} : vector<3x668xf32> to vector<3x581xf32>
    %182 = vector.extract_strided_slice %180 {offsets = [0, 1], sizes = [3, 581], strides = [1, 1]} : vector<3x668xf32> to vector<3x581xf32>
    %183 = arith.maximumf %181, %182 : vector<3x581xf32>
    %184 = vector.extract_strided_slice %180 {offsets = [0, 2], sizes = [3, 581], strides = [1, 1]} : vector<3x668xf32> to vector<3x581xf32>
    %185 = arith.maximumf %183, %184 : vector<3x581xf32>
    %186 = vector.extract_strided_slice %180 {offsets = [0, 3], sizes = [3, 581], strides = [1, 1]} : vector<3x668xf32> to vector<3x581xf32>
    %187 = arith.maximumf %185, %186 : vector<3x581xf32>
    %188 = vector.extract_strided_slice %180 {offsets = [0, 28], sizes = [3, 581], strides = [1, 1]} : vector<3x668xf32> to vector<3x581xf32>
    %189 = arith.maximumf %187, %188 : vector<3x581xf32>
    %190 = vector.extract_strided_slice %180 {offsets = [0, 29], sizes = [3, 581], strides = [1, 1]} : vector<3x668xf32> to vector<3x581xf32>
    %191 = arith.maximumf %189, %190 : vector<3x581xf32>
    %192 = vector.extract_strided_slice %180 {offsets = [0, 30], sizes = [3, 581], strides = [1, 1]} : vector<3x668xf32> to vector<3x581xf32>
    %193 = arith.maximumf %191, %192 : vector<3x581xf32>
    %194 = vector.extract_strided_slice %180 {offsets = [0, 31], sizes = [3, 581], strides = [1, 1]} : vector<3x668xf32> to vector<3x581xf32>
    %195 = arith.maximumf %193, %194 : vector<3x581xf32>
    %196 = vector.extract_strided_slice %180 {offsets = [0, 56], sizes = [3, 581], strides = [1, 1]} : vector<3x668xf32> to vector<3x581xf32>
    %197 = arith.maximumf %195, %196 : vector<3x581xf32>
    %198 = vector.extract_strided_slice %180 {offsets = [0, 57], sizes = [3, 581], strides = [1, 1]} : vector<3x668xf32> to vector<3x581xf32>
    %199 = arith.maximumf %197, %198 : vector<3x581xf32>
    %200 = vector.extract_strided_slice %180 {offsets = [0, 58], sizes = [3, 581], strides = [1, 1]} : vector<3x668xf32> to vector<3x581xf32>
    %201 = arith.maximumf %199, %200 : vector<3x581xf32>
    %202 = vector.extract_strided_slice %180 {offsets = [0, 59], sizes = [3, 581], strides = [1, 1]} : vector<3x668xf32> to vector<3x581xf32>
    %203 = arith.maximumf %201, %202 : vector<3x581xf32>
    %204 = vector.extract_strided_slice %180 {offsets = [0, 84], sizes = [3, 581], strides = [1, 1]} : vector<3x668xf32> to vector<3x581xf32>
    %205 = arith.maximumf %203, %204 : vector<3x581xf32>
    %206 = vector.extract_strided_slice %180 {offsets = [0, 85], sizes = [3, 581], strides = [1, 1]} : vector<3x668xf32> to vector<3x581xf32>
    %207 = arith.maximumf %205, %206 : vector<3x581xf32>
    %208 = vector.extract_strided_slice %180 {offsets = [0, 86], sizes = [3, 581], strides = [1, 1]} : vector<3x668xf32> to vector<3x581xf32>
    %209 = arith.maximumf %207, %208 : vector<3x581xf32>
    %210 = vector.extract_strided_slice %180 {offsets = [0, 87], sizes = [3, 581], strides = [1, 1]} : vector<3x668xf32> to vector<3x581xf32>
    %211 = arith.maximumf %209, %210 : vector<3x581xf32>
    %212 = vector.extract_strided_slice %211 {offsets = [0, 0], sizes = [3, 465], strides = [1, 1]} : vector<3x581xf32> to vector<3x465xf32>
    %c0_55 = arith.constant 0 : index
    %c0_56 = arith.constant 0 : index
    %c0_57 = arith.constant 0 : index
    %213 = vector.load %arg4[%c0_55, %c0_56, %c0_57] : memref<25x6x3xf32, #tpu.memory_space<vmem>>, vector<1x6x3xf32>
    %214 = vector.shape_cast %213 : vector<1x6x3xf32> to vector<6x3xf32>
    %cst_58 = arith.constant dense<0.000000e+00> : vector<6x465xf32>
    %215 = tpu.matmul %214, %212, %cst_58 {dimension_numbers = #tpu.dot_dimension_numbers<[1], [0], [0], [1], [0, 0, 1, 1], [], []>} : vector<6x3xf32>, vector<3x465xf32>, vector<6x465xf32> -> vector<6x465xf32>
    %216 = vector.extract_strided_slice %211 {offsets = [0, 1], sizes = [3, 465], strides = [1, 1]} : vector<3x581xf32> to vector<3x465xf32>
    %c1_59 = arith.constant 1 : index
    %c0_60 = arith.constant 0 : index
    %c0_61 = arith.constant 0 : index
    %217 = vector.load %arg4[%c1_59, %c0_60, %c0_61] : memref<25x6x3xf32, #tpu.memory_space<vmem>>, vector<1x6x3xf32>
    %218 = vector.shape_cast %217 : vector<1x6x3xf32> to vector<6x3xf32>
    %cst_62 = arith.constant dense<0.000000e+00> : vector<6x465xf32>
    %219 = tpu.matmul %218, %216, %cst_62 {dimension_numbers = #tpu.dot_dimension_numbers<[1], [0], [0], [1], [0, 0, 1, 1], [], []>} : vector<6x3xf32>, vector<3x465xf32>, vector<6x465xf32> -> vector<6x465xf32>
    %220 = arith.addf %215, %219 : vector<6x465xf32>
    %221 = vector.extract_strided_slice %211 {offsets = [0, 2], sizes = [3, 465], strides = [1, 1]} : vector<3x581xf32> to vector<3x465xf32>
    %c2_63 = arith.constant 2 : index
    %c0_64 = arith.constant 0 : index
    %c0_65 = arith.constant 0 : index
    %222 = vector.load %arg4[%c2_63, %c0_64, %c0_65] : memref<25x6x3xf32, #tpu.memory_space<vmem>>, vector<1x6x3xf32>
    %223 = vector.shape_cast %222 : vector<1x6x3xf32> to vector<6x3xf32>
    %cst_66 = arith.constant dense<0.000000e+00> : vector<6x465xf32>
    %224 = tpu.matmul %223, %221, %cst_66 {dimension_numbers = #tpu.dot_dimension_numbers<[1], [0], [0], [1], [0, 0, 1, 1], [], []>} : vector<6x3xf32>, vector<3x465xf32>, vector<6x465xf32> -> vector<6x465xf32>
    %225 = arith.addf %220, %224 : vector<6x465xf32>
    %226 = vector.extract_strided_slice %211 {offsets = [0, 3], sizes = [3, 465], strides = [1, 1]} : vector<3x581xf32> to vector<3x465xf32>
    %c3_67 = arith.constant 3 : index
    %c0_68 = arith.constant 0 : index
    %c0_69 = arith.constant 0 : index
    %227 = vector.load %arg4[%c3_67, %c0_68, %c0_69] : memref<25x6x3xf32, #tpu.memory_space<vmem>>, vector<1x6x3xf32>
    %228 = vector.shape_cast %227 : vector<1x6x3xf32> to vector<6x3xf32>
    %cst_70 = arith.constant dense<0.000000e+00> : vector<6x465xf32>
    %229 = tpu.matmul %228, %226, %cst_70 {dimension_numbers = #tpu.dot_dimension_numbers<[1], [0], [0], [1], [0, 0, 1, 1], [], []>} : vector<6x3xf32>, vector<3x465xf32>, vector<6x465xf32> -> vector<6x465xf32>
    %230 = arith.addf %225, %229 : vector<6x465xf32>
    %231 = vector.extract_strided_slice %211 {offsets = [0, 4], sizes = [3, 465], strides = [1, 1]} : vector<3x581xf32> to vector<3x465xf32>
    %c4_71 = arith.constant 4 : index
    %c0_72 = arith.constant 0 : index
    %c0_73 = arith.constant 0 : index
    %232 = vector.load %arg4[%c4_71, %c0_72, %c0_73] : memref<25x6x3xf32, #tpu.memory_space<vmem>>, vector<1x6x3xf32>
    %233 = vector.shape_cast %232 : vector<1x6x3xf32> to vector<6x3xf32>
    %cst_74 = arith.constant dense<0.000000e+00> : vector<6x465xf32>
    %234 = tpu.matmul %233, %231, %cst_74 {dimension_numbers = #tpu.dot_dimension_numbers<[1], [0], [0], [1], [0, 0, 1, 1], [], []>} : vector<6x3xf32>, vector<3x465xf32>, vector<6x465xf32> -> vector<6x465xf32>
    %235 = arith.addf %230, %234 : vector<6x465xf32>
    %236 = vector.extract_strided_slice %211 {offsets = [0, 28], sizes = [3, 465], strides = [1, 1]} : vector<3x581xf32> to vector<3x465xf32>
    %c5_75 = arith.constant 5 : index
    %c0_76 = arith.constant 0 : index
    %c0_77 = arith.constant 0 : index
    %237 = vector.load %arg4[%c5_75, %c0_76, %c0_77] : memref<25x6x3xf32, #tpu.memory_space<vmem>>, vector<1x6x3xf32>
    %238 = vector.shape_cast %237 : vector<1x6x3xf32> to vector<6x3xf32>
    %cst_78 = arith.constant dense<0.000000e+00> : vector<6x465xf32>
    %239 = tpu.matmul %238, %236, %cst_78 {dimension_numbers = #tpu.dot_dimension_numbers<[1], [0], [0], [1], [0, 0, 1, 1], [], []>} : vector<6x3xf32>, vector<3x465xf32>, vector<6x465xf32> -> vector<6x465xf32>
    %240 = arith.addf %235, %239 : vector<6x465xf32>
    %241 = vector.extract_strided_slice %211 {offsets = [0, 29], sizes = [3, 465], strides = [1, 1]} : vector<3x581xf32> to vector<3x465xf32>
    %c6_79 = arith.constant 6 : index
    %c0_80 = arith.constant 0 : index
    %c0_81 = arith.constant 0 : index
    %242 = vector.load %arg4[%c6_79, %c0_80, %c0_81] : memref<25x6x3xf32, #tpu.memory_space<vmem>>, vector<1x6x3xf32>
    %243 = vector.shape_cast %242 : vector<1x6x3xf32> to vector<6x3xf32>
    %cst_82 = arith.constant dense<0.000000e+00> : vector<6x465xf32>
    %244 = tpu.matmul %243, %241, %cst_82 {dimension_numbers = #tpu.dot_dimension_numbers<[1], [0], [0], [1], [0, 0, 1, 1], [], []>} : vector<6x3xf32>, vector<3x465xf32>, vector<6x465xf32> -> vector<6x465xf32>
    %245 = arith.addf %240, %244 : vector<6x465xf32>
    %246 = vector.extract_strided_slice %211 {offsets = [0, 30], sizes = [3, 465], strides = [1, 1]} : vector<3x581xf32> to vector<3x465xf32>
    %c7_83 = arith.constant 7 : index
    %c0_84 = arith.constant 0 : index
    %c0_85 = arith.constant 0 : index
    %247 = vector.load %arg4[%c7_83, %c0_84, %c0_85] : memref<25x6x3xf32, #tpu.memory_space<vmem>>, vector<1x6x3xf32>
    %248 = vector.shape_cast %247 : vector<1x6x3xf32> to vector<6x3xf32>
    %cst_86 = arith.constant dense<0.000000e+00> : vector<6x465xf32>
    %249 = tpu.matmul %248, %246, %cst_86 {dimension_numbers = #tpu.dot_dimension_numbers<[1], [0], [0], [1], [0, 0, 1, 1], [], []>} : vector<6x3xf32>, vector<3x465xf32>, vector<6x465xf32> -> vector<6x465xf32>
    %250 = arith.addf %245, %249 : vector<6x465xf32>
    %251 = vector.extract_strided_slice %211 {offsets = [0, 31], sizes = [3, 465], strides = [1, 1]} : vector<3x581xf32> to vector<3x465xf32>
    %c8_87 = arith.constant 8 : index
    %c0_88 = arith.constant 0 : index
    %c0_89 = arith.constant 0 : index
    %252 = vector.load %arg4[%c8_87, %c0_88, %c0_89] : memref<25x6x3xf32, #tpu.memory_space<vmem>>, vector<1x6x3xf32>
    %253 = vector.shape_cast %252 : vector<1x6x3xf32> to vector<6x3xf32>
    %cst_90 = arith.constant dense<0.000000e+00> : vector<6x465xf32>
    %254 = tpu.matmul %253, %251, %cst_90 {dimension_numbers = #tpu.dot_dimension_numbers<[1], [0], [0], [1], [0, 0, 1, 1], [], []>} : vector<6x3xf32>, vector<3x465xf32>, vector<6x465xf32> -> vector<6x465xf32>
    %255 = arith.addf %250, %254 : vector<6x465xf32>
    %256 = vector.extract_strided_slice %211 {offsets = [0, 32], sizes = [3, 465], strides = [1, 1]} : vector<3x581xf32> to vector<3x465xf32>
    %c9_91 = arith.constant 9 : index
    %c0_92 = arith.constant 0 : index
    %c0_93 = arith.constant 0 : index
    %257 = vector.load %arg4[%c9_91, %c0_92, %c0_93] : memref<25x6x3xf32, #tpu.memory_space<vmem>>, vector<1x6x3xf32>
    %258 = vector.shape_cast %257 : vector<1x6x3xf32> to vector<6x3xf32>
    %cst_94 = arith.constant dense<0.000000e+00> : vector<6x465xf32>
    %259 = tpu.matmul %258, %256, %cst_94 {dimension_numbers = #tpu.dot_dimension_numbers<[1], [0], [0], [1], [0, 0, 1, 1], [], []>} : vector<6x3xf32>, vector<3x465xf32>, vector<6x465xf32> -> vector<6x465xf32>
    %260 = arith.addf %255, %259 : vector<6x465xf32>
    %261 = vector.extract_strided_slice %211 {offsets = [0, 56], sizes = [3, 465], strides = [1, 1]} : vector<3x581xf32> to vector<3x465xf32>
    %c10_95 = arith.constant 10 : index
    %c0_96 = arith.constant 0 : index
    %c0_97 = arith.constant 0 : index
    %262 = vector.load %arg4[%c10_95, %c0_96, %c0_97] : memref<25x6x3xf32, #tpu.memory_space<vmem>>, vector<1x6x3xf32>
    %263 = vector.shape_cast %262 : vector<1x6x3xf32> to vector<6x3xf32>
    %cst_98 = arith.constant dense<0.000000e+00> : vector<6x465xf32>
    %264 = tpu.matmul %263, %261, %cst_98 {dimension_numbers = #tpu.dot_dimension_numbers<[1], [0], [0], [1], [0, 0, 1, 1], [], []>} : vector<6x3xf32>, vector<3x465xf32>, vector<6x465xf32> -> vector<6x465xf32>
    %265 = arith.addf %260, %264 : vector<6x465xf32>
    %266 = vector.extract_strided_slice %211 {offsets = [0, 57], sizes = [3, 465], strides = [1, 1]} : vector<3x581xf32> to vector<3x465xf32>
    %c11_99 = arith.constant 11 : index
    %c0_100 = arith.constant 0 : index
    %c0_101 = arith.constant 0 : index
    %267 = vector.load %arg4[%c11_99, %c0_100, %c0_101] : memref<25x6x3xf32, #tpu.memory_space<vmem>>, vector<1x6x3xf32>
    %268 = vector.shape_cast %267 : vector<1x6x3xf32> to vector<6x3xf32>
    %cst_102 = arith.constant dense<0.000000e+00> : vector<6x465xf32>
    %269 = tpu.matmul %268, %266, %cst_102 {dimension_numbers = #tpu.dot_dimension_numbers<[1], [0], [0], [1], [0, 0, 1, 1], [], []>} : vector<6x3xf32>, vector<3x465xf32>, vector<6x465xf32> -> vector<6x465xf32>
    %270 = arith.addf %265, %269 : vector<6x465xf32>
    %271 = vector.extract_strided_slice %211 {offsets = [0, 58], sizes = [3, 465], strides = [1, 1]} : vector<3x581xf32> to vector<3x465xf32>
    %c12_103 = arith.constant 12 : index
    %c0_104 = arith.constant 0 : index
    %c0_105 = arith.constant 0 : index
    %272 = vector.load %arg4[%c12_103, %c0_104, %c0_105] : memref<25x6x3xf32, #tpu.memory_space<vmem>>, vector<1x6x3xf32>
    %273 = vector.shape_cast %272 : vector<1x6x3xf32> to vector<6x3xf32>
    %cst_106 = arith.constant dense<0.000000e+00> : vector<6x465xf32>
    %274 = tpu.matmul %273, %271, %cst_106 {dimension_numbers = #tpu.dot_dimension_numbers<[1], [0], [0], [1], [0, 0, 1, 1], [], []>} : vector<6x3xf32>, vector<3x465xf32>, vector<6x465xf32> -> vector<6x465xf32>
    %275 = arith.addf %270, %274 : vector<6x465xf32>
    %276 = vector.extract_strided_slice %211 {offsets = [0, 59], sizes = [3, 465], strides = [1, 1]} : vector<3x581xf32> to vector<3x465xf32>
    %c13_107 = arith.constant 13 : index
    %c0_108 = arith.constant 0 : index
    %c0_109 = arith.constant 0 : index
    %277 = vector.load %arg4[%c13_107, %c0_108, %c0_109] : memref<25x6x3xf32, #tpu.memory_space<vmem>>, vector<1x6x3xf32>
    %278 = vector.shape_cast %277 : vector<1x6x3xf32> to vector<6x3xf32>
    %cst_110 = arith.constant dense<0.000000e+00> : vector<6x465xf32>
    %279 = tpu.matmul %278, %276, %cst_110 {dimension_numbers = #tpu.dot_dimension_numbers<[1], [0], [0], [1], [0, 0, 1, 1], [], []>} : vector<6x3xf32>, vector<3x465xf32>, vector<6x465xf32> -> vector<6x465xf32>
    %280 = arith.addf %275, %279 : vector<6x465xf32>
    %281 = vector.extract_strided_slice %211 {offsets = [0, 60], sizes = [3, 465], strides = [1, 1]} : vector<3x581xf32> to vector<3x465xf32>
    %c14_111 = arith.constant 14 : index
    %c0_112 = arith.constant 0 : index
    %c0_113 = arith.constant 0 : index
    %282 = vector.load %arg4[%c14_111, %c0_112, %c0_113] : memref<25x6x3xf32, #tpu.memory_space<vmem>>, vector<1x6x3xf32>
    %283 = vector.shape_cast %282 : vector<1x6x3xf32> to vector<6x3xf32>
    %cst_114 = arith.constant dense<0.000000e+00> : vector<6x465xf32>
    %284 = tpu.matmul %283, %281, %cst_114 {dimension_numbers = #tpu.dot_dimension_numbers<[1], [0], [0], [1], [0, 0, 1, 1], [], []>} : vector<6x3xf32>, vector<3x465xf32>, vector<6x465xf32> -> vector<6x465xf32>
    %285 = arith.addf %280, %284 : vector<6x465xf32>
    %286 = vector.extract_strided_slice %211 {offsets = [0, 84], sizes = [3, 465], strides = [1, 1]} : vector<3x581xf32> to vector<3x465xf32>
    %c15_115 = arith.constant 15 : index
    %c0_116 = arith.constant 0 : index
    %c0_117 = arith.constant 0 : index
    %287 = vector.load %arg4[%c15_115, %c0_116, %c0_117] : memref<25x6x3xf32, #tpu.memory_space<vmem>>, vector<1x6x3xf32>
    %288 = vector.shape_cast %287 : vector<1x6x3xf32> to vector<6x3xf32>
    %cst_118 = arith.constant dense<0.000000e+00> : vector<6x465xf32>
    %289 = tpu.matmul %288, %286, %cst_118 {dimension_numbers = #tpu.dot_dimension_numbers<[1], [0], [0], [1], [0, 0, 1, 1], [], []>} : vector<6x3xf32>, vector<3x465xf32>, vector<6x465xf32> -> vector<6x465xf32>
    %290 = arith.addf %285, %289 : vector<6x465xf32>
    %291 = vector.extract_strided_slice %211 {offsets = [0, 85], sizes = [3, 465], strides = [1, 1]} : vector<3x581xf32> to vector<3x465xf32>
    %c16_119 = arith.constant 16 : index
    %c0_120 = arith.constant 0 : index
    %c0_121 = arith.constant 0 : index
    %292 = vector.load %arg4[%c16_119, %c0_120, %c0_121] : memref<25x6x3xf32, #tpu.memory_space<vmem>>, vector<1x6x3xf32>
    %293 = vector.shape_cast %292 : vector<1x6x3xf32> to vector<6x3xf32>
    %cst_122 = arith.constant dense<0.000000e+00> : vector<6x465xf32>
    %294 = tpu.matmul %293, %291, %cst_122 {dimension_numbers = #tpu.dot_dimension_numbers<[1], [0], [0], [1], [0, 0, 1, 1], [], []>} : vector<6x3xf32>, vector<3x465xf32>, vector<6x465xf32> -> vector<6x465xf32>
    %295 = arith.addf %290, %294 : vector<6x465xf32>
    %296 = vector.extract_strided_slice %211 {offsets = [0, 86], sizes = [3, 465], strides = [1, 1]} : vector<3x581xf32> to vector<3x465xf32>
    %c17_123 = arith.constant 17 : index
    %c0_124 = arith.constant 0 : index
    %c0_125 = arith.constant 0 : index
    %297 = vector.load %arg4[%c17_123, %c0_124, %c0_125] : memref<25x6x3xf32, #tpu.memory_space<vmem>>, vector<1x6x3xf32>
    %298 = vector.shape_cast %297 : vector<1x6x3xf32> to vector<6x3xf32>
    %cst_126 = arith.constant dense<0.000000e+00> : vector<6x465xf32>
    %299 = tpu.matmul %298, %296, %cst_126 {dimension_numbers = #tpu.dot_dimension_numbers<[1], [0], [0], [1], [0, 0, 1, 1], [], []>} : vector<6x3xf32>, vector<3x465xf32>, vector<6x465xf32> -> vector<6x465xf32>
    %300 = arith.addf %295, %299 : vector<6x465xf32>
    %301 = vector.extract_strided_slice %211 {offsets = [0, 87], sizes = [3, 465], strides = [1, 1]} : vector<3x581xf32> to vector<3x465xf32>
    %c18_127 = arith.constant 18 : index
    %c0_128 = arith.constant 0 : index
    %c0_129 = arith.constant 0 : index
    %302 = vector.load %arg4[%c18_127, %c0_128, %c0_129] : memref<25x6x3xf32, #tpu.memory_space<vmem>>, vector<1x6x3xf32>
    %303 = vector.shape_cast %302 : vector<1x6x3xf32> to vector<6x3xf32>
    %cst_130 = arith.constant dense<0.000000e+00> : vector<6x465xf32>
    %304 = tpu.matmul %303, %301, %cst_130 {dimension_numbers = #tpu.dot_dimension_numbers<[1], [0], [0], [1], [0, 0, 1, 1], [], []>} : vector<6x3xf32>, vector<3x465xf32>, vector<6x465xf32> -> vector<6x465xf32>
    %305 = arith.addf %300, %304 : vector<6x465xf32>
    %306 = vector.extract_strided_slice %211 {offsets = [0, 88], sizes = [3, 465], strides = [1, 1]} : vector<3x581xf32> to vector<3x465xf32>
    %c19_131 = arith.constant 19 : index
    %c0_132 = arith.constant 0 : index
    %c0_133 = arith.constant 0 : index
    %307 = vector.load %arg4[%c19_131, %c0_132, %c0_133] : memref<25x6x3xf32, #tpu.memory_space<vmem>>, vector<1x6x3xf32>
    %308 = vector.shape_cast %307 : vector<1x6x3xf32> to vector<6x3xf32>
    %cst_134 = arith.constant dense<0.000000e+00> : vector<6x465xf32>
    %309 = tpu.matmul %308, %306, %cst_134 {dimension_numbers = #tpu.dot_dimension_numbers<[1], [0], [0], [1], [0, 0, 1, 1], [], []>} : vector<6x3xf32>, vector<3x465xf32>, vector<6x465xf32> -> vector<6x465xf32>
    %310 = arith.addf %305, %309 : vector<6x465xf32>
    %311 = vector.extract_strided_slice %211 {offsets = [0, 112], sizes = [3, 465], strides = [1, 1]} : vector<3x581xf32> to vector<3x465xf32>
    %c20_135 = arith.constant 20 : index
    %c0_136 = arith.constant 0 : index
    %c0_137 = arith.constant 0 : index
    %312 = vector.load %arg4[%c20_135, %c0_136, %c0_137] : memref<25x6x3xf32, #tpu.memory_space<vmem>>, vector<1x6x3xf32>
    %313 = vector.shape_cast %312 : vector<1x6x3xf32> to vector<6x3xf32>
    %cst_138 = arith.constant dense<0.000000e+00> : vector<6x465xf32>
    %314 = tpu.matmul %313, %311, %cst_138 {dimension_numbers = #tpu.dot_dimension_numbers<[1], [0], [0], [1], [0, 0, 1, 1], [], []>} : vector<6x3xf32>, vector<3x465xf32>, vector<6x465xf32> -> vector<6x465xf32>
    %315 = arith.addf %310, %314 : vector<6x465xf32>
    %316 = vector.extract_strided_slice %211 {offsets = [0, 113], sizes = [3, 465], strides = [1, 1]} : vector<3x581xf32> to vector<3x465xf32>
    %c21_139 = arith.constant 21 : index
    %c0_140 = arith.constant 0 : index
    %c0_141 = arith.constant 0 : index
    %317 = vector.load %arg4[%c21_139, %c0_140, %c0_141] : memref<25x6x3xf32, #tpu.memory_space<vmem>>, vector<1x6x3xf32>
    %318 = vector.shape_cast %317 : vector<1x6x3xf32> to vector<6x3xf32>
    %cst_142 = arith.constant dense<0.000000e+00> : vector<6x465xf32>
    %319 = tpu.matmul %318, %316, %cst_142 {dimension_numbers = #tpu.dot_dimension_numbers<[1], [0], [0], [1], [0, 0, 1, 1], [], []>} : vector<6x3xf32>, vector<3x465xf32>, vector<6x465xf32> -> vector<6x465xf32>
    %320 = arith.addf %315, %319 : vector<6x465xf32>
    %321 = vector.extract_strided_slice %211 {offsets = [0, 114], sizes = [3, 465], strides = [1, 1]} : vector<3x581xf32> to vector<3x465xf32>
    %c22_143 = arith.constant 22 : index
    %c0_144 = arith.constant 0 : index
    %c0_145 = arith.constant 0 : index
    %322 = vector.load %arg4[%c22_143, %c0_144, %c0_145] : memref<25x6x3xf32, #tpu.memory_space<vmem>>, vector<1x6x3xf32>
    %323 = vector.shape_cast %322 : vector<1x6x3xf32> to vector<6x3xf32>
    %cst_146 = arith.constant dense<0.000000e+00> : vector<6x465xf32>
    %324 = tpu.matmul %323, %321, %cst_146 {dimension_numbers = #tpu.dot_dimension_numbers<[1], [0], [0], [1], [0, 0, 1, 1], [], []>} : vector<6x3xf32>, vector<3x465xf32>, vector<6x465xf32> -> vector<6x465xf32>
    %325 = arith.addf %320, %324 : vector<6x465xf32>
    %326 = vector.extract_strided_slice %211 {offsets = [0, 115], sizes = [3, 465], strides = [1, 1]} : vector<3x581xf32> to vector<3x465xf32>
    %c23_147 = arith.constant 23 : index
    %c0_148 = arith.constant 0 : index
    %c0_149 = arith.constant 0 : index
    %327 = vector.load %arg4[%c23_147, %c0_148, %c0_149] : memref<25x6x3xf32, #tpu.memory_space<vmem>>, vector<1x6x3xf32>
    %328 = vector.shape_cast %327 : vector<1x6x3xf32> to vector<6x3xf32>
    %cst_150 = arith.constant dense<0.000000e+00> : vector<6x465xf32>
    %329 = tpu.matmul %328, %326, %cst_150 {dimension_numbers = #tpu.dot_dimension_numbers<[1], [0], [0], [1], [0, 0, 1, 1], [], []>} : vector<6x3xf32>, vector<3x465xf32>, vector<6x465xf32> -> vector<6x465xf32>
    %330 = arith.addf %325, %329 : vector<6x465xf32>
    %331 = vector.extract_strided_slice %211 {offsets = [0, 116], sizes = [3, 465], strides = [1, 1]} : vector<3x581xf32> to vector<3x465xf32>
    %c24_151 = arith.constant 24 : index
    %c0_152 = arith.constant 0 : index
    %c0_153 = arith.constant 0 : index
    %332 = vector.load %arg4[%c24_151, %c0_152, %c0_153] : memref<25x6x3xf32, #tpu.memory_space<vmem>>, vector<1x6x3xf32>
    %333 = vector.shape_cast %332 : vector<1x6x3xf32> to vector<6x3xf32>
    %cst_154 = arith.constant dense<0.000000e+00> : vector<6x465xf32>
    %334 = tpu.matmul %333, %331, %cst_154 {dimension_numbers = #tpu.dot_dimension_numbers<[1], [0], [0], [1], [0, 0, 1, 1], [], []>} : vector<6x3xf32>, vector<3x465xf32>, vector<6x465xf32> -> vector<6x465xf32>
    %335 = arith.addf %330, %334 : vector<6x465xf32>
    %c0_155 = arith.constant 0 : index
    %c0_156 = arith.constant 0 : index
    %336 = vector.load %arg5[%c0_155, %c0_156] : memref<6x1xf32, #tpu.memory_space<vmem>>, vector<6x1xf32>
    %337 = vector.broadcast %336 : vector<6x1xf32> to vector<6x465xf32>
    %338 = arith.addf %335, %337 : vector<6x465xf32>
    %cst_157 = arith.constant 0.000000e+00 : f32
    %339 = vector.broadcast %cst_157 : f32 to vector<6x465xf32>
    %340 = arith.maximumf %338, %339 : vector<6x465xf32>
    %341 = vector.extract_strided_slice %340 {offsets = [0, 0], sizes = [6, 378], strides = [1, 1]} : vector<6x465xf32> to vector<6x378xf32>
    %342 = vector.extract_strided_slice %340 {offsets = [0, 1], sizes = [6, 378], strides = [1, 1]} : vector<6x465xf32> to vector<6x378xf32>
    %343 = arith.maximumf %341, %342 : vector<6x378xf32>
    %344 = vector.extract_strided_slice %340 {offsets = [0, 2], sizes = [6, 378], strides = [1, 1]} : vector<6x465xf32> to vector<6x378xf32>
    %345 = arith.maximumf %343, %344 : vector<6x378xf32>
    %346 = vector.extract_strided_slice %340 {offsets = [0, 3], sizes = [6, 378], strides = [1, 1]} : vector<6x465xf32> to vector<6x378xf32>
    %347 = arith.maximumf %345, %346 : vector<6x378xf32>
    %348 = vector.extract_strided_slice %340 {offsets = [0, 28], sizes = [6, 378], strides = [1, 1]} : vector<6x465xf32> to vector<6x378xf32>
    %349 = arith.maximumf %347, %348 : vector<6x378xf32>
    %350 = vector.extract_strided_slice %340 {offsets = [0, 29], sizes = [6, 378], strides = [1, 1]} : vector<6x465xf32> to vector<6x378xf32>
    %351 = arith.maximumf %349, %350 : vector<6x378xf32>
    %352 = vector.extract_strided_slice %340 {offsets = [0, 30], sizes = [6, 378], strides = [1, 1]} : vector<6x465xf32> to vector<6x378xf32>
    %353 = arith.maximumf %351, %352 : vector<6x378xf32>
    %354 = vector.extract_strided_slice %340 {offsets = [0, 31], sizes = [6, 378], strides = [1, 1]} : vector<6x465xf32> to vector<6x378xf32>
    %355 = arith.maximumf %353, %354 : vector<6x378xf32>
    %356 = vector.extract_strided_slice %340 {offsets = [0, 56], sizes = [6, 378], strides = [1, 1]} : vector<6x465xf32> to vector<6x378xf32>
    %357 = arith.maximumf %355, %356 : vector<6x378xf32>
    %358 = vector.extract_strided_slice %340 {offsets = [0, 57], sizes = [6, 378], strides = [1, 1]} : vector<6x465xf32> to vector<6x378xf32>
    %359 = arith.maximumf %357, %358 : vector<6x378xf32>
    %360 = vector.extract_strided_slice %340 {offsets = [0, 58], sizes = [6, 378], strides = [1, 1]} : vector<6x465xf32> to vector<6x378xf32>
    %361 = arith.maximumf %359, %360 : vector<6x378xf32>
    %362 = vector.extract_strided_slice %340 {offsets = [0, 59], sizes = [6, 378], strides = [1, 1]} : vector<6x465xf32> to vector<6x378xf32>
    %363 = arith.maximumf %361, %362 : vector<6x378xf32>
    %364 = vector.extract_strided_slice %340 {offsets = [0, 84], sizes = [6, 378], strides = [1, 1]} : vector<6x465xf32> to vector<6x378xf32>
    %365 = arith.maximumf %363, %364 : vector<6x378xf32>
    %366 = vector.extract_strided_slice %340 {offsets = [0, 85], sizes = [6, 378], strides = [1, 1]} : vector<6x465xf32> to vector<6x378xf32>
    %367 = arith.maximumf %365, %366 : vector<6x378xf32>
    %368 = vector.extract_strided_slice %340 {offsets = [0, 86], sizes = [6, 378], strides = [1, 1]} : vector<6x465xf32> to vector<6x378xf32>
    %369 = arith.maximumf %367, %368 : vector<6x378xf32>
    %370 = vector.extract_strided_slice %340 {offsets = [0, 87], sizes = [6, 378], strides = [1, 1]} : vector<6x465xf32> to vector<6x378xf32>
    %371 = arith.maximumf %369, %370 : vector<6x378xf32>
    %372 = vector.extract_strided_slice %371 {offsets = [0, 0], sizes = [6, 262], strides = [1, 1]} : vector<6x378xf32> to vector<6x262xf32>
    %c0_158 = arith.constant 0 : index
    %c0_159 = arith.constant 0 : index
    %c0_160 = arith.constant 0 : index
    %373 = vector.load %arg6[%c0_158, %c0_159, %c0_160] : memref<25x12x6xf32, #tpu.memory_space<vmem>>, vector<1x12x6xf32>
    %374 = vector.shape_cast %373 : vector<1x12x6xf32> to vector<12x6xf32>
    %cst_161 = arith.constant dense<0.000000e+00> : vector<12x262xf32>
    %375 = tpu.matmul %374, %372, %cst_161 {dimension_numbers = #tpu.dot_dimension_numbers<[1], [0], [0], [1], [0, 0, 1, 1], [], []>} : vector<12x6xf32>, vector<6x262xf32>, vector<12x262xf32> -> vector<12x262xf32>
    %376 = vector.extract_strided_slice %371 {offsets = [0, 1], sizes = [6, 262], strides = [1, 1]} : vector<6x378xf32> to vector<6x262xf32>
    %c1_162 = arith.constant 1 : index
    %c0_163 = arith.constant 0 : index
    %c0_164 = arith.constant 0 : index
    %377 = vector.load %arg6[%c1_162, %c0_163, %c0_164] : memref<25x12x6xf32, #tpu.memory_space<vmem>>, vector<1x12x6xf32>
    %378 = vector.shape_cast %377 : vector<1x12x6xf32> to vector<12x6xf32>
    %cst_165 = arith.constant dense<0.000000e+00> : vector<12x262xf32>
    %379 = tpu.matmul %378, %376, %cst_165 {dimension_numbers = #tpu.dot_dimension_numbers<[1], [0], [0], [1], [0, 0, 1, 1], [], []>} : vector<12x6xf32>, vector<6x262xf32>, vector<12x262xf32> -> vector<12x262xf32>
    %380 = arith.addf %375, %379 : vector<12x262xf32>
    %381 = vector.extract_strided_slice %371 {offsets = [0, 2], sizes = [6, 262], strides = [1, 1]} : vector<6x378xf32> to vector<6x262xf32>
    %c2_166 = arith.constant 2 : index
    %c0_167 = arith.constant 0 : index
    %c0_168 = arith.constant 0 : index
    %382 = vector.load %arg6[%c2_166, %c0_167, %c0_168] : memref<25x12x6xf32, #tpu.memory_space<vmem>>, vector<1x12x6xf32>
    %383 = vector.shape_cast %382 : vector<1x12x6xf32> to vector<12x6xf32>
    %cst_169 = arith.constant dense<0.000000e+00> : vector<12x262xf32>
    %384 = tpu.matmul %383, %381, %cst_169 {dimension_numbers = #tpu.dot_dimension_numbers<[1], [0], [0], [1], [0, 0, 1, 1], [], []>} : vector<12x6xf32>, vector<6x262xf32>, vector<12x262xf32> -> vector<12x262xf32>
    %385 = arith.addf %380, %384 : vector<12x262xf32>
    %386 = vector.extract_strided_slice %371 {offsets = [0, 3], sizes = [6, 262], strides = [1, 1]} : vector<6x378xf32> to vector<6x262xf32>
    %c3_170 = arith.constant 3 : index
    %c0_171 = arith.constant 0 : index
    %c0_172 = arith.constant 0 : index
    %387 = vector.load %arg6[%c3_170, %c0_171, %c0_172] : memref<25x12x6xf32, #tpu.memory_space<vmem>>, vector<1x12x6xf32>
    %388 = vector.shape_cast %387 : vector<1x12x6xf32> to vector<12x6xf32>
    %cst_173 = arith.constant dense<0.000000e+00> : vector<12x262xf32>
    %389 = tpu.matmul %388, %386, %cst_173 {dimension_numbers = #tpu.dot_dimension_numbers<[1], [0], [0], [1], [0, 0, 1, 1], [], []>} : vector<12x6xf32>, vector<6x262xf32>, vector<12x262xf32> -> vector<12x262xf32>
    %390 = arith.addf %385, %389 : vector<12x262xf32>
    %391 = vector.extract_strided_slice %371 {offsets = [0, 4], sizes = [6, 262], strides = [1, 1]} : vector<6x378xf32> to vector<6x262xf32>
    %c4_174 = arith.constant 4 : index
    %c0_175 = arith.constant 0 : index
    %c0_176 = arith.constant 0 : index
    %392 = vector.load %arg6[%c4_174, %c0_175, %c0_176] : memref<25x12x6xf32, #tpu.memory_space<vmem>>, vector<1x12x6xf32>
    %393 = vector.shape_cast %392 : vector<1x12x6xf32> to vector<12x6xf32>
    %cst_177 = arith.constant dense<0.000000e+00> : vector<12x262xf32>
    %394 = tpu.matmul %393, %391, %cst_177 {dimension_numbers = #tpu.dot_dimension_numbers<[1], [0], [0], [1], [0, 0, 1, 1], [], []>} : vector<12x6xf32>, vector<6x262xf32>, vector<12x262xf32> -> vector<12x262xf32>
    %395 = arith.addf %390, %394 : vector<12x262xf32>
    %396 = vector.extract_strided_slice %371 {offsets = [0, 28], sizes = [6, 262], strides = [1, 1]} : vector<6x378xf32> to vector<6x262xf32>
    %c5_178 = arith.constant 5 : index
    %c0_179 = arith.constant 0 : index
    %c0_180 = arith.constant 0 : index
    %397 = vector.load %arg6[%c5_178, %c0_179, %c0_180] : memref<25x12x6xf32, #tpu.memory_space<vmem>>, vector<1x12x6xf32>
    %398 = vector.shape_cast %397 : vector<1x12x6xf32> to vector<12x6xf32>
    %cst_181 = arith.constant dense<0.000000e+00> : vector<12x262xf32>
    %399 = tpu.matmul %398, %396, %cst_181 {dimension_numbers = #tpu.dot_dimension_numbers<[1], [0], [0], [1], [0, 0, 1, 1], [], []>} : vector<12x6xf32>, vector<6x262xf32>, vector<12x262xf32> -> vector<12x262xf32>
    %400 = arith.addf %395, %399 : vector<12x262xf32>
    %401 = vector.extract_strided_slice %371 {offsets = [0, 29], sizes = [6, 262], strides = [1, 1]} : vector<6x378xf32> to vector<6x262xf32>
    %c6_182 = arith.constant 6 : index
    %c0_183 = arith.constant 0 : index
    %c0_184 = arith.constant 0 : index
    %402 = vector.load %arg6[%c6_182, %c0_183, %c0_184] : memref<25x12x6xf32, #tpu.memory_space<vmem>>, vector<1x12x6xf32>
    %403 = vector.shape_cast %402 : vector<1x12x6xf32> to vector<12x6xf32>
    %cst_185 = arith.constant dense<0.000000e+00> : vector<12x262xf32>
    %404 = tpu.matmul %403, %401, %cst_185 {dimension_numbers = #tpu.dot_dimension_numbers<[1], [0], [0], [1], [0, 0, 1, 1], [], []>} : vector<12x6xf32>, vector<6x262xf32>, vector<12x262xf32> -> vector<12x262xf32>
    %405 = arith.addf %400, %404 : vector<12x262xf32>
    %406 = vector.extract_strided_slice %371 {offsets = [0, 30], sizes = [6, 262], strides = [1, 1]} : vector<6x378xf32> to vector<6x262xf32>
    %c7_186 = arith.constant 7 : index
    %c0_187 = arith.constant 0 : index
    %c0_188 = arith.constant 0 : index
    %407 = vector.load %arg6[%c7_186, %c0_187, %c0_188] : memref<25x12x6xf32, #tpu.memory_space<vmem>>, vector<1x12x6xf32>
    %408 = vector.shape_cast %407 : vector<1x12x6xf32> to vector<12x6xf32>
    %cst_189 = arith.constant dense<0.000000e+00> : vector<12x262xf32>
    %409 = tpu.matmul %408, %406, %cst_189 {dimension_numbers = #tpu.dot_dimension_numbers<[1], [0], [0], [1], [0, 0, 1, 1], [], []>} : vector<12x6xf32>, vector<6x262xf32>, vector<12x262xf32> -> vector<12x262xf32>
    %410 = arith.addf %405, %409 : vector<12x262xf32>
    %411 = vector.extract_strided_slice %371 {offsets = [0, 31], sizes = [6, 262], strides = [1, 1]} : vector<6x378xf32> to vector<6x262xf32>
    %c8_190 = arith.constant 8 : index
    %c0_191 = arith.constant 0 : index
    %c0_192 = arith.constant 0 : index
    %412 = vector.load %arg6[%c8_190, %c0_191, %c0_192] : memref<25x12x6xf32, #tpu.memory_space<vmem>>, vector<1x12x6xf32>
    %413 = vector.shape_cast %412 : vector<1x12x6xf32> to vector<12x6xf32>
    %cst_193 = arith.constant dense<0.000000e+00> : vector<12x262xf32>
    %414 = tpu.matmul %413, %411, %cst_193 {dimension_numbers = #tpu.dot_dimension_numbers<[1], [0], [0], [1], [0, 0, 1, 1], [], []>} : vector<12x6xf32>, vector<6x262xf32>, vector<12x262xf32> -> vector<12x262xf32>
    %415 = arith.addf %410, %414 : vector<12x262xf32>
    %416 = vector.extract_strided_slice %371 {offsets = [0, 32], sizes = [6, 262], strides = [1, 1]} : vector<6x378xf32> to vector<6x262xf32>
    %c9_194 = arith.constant 9 : index
    %c0_195 = arith.constant 0 : index
    %c0_196 = arith.constant 0 : index
    %417 = vector.load %arg6[%c9_194, %c0_195, %c0_196] : memref<25x12x6xf32, #tpu.memory_space<vmem>>, vector<1x12x6xf32>
    %418 = vector.shape_cast %417 : vector<1x12x6xf32> to vector<12x6xf32>
    %cst_197 = arith.constant dense<0.000000e+00> : vector<12x262xf32>
    %419 = tpu.matmul %418, %416, %cst_197 {dimension_numbers = #tpu.dot_dimension_numbers<[1], [0], [0], [1], [0, 0, 1, 1], [], []>} : vector<12x6xf32>, vector<6x262xf32>, vector<12x262xf32> -> vector<12x262xf32>
    %420 = arith.addf %415, %419 : vector<12x262xf32>
    %421 = vector.extract_strided_slice %371 {offsets = [0, 56], sizes = [6, 262], strides = [1, 1]} : vector<6x378xf32> to vector<6x262xf32>
    %c10_198 = arith.constant 10 : index
    %c0_199 = arith.constant 0 : index
    %c0_200 = arith.constant 0 : index
    %422 = vector.load %arg6[%c10_198, %c0_199, %c0_200] : memref<25x12x6xf32, #tpu.memory_space<vmem>>, vector<1x12x6xf32>
    %423 = vector.shape_cast %422 : vector<1x12x6xf32> to vector<12x6xf32>
    %cst_201 = arith.constant dense<0.000000e+00> : vector<12x262xf32>
    %424 = tpu.matmul %423, %421, %cst_201 {dimension_numbers = #tpu.dot_dimension_numbers<[1], [0], [0], [1], [0, 0, 1, 1], [], []>} : vector<12x6xf32>, vector<6x262xf32>, vector<12x262xf32> -> vector<12x262xf32>
    %425 = arith.addf %420, %424 : vector<12x262xf32>
    %426 = vector.extract_strided_slice %371 {offsets = [0, 57], sizes = [6, 262], strides = [1, 1]} : vector<6x378xf32> to vector<6x262xf32>
    %c11_202 = arith.constant 11 : index
    %c0_203 = arith.constant 0 : index
    %c0_204 = arith.constant 0 : index
    %427 = vector.load %arg6[%c11_202, %c0_203, %c0_204] : memref<25x12x6xf32, #tpu.memory_space<vmem>>, vector<1x12x6xf32>
    %428 = vector.shape_cast %427 : vector<1x12x6xf32> to vector<12x6xf32>
    %cst_205 = arith.constant dense<0.000000e+00> : vector<12x262xf32>
    %429 = tpu.matmul %428, %426, %cst_205 {dimension_numbers = #tpu.dot_dimension_numbers<[1], [0], [0], [1], [0, 0, 1, 1], [], []>} : vector<12x6xf32>, vector<6x262xf32>, vector<12x262xf32> -> vector<12x262xf32>
    %430 = arith.addf %425, %429 : vector<12x262xf32>
    %431 = vector.extract_strided_slice %371 {offsets = [0, 58], sizes = [6, 262], strides = [1, 1]} : vector<6x378xf32> to vector<6x262xf32>
    %c12_206 = arith.constant 12 : index
    %c0_207 = arith.constant 0 : index
    %c0_208 = arith.constant 0 : index
    %432 = vector.load %arg6[%c12_206, %c0_207, %c0_208] : memref<25x12x6xf32, #tpu.memory_space<vmem>>, vector<1x12x6xf32>
    %433 = vector.shape_cast %432 : vector<1x12x6xf32> to vector<12x6xf32>
    %cst_209 = arith.constant dense<0.000000e+00> : vector<12x262xf32>
    %434 = tpu.matmul %433, %431, %cst_209 {dimension_numbers = #tpu.dot_dimension_numbers<[1], [0], [0], [1], [0, 0, 1, 1], [], []>} : vector<12x6xf32>, vector<6x262xf32>, vector<12x262xf32> -> vector<12x262xf32>
    %435 = arith.addf %430, %434 : vector<12x262xf32>
    %436 = vector.extract_strided_slice %371 {offsets = [0, 59], sizes = [6, 262], strides = [1, 1]} : vector<6x378xf32> to vector<6x262xf32>
    %c13_210 = arith.constant 13 : index
    %c0_211 = arith.constant 0 : index
    %c0_212 = arith.constant 0 : index
    %437 = vector.load %arg6[%c13_210, %c0_211, %c0_212] : memref<25x12x6xf32, #tpu.memory_space<vmem>>, vector<1x12x6xf32>
    %438 = vector.shape_cast %437 : vector<1x12x6xf32> to vector<12x6xf32>
    %cst_213 = arith.constant dense<0.000000e+00> : vector<12x262xf32>
    %439 = tpu.matmul %438, %436, %cst_213 {dimension_numbers = #tpu.dot_dimension_numbers<[1], [0], [0], [1], [0, 0, 1, 1], [], []>} : vector<12x6xf32>, vector<6x262xf32>, vector<12x262xf32> -> vector<12x262xf32>
    %440 = arith.addf %435, %439 : vector<12x262xf32>
    %441 = vector.extract_strided_slice %371 {offsets = [0, 60], sizes = [6, 262], strides = [1, 1]} : vector<6x378xf32> to vector<6x262xf32>
    %c14_214 = arith.constant 14 : index
    %c0_215 = arith.constant 0 : index
    %c0_216 = arith.constant 0 : index
    %442 = vector.load %arg6[%c14_214, %c0_215, %c0_216] : memref<25x12x6xf32, #tpu.memory_space<vmem>>, vector<1x12x6xf32>
    %443 = vector.shape_cast %442 : vector<1x12x6xf32> to vector<12x6xf32>
    %cst_217 = arith.constant dense<0.000000e+00> : vector<12x262xf32>
    %444 = tpu.matmul %443, %441, %cst_217 {dimension_numbers = #tpu.dot_dimension_numbers<[1], [0], [0], [1], [0, 0, 1, 1], [], []>} : vector<12x6xf32>, vector<6x262xf32>, vector<12x262xf32> -> vector<12x262xf32>
    %445 = arith.addf %440, %444 : vector<12x262xf32>
    %446 = vector.extract_strided_slice %371 {offsets = [0, 84], sizes = [6, 262], strides = [1, 1]} : vector<6x378xf32> to vector<6x262xf32>
    %c15_218 = arith.constant 15 : index
    %c0_219 = arith.constant 0 : index
    %c0_220 = arith.constant 0 : index
    %447 = vector.load %arg6[%c15_218, %c0_219, %c0_220] : memref<25x12x6xf32, #tpu.memory_space<vmem>>, vector<1x12x6xf32>
    %448 = vector.shape_cast %447 : vector<1x12x6xf32> to vector<12x6xf32>
    %cst_221 = arith.constant dense<0.000000e+00> : vector<12x262xf32>
    %449 = tpu.matmul %448, %446, %cst_221 {dimension_numbers = #tpu.dot_dimension_numbers<[1], [0], [0], [1], [0, 0, 1, 1], [], []>} : vector<12x6xf32>, vector<6x262xf32>, vector<12x262xf32> -> vector<12x262xf32>
    %450 = arith.addf %445, %449 : vector<12x262xf32>
    %451 = vector.extract_strided_slice %371 {offsets = [0, 85], sizes = [6, 262], strides = [1, 1]} : vector<6x378xf32> to vector<6x262xf32>
    %c16_222 = arith.constant 16 : index
    %c0_223 = arith.constant 0 : index
    %c0_224 = arith.constant 0 : index
    %452 = vector.load %arg6[%c16_222, %c0_223, %c0_224] : memref<25x12x6xf32, #tpu.memory_space<vmem>>, vector<1x12x6xf32>
    %453 = vector.shape_cast %452 : vector<1x12x6xf32> to vector<12x6xf32>
    %cst_225 = arith.constant dense<0.000000e+00> : vector<12x262xf32>
    %454 = tpu.matmul %453, %451, %cst_225 {dimension_numbers = #tpu.dot_dimension_numbers<[1], [0], [0], [1], [0, 0, 1, 1], [], []>} : vector<12x6xf32>, vector<6x262xf32>, vector<12x262xf32> -> vector<12x262xf32>
    %455 = arith.addf %450, %454 : vector<12x262xf32>
    %456 = vector.extract_strided_slice %371 {offsets = [0, 86], sizes = [6, 262], strides = [1, 1]} : vector<6x378xf32> to vector<6x262xf32>
    %c17_226 = arith.constant 17 : index
    %c0_227 = arith.constant 0 : index
    %c0_228 = arith.constant 0 : index
    %457 = vector.load %arg6[%c17_226, %c0_227, %c0_228] : memref<25x12x6xf32, #tpu.memory_space<vmem>>, vector<1x12x6xf32>
    %458 = vector.shape_cast %457 : vector<1x12x6xf32> to vector<12x6xf32>
    %cst_229 = arith.constant dense<0.000000e+00> : vector<12x262xf32>
    %459 = tpu.matmul %458, %456, %cst_229 {dimension_numbers = #tpu.dot_dimension_numbers<[1], [0], [0], [1], [0, 0, 1, 1], [], []>} : vector<12x6xf32>, vector<6x262xf32>, vector<12x262xf32> -> vector<12x262xf32>
    %460 = arith.addf %455, %459 : vector<12x262xf32>
    %461 = vector.extract_strided_slice %371 {offsets = [0, 87], sizes = [6, 262], strides = [1, 1]} : vector<6x378xf32> to vector<6x262xf32>
    %c18_230 = arith.constant 18 : index
    %c0_231 = arith.constant 0 : index
    %c0_232 = arith.constant 0 : index
    %462 = vector.load %arg6[%c18_230, %c0_231, %c0_232] : memref<25x12x6xf32, #tpu.memory_space<vmem>>, vector<1x12x6xf32>
    %463 = vector.shape_cast %462 : vector<1x12x6xf32> to vector<12x6xf32>
    %cst_233 = arith.constant dense<0.000000e+00> : vector<12x262xf32>
    %464 = tpu.matmul %463, %461, %cst_233 {dimension_numbers = #tpu.dot_dimension_numbers<[1], [0], [0], [1], [0, 0, 1, 1], [], []>} : vector<12x6xf32>, vector<6x262xf32>, vector<12x262xf32> -> vector<12x262xf32>
    %465 = arith.addf %460, %464 : vector<12x262xf32>
    %466 = vector.extract_strided_slice %371 {offsets = [0, 88], sizes = [6, 262], strides = [1, 1]} : vector<6x378xf32> to vector<6x262xf32>
    %c19_234 = arith.constant 19 : index
    %c0_235 = arith.constant 0 : index
    %c0_236 = arith.constant 0 : index
    %467 = vector.load %arg6[%c19_234, %c0_235, %c0_236] : memref<25x12x6xf32, #tpu.memory_space<vmem>>, vector<1x12x6xf32>
    %468 = vector.shape_cast %467 : vector<1x12x6xf32> to vector<12x6xf32>
    %cst_237 = arith.constant dense<0.000000e+00> : vector<12x262xf32>
    %469 = tpu.matmul %468, %466, %cst_237 {dimension_numbers = #tpu.dot_dimension_numbers<[1], [0], [0], [1], [0, 0, 1, 1], [], []>} : vector<12x6xf32>, vector<6x262xf32>, vector<12x262xf32> -> vector<12x262xf32>
    %470 = arith.addf %465, %469 : vector<12x262xf32>
    %471 = vector.extract_strided_slice %371 {offsets = [0, 112], sizes = [6, 262], strides = [1, 1]} : vector<6x378xf32> to vector<6x262xf32>
    %c20_238 = arith.constant 20 : index
    %c0_239 = arith.constant 0 : index
    %c0_240 = arith.constant 0 : index
    %472 = vector.load %arg6[%c20_238, %c0_239, %c0_240] : memref<25x12x6xf32, #tpu.memory_space<vmem>>, vector<1x12x6xf32>
    %473 = vector.shape_cast %472 : vector<1x12x6xf32> to vector<12x6xf32>
    %cst_241 = arith.constant dense<0.000000e+00> : vector<12x262xf32>
    %474 = tpu.matmul %473, %471, %cst_241 {dimension_numbers = #tpu.dot_dimension_numbers<[1], [0], [0], [1], [0, 0, 1, 1], [], []>} : vector<12x6xf32>, vector<6x262xf32>, vector<12x262xf32> -> vector<12x262xf32>
    %475 = arith.addf %470, %474 : vector<12x262xf32>
    %476 = vector.extract_strided_slice %371 {offsets = [0, 113], sizes = [6, 262], strides = [1, 1]} : vector<6x378xf32> to vector<6x262xf32>
    %c21_242 = arith.constant 21 : index
    %c0_243 = arith.constant 0 : index
    %c0_244 = arith.constant 0 : index
    %477 = vector.load %arg6[%c21_242, %c0_243, %c0_244] : memref<25x12x6xf32, #tpu.memory_space<vmem>>, vector<1x12x6xf32>
    %478 = vector.shape_cast %477 : vector<1x12x6xf32> to vector<12x6xf32>
    %cst_245 = arith.constant dense<0.000000e+00> : vector<12x262xf32>
    %479 = tpu.matmul %478, %476, %cst_245 {dimension_numbers = #tpu.dot_dimension_numbers<[1], [0], [0], [1], [0, 0, 1, 1], [], []>} : vector<12x6xf32>, vector<6x262xf32>, vector<12x262xf32> -> vector<12x262xf32>
    %480 = arith.addf %475, %479 : vector<12x262xf32>
    %481 = vector.extract_strided_slice %371 {offsets = [0, 114], sizes = [6, 262], strides = [1, 1]} : vector<6x378xf32> to vector<6x262xf32>
    %c22_246 = arith.constant 22 : index
    %c0_247 = arith.constant 0 : index
    %c0_248 = arith.constant 0 : index
    %482 = vector.load %arg6[%c22_246, %c0_247, %c0_248] : memref<25x12x6xf32, #tpu.memory_space<vmem>>, vector<1x12x6xf32>
    %483 = vector.shape_cast %482 : vector<1x12x6xf32> to vector<12x6xf32>
    %cst_249 = arith.constant dense<0.000000e+00> : vector<12x262xf32>
    %484 = tpu.matmul %483, %481, %cst_249 {dimension_numbers = #tpu.dot_dimension_numbers<[1], [0], [0], [1], [0, 0, 1, 1], [], []>} : vector<12x6xf32>, vector<6x262xf32>, vector<12x262xf32> -> vector<12x262xf32>
    %485 = arith.addf %480, %484 : vector<12x262xf32>
    %486 = vector.extract_strided_slice %371 {offsets = [0, 115], sizes = [6, 262], strides = [1, 1]} : vector<6x378xf32> to vector<6x262xf32>
    %c23_250 = arith.constant 23 : index
    %c0_251 = arith.constant 0 : index
    %c0_252 = arith.constant 0 : index
    %487 = vector.load %arg6[%c23_250, %c0_251, %c0_252] : memref<25x12x6xf32, #tpu.memory_space<vmem>>, vector<1x12x6xf32>
    %488 = vector.shape_cast %487 : vector<1x12x6xf32> to vector<12x6xf32>
    %cst_253 = arith.constant dense<0.000000e+00> : vector<12x262xf32>
    %489 = tpu.matmul %488, %486, %cst_253 {dimension_numbers = #tpu.dot_dimension_numbers<[1], [0], [0], [1], [0, 0, 1, 1], [], []>} : vector<12x6xf32>, vector<6x262xf32>, vector<12x262xf32> -> vector<12x262xf32>
    %490 = arith.addf %485, %489 : vector<12x262xf32>
    %491 = vector.extract_strided_slice %371 {offsets = [0, 116], sizes = [6, 262], strides = [1, 1]} : vector<6x378xf32> to vector<6x262xf32>
    %c24_254 = arith.constant 24 : index
    %c0_255 = arith.constant 0 : index
    %c0_256 = arith.constant 0 : index
    %492 = vector.load %arg6[%c24_254, %c0_255, %c0_256] : memref<25x12x6xf32, #tpu.memory_space<vmem>>, vector<1x12x6xf32>
    %493 = vector.shape_cast %492 : vector<1x12x6xf32> to vector<12x6xf32>
    %cst_257 = arith.constant dense<0.000000e+00> : vector<12x262xf32>
    %494 = tpu.matmul %493, %491, %cst_257 {dimension_numbers = #tpu.dot_dimension_numbers<[1], [0], [0], [1], [0, 0, 1, 1], [], []>} : vector<12x6xf32>, vector<6x262xf32>, vector<12x262xf32> -> vector<12x262xf32>
    %495 = arith.addf %490, %494 : vector<12x262xf32>
    %c0_258 = arith.constant 0 : index
    %c0_259 = arith.constant 0 : index
    %496 = vector.load %arg7[%c0_258, %c0_259] : memref<12x1xf32, #tpu.memory_space<vmem>>, vector<12x1xf32>
    %497 = vector.broadcast %496 : vector<12x1xf32> to vector<12x262xf32>
    %498 = arith.addf %495, %497 : vector<12x262xf32>
    %cst_260 = arith.constant 0.000000e+00 : f32
    %499 = vector.broadcast %cst_260 : f32 to vector<12x262xf32>
    %500 = arith.maximumf %498, %499 : vector<12x262xf32>
    %501 = vector.extract_strided_slice %500 {offsets = [0, 0], sizes = [12, 175], strides = [1, 1]} : vector<12x262xf32> to vector<12x175xf32>
    %502 = vector.extract_strided_slice %500 {offsets = [0, 1], sizes = [12, 175], strides = [1, 1]} : vector<12x262xf32> to vector<12x175xf32>
    %503 = arith.maximumf %501, %502 : vector<12x175xf32>
    %504 = vector.extract_strided_slice %500 {offsets = [0, 2], sizes = [12, 175], strides = [1, 1]} : vector<12x262xf32> to vector<12x175xf32>
    %505 = arith.maximumf %503, %504 : vector<12x175xf32>
    %506 = vector.extract_strided_slice %500 {offsets = [0, 3], sizes = [12, 175], strides = [1, 1]} : vector<12x262xf32> to vector<12x175xf32>
    %507 = arith.maximumf %505, %506 : vector<12x175xf32>
    %508 = vector.extract_strided_slice %500 {offsets = [0, 28], sizes = [12, 175], strides = [1, 1]} : vector<12x262xf32> to vector<12x175xf32>
    %509 = arith.maximumf %507, %508 : vector<12x175xf32>
    %510 = vector.extract_strided_slice %500 {offsets = [0, 29], sizes = [12, 175], strides = [1, 1]} : vector<12x262xf32> to vector<12x175xf32>
    %511 = arith.maximumf %509, %510 : vector<12x175xf32>
    %512 = vector.extract_strided_slice %500 {offsets = [0, 30], sizes = [12, 175], strides = [1, 1]} : vector<12x262xf32> to vector<12x175xf32>
    %513 = arith.maximumf %511, %512 : vector<12x175xf32>
    %514 = vector.extract_strided_slice %500 {offsets = [0, 31], sizes = [12, 175], strides = [1, 1]} : vector<12x262xf32> to vector<12x175xf32>
    %515 = arith.maximumf %513, %514 : vector<12x175xf32>
    %516 = vector.extract_strided_slice %500 {offsets = [0, 56], sizes = [12, 175], strides = [1, 1]} : vector<12x262xf32> to vector<12x175xf32>
    %517 = arith.maximumf %515, %516 : vector<12x175xf32>
    %518 = vector.extract_strided_slice %500 {offsets = [0, 57], sizes = [12, 175], strides = [1, 1]} : vector<12x262xf32> to vector<12x175xf32>
    %519 = arith.maximumf %517, %518 : vector<12x175xf32>
    %520 = vector.extract_strided_slice %500 {offsets = [0, 58], sizes = [12, 175], strides = [1, 1]} : vector<12x262xf32> to vector<12x175xf32>
    %521 = arith.maximumf %519, %520 : vector<12x175xf32>
    %522 = vector.extract_strided_slice %500 {offsets = [0, 59], sizes = [12, 175], strides = [1, 1]} : vector<12x262xf32> to vector<12x175xf32>
    %523 = arith.maximumf %521, %522 : vector<12x175xf32>
    %524 = vector.extract_strided_slice %500 {offsets = [0, 84], sizes = [12, 175], strides = [1, 1]} : vector<12x262xf32> to vector<12x175xf32>
    %525 = arith.maximumf %523, %524 : vector<12x175xf32>
    %526 = vector.extract_strided_slice %500 {offsets = [0, 85], sizes = [12, 175], strides = [1, 1]} : vector<12x262xf32> to vector<12x175xf32>
    %527 = arith.maximumf %525, %526 : vector<12x175xf32>
    %528 = vector.extract_strided_slice %500 {offsets = [0, 86], sizes = [12, 175], strides = [1, 1]} : vector<12x262xf32> to vector<12x175xf32>
    %529 = arith.maximumf %527, %528 : vector<12x175xf32>
    %530 = vector.extract_strided_slice %500 {offsets = [0, 87], sizes = [12, 175], strides = [1, 1]} : vector<12x262xf32> to vector<12x175xf32>
    %531 = arith.maximumf %529, %530 : vector<12x175xf32>
    %532 = vector.extract_strided_slice %531 {offsets = [0, 0], sizes = [1, 175], strides = [1, 1]} : vector<12x175xf32> to vector<1x175xf32>
    %c0_261 = arith.constant 0 : index
    %c0_262 = arith.constant 0 : index
    %c0_263 = arith.constant 0 : index
    %533 = vector.load %arg8[%c0_261, %c0_262, %c0_263] : memref<12x175x100xf32, #tpu.memory_space<vmem>>, vector<1x175x100xf32>
    %534 = vector.shape_cast %533 : vector<1x175x100xf32> to vector<175x100xf32>
    %cst_264 = arith.constant dense<0.000000e+00> : vector<1x100xf32>
    %535 = tpu.matmul %532, %534, %cst_264 {dimension_numbers = #tpu.dot_dimension_numbers<[1], [0], [0], [1], [0, 0, 1, 1], [], []>} : vector<1x175xf32>, vector<175x100xf32>, vector<1x100xf32> -> vector<1x100xf32>
    %536 = vector.extract_strided_slice %531 {offsets = [1, 0], sizes = [1, 175], strides = [1, 1]} : vector<12x175xf32> to vector<1x175xf32>
    %c1_265 = arith.constant 1 : index
    %c0_266 = arith.constant 0 : index
    %c0_267 = arith.constant 0 : index
    %537 = vector.load %arg8[%c1_265, %c0_266, %c0_267] : memref<12x175x100xf32, #tpu.memory_space<vmem>>, vector<1x175x100xf32>
    %538 = vector.shape_cast %537 : vector<1x175x100xf32> to vector<175x100xf32>
    %cst_268 = arith.constant dense<0.000000e+00> : vector<1x100xf32>
    %539 = tpu.matmul %536, %538, %cst_268 {dimension_numbers = #tpu.dot_dimension_numbers<[1], [0], [0], [1], [0, 0, 1, 1], [], []>} : vector<1x175xf32>, vector<175x100xf32>, vector<1x100xf32> -> vector<1x100xf32>
    %540 = arith.addf %535, %539 : vector<1x100xf32>
    %541 = vector.extract_strided_slice %531 {offsets = [2, 0], sizes = [1, 175], strides = [1, 1]} : vector<12x175xf32> to vector<1x175xf32>
    %c2_269 = arith.constant 2 : index
    %c0_270 = arith.constant 0 : index
    %c0_271 = arith.constant 0 : index
    %542 = vector.load %arg8[%c2_269, %c0_270, %c0_271] : memref<12x175x100xf32, #tpu.memory_space<vmem>>, vector<1x175x100xf32>
    %543 = vector.shape_cast %542 : vector<1x175x100xf32> to vector<175x100xf32>
    %cst_272 = arith.constant dense<0.000000e+00> : vector<1x100xf32>
    %544 = tpu.matmul %541, %543, %cst_272 {dimension_numbers = #tpu.dot_dimension_numbers<[1], [0], [0], [1], [0, 0, 1, 1], [], []>} : vector<1x175xf32>, vector<175x100xf32>, vector<1x100xf32> -> vector<1x100xf32>
    %545 = arith.addf %540, %544 : vector<1x100xf32>
    %546 = vector.extract_strided_slice %531 {offsets = [3, 0], sizes = [1, 175], strides = [1, 1]} : vector<12x175xf32> to vector<1x175xf32>
    %c3_273 = arith.constant 3 : index
    %c0_274 = arith.constant 0 : index
    %c0_275 = arith.constant 0 : index
    %547 = vector.load %arg8[%c3_273, %c0_274, %c0_275] : memref<12x175x100xf32, #tpu.memory_space<vmem>>, vector<1x175x100xf32>
    %548 = vector.shape_cast %547 : vector<1x175x100xf32> to vector<175x100xf32>
    %cst_276 = arith.constant dense<0.000000e+00> : vector<1x100xf32>
    %549 = tpu.matmul %546, %548, %cst_276 {dimension_numbers = #tpu.dot_dimension_numbers<[1], [0], [0], [1], [0, 0, 1, 1], [], []>} : vector<1x175xf32>, vector<175x100xf32>, vector<1x100xf32> -> vector<1x100xf32>
    %550 = arith.addf %545, %549 : vector<1x100xf32>
    %551 = vector.extract_strided_slice %531 {offsets = [4, 0], sizes = [1, 175], strides = [1, 1]} : vector<12x175xf32> to vector<1x175xf32>
    %c4_277 = arith.constant 4 : index
    %c0_278 = arith.constant 0 : index
    %c0_279 = arith.constant 0 : index
    %552 = vector.load %arg8[%c4_277, %c0_278, %c0_279] : memref<12x175x100xf32, #tpu.memory_space<vmem>>, vector<1x175x100xf32>
    %553 = vector.shape_cast %552 : vector<1x175x100xf32> to vector<175x100xf32>
    %cst_280 = arith.constant dense<0.000000e+00> : vector<1x100xf32>
    %554 = tpu.matmul %551, %553, %cst_280 {dimension_numbers = #tpu.dot_dimension_numbers<[1], [0], [0], [1], [0, 0, 1, 1], [], []>} : vector<1x175xf32>, vector<175x100xf32>, vector<1x100xf32> -> vector<1x100xf32>
    %555 = arith.addf %550, %554 : vector<1x100xf32>
    %556 = vector.extract_strided_slice %531 {offsets = [5, 0], sizes = [1, 175], strides = [1, 1]} : vector<12x175xf32> to vector<1x175xf32>
    %c5_281 = arith.constant 5 : index
    %c0_282 = arith.constant 0 : index
    %c0_283 = arith.constant 0 : index
    %557 = vector.load %arg8[%c5_281, %c0_282, %c0_283] : memref<12x175x100xf32, #tpu.memory_space<vmem>>, vector<1x175x100xf32>
    %558 = vector.shape_cast %557 : vector<1x175x100xf32> to vector<175x100xf32>
    %cst_284 = arith.constant dense<0.000000e+00> : vector<1x100xf32>
    %559 = tpu.matmul %556, %558, %cst_284 {dimension_numbers = #tpu.dot_dimension_numbers<[1], [0], [0], [1], [0, 0, 1, 1], [], []>} : vector<1x175xf32>, vector<175x100xf32>, vector<1x100xf32> -> vector<1x100xf32>
    %560 = arith.addf %555, %559 : vector<1x100xf32>
    %561 = vector.extract_strided_slice %531 {offsets = [6, 0], sizes = [1, 175], strides = [1, 1]} : vector<12x175xf32> to vector<1x175xf32>
    %c6_285 = arith.constant 6 : index
    %c0_286 = arith.constant 0 : index
    %c0_287 = arith.constant 0 : index
    %562 = vector.load %arg8[%c6_285, %c0_286, %c0_287] : memref<12x175x100xf32, #tpu.memory_space<vmem>>, vector<1x175x100xf32>
    %563 = vector.shape_cast %562 : vector<1x175x100xf32> to vector<175x100xf32>
    %cst_288 = arith.constant dense<0.000000e+00> : vector<1x100xf32>
    %564 = tpu.matmul %561, %563, %cst_288 {dimension_numbers = #tpu.dot_dimension_numbers<[1], [0], [0], [1], [0, 0, 1, 1], [], []>} : vector<1x175xf32>, vector<175x100xf32>, vector<1x100xf32> -> vector<1x100xf32>
    %565 = arith.addf %560, %564 : vector<1x100xf32>
    %566 = vector.extract_strided_slice %531 {offsets = [7, 0], sizes = [1, 175], strides = [1, 1]} : vector<12x175xf32> to vector<1x175xf32>
    %c7_289 = arith.constant 7 : index
    %c0_290 = arith.constant 0 : index
    %c0_291 = arith.constant 0 : index
    %567 = vector.load %arg8[%c7_289, %c0_290, %c0_291] : memref<12x175x100xf32, #tpu.memory_space<vmem>>, vector<1x175x100xf32>
    %568 = vector.shape_cast %567 : vector<1x175x100xf32> to vector<175x100xf32>
    %cst_292 = arith.constant dense<0.000000e+00> : vector<1x100xf32>
    %569 = tpu.matmul %566, %568, %cst_292 {dimension_numbers = #tpu.dot_dimension_numbers<[1], [0], [0], [1], [0, 0, 1, 1], [], []>} : vector<1x175xf32>, vector<175x100xf32>, vector<1x100xf32> -> vector<1x100xf32>
    %570 = arith.addf %565, %569 : vector<1x100xf32>
    %571 = vector.extract_strided_slice %531 {offsets = [8, 0], sizes = [1, 175], strides = [1, 1]} : vector<12x175xf32> to vector<1x175xf32>
    %c8_293 = arith.constant 8 : index
    %c0_294 = arith.constant 0 : index
    %c0_295 = arith.constant 0 : index
    %572 = vector.load %arg8[%c8_293, %c0_294, %c0_295] : memref<12x175x100xf32, #tpu.memory_space<vmem>>, vector<1x175x100xf32>
    %573 = vector.shape_cast %572 : vector<1x175x100xf32> to vector<175x100xf32>
    %cst_296 = arith.constant dense<0.000000e+00> : vector<1x100xf32>
    %574 = tpu.matmul %571, %573, %cst_296 {dimension_numbers = #tpu.dot_dimension_numbers<[1], [0], [0], [1], [0, 0, 1, 1], [], []>} : vector<1x175xf32>, vector<175x100xf32>, vector<1x100xf32> -> vector<1x100xf32>
    %575 = arith.addf %570, %574 : vector<1x100xf32>
    %576 = vector.extract_strided_slice %531 {offsets = [9, 0], sizes = [1, 175], strides = [1, 1]} : vector<12x175xf32> to vector<1x175xf32>
    %c9_297 = arith.constant 9 : index
    %c0_298 = arith.constant 0 : index
    %c0_299 = arith.constant 0 : index
    %577 = vector.load %arg8[%c9_297, %c0_298, %c0_299] : memref<12x175x100xf32, #tpu.memory_space<vmem>>, vector<1x175x100xf32>
    %578 = vector.shape_cast %577 : vector<1x175x100xf32> to vector<175x100xf32>
    %cst_300 = arith.constant dense<0.000000e+00> : vector<1x100xf32>
    %579 = tpu.matmul %576, %578, %cst_300 {dimension_numbers = #tpu.dot_dimension_numbers<[1], [0], [0], [1], [0, 0, 1, 1], [], []>} : vector<1x175xf32>, vector<175x100xf32>, vector<1x100xf32> -> vector<1x100xf32>
    %580 = arith.addf %575, %579 : vector<1x100xf32>
    %581 = vector.extract_strided_slice %531 {offsets = [10, 0], sizes = [1, 175], strides = [1, 1]} : vector<12x175xf32> to vector<1x175xf32>
    %c10_301 = arith.constant 10 : index
    %c0_302 = arith.constant 0 : index
    %c0_303 = arith.constant 0 : index
    %582 = vector.load %arg8[%c10_301, %c0_302, %c0_303] : memref<12x175x100xf32, #tpu.memory_space<vmem>>, vector<1x175x100xf32>
    %583 = vector.shape_cast %582 : vector<1x175x100xf32> to vector<175x100xf32>
    %cst_304 = arith.constant dense<0.000000e+00> : vector<1x100xf32>
    %584 = tpu.matmul %581, %583, %cst_304 {dimension_numbers = #tpu.dot_dimension_numbers<[1], [0], [0], [1], [0, 0, 1, 1], [], []>} : vector<1x175xf32>, vector<175x100xf32>, vector<1x100xf32> -> vector<1x100xf32>
    %585 = arith.addf %580, %584 : vector<1x100xf32>
    %586 = vector.extract_strided_slice %531 {offsets = [11, 0], sizes = [1, 175], strides = [1, 1]} : vector<12x175xf32> to vector<1x175xf32>
    %c11_305 = arith.constant 11 : index
    %c0_306 = arith.constant 0 : index
    %c0_307 = arith.constant 0 : index
    %587 = vector.load %arg8[%c11_305, %c0_306, %c0_307] : memref<12x175x100xf32, #tpu.memory_space<vmem>>, vector<1x175x100xf32>
    %588 = vector.shape_cast %587 : vector<1x175x100xf32> to vector<175x100xf32>
    %cst_308 = arith.constant dense<0.000000e+00> : vector<1x100xf32>
    %589 = tpu.matmul %586, %588, %cst_308 {dimension_numbers = #tpu.dot_dimension_numbers<[1], [0], [0], [1], [0, 0, 1, 1], [], []>} : vector<1x175xf32>, vector<175x100xf32>, vector<1x100xf32> -> vector<1x100xf32>
    %590 = arith.addf %585, %589 : vector<1x100xf32>
    %c0_309 = arith.constant 0 : index
    %c0_310 = arith.constant 0 : index
    %591 = vector.load %arg9[%c0_309, %c0_310] : memref<1x100xf32, #tpu.memory_space<vmem>>, vector<1x100xf32>
    %592 = arith.addf %590, %591 : vector<1x100xf32>
    %cst_311 = arith.constant 0.000000e+00 : f32
    %593 = vector.broadcast %cst_311 : f32 to vector<1x100xf32>
    %594 = arith.maximumf %592, %593 : vector<1x100xf32>
    %c0_312 = arith.constant 0 : index
    %c0_313 = arith.constant 0 : index
    %595 = vector.load %arg10[%c0_312, %c0_313] : memref<100x50xf32, #tpu.memory_space<vmem>>, vector<100x50xf32>
    %cst_314 = arith.constant dense<0.000000e+00> : vector<1x50xf32>
    %596 = tpu.matmul %594, %595, %cst_314 {dimension_numbers = #tpu.dot_dimension_numbers<[1], [0], [0], [1], [0, 0, 1, 1], [], []>} : vector<1x100xf32>, vector<100x50xf32>, vector<1x50xf32> -> vector<1x50xf32>
    %c0_315 = arith.constant 0 : index
    %c0_316 = arith.constant 0 : index
    %597 = vector.load %arg11[%c0_315, %c0_316] : memref<1x50xf32, #tpu.memory_space<vmem>>, vector<1x50xf32>
    %598 = arith.addf %596, %597 : vector<1x50xf32>
    %cst_317 = arith.constant 0.000000e+00 : f32
    %599 = vector.broadcast %cst_317 : f32 to vector<1x50xf32>
    %600 = arith.maximumf %598, %599 : vector<1x50xf32>
    %c0_318 = arith.constant 0 : index
    %c0_319 = arith.constant 0 : index
    %601 = vector.load %arg12[%c0_318, %c0_319] : memref<50x10xf32, #tpu.memory_space<vmem>>, vector<50x10xf32>
    %cst_320 = arith.constant dense<0.000000e+00> : vector<1x10xf32>
    %602 = tpu.matmul %600, %601, %cst_320 {dimension_numbers = #tpu.dot_dimension_numbers<[1], [0], [0], [1], [0, 0, 1, 1], [], []>} : vector<1x50xf32>, vector<50x10xf32>, vector<1x10xf32> -> vector<1x10xf32>
    %c0_321 = arith.constant 0 : index
    %c0_322 = arith.constant 0 : index
    %603 = vector.load %arg13[%c0_321, %c0_322] : memref<1x10xf32, #tpu.memory_space<vmem>>, vector<1x10xf32>
    %604 = arith.addf %602, %603 : vector<1x10xf32>
    %cst_323 = arith.constant dense<0xFF800000> : vector<1xf32>
    %605 = vector.multi_reduction <maximumf>, %604, %cst_323 [1] : vector<1x10xf32> to vector<1xf32>
    %606 = vector.shape_cast %605 : vector<1xf32> to vector<1x1xf32>
    %607 = vector.broadcast %606 : vector<1x1xf32> to vector<1x10xf32>
    %608 = arith.subf %604, %607 : vector<1x10xf32>
    %609 = math.exp %608 : vector<1x10xf32>
    %cst_324 = arith.constant dense<0.000000e+00> : vector<1xf32>
    %610 = vector.multi_reduction <add>, %609, %cst_324 [1] : vector<1x10xf32> to vector<1xf32>
    %611 = vector.shape_cast %610 : vector<1xf32> to vector<1x1xf32>
    %612 = vector.broadcast %611 : vector<1x1xf32> to vector<1x10xf32>
    %613 = arith.divf %609, %612 : vector<1x10xf32>
    %c0_325 = arith.constant 0 : index
    %c0_326 = arith.constant 0 : index
    %c0_327 = arith.constant 0 : index
    %614 = vector.load %arg14[%c0_325, %c0_326, %c0_327] : memref<1x1x10xf32, #tpu.memory_space<vmem>>, vector<1x1x10xf32>
    %615 = vector.shape_cast %614 : vector<1x1x10xf32> to vector<1x10xf32>
    %616 = vector.shape_cast %613 : vector<1x10xf32> to vector<1x1x10xf32>
    tpu.vector_store %arg14[%c0_325, %c0_326, %c0_327], %616 {strides = array<i32>} : memref<1x1x10xf32, #tpu.memory_space<vmem>>, vector<1x1x10xf32>,
    return
  }
  func.func @transform_0(%arg0: i32) -> (i32, i32, i32) {
    %c0_i32 = arith.constant 0 : i32
    %c0_i32_0 = arith.constant 0 : i32
    %c0_i32_1 = arith.constant 0 : i32
    return %arg0, %c0_i32, %c0_i32_0 : i32, i32, i32
  }
  func.func @transform_1(%arg0: i32) -> (i32, i32, i32) {
    %c0_i32 = arith.constant 0 : i32
    %c0_i32_0 = arith.constant 0 : i32
    %c0_i32_1 = arith.constant 0 : i32
    %c0_i32_2 = arith.constant 0 : i32
    return %c0_i32, %c0_i32_0, %c0_i32_1 : i32, i32, i32
  }
  func.func @transform_2(%arg0: i32) -> (i32, i32) {
    %c0_i32 = arith.constant 0 : i32
    %c0_i32_0 = arith.constant 0 : i32
    %c0_i32_1 = arith.constant 0 : i32
    return %c0_i32, %c0_i32_0 : i32, i32
  }
  func.func @transform_3(%arg0: i32) -> (i32, i32, i32) {
    %c0_i32 = arith.constant 0 : i32
    %c0_i32_0 = arith.constant 0 : i32
    %c0_i32_1 = arith.constant 0 : i32
    %c0_i32_2 = arith.constant 0 : i32
    return %c0_i32, %c0_i32_0, %c0_i32_1 : i32, i32, i32
  }
  func.func @transform_4(%arg0: i32) -> (i32, i32) {
    %c0_i32 = arith.constant 0 : i32
    %c0_i32_0 = arith.constant 0 : i32
    %c0_i32_1 = arith.constant 0 : i32
    return %c0_i32, %c0_i32_0 : i32, i32
  }
  func.func @transform_5(%arg0: i32) -> (i32, i32, i32) {
    %c0_i32 = arith.constant 0 : i32
    %c0_i32_0 = arith.constant 0 : i32
    %c0_i32_1 = arith.constant 0 : i32
    %c0_i32_2 = arith.constant 0 : i32
    return %c0_i32, %c0_i32_0, %c0_i32_1 : i32, i32, i32
  }
  func.func @transform_6(%arg0: i32) -> (i32, i32) {
    %c0_i32 = arith.constant 0 : i32
    %c0_i32_0 = arith.constant 0 : i32
    %c0_i32_1 = arith.constant 0 : i32
    return %c0_i32, %c0_i32_0 : i32, i32
  }
  func.func @transform_7(%arg0: i32) -> (i32, i32, i32) {
    %c0_i32 = arith.constant 0 : i32
    %c0_i32_0 = arith.constant 0 : i32
    %c0_i32_1 = arith.constant 0 : i32
    %c0_i32_2 = arith.constant 0 : i32
    return %c0_i32, %c0_i32_0, %c0_i32_1 : i32, i32, i32
  }
  func.func @transform_8(%arg0: i32) -> (i32, i32) {
    %c0_i32 = arith.constant 0 : i32
    %c0_i32_0 = arith.constant 0 : i32
    %c0_i32_1 = arith.constant 0 : i32
    return %c0_i32, %c0_i32_0 : i32, i32
  }
  func.func @transform_9(%arg0: i32) -> (i32, i32) {
    %c0_i32 = arith.constant 0 : i32
    %c0_i32_0 = arith.constant 0 : i32
    %c0_i32_1 = arith.constant 0 : i32
    return %c0_i32, %c0_i32_0 : i32, i32
  }
  func.func @transform_10(%arg0: i32) -> (i32, i32) {
    %c0_i32 = arith.constant 0 : i32
    %c0_i32_0 = arith.constant 0 : i32
    %c0_i32_1 = arith.constant 0 : i32
    return %c0_i32, %c0_i32_0 : i32, i32
  }
  func.func @transform_11(%arg0: i32) -> (i32, i32) {
    %c0_i32 = arith.constant 0 : i32
    %c0_i32_0 = arith.constant 0 : i32
    %c0_i32_1 = arith.constant 0 : i32
    return %c0_i32, %c0_i32_0 : i32, i32
  }
  func.func @transform_12(%arg0: i32) -> (i32, i32) {
    %c0_i32 = arith.constant 0 : i32
    %c0_i32_0 = arith.constant 0 : i32
    %c0_i32_1 = arith.constant 0 : i32
    return %c0_i32, %c0_i32_0 : i32, i32
  }
  func.func @transform_13(%arg0: i32) -> (i32, i32, i32) {
    %c0_i32 = arith.constant 0 : i32
    %c0_i32_0 = arith.constant 0 : i32
    %c0_i32_1 = arith.constant 0 : i32
    return %arg0, %c0_i32, %c0_i32_0 : i32, i32, i32
  }
}

</mosaic_0001>

<llo_original>
// kernel: convnet_forward.1
$region0: #{convnet_forward.1}
  #allocation0 [shape = 'u32[]', space=smem, size = 0x4, offset = 0x4, fixed_abs, tag = 'smem constant byte address 0x4 - core index']
  #allocation1 [shape = 'u32[72,128]{1,0:T(1,128)}', space=vmem, size = 0x9000, scoped, tag = 'internal scratch']
  %s0 = inlined_call_operand.vmem [shape: f32[2,1,784], index: 0, kind: input, shape index: {}]
  %s1 = inlined_call_operand.vmem [shape: f32[25,3,1], index: 1, kind: input, shape index: {}]
  %s2 = inlined_call_operand.vmem [shape: f32[3,1], index: 2, kind: input, shape index: {}]
  %s3 = inlined_call_operand.vmem [shape: f32[25,6,3], index: 3, kind: input, shape index: {}]
  %s4 = inlined_call_operand.vmem [shape: f32[6,1], index: 4, kind: input, shape index: {}]
  %s5 = inlined_call_operand.vmem [shape: f32[25,12,6], index: 5, kind: input, shape index: {}]
  %s6 = inlined_call_operand.vmem [shape: f32[12,1], index: 6, kind: input, shape index: {}]
  %s7 = inlined_call_operand.hbm [shape: f32[12,175,100], index: 7, kind: input, shape index: {}]
  %s8 = inlined_call_operand.hbm [shape: f32[1,100], index: 8, kind: input, shape index: {}]
  %s9 = inlined_call_operand.vmem [shape: f32[100,50], index: 9, kind: input, shape index: {}]
  %s10 = inlined_call_operand.hbm [shape: f32[1,50], index: 10, kind: input, shape index: {}]
  %s11 = inlined_call_operand.vmem [shape: f32[50,10], index: 11, kind: input, shape index: {}]
  %s12 = inlined_call_operand.hbm [shape: f32[1,10], index: 12, kind: input, shape index: {}]
  %s13 = inlined_call_operand.hbm [shape: f32[2,1,10], index: 13, kind: output, shape index: {}]
  %s14 = sld [smem:[#allocation0]]
  $region101: #{convnet_forward.1} parent=0
    _
  %s16 = ssub.s32 1, %s14
  %s17 = scalar_select 0, %s16, %s14
  $region1: #{convnet_forward.1} parent=0
    #allocation2 [shape = 'u8[1081344]{0}', space=vmem, size = 0x108000, scoped, tag = 'input window, operand 7, single buffered']
    #allocation3 [shape = 's32[2]{0}', space=sflag, size = 0x8, scoped, tag = 'scoped memory for convnet_forward.1']
    #allocation4 [shape = 's32[2]{0}', space=sflag, size = 0x8, scoped, tag = 'scoped memory for convnet_forward.1']
    #allocation5 [shape = 'u8[512]{0}', space=vmem, size = 0x400, scoped, tag = 'input window, operand 8, single buffered']
    #allocation6 [shape = 's32[1]{0}', space=sflag, size = 0x4, scoped, tag = 'scoped memory for convnet_forward.1']
    #allocation7 [shape = 'u8[512]{0}', space=vmem, size = 0x400, scoped, tag = 'input window, operand 10, single buffered']
    #allocation8 [shape = 'u8[512]{0}', space=vmem, size = 0x400, scoped, tag = 'input window, operand 12, single buffered']
    #allocation9 [shape = 's32[1]{0}', space=sflag, size = 0x4, scoped, tag = 'scoped memory for convnet_forward.1']
    #allocation10 [shape = 'u8[1024]{0}', space=vmem, size = 0x400, scoped, tag = 'output window, operand 0']
    %18 = vsyncpa [#allocation3], 0
    %19 = vsyncpa [#allocation6], 0
    %20 = vsyncpa [#allocation9], 0
    %21 = vsyncpa [#allocation4], 0
    %s22 = scalar_lea.sflag [#allocation4], 1
    %23 = vsyncpa %s22, 0
    loop: start=0, step=1, limit=4
    $region2: #{convnet_forward.1} parent=1 // loop_pre_header
      _
    $region3: #{convnet_forward.1} parent=1 // loop_header
      %s25 = sphi 0, %s29
      %p26 = scmp.ge.s32.totalorder %s25, 4
      %s35 = sphi 0, %s37
      %s38 = sphi 0, %s35
      %s39 = sphi 0, %s38
      %s55 = sphi 0, %s39
      %s59 = sphi 0, %s59
      %s61 = sphi 0, %s59
      %s62 = sphi 0, %s61
      %s76 = sphi 0, %s62
      %s80 = sphi 0, %s80
      %s82 = sphi 0, %s80
      %s83 = sphi 0, %s82
      %s97 = sphi 0, %s83
      %s101 = sphi 0, %s101
      %s103 = sphi 0, %s101
      %s104 = sphi 0, %s103
      %s118 = sphi 0, %s104
      %s122 = sphi 0, %s122
      %s124 = sphi 0, %s122
      %s125 = sphi 0, %s124
      %s139 = sphi 0, %s125
      %s143 = sphi 0, %s143
      %s145 = sphi 0, %s143
      %s146 = sphi 0, %s145
      %s160 = sphi 0, %s146
      %s164 = sphi 0, %s164
      %s166 = sphi 0, %s164
      %s167 = sphi 0, %s166
      %s181 = sphi 0, %s167
      %s185 = sphi 0, %s185
      %s187 = sphi 0, %s185
      %s188 = sphi 0, %s187
      %s202 = sphi 0, %s188
      %s206 = sphi 0, %s206
      %s208 = sphi 0, %s206
      %s209 = sphi 0, %s208
      %s223 = sphi 0, %s209
      %s227 = sphi 0, %s227
      %s229 = sphi 0, %s227
      %s230 = sphi 0, %s229
      %s244 = sphi 0, %s230
      %s248 = sphi 0, %s248
      %s250 = sphi 0, %s248
      %s251 = sphi 0, %s250
      %s265 = sphi 0, %s251
      %s269 = sphi 0, %s269
      %s271 = sphi 0, %s269
      %s272 = sphi 0, %s271
      %s286 = sphi 0, %s272
      %s290 = sphi 0, %s290
      %s292 = sphi 0, %s290
      %s293 = sphi 0, %s292
      %s307 = sphi 0, %s293
      %s313 = sphi 0, %s315
      %s316 = sphi 0, %s313
      %s317 = sphi 0, %s316
      %s333 = sphi 0, %s317
    $region4: #{convnet_forward.1} parent=1 // loop_header_branch
      %28 = sbr.rel (%p26) target = $region8
    $region5: #{convnet_forward.1} parent=1 // loop_body
      %s30 = ssub.s32 %s25, 1
      %s31 = ssub.s32 %s25, 2
      %s32 = sadd.s32 %s25, 1
      %s33 = ssub.s32 %s25, %s32
      %p34 = scmp.eq.s32.totalorder %s33, 0
      %s36 = sadd.s32 %s35, 1
      %s37 = scalar_select %p34, %s35, %s36
      %p40 = pneg %p34
      %p41 = scmp.eq.s32.totalorder %s25, 1
      %p42 = por %p40, %p41
      %p43 = scmp.ne.s32.totalorder %s35, %s38
      %p44 = scmp.eq.s32.totalorder %s25, 0
      %p45 = por %p43, %p44
      %p46 = scmp.ne.s32.totalorder %s35, %s38
      %p47 = scmp.eq.s32.totalorder %s30, 1
      %p48 = por %p46, %p47
      %p49 = scmp.ne.s32.totalorder %s38, %s39
      %p50 = scmp.eq.s32.totalorder %s30, 0
      %p51 = por %p49, %p50
      %p52 = scmp.ne.s32.totalorder %s38, %s39
      %p53 = scmp.eq.s32.totalorder %s31, 1
      %p54 = por %p52, %p53
      %p56 = scmp.ne.s32.totalorder %s39, %s55
      %p57 = scmp.eq.s32.totalorder %s31, 0
      %p58 = por %p56, %p57
      %s60 = sadd.s32 %s59, 1
      %p63 = scmp.eq.s32.totalorder %s25, 1
      %p64 = scmp.ne.s32.totalorder %s59, %s61
      %p65 = scmp.eq.s32.totalorder %s25, 0
      %p66 = por %p64, %p65
      %p67 = scmp.ne.s32.totalorder %s59, %s61
      %p68 = scmp.eq.s32.totalorder %s30, 1
      %p69 = por %p67, %p68
      %p70 = scmp.ne.s32.totalorder %s61, %s62
      %p71 = scmp.eq.s32.totalorder %s30, 0
      %p72 = por %p70, %p71
      %p73 = scmp.ne.s32.totalorder %s61, %s62
      %p74 = scmp.eq.s32.totalorder %s31, 1
      %p75 = por %p73, %p74
      %p77 = scmp.ne.s32.totalorder %s62, %s76
      %p78 = scmp.eq.s32.totalorder %s31, 0
      %p79 = por %p77, %p78
      %s81 = sadd.s32 %s80, 1
      %p84 = scmp.eq.s32.totalorder %s25, 1
      %p85 = scmp.ne.s32.totalorder %s80, %s82
      %p86 = scmp.eq.s32.totalorder %s25, 0
      %p87 = por %p85, %p86
      %p88 = scmp.ne.s32.totalorder %s80, %s82
      %p89 = scmp.eq.s32.totalorder %s30, 1
      %p90 = por %p88, %p89
      %p91 = scmp.ne.s32.totalorder %s82, %s83
      %p92 = scmp.eq.s32.totalorder %s30, 0
      %p93 = por %p91, %p92
      %p94 = scmp.ne.s32.totalorder %s82, %s83
      %p95 = scmp.eq.s32.totalorder %s31, 1
      %p96 = por %p94, %p95
      %p98 = scmp.ne.s32.totalorder %s83, %s97
      %p99 = scmp.eq.s32.totalorder %s31, 0
      %p100 = por %p98, %p99
      %s102 = sadd.s32 %s101, 1
      %p105 = scmp.eq.s32.totalorder %s25, 1
      %p106 = scmp.ne.s32.totalorder %s101, %s103
      %p107 = scmp.eq.s32.totalorder %s25, 0
      %p108 = por %p106, %p107
      %p109 = scmp.ne.s32.totalorder %s101, %s103
      %p110 = scmp.eq.s32.totalorder %s30, 1
      %p111 = por %p109, %p110
      %p112 = scmp.ne.s32.totalorder %s103, %s104
      %p113 = scmp.eq.s32.totalorder %s30, 0
      %p114 = por %p112, %p113
      %p115 = scmp.ne.s32.totalorder %s103, %s104
      %p116 = scmp.eq.s32.totalorder %s31, 1
      %p117 = por %p115, %p116
      %p119 = scmp.ne.s32.totalorder %s104, %s118
      %p120 = scmp.eq.s32.totalorder %s31, 0
      %p121 = por %p119, %p120
      %s123 = sadd.s32 %s122, 1
      %p126 = scmp.eq.s32.totalorder %s25, 1
      %p127 = scmp.ne.s32.totalorder %s122, %s124
      %p128 = scmp.eq.s32.totalorder %s25, 0
      %p129 = por %p127, %p128
      %p130 = scmp.ne.s32.totalorder %s122, %s124
      %p131 = scmp.eq.s32.totalorder %s30, 1
      %p132 = por %p130, %p131
      %p133 = scmp.ne.s32.totalorder %s124, %s125
      %p134 = scmp.eq.s32.totalorder %s30, 0
      %p135 = por %p133, %p134
      %p136 = scmp.ne.s32.totalorder %s124, %s125
      %p137 = scmp.eq.s32.totalorder %s31, 1
      %p138 = por %p136, %p137
      %p140 = scmp.ne.s32.totalorder %s125, %s139
      %p141 = scmp.eq.s32.totalorder %s31, 0
      %p142 = por %p140, %p141
      %s144 = sadd.s32 %s143, 1
      %p147 = scmp.eq.s32.totalorder %s25, 1
      %p148 = scmp.ne.s32.totalorder %s143, %s145
      %p149 = scmp.eq.s32.totalorder %s25, 0
      %p150 = por %p148, %p149
      %p151 = scmp.ne.s32.totalorder %s143, %s145
      %p152 = scmp.eq.s32.totalorder %s30, 1
      %p153 = por %p151, %p152
      %p154 = scmp.ne.s32.totalorder %s145, %s146
      %p155 = scmp.eq.s32.totalorder %s30, 0
      %p156 = por %p154, %p155
      %p157 = scmp.ne.s32.totalorder %s145, %s146
      %p158 = scmp.eq.s32.totalorder %s31, 1
      %p159 = por %p157, %p158
      %p161 = scmp.ne.s32.totalorder %s146, %s160
      %p162 = scmp.eq.s32.totalorder %s31, 0
      %p163 = por %p161, %p162
      %s165 = sadd.s32 %s164, 1
      %p168 = scmp.eq.s32.totalorder %s25, 1
      %p169 = scmp.ne.s32.totalorder %s164, %s166
      %p170 = scmp.eq.s32.totalorder %s25, 0
      %p171 = por %p169, %p170
      %p172 = scmp.ne.s32.totalorder %s164, %s166
      %p173 = scmp.eq.s32.totalorder %s30, 1
      %p174 = por %p172, %p173
      %p175 = scmp.ne.s32.totalorder %s166, %s167
      %p176 = scmp.eq.s32.totalorder %s30, 0
      %p177 = por %p175, %p176
      %p178 = scmp.ne.s32.totalorder %s166, %s167
      %p179 = scmp.eq.s32.totalorder %s31, 1
      %p180 = por %p178, %p179
      %p182 = scmp.ne.s32.totalorder %s167, %s181
      %p183 = scmp.eq.s32.totalorder %s31, 0
      %p184 = por %p182, %p183
      %s186 = sadd.s32 %s185, 1
      %p189 = scmp.eq.s32.totalorder %s25, 1
      %p190 = scmp.ne.s32.totalorder %s185, %s187
      %p191 = scmp.eq.s32.totalorder %s25, 0
      %p192 = por %p190, %p191
      %p193 = scmp.ne.s32.totalorder %s185, %s187
      %p194 = scmp.eq.s32.totalorder %s30, 1
      %p195 = por %p193, %p194
      %p196 = scmp.ne.s32.totalorder %s187, %s188
      %p197 = scmp.eq.s32.totalorder %s30, 0
      %p198 = por %p196, %p197
      %p199 = scmp.ne.s32.totalorder %s187, %s188
      %p200 = scmp.eq.s32.totalorder %s31, 1
      %p201 = por %p199, %p200
      %p203 = scmp.ne.s32.totalorder %s188, %s202
      %p204 = scmp.eq.s32.totalorder %s31, 0
      %p205 = por %p203, %p204
      %s207 = sadd.s32 %s206, 1
      %p210 = scmp.eq.s32.totalorder %s25, 1
      %p211 = scmp.ne.s32.totalorder %s206, %s208
      %p212 = scmp.eq.s32.totalorder %s25, 0
      %p213 = por %p211, %p212
      %p214 = scmp.ne.s32.totalorder %s206, %s208
      %p215 = scmp.eq.s32.totalorder %s30, 1
      %p216 = por %p214, %p215
      %p217 = scmp.ne.s32.totalorder %s208, %s209
      %p218 = scmp.eq.s32.totalorder %s30, 0
      %p219 = por %p217, %p218
      %p220 = scmp.ne.s32.totalorder %s208, %s209
      %p221 = scmp.eq.s32.totalorder %s31, 1
      %p222 = por %p220, %p221
      %p224 = scmp.ne.s32.totalorder %s209, %s223
      %p225 = scmp.eq.s32.totalorder %s31, 0
      %p226 = por %p224, %p225
      %s228 = sadd.s32 %s227, 1
      %p231 = scmp.eq.s32.totalorder %s25, 1
      %p232 = scmp.ne.s32.totalorder %s227, %s229
      %p233 = scmp.eq.s32.totalorder %s25, 0
      %p234 = por %p232, %p233
      %p235 = scmp.ne.s32.totalorder %s227, %s229
      %p236 = scmp.eq.s32.totalorder %s30, 1
      %p237 = por %p235, %p236
      %p238 = scmp.ne.s32.totalorder %s229, %s230
      %p239 = scmp.eq.s32.totalorder %s30, 0
      %p240 = por %p238, %p239
      %p241 = scmp.ne.s32.totalorder %s229, %s230
      %p242 = scmp.eq.s32.totalorder %s31, 1
      %p243 = por %p241, %p242
      %p245 = scmp.ne.s32.totalorder %s230, %s244
      %p246 = scmp.eq.s32.totalorder %s31, 0
      %p247 = por %p245, %p246
      %s249 = sadd.s32 %s248, 1
      %p252 = scmp.eq.s32.totalorder %s25, 1
      %p253 = scmp.ne.s32.totalorder %s248, %s250
      %p254 = scmp.eq.s32.totalorder %s25, 0
      %p255 = por %p253, %p254
      %p256 = scmp.ne.s32.totalorder %s248, %s250
      %p257 = scmp.eq.s32.totalorder %s30, 1
      %p258 = por %p256, %p257
      %p259 = scmp.ne.s32.totalorder %s250, %s251
      %p260 = scmp.eq.s32.totalorder %s30, 0
      %p261 = por %p259, %p260
      %p262 = scmp.ne.s32.totalorder %s250, %s251
      %p263 = scmp.eq.s32.totalorder %s31, 1
      %p264 = por %p262, %p263
      %p266 = scmp.ne.s32.totalorder %s251, %s265
      %p267 = scmp.eq.s32.totalorder %s31, 0
      %p268 = por %p266, %p267
      %s270 = sadd.s32 %s269, 1
      %p273 = scmp.eq.s32.totalorder %s25, 1
      %p274 = scmp.ne.s32.totalorder %s269, %s271
      %p275 = scmp.eq.s32.totalorder %s25, 0
      %p276 = por %p274, %p275
      %p277 = scmp.ne.s32.totalorder %s269, %s271
      %p278 = scmp.eq.s32.totalorder %s30, 1
      %p279 = por %p277, %p278
      %p280 = scmp.ne.s32.totalorder %s271, %s272
      %p281 = scmp.eq.s32.totalorder %s30, 0
      %p282 = por %p280, %p281
      %p283 = scmp.ne.s32.totalorder %s271, %s272
      %p284 = scmp.eq.s32.totalorder %s31, 1
      %p285 = por %p283, %p284
      %p287 = scmp.ne.s32.totalorder %s272, %s286
      %p288 = scmp.eq.s32.totalorder %s31, 0
      %p289 = por %p287, %p288
      %s291 = sadd.s32 %s290, 1
      %p294 = scmp.eq.s32.totalorder %s25, 1
      %p295 = scmp.ne.s32.totalorder %s290, %s292
      %p296 = scmp.eq.s32.totalorder %s25, 0
      %p297 = por %p295, %p296
      %p298 = scmp.ne.s32.totalorder %s290, %s292
      %p299 = scmp.eq.s32.totalorder %s30, 1
      %p300 = por %p298, %p299
      %p301 = scmp.ne.s32.totalorder %s292, %s293
      %p302 = scmp.eq.s32.totalorder %s30, 0
      %p303 = por %p301, %p302
      %p304 = scmp.ne.s32.totalorder %s292, %s293
      %p305 = scmp.eq.s32.totalorder %s31, 1
      %p306 = por %p304, %p305
      %p308 = scmp.ne.s32.totalorder %s293, %s307
      %p309 = scmp.eq.s32.totalorder %s31, 0
      %p310 = por %p308, %p309
      %s311 = ssub.s32 %s25, %s32
      %p312 = scmp.eq.s32.totalorder %s311, 0
      %s314 = sadd.s32 %s313, 1
      %s315 = scalar_select %p312, %s313, %s314
      %p318 = pneg %p312
      %p319 = scmp.eq.s32.totalorder %s25, 1
      %p320 = por %p318, %p319
      %p321 = scmp.ne.s32.totalorder %s313, %s316
      %p322 = scmp.eq.s32.totalorder %s25, 0
      %p323 = por %p321, %p322
      %p324 = scmp.ne.s32.totalorder %s313, %s316
      %p325 = scmp.eq.s32.totalorder %s30, 1
      %p326 = por %p324, %p325
      %p327 = scmp.ne.s32.totalorder %s316, %s317
      %p328 = scmp.eq.s32.totalorder %s30, 0
      %p329 = por %p327, %p328
      %p330 = scmp.ne.s32.totalorder %s316, %s317
      %p331 = scmp.eq.s32.totalorder %s31, 1
      %p332 = por %p330, %p331
      %p334 = scmp.ne.s32.totalorder %s317, %s333
      %p335 = scmp.eq.s32.totalorder %s31, 0
      %p336 = por %p334, %p335
      %p337 = scmp.le.s32.totalorder 1, %s25
      %p338 = scmp.lt.s32.totalorder %s25, 3
      %p339 = pnand %p337, %p338
      %p340 = pneg %p339
      // Predicated region
      $region9: #{convnet_forward.1} parent=5 // pred_check
        _
      $region10: #{convnet_forward.1} parent=5 // pred_check_branch
        %342 = sbr.rel (%p339) target = $region12
      $region11: #{convnet_forward.1} parent=5 // pred_region
        %s343 = ssub.s32 %s25, 1
        // Predicated region
        $region13: #{convnet_forward.1} parent=11 // pred_check
          %p344 = pneg %p72
        $region14: #{convnet_forward.1} parent=11 // pred_check_branch
          %346 = sbr.rel (%p344) target = $region16
        $region15: #{convnet_forward.1} parent=11 // pred_region
          _
        $region16: #{convnet_forward.1} parent=11 // pred_fallthru
          _
        // Predicated region
        $region17: #{convnet_forward.1} parent=11 // pred_check
          %p347 = pneg %p93
        $region18: #{convnet_forward.1} parent=11 // pred_check_branch
          %349 = sbr.rel (%p347) target = $region20
        $region19: #{convnet_forward.1} parent=11 // pred_region
          _
        $region20: #{convnet_forward.1} parent=11 // pred_fallthru
          _
        // Predicated region
        $region21: #{convnet_forward.1} parent=11 // pred_check
          %p350 = pneg %p114
        $region22: #{convnet_forward.1} parent=11 // pred_check_branch
          %352 = sbr.rel (%p350) target = $region24
        $region23: #{convnet_forward.1} parent=11 // pred_region
          _
        $region24: #{convnet_forward.1} parent=11 // pred_fallthru
          _
        // Predicated region
        $region25: #{convnet_forward.1} parent=11 // pred_check
          %p353 = pneg %p135
        $region26: #{convnet_forward.1} parent=11 // pred_check_branch
          %355 = sbr.rel (%p353) target = $region28
        $region27: #{convnet_forward.1} parent=11 // pred_region
          _
        $region28: #{convnet_forward.1} parent=11 // pred_fallthru
          _
        // Predicated region
        $region29: #{convnet_forward.1} parent=11 // pred_check
          %p356 = pneg %p156
        $region30: #{convnet_forward.1} parent=11 // pred_check_branch
          %358 = sbr.rel (%p356) target = $region32
        $region31: #{convnet_forward.1} parent=11 // pred_region
          _
        $region32: #{convnet_forward.1} parent=11 // pred_fallthru
          _
        // Predicated region
        $region33: #{convnet_forward.1} parent=11 // pred_check
          %p359 = pneg %p177
        $region34: #{convnet_forward.1} parent=11 // pred_check_branch
          %361 = sbr.rel (%p359) target = $region36
        $region35: #{convnet_forward.1} parent=11 // pred_region
          _
        $region36: #{convnet_forward.1} parent=11 // pred_fallthru
          _
        // Predicated region
        $region37: #{convnet_forward.1} parent=11 // pred_check
          %p362 = pneg %p198
        $region38: #{convnet_forward.1} parent=11 // pred_check_branch
          %364 = sbr.rel (%p362) target = $region40
        $region39: #{convnet_forward.1} parent=11 // pred_region
          %366 = vsyncadd [#allocation3], 0
          %s367 = sshll.u32 %s7, 4
          %s368 = int_to_ptr.hbm [resolvable:$true] %s367
          %s369 = sshll.u32 [#allocation2], 4
          %s370 = int_to_ptr.vmem [resolvable:$true] %s369
          %375 = dma.hbm_to_vmem [thread:$0]  %s368, 33792, %s370, [#allocation3], 128, 128, 8
        $region40: #{convnet_forward.1} parent=11 // pred_fallthru
          _
        // Predicated region
        $region41: #{convnet_forward.1} parent=11 // pred_check
          %p376 = pneg %p219
        $region42: #{convnet_forward.1} parent=11 // pred_check_branch
          %378 = sbr.rel (%p376) target = $region44
        $region43: #{convnet_forward.1} parent=11 // pred_region
          %380 = vsyncadd [#allocation6], 0
          %s382 = sshll.u32 %s8, 4
          %s383 = int_to_ptr.hbm [resolvable:$true] %s382
          %s384 = sshll.u32 [#allocation5], 4
          %s385 = int_to_ptr.vmem [resolvable:$true] %s384
          %387 = dma.hbm_to_vmem [thread:$0]  %s383, 16, %s385, [#allocation6]
        $region44: #{convnet_forward.1} parent=11 // pred_fallthru
          _
        // Predicated region
        $region45: #{convnet_forward.1} parent=11 // pred_check
          %p388 = pneg %p240
        $region46: #{convnet_forward.1} parent=11 // pred_check_branch
          %390 = sbr.rel (%p388) target = $region48
        $region47: #{convnet_forward.1} parent=11 // pred_region
          _
        $region48: #{convnet_forward.1} parent=11 // pred_fallthru
          _
        // Predicated region
        $region49: #{convnet_forward.1} parent=11 // pred_check
          %p391 = pneg %p261
        $region50: #{convnet_forward.1} parent=11 // pred_check_branch
          %393 = sbr.rel (%p391) target = $region52
        $region51: #{convnet_forward.1} parent=11 // pred_region
          %395 = vsyncadd [#allocation6], 0
          %s397 = sshll.u32 %s10, 4
          %s398 = int_to_ptr.hbm [resolvable:$true] %s397
          %s399 = sshll.u32 [#allocation7], 4
          %s400 = int_to_ptr.vmem [resolvable:$true] %s399
          %402 = dma.hbm_to_vmem [thread:$0]  %s398, 16, %s400, [#allocation6]
        $region52: #{convnet_forward.1} parent=11 // pred_fallthru
          _
        // Predicated region
        $region53: #{convnet_forward.1} parent=11 // pred_check
          %p403 = pneg %p282
        $region54: #{convnet_forward.1} parent=11 // pred_check_branch
          %405 = sbr.rel (%p403) target = $region56
        $region55: #{convnet_forward.1} parent=11 // pred_region
          _
        $region56: #{convnet_forward.1} parent=11 // pred_fallthru
          _
        // Predicated region
        $region57: #{convnet_forward.1} parent=11 // pred_check
          %p406 = pneg %p303
        $region58: #{convnet_forward.1} parent=11 // pred_check_branch
          %408 = sbr.rel (%p406) target = $region60
        $region59: #{convnet_forward.1} parent=11 // pred_region
          %410 = vsyncadd [#allocation9], 0
          %s412 = sshll.u32 %s12, 4
          %s413 = int_to_ptr.hbm [resolvable:$true] %s412
          %s414 = sshll.u32 [#allocation8], 4
          %s415 = int_to_ptr.vmem [resolvable:$true] %s414
          %417 = dma.hbm_to_vmem [thread:$0]  %s413, 16, %s415, [#allocation9]
        $region60: #{convnet_forward.1} parent=11 // pred_fallthru
          _
      $region12: #{convnet_forward.1} parent=5 // pred_fallthru
        _
      %p418 = scmp.lt.s32.totalorder %s25, 2
      // Predicated region
      $region61: #{convnet_forward.1} parent=5 // pred_check
        %p419 = pneg %p418
      $region62: #{convnet_forward.1} parent=5 // pred_check_branch
        %421 = sbr.rel (%p419) target = $region64
      $region63: #{convnet_forward.1} parent=5 // pred_region
        // Predicated region
        $region65: #{convnet_forward.1} parent=63 // pred_check
          %p422 = pneg %p45
        $region66: #{convnet_forward.1} parent=63 // pred_check_branch
          %424 = sbr.rel (%p422) target = $region68
        $region67: #{convnet_forward.1} parent=63 // pred_region
          %p425 = scmp.lt.s32.totalorder %s25, 1
          %s426 = scalar_select %p425, %s25, 1
          %s427 = smul.addr %s426, 7
          %s428 = scalar_lea.vmem %s0, %s427
        $region68: #{convnet_forward.1} parent=63 // pred_fallthru
          _
      $region64: #{convnet_forward.1} parent=5 // pred_fallthru
        _
      %p429 = scmp.le.s32.totalorder 1, %s25
      %p430 = scmp.lt.s32.totalorder %s25, 3
      %p431 = pnand %p429, %p430
      %p432 = pneg %p431
      // Predicated region
      $region69: #{convnet_forward.1} parent=5 // pred_check
        _
      $region70: #{convnet_forward.1} parent=5 // pred_check_branch
        %434 = sbr.rel (%p431) target = $region72
      $region71: #{convnet_forward.1} parent=5 // pred_region
        %s435 = ssub.s32 %s25, 1
        // Predicated region
        $region73: #{convnet_forward.1} parent=71 // pred_check
          %p436 = pneg %p198
        $region74: #{convnet_forward.1} parent=71 // pred_check_branch
          %438 = sbr.rel (%p436) target = $region76
        $region75: #{convnet_forward.1} parent=71 // pred_region
          %440 = dma.done [#allocation3], 33792
        $region76: #{convnet_forward.1} parent=71 // pred_fallthru
          _
        // Predicated region
        $region77: #{convnet_forward.1} parent=71 // pred_check
          %p441 = pneg %p219
        $region78: #{convnet_forward.1} parent=71 // pred_check_branch
          %443 = sbr.rel (%p441) target = $region80
        $region79: #{convnet_forward.1} parent=71 // pred_region
          %445 = dma.done [#allocation6], 16
        $region80: #{convnet_forward.1} parent=71 // pred_fallthru
          _
        // Predicated region
        $region81: #{convnet_forward.1} parent=71 // pred_check
          %p446 = pneg %p261
        $region82: #{convnet_forward.1} parent=71 // pred_check_branch
          %448 = sbr.rel (%p446) target = $region84
        $region83: #{convnet_forward.1} parent=71 // pred_region
          %450 = dma.done [#allocation6], 16
        $region84: #{convnet_forward.1} parent=71 // pred_fallthru
          _
        // Predicated region
        $region85: #{convnet_forward.1} parent=71 // pred_check
          %p451 = pneg %p303
        $region86: #{convnet_forward.1} parent=71 // pred_check_branch
          %453 = sbr.rel (%p451) target = $region88
        $region87: #{convnet_forward.1} parent=71 // pred_region
          %455 = dma.done [#allocation9], 16
        $region88: #{convnet_forward.1} parent=71 // pred_fallthru
          _
        %p456 = scmp.lt.s32.totalorder %s30, 1
        %s457 = scalar_select %p456, %s30, 1
        %s458 = smul.addr %s457, 7
        %s459 = scalar_lea.vmem %s0, %s458
        %p460 = pneg %p51
        %p461 = pneg %p48
        %p462 = pneg %p72
        %p463 = pneg %p69
        %p464 = pneg %p93
        %p465 = pneg %p90
        %p466 = pneg %p114
        %p467 = pneg %p111
        %p468 = pneg %p135
        %p469 = pneg %p132
        %p470 = pneg %p156
        %p471 = pneg %p153
        %p472 = pneg %p177
        %p473 = pneg %p174
        %p474 = pneg %p198
        %p475 = pneg %p195
        %p476 = pneg %p219
        %p477 = pneg %p216
        %p478 = pneg %p240
        %p479 = pneg %p237
        %p480 = pneg %p261
        %p481 = pneg %p258
        %p482 = pneg %p282
        %p483 = pneg %p279
        %p484 = pneg %p303
        %p485 = pneg %p300
        %p486 = pneg %p329
        %p487 = pneg %p326
        %s488 = sand.u32 %s316, 1
        %s489 = scalar_lea.sflag [#allocation4], %s488
        %s490 = sand.u32 %s316, 1
        %s491 = scalar_lea.vmem [#allocation10], %s490
        %p492 = scmp.lt.s32.totalorder %s30, 1
        %s493 = scalar_select %p492, %s30, 1
        %s494 = smul.addr %s493, 7
        %s495 = scalar_lea.vmem %s0, %s494
        %v496 = vld [vmem:[%s495] sm:$0x7f]
        %v497 = vld [vmem:[%s1] sm:$0x7]
        %499 = vset.pattern.permute.xlu0 0
        %500 = vperm.xlu0 %499, %v497
        %v501 = vpop.permute.xlu0 %500
        %v504 = vperm.slane %v496, 0
        %v505 = vperm.slane %v496, 1
        %v506 = vperm.slane %v496, 2
        %v507 = vperm.slane %v496, 3
        %v508 = vperm.slane %v496, 4
        %v509 = vperm.slane %v496, 5
        %v516 = vmul.f32 %v501, %v504
        %v517 = vmul.f32 %v501, %v505
        %v518 = vmul.f32 %v501, %v506
        %v519 = vmul.f32 %v501, %v507
        %v520 = vmul.f32 %v501, %v508
        %v521 = vmul.f32 %v501, %v509
        %s522 = scalar_lea.vmem %s1, 4
        %v523 = vld [vmem:[%s522] sm:$0x7]
        %525 = vset.pattern.permute.xlu0 0
        %526 = vperm.xlu0 %525, %v523
        %v527 = vpop.permute.xlu0 %526
        %v529 = vmul.f32 %v527, %v504
        %v530 = vmul.f32 %v527, %v505
        %v531 = vmul.f32 %v527, %v506
        %v532 = vmul.f32 %v527, %v507
        %v533 = vmul.f32 %v527, %v508
        %v534 = vmul.f32 %v527, %v509
        %541 = vrot.lane.b32.xlu0 %v529, 127
        %v542 = vpop.permute.xlu0 %541
        %543 = vrot.lane.b32.xlu0 %v530, 127
        %v544 = vpop.permute.xlu0 %543
        %545 = vrot.lane.b32.xlu0 %v531, 127
        %v546 = vpop.permute.xlu0 %545
        %547 = vrot.lane.b32.xlu0 %v532, 127
        %v548 = vpop.permute.xlu0 %547
        %549 = vrot.lane.b32.xlu0 %v533, 127
        %v550 = vpop.permute.xlu0 %549
        %551 = vrot.lane.b32.xlu0 %v534, 127
        %v552 = vpop.permute.xlu0 %551
        %vm553 = vcmask 1039360
        %v554 = vsel %vm553, %v542, %v544
        %v555 = vsel %vm553, %v544, %v546
        %v556 = vsel %vm553, %v546, %v548
        %v557 = vsel %vm553, %v548, %v550
        %v558 = vsel %vm553, %v550, %v552
        %v565 = vadd.f32 %v516, %v554
        %v566 = vadd.f32 %v517, %v555
        %v567 = vadd.f32 %v518, %v556
        %v568 = vadd.f32 %v519, %v557
        %v569 = vadd.f32 %v520, %v558
        %v570 = vadd.f32 %v521, %v552
        %s571 = scalar_lea.vmem %s1, 8
        %v572 = vld [vmem:[%s571] sm:$0x7]
        %574 = vset.pattern.permute.xlu0 0
        %575 = vperm.xlu0 %574, %v572
        %v576 = vpop.permute.xlu0 %575
        %v578 = vmul.f32 %v576, %v504
        %v579 = vmul.f32 %v576, %v505
        %v580 = vmul.f32 %v576, %v506
        %v581 = vmul.f32 %v576, %v507
        %v582 = vmul.f32 %v576, %v508
        %v583 = vmul.f32 %v576, %v509
        %590 = vrot.lane.b32.xlu0 %v578, 126
        %v591 = vpop.permute.xlu0 %590
        %592 = vrot.lane.b32.xlu0 %v579, 126
        %v593 = vpop.permute.xlu0 %592
        %594 = vrot.lane.b32.xlu0 %v580, 126
        %v595 = vpop.permute.xlu0 %594
        %596 = vrot.lane.b32.xlu0 %v581, 126
        %v597 = vpop.permute.xlu0 %596
        %598 = vrot.lane.b32.xlu0 %v582, 126
        %v599 = vpop.permute.xlu0 %598
        %600 = vrot.lane.b32.xlu0 %v583, 126
        %v601 = vpop.permute.xlu0 %600
        %vm602 = vcmask 1031168
        %v603 = vsel %vm602, %v591, %v593
        %v604 = vsel %vm602, %v593, %v595
        %v605 = vsel %vm602, %v595, %v597
        %v606 = vsel %vm602, %v597, %v599
        %v607 = vsel %vm602, %v599, %v601
        %v614 = vadd.f32 %v565, %v603
        %v615 = vadd.f32 %v566, %v604
        %v616 = vadd.f32 %v567, %v605
        %v617 = vadd.f32 %v568, %v606
        %v618 = vadd.f32 %v569, %v607
        %v619 = vadd.f32 %v570, %v601
        %s620 = scalar_lea.vmem %s1, 12
        %v621 = vld [vmem:[%s620] sm:$0x7]
        %623 = vset.pattern.permute.xlu0 0
        %624 = vperm.xlu0 %623, %v621
        %v625 = vpop.permute.xlu0 %624
        %v627 = vmul.f32 %v625, %v504
        %v628 = vmul.f32 %v625, %v505
        %v629 = vmul.f32 %v625, %v506
        %v630 = vmul.f32 %v625, %v507
        %v631 = vmul.f32 %v625, %v508
        %v632 = vmul.f32 %v625, %v509
        %639 = vrot.lane.b32.xlu0 %v627, 125
        %v640 = vpop.permute.xlu0 %639
        %641 = vrot.lane.b32.xlu0 %v628, 125
        %v642 = vpop.permute.xlu0 %641
        %643 = vrot.lane.b32.xlu0 %v629, 125
        %v644 = vpop.permute.xlu0 %643
        %645 = vrot.lane.b32.xlu0 %v630, 125
        %v646 = vpop.permute.xlu0 %645
        %647 = vrot.lane.b32.xlu0 %v631, 125
        %v648 = vpop.permute.xlu0 %647
        %649 = vrot.lane.b32.xlu0 %v632, 125
        %v650 = vpop.permute.xlu0 %649
        %vm651 = vcmask 1022976
        %v652 = vsel %vm651, %v640, %v642
        %v653 = vsel %vm651, %v642, %v644
        %v654 = vsel %vm651, %v644, %v646
        %v655 = vsel %vm651, %v646, %v648
        %v656 = vsel %vm651, %v648, %v650
        %v663 = vadd.f32 %v614, %v652
        %v664 = vadd.f32 %v615, %v653
        %v665 = vadd.f32 %v616, %v654
        %v666 = vadd.f32 %v617, %v655
        %v667 = vadd.f32 %v618, %v656
        %v668 = vadd.f32 %v619, %v650
        %s669 = scalar_lea.vmem %s1, 16
        %v670 = vld [vmem:[%s669] sm:$0x7]
        %672 = vset.pattern.permute.xlu0 0
        %673 = vperm.xlu0 %672, %v670
        %v674 = vpop.permute.xlu0 %673
        %v676 = vmul.f32 %v674, %v504
        %v677 = vmul.f32 %v674, %v505
        %v678 = vmul.f32 %v674, %v506
        %v679 = vmul.f32 %v674, %v507
        %v680 = vmul.f32 %v674, %v508
        %v681 = vmul.f32 %v674, %v509
        %688 = vrot.lane.b32.xlu0 %v676, 124
        %v689 = vpop.permute.xlu0 %688
        %690 = vrot.lane.b32.xlu0 %v677, 124
        %v691 = vpop.permute.xlu0 %690
        %692 = vrot.lane.b32.xlu0 %v678, 124
        %v693 = vpop.permute.xlu0 %692
        %694 = vrot.lane.b32.xlu0 %v679, 124
        %v695 = vpop.permute.xlu0 %694
        %696 = vrot.lane.b32.xlu0 %v680, 124
        %v697 = vpop.permute.xlu0 %696
        %698 = vrot.lane.b32.xlu0 %v681, 124
        %v699 = vpop.permute.xlu0 %698
        %vm700 = vcmask 1014784
        %v701 = vsel %vm700, %v689, %v691
        %v702 = vsel %vm700, %v691, %v693
        %v703 = vsel %vm700, %v693, %v695
        %v704 = vsel %vm700, %v695, %v697
        %v705 = vsel %vm700, %v697, %v699
        %v712 = vadd.f32 %v663, %v701
        %v713 = vadd.f32 %v664, %v702
        %v714 = vadd.f32 %v665, %v703
        %v715 = vadd.f32 %v666, %v704
        %v716 = vadd.f32 %v667, %v705
        %v717 = vadd.f32 %v668, %v699
        %s718 = scalar_lea.vmem %s1, 20
        %v719 = vld [vmem:[%s718] sm:$0x7]
        %721 = vset.pattern.permute.xlu0 0
        %722 = vperm.xlu0 %721, %v719
        %v723 = vpop.permute.xlu0 %722
        %v725 = vmul.f32 %v723, %v504
        %v726 = vmul.f32 %v723, %v505
        %v727 = vmul.f32 %v723, %v506
        %v728 = vmul.f32 %v723, %v507
        %v729 = vmul.f32 %v723, %v508
        %v730 = vmul.f32 %v723, %v509
        %737 = vrot.lane.b32.xlu0 %v725, 100
        %v738 = vpop.permute.xlu0 %737
        %739 = vrot.lane.b32.xlu0 %v726, 100
        %v740 = vpop.permute.xlu0 %739
        %741 = vrot.lane.b32.xlu0 %v727, 100
        %v742 = vpop.permute.xlu0 %741
        %743 = vrot.lane.b32.xlu0 %v728, 100
        %v744 = vpop.permute.xlu0 %743
        %745 = vrot.lane.b32.xlu0 %v729, 100
        %v746 = vpop.permute.xlu0 %745
        %747 = vrot.lane.b32.xlu0 %v730, 100
        %v748 = vpop.permute.xlu0 %747
        %vm749 = vcmask 818176
        %v750 = vsel %vm749, %v738, %v740
        %v751 = vsel %vm749, %v740, %v742
        %v752 = vsel %vm749, %v742, %v744
        %v753 = vsel %vm749, %v744, %v746
        %v754 = vsel %vm749, %v746, %v748
        %v761 = vadd.f32 %v712, %v750
        %v762 = vadd.f32 %v713, %v751
        %v763 = vadd.f32 %v714, %v752
        %v764 = vadd.f32 %v715, %v753
        %v765 = vadd.f32 %v716, %v754
        %v766 = vadd.f32 %v717, %v748
        %s767 = scalar_lea.vmem %s1, 24
        %v768 = vld [vmem:[%s767] sm:$0x7]
        %770 = vset.pattern.permute.xlu0 0
        %771 = vperm.xlu0 %770, %v768
        %v772 = vpop.permute.xlu0 %771
        %v774 = vmul.f32 %v772, %v504
        %v775 = vmul.f32 %v772, %v505
        %v776 = vmul.f32 %v772, %v506
        %v777 = vmul.f32 %v772, %v507
        %v778 = vmul.f32 %v772, %v508
        %v779 = vmul.f32 %v772, %v509
        %786 = vrot.lane.b32.xlu0 %v774, 99
        %v787 = vpop.permute.xlu0 %786
        %788 = vrot.lane.b32.xlu0 %v775, 99
        %v789 = vpop.permute.xlu0 %788
        %790 = vrot.lane.b32.xlu0 %v776, 99
        %v791 = vpop.permute.xlu0 %790
        %792 = vrot.lane.b32.xlu0 %v777, 99
        %v793 = vpop.permute.xlu0 %792
        %794 = vrot.lane.b32.xlu0 %v778, 99
        %v795 = vpop.permute.xlu0 %794
        %796 = vrot.lane.b32.xlu0 %v779, 99
        %v797 = vpop.permute.xlu0 %796
        %vm798 = vcmask 809984
        %v799 = vsel %vm798, %v787, %v789
        %v800 = vsel %vm798, %v789, %v791
        %v801 = vsel %vm798, %v791, %v793
        %v802 = vsel %vm798, %v793, %v795
        %v803 = vsel %vm798, %v795, %v797
        %v810 = vadd.f32 %v761, %v799
        %v811 = vadd.f32 %v762, %v800
        %v812 = vadd.f32 %v763, %v801
        %v813 = vadd.f32 %v764, %v802
        %v814 = vadd.f32 %v765, %v803
        %v815 = vadd.f32 %v766, %v797
        %s816 = scalar_lea.vmem %s1, 28
        %v817 = vld [vmem:[%s816] sm:$0x7]
        %819 = vset.pattern.permute.xlu0 0
        %820 = vperm.xlu0 %819, %v817
        %v821 = vpop.permute.xlu0 %820
        %v823 = vmul.f32 %v821, %v504
        %v824 = vmul.f32 %v821, %v505
        %v825 = vmul.f32 %v821, %v506
        %v826 = vmul.f32 %v821, %v507
        %v827 = vmul.f32 %v821, %v508
        %v828 = vmul.f32 %v821, %v509
        %835 = vrot.lane.b32.xlu0 %v823, 98
        %v836 = vpop.permute.xlu0 %835
        %837 = vrot.lane.b32.xlu0 %v824, 98
        %v838 = vpop.permute.xlu0 %837
        %839 = vrot.lane.b32.xlu0 %v825, 98
        %v840 = vpop.permute.xlu0 %839
        %841 = vrot.lane.b32.xlu0 %v826, 98
        %v842 = vpop.permute.xlu0 %841
        %843 = vrot.lane.b32.xlu0 %v827, 98
        %v844 = vpop.permute.xlu0 %843
        %845 = vrot.lane.b32.xlu0 %v828, 98
        %v846 = vpop.permute.xlu0 %845
        %vm847 = vcmask 801792
        %v848 = vsel %vm847, %v836, %v838
        %v849 = vsel %vm847, %v838, %v840
        %v850 = vsel %vm847, %v840, %v842
        %v851 = vsel %vm847, %v842, %v844
        %v852 = vsel %vm847, %v844, %v846
        %v859 = vadd.f32 %v810, %v848
        %v860 = vadd.f32 %v811, %v849
        %v861 = vadd.f32 %v812, %v850
        %v862 = vadd.f32 %v813, %v851
        %v863 = vadd.f32 %v814, %v852
        %v864 = vadd.f32 %v815, %v846
        %s865 = scalar_lea.vmem %s1, 32
        %v866 = vld [vmem:[%s865] sm:$0x7]
        %868 = vset.pattern.permute.xlu0 0
        %869 = vperm.xlu0 %868, %v866
        %v870 = vpop.permute.xlu0 %869
        %v872 = vmul.f32 %v870, %v504
        %v873 = vmul.f32 %v870, %v505
        %v874 = vmul.f32 %v870, %v506
        %v875 = vmul.f32 %v870, %v507
        %v876 = vmul.f32 %v870, %v508
        %v877 = vmul.f32 %v870, %v509
        %884 = vrot.lane.b32.xlu0 %v872, 97
        %v885 = vpop.permute.xlu0 %884
        %886 = vrot.lane.b32.xlu0 %v873, 97
        %v887 = vpop.permute.xlu0 %886
        %888 = vrot.lane.b32.xlu0 %v874, 97
        %v889 = vpop.permute.xlu0 %888
        %890 = vrot.lane.b32.xlu0 %v875, 97
        %v891 = vpop.permute.xlu0 %890
        %892 = vrot.lane.b32.xlu0 %v876, 97
        %v893 = vpop.permute.xlu0 %892
        %894 = vrot.lane.b32.xlu0 %v877, 97
        %v895 = vpop.permute.xlu0 %894
        %vm896 = vcmask 793600
        %v897 = vsel %vm896, %v885, %v887
        %v898 = vsel %vm896, %v887, %v889
        %v899 = vsel %vm896, %v889, %v891
        %v900 = vsel %vm896, %v891, %v893
        %v901 = vsel %vm896, %v893, %v895
        %v908 = vadd.f32 %v859, %v897
        %v909 = vadd.f32 %v860, %v898
        %v910 = vadd.f32 %v861, %v899
        %v911 = vadd.f32 %v862, %v900
        %v912 = vadd.f32 %v863, %v901
        %v913 = vadd.f32 %v864, %v895
        %s914 = scalar_lea.vmem %s1, 36
        %v915 = vld [vmem:[%s914] sm:$0x7]
        %917 = vset.pattern.permute.xlu0 0
        %918 = vperm.xlu0 %917, %v915
        %v919 = vpop.permute.xlu0 %918
        %v921 = vmul.f32 %v919, %v504
        %v922 = vmul.f32 %v919, %v505
        %v923 = vmul.f32 %v919, %v506
        %v924 = vmul.f32 %v919, %v507
        %v925 = vmul.f32 %v919, %v508
        %v926 = vmul.f32 %v919, %v509
        %933 = vrot.lane.b32.xlu0 %v921, 96
        %v934 = vpop.permute.xlu0 %933
        %935 = vrot.lane.b32.xlu0 %v922, 96
        %v936 = vpop.permute.xlu0 %935
        %937 = vrot.lane.b32.xlu0 %v923, 96
        %v938 = vpop.permute.xlu0 %937
        %939 = vrot.lane.b32.xlu0 %v924, 96
        %v940 = vpop.permute.xlu0 %939
        %941 = vrot.lane.b32.xlu0 %v925, 96
        %v942 = vpop.permute.xlu0 %941
        %943 = vrot.lane.b32.xlu0 %v926, 96
        %v944 = vpop.permute.xlu0 %943
        %vm945 = vcmask 785408
        %v946 = vsel %vm945, %v934, %v936
        %v947 = vsel %vm945, %v936, %v938
        %v948 = vsel %vm945, %v938, %v940
        %v949 = vsel %vm945, %v940, %v942
        %v950 = vsel %vm945, %v942, %v944
        %v957 = vadd.f32 %v908, %v946
        %v958 = vadd.f32 %v909, %v947
        %v959 = vadd.f32 %v910, %v948
        %v960 = vadd.f32 %v911, %v949
        %v961 = vadd.f32 %v912, %v950
        %v962 = vadd.f32 %v913, %v944
        %s963 = scalar_lea.vmem %s1, 40
        %v964 = vld [vmem:[%s963] sm:$0x7]
        %966 = vset.pattern.permute.xlu0 0
        %967 = vperm.xlu0 %966, %v964
        %v968 = vpop.permute.xlu0 %967
        %v970 = vmul.f32 %v968, %v504
        %v971 = vmul.f32 %v968, %v505
        %v972 = vmul.f32 %v968, %v506
        %v973 = vmul.f32 %v968, %v507
        %v974 = vmul.f32 %v968, %v508
        %v975 = vmul.f32 %v968, %v509
        %982 = vrot.lane.b32.xlu0 %v970, 72
        %v983 = vpop.permute.xlu0 %982
        %984 = vrot.lane.b32.xlu0 %v971, 72
        %v985 = vpop.permute.xlu0 %984
        %986 = vrot.lane.b32.xlu0 %v972, 72
        %v987 = vpop.permute.xlu0 %986
        %988 = vrot.lane.b32.xlu0 %v973, 72
        %v989 = vpop.permute.xlu0 %988
        %990 = vrot.lane.b32.xlu0 %v974, 72
        %v991 = vpop.permute.xlu0 %990
        %992 = vrot.lane.b32.xlu0 %v975, 72
        %v993 = vpop.permute.xlu0 %992
        %vm994 = vcmask 588800
        %v995 = vsel %vm994, %v983, %v985
        %v996 = vsel %vm994, %v985, %v987
        %v997 = vsel %vm994, %v987, %v989
        %v998 = vsel %vm994, %v989, %v991
        %v999 = vsel %vm994, %v991, %v993
        %v1006 = vadd.f32 %v957, %v995
        %v1007 = vadd.f32 %v958, %v996
        %v1008 = vadd.f32 %v959, %v997
        %v1009 = vadd.f32 %v960, %v998
        %v1010 = vadd.f32 %v961, %v999
        %v1011 = vadd.f32 %v962, %v993
        %s1012 = scalar_lea.vmem %s1, 44
        %v1013 = vld [vmem:[%s1012] sm:$0x7]
        %1015 = vset.pattern.permute.xlu0 0
        %1016 = vperm.xlu0 %1015, %v1013
        %v1017 = vpop.permute.xlu0 %1016
        %v1019 = vmul.f32 %v1017, %v504
        %v1020 = vmul.f32 %v1017, %v505
        %v1021 = vmul.f32 %v1017, %v506
        %v1022 = vmul.f32 %v1017, %v507
        %v1023 = vmul.f32 %v1017, %v508
        %v1024 = vmul.f32 %v1017, %v509
        %1031 = vrot.lane.b32.xlu0 %v1019, 71
        %v1032 = vpop.permute.xlu0 %1031
        %1033 = vrot.lane.b32.xlu0 %v1020, 71
        %v1034 = vpop.permute.xlu0 %1033
        %1035 = vrot.lane.b32.xlu0 %v1021, 71
        %v1036 = vpop.permute.xlu0 %1035
        %1037 = vrot.lane.b32.xlu0 %v1022, 71
        %v1038 = vpop.permute.xlu0 %1037
        %1039 = vrot.lane.b32.xlu0 %v1023, 71
        %v1040 = vpop.permute.xlu0 %1039
        %1041 = vrot.lane.b32.xlu0 %v1024, 71
        %v1042 = vpop.permute.xlu0 %1041
        %vm1043 = vcmask 580608
        %v1044 = vsel %vm1043, %v1032, %v1034
        %v1045 = vsel %vm1043, %v1034, %v1036
        %v1046 = vsel %vm1043, %v1036, %v1038
        %v1047 = vsel %vm1043, %v1038, %v1040
        %v1048 = vsel %vm1043, %v1040, %v1042
        %v1055 = vadd.f32 %v1006, %v1044
        %v1056 = vadd.f32 %v1007, %v1045
        %v1057 = vadd.f32 %v1008, %v1046
        %v1058 = vadd.f32 %v1009, %v1047
        %v1059 = vadd.f32 %v1010, %v1048
        %v1060 = vadd.f32 %v1011, %v1042
        %s1061 = scalar_lea.vmem %s1, 48
        %v1062 = vld [vmem:[%s1061] sm:$0x7]
        %1064 = vset.pattern.permute.xlu0 0
        %1065 = vperm.xlu0 %1064, %v1062
        %v1066 = vpop.permute.xlu0 %1065
        %v1068 = vmul.f32 %v1066, %v504
        %v1069 = vmul.f32 %v1066, %v505
        %v1070 = vmul.f32 %v1066, %v506
        %v1071 = vmul.f32 %v1066, %v507
        %v1072 = vmul.f32 %v1066, %v508
        %v1073 = vmul.f32 %v1066, %v509
        %1080 = vrot.lane.b32.xlu0 %v1068, 70
        %v1081 = vpop.permute.xlu0 %1080
        %1082 = vrot.lane.b32.xlu0 %v1069, 70
        %v1083 = vpop.permute.xlu0 %1082
        %1084 = vrot.lane.b32.xlu0 %v1070, 70
        %v1085 = vpop.permute.xlu0 %1084
        %1086 = vrot.lane.b32.xlu0 %v1071, 70
        %v1087 = vpop.permute.xlu0 %1086
        %1088 = vrot.lane.b32.xlu0 %v1072, 70
        %v1089 = vpop.permute.xlu0 %1088
        %1090 = vrot.lane.b32.xlu0 %v1073, 70
        %v1091 = vpop.permute.xlu0 %1090
        %vm1092 = vcmask 572416
        %v1093 = vsel %vm1092, %v1081, %v1083
        %v1094 = vsel %vm1092, %v1083, %v1085
        %v1095 = vsel %vm1092, %v1085, %v1087
        %v1096 = vsel %vm1092, %v1087, %v1089
        %v1097 = vsel %vm1092, %v1089, %v1091
        %v1104 = vadd.f32 %v1055, %v1093
        %v1105 = vadd.f32 %v1056, %v1094
        %v1106 = vadd.f32 %v1057, %v1095
        %v1107 = vadd.f32 %v1058, %v1096
        %v1108 = vadd.f32 %v1059, %v1097
        %v1109 = vadd.f32 %v1060, %v1091
        %s1110 = scalar_lea.vmem %s1, 52
        %v1111 = vld [vmem:[%s1110] sm:$0x7]
        %1113 = vset.pattern.permute.xlu0 0
        %1114 = vperm.xlu0 %1113, %v1111
        %v1115 = vpop.permute.xlu0 %1114
        %v1117 = vmul.f32 %v1115, %v504
        %v1118 = vmul.f32 %v1115, %v505
        %v1119 = vmul.f32 %v1115, %v506
        %v1120 = vmul.f32 %v1115, %v507
        %v1121 = vmul.f32 %v1115, %v508
        %v1122 = vmul.f32 %v1115, %v509
        %1129 = vrot.lane.b32.xlu0 %v1117, 69
        %v1130 = vpop.permute.xlu0 %1129
        %1131 = vrot.lane.b32.xlu0 %v1118, 69
        %v1132 = vpop.permute.xlu0 %1131
        %1133 = vrot.lane.b32.xlu0 %v1119, 69
        %v1134 = vpop.permute.xlu0 %1133
        %1135 = vrot.lane.b32.xlu0 %v1120, 69
        %v1136 = vpop.permute.xlu0 %1135
        %1137 = vrot.lane.b32.xlu0 %v1121, 69
        %v1138 = vpop.permute.xlu0 %1137
        %1139 = vrot.lane.b32.xlu0 %v1122, 69
        %v1140 = vpop.permute.xlu0 %1139
        %vm1141 = vcmask 564224
        %v1142 = vsel %vm1141, %v1130, %v1132
        %v1143 = vsel %vm1141, %v1132, %v1134
        %v1144 = vsel %vm1141, %v1134, %v1136
        %v1145 = vsel %vm1141, %v1136, %v1138
        %v1146 = vsel %vm1141, %v1138, %v1140
        %v1153 = vadd.f32 %v1104, %v1142
        %v1154 = vadd.f32 %v1105, %v1143
        %v1155 = vadd.f32 %v1106, %v1144
        %v1156 = vadd.f32 %v1107, %v1145
        %v1157 = vadd.f32 %v1108, %v1146
        %v1158 = vadd.f32 %v1109, %v1140
        %s1159 = scalar_lea.vmem %s1, 56
        %v1160 = vld [vmem:[%s1159] sm:$0x7]
        %1162 = vset.pattern.permute.xlu0 0
        %1163 = vperm.xlu0 %1162, %v1160
        %v1164 = vpop.permute.xlu0 %1163
        %v1166 = vmul.f32 %v1164, %v504
        %v1167 = vmul.f32 %v1164, %v505
        %v1168 = vmul.f32 %v1164, %v506
        %v1169 = vmul.f32 %v1164, %v507
        %v1170 = vmul.f32 %v1164, %v508
        %v1171 = vmul.f32 %v1164, %v509
        %1178 = vrot.lane.b32.xlu0 %v1166, 68
        %v1179 = vpop.permute.xlu0 %1178
        %1180 = vrot.lane.b32.xlu0 %v1167, 68
        %v1181 = vpop.permute.xlu0 %1180
        %1182 = vrot.lane.b32.xlu0 %v1168, 68
        %v1183 = vpop.permute.xlu0 %1182
        %1184 = vrot.lane.b32.xlu0 %v1169, 68
        %v1185 = vpop.permute.xlu0 %1184
        %1186 = vrot.lane.b32.xlu0 %v1170, 68
        %v1187 = vpop.permute.xlu0 %1186
        %1188 = vrot.lane.b32.xlu0 %v1171, 68
        %v1189 = vpop.permute.xlu0 %1188
        %vm1190 = vcmask 556032
        %v1191 = vsel %vm1190, %v1179, %v1181
        %v1192 = vsel %vm1190, %v1181, %v1183
        %v1193 = vsel %vm1190, %v1183, %v1185
        %v1194 = vsel %vm1190, %v1185, %v1187
        %v1195 = vsel %vm1190, %v1187, %v1189
        %v1202 = vadd.f32 %v1153, %v1191
        %v1203 = vadd.f32 %v1154, %v1192
        %v1204 = vadd.f32 %v1155, %v1193
        %v1205 = vadd.f32 %v1156, %v1194
        %v1206 = vadd.f32 %v1157, %v1195
        %v1207 = vadd.f32 %v1158, %v1189
        %s1208 = scalar_lea.vmem %s1, 60
        %v1209 = vld [vmem:[%s1208] sm:$0x7]
        %1211 = vset.pattern.permute.xlu0 0
        %1212 = vperm.xlu0 %1211, %v1209
        %v1213 = vpop.permute.xlu0 %1212
        %v1215 = vmul.f32 %v1213, %v504
        %v1216 = vmul.f32 %v1213, %v505
        %v1217 = vmul.f32 %v1213, %v506
        %v1218 = vmul.f32 %v1213, %v507
        %v1219 = vmul.f32 %v1213, %v508
        %v1220 = vmul.f32 %v1213, %v509
        %1227 = vrot.lane.b32.xlu0 %v1215, 44
        %v1228 = vpop.permute.xlu0 %1227
        %1229 = vrot.lane.b32.xlu0 %v1216, 44
        %v1230 = vpop.permute.xlu0 %1229
        %1231 = vrot.lane.b32.xlu0 %v1217, 44
        %v1232 = vpop.permute.xlu0 %1231
        %1233 = vrot.lane.b32.xlu0 %v1218, 44
        %v1234 = vpop.permute.xlu0 %1233
        %1235 = vrot.lane.b32.xlu0 %v1219, 44
        %v1236 = vpop.permute.xlu0 %1235
        %1237 = vrot.lane.b32.xlu0 %v1220, 44
        %v1238 = vpop.permute.xlu0 %1237
        %vm1239 = vcmask 359424
        %v1240 = vsel %vm1239, %v1228, %v1230
        %v1241 = vsel %vm1239, %v1230, %v1232
        %v1242 = vsel %vm1239, %v1232, %v1234
        %v1243 = vsel %vm1239, %v1234, %v1236
        %v1244 = vsel %vm1239, %v1236, %v1238
        %v1251 = vadd.f32 %v1202, %v1240
        %v1252 = vadd.f32 %v1203, %v1241
        %v1253 = vadd.f32 %v1204, %v1242
        %v1254 = vadd.f32 %v1205, %v1243
        %v1255 = vadd.f32 %v1206, %v1244
        %v1256 = vadd.f32 %v1207, %v1238
        %s1257 = scalar_lea.vmem %s1, 64
        %v1258 = vld [vmem:[%s1257] sm:$0x7]
        %1260 = vset.pattern.permute.xlu0 0
        %1261 = vperm.xlu0 %1260, %v1258
        %v1262 = vpop.permute.xlu0 %1261
        %v1264 = vmul.f32 %v1262, %v504
        %v1265 = vmul.f32 %v1262, %v505
        %v1266 = vmul.f32 %v1262, %v506
        %v1267 = vmul.f32 %v1262, %v507
        %v1268 = vmul.f32 %v1262, %v508
        %v1269 = vmul.f32 %v1262, %v509
        %1276 = vrot.lane.b32.xlu0 %v1264, 43
        %v1277 = vpop.permute.xlu0 %1276
        %1278 = vrot.lane.b32.xlu0 %v1265, 43
        %v1279 = vpop.permute.xlu0 %1278
        %1280 = vrot.lane.b32.xlu0 %v1266, 43
        %v1281 = vpop.permute.xlu0 %1280
        %1282 = vrot.lane.b32.xlu0 %v1267, 43
        %v1283 = vpop.permute.xlu0 %1282
        %1284 = vrot.lane.b32.xlu0 %v1268, 43
        %v1285 = vpop.permute.xlu0 %1284
        %1286 = vrot.lane.b32.xlu0 %v1269, 43
        %v1287 = vpop.permute.xlu0 %1286
        %vm1288 = vcmask 351232
        %v1289 = vsel %vm1288, %v1277, %v1279
        %v1290 = vsel %vm1288, %v1279, %v1281
        %v1291 = vsel %vm1288, %v1281, %v1283
        %v1292 = vsel %vm1288, %v1283, %v1285
        %v1293 = vsel %vm1288, %v1285, %v1287
        %v1300 = vadd.f32 %v1251, %v1289
        %v1301 = vadd.f32 %v1252, %v1290
        %v1302 = vadd.f32 %v1253, %v1291
        %v1303 = vadd.f32 %v1254, %v1292
        %v1304 = vadd.f32 %v1255, %v1293
        %v1305 = vadd.f32 %v1256, %v1287
        %s1306 = scalar_lea.vmem %s1, 68
        %v1307 = vld [vmem:[%s1306] sm:$0x7]
        %1309 = vset.pattern.permute.xlu0 0
        %1310 = vperm.xlu0 %1309, %v1307
        %v1311 = vpop.permute.xlu0 %1310
        %v1313 = vmul.f32 %v1311, %v504
        %v1314 = vmul.f32 %v1311, %v505
        %v1315 = vmul.f32 %v1311, %v506
        %v1316 = vmul.f32 %v1311, %v507
        %v1317 = vmul.f32 %v1311, %v508
        %v1318 = vmul.f32 %v1311, %v509
        %1325 = vrot.lane.b32.xlu0 %v1313, 42
        %v1326 = vpop.permute.xlu0 %1325
        %1327 = vrot.lane.b32.xlu0 %v1314, 42
        %v1328 = vpop.permute.xlu0 %1327
        %1329 = vrot.lane.b32.xlu0 %v1315, 42
        %v1330 = vpop.permute.xlu0 %1329
        %1331 = vrot.lane.b32.xlu0 %v1316, 42
        %v1332 = vpop.permute.xlu0 %1331
        %1333 = vrot.lane.b32.xlu0 %v1317, 42
        %v1334 = vpop.permute.xlu0 %1333
        %1335 = vrot.lane.b32.xlu0 %v1318, 42
        %v1336 = vpop.permute.xlu0 %1335
        %vm1337 = vcmask 343040
        %v1338 = vsel %vm1337, %v1326, %v1328
        %v1339 = vsel %vm1337, %v1328, %v1330
        %v1340 = vsel %vm1337, %v1330, %v1332
        %v1341 = vsel %vm1337, %v1332, %v1334
        %v1342 = vsel %vm1337, %v1334, %v1336
        %v1349 = vadd.f32 %v1300, %v1338
        %v1350 = vadd.f32 %v1301, %v1339
        %v1351 = vadd.f32 %v1302, %v1340
        %v1352 = vadd.f32 %v1303, %v1341
        %v1353 = vadd.f32 %v1304, %v1342
        %v1354 = vadd.f32 %v1305, %v1336
        %s1355 = scalar_lea.vmem %s1, 72
        %v1356 = vld [vmem:[%s1355] sm:$0x7]
        %1358 = vset.pattern.permute.xlu0 0
        %1359 = vperm.xlu0 %1358, %v1356
        %v1360 = vpop.permute.xlu0 %1359
        %v1362 = vmul.f32 %v1360, %v504
        %v1363 = vmul.f32 %v1360, %v505
        %v1364 = vmul.f32 %v1360, %v506
        %v1365 = vmul.f32 %v1360, %v507
        %v1366 = vmul.f32 %v1360, %v508
        %v1367 = vmul.f32 %v1360, %v509
        %1374 = vrot.lane.b32.xlu0 %v1362, 41
        %v1375 = vpop.permute.xlu0 %1374
        %1376 = vrot.lane.b32.xlu0 %v1363, 41
        %v1377 = vpop.permute.xlu0 %1376
        %1378 = vrot.lane.b32.xlu0 %v1364, 41
        %v1379 = vpop.permute.xlu0 %1378
        %1380 = vrot.lane.b32.xlu0 %v1365, 41
        %v1381 = vpop.permute.xlu0 %1380
        %1382 = vrot.lane.b32.xlu0 %v1366, 41
        %v1383 = vpop.permute.xlu0 %1382
        %1384 = vrot.lane.b32.xlu0 %v1367, 41
        %v1385 = vpop.permute.xlu0 %1384
        %vm1386 = vcmask 334848
        %v1387 = vsel %vm1386, %v1375, %v1377
        %v1388 = vsel %vm1386, %v1377, %v1379
        %v1389 = vsel %vm1386, %v1379, %v1381
        %v1390 = vsel %vm1386, %v1381, %v1383
        %v1391 = vsel %vm1386, %v1383, %v1385
        %v1398 = vadd.f32 %v1349, %v1387
        %v1399 = vadd.f32 %v1350, %v1388
        %v1400 = vadd.f32 %v1351, %v1389
        %v1401 = vadd.f32 %v1352, %v1390
        %v1402 = vadd.f32 %v1353, %v1391
        %v1403 = vadd.f32 %v1354, %v1385
        %s1404 = scalar_lea.vmem %s1, 76
        %v1405 = vld [vmem:[%s1404] sm:$0x7]
        %1407 = vset.pattern.permute.xlu0 0
        %1408 = vperm.xlu0 %1407, %v1405
        %v1409 = vpop.permute.xlu0 %1408
        %v1411 = vmul.f32 %v1409, %v504
        %v1412 = vmul.f32 %v1409, %v505
        %v1413 = vmul.f32 %v1409, %v506
        %v1414 = vmul.f32 %v1409, %v507
        %v1415 = vmul.f32 %v1409, %v508
        %v1416 = vmul.f32 %v1409, %v509
        %1423 = vrot.lane.b32.xlu0 %v1411, 40
        %v1424 = vpop.permute.xlu0 %1423
        %1425 = vrot.lane.b32.xlu0 %v1412, 40
        %v1426 = vpop.permute.xlu0 %1425
        %1427 = vrot.lane.b32.xlu0 %v1413, 40
        %v1428 = vpop.permute.xlu0 %1427
        %1429 = vrot.lane.b32.xlu0 %v1414, 40
        %v1430 = vpop.permute.xlu0 %1429
        %1431 = vrot.lane.b32.xlu0 %v1415, 40
        %v1432 = vpop.permute.xlu0 %1431
        %1433 = vrot.lane.b32.xlu0 %v1416, 40
        %v1434 = vpop.permute.xlu0 %1433
        %vm1435 = vcmask 326656
        %v1436 = vsel %vm1435, %v1424, %v1426
        %v1437 = vsel %vm1435, %v1426, %v1428
        %v1438 = vsel %vm1435, %v1428, %v1430
        %v1439 = vsel %vm1435, %v1430, %v1432
        %v1440 = vsel %vm1435, %v1432, %v1434
        %v1447 = vadd.f32 %v1398, %v1436
        %v1448 = vadd.f32 %v1399, %v1437
        %v1449 = vadd.f32 %v1400, %v1438
        %v1450 = vadd.f32 %v1401, %v1439
        %v1451 = vadd.f32 %v1402, %v1440
        %v1452 = vadd.f32 %v1403, %v1434
        %s1453 = scalar_lea.vmem %s1, 80
        %v1454 = vld [vmem:[%s1453] sm:$0x7]
        %1456 = vset.pattern.permute.xlu0 0
        %1457 = vperm.xlu0 %1456, %v1454
        %v1458 = vpop.permute.xlu0 %1457
        %v1460 = vperm.slane %v496, 6
        %v1462 = vmul.f32 %v1458, %v504
        %v1463 = vmul.f32 %v1458, %v505
        %v1464 = vmul.f32 %v1458, %v506
        %v1465 = vmul.f32 %v1458, %v507
        %v1466 = vmul.f32 %v1458, %v508
        %v1467 = vmul.f32 %v1458, %v509
        %v1468 = vmul.f32 %v1458, %v1460
        %1476 = vrot.lane.b32.xlu0 %v1462, 16
        %v1477 = vpop.permute.xlu0 %1476
        %1478 = vrot.lane.b32.xlu0 %v1463, 16
        %v1479 = vpop.permute.xlu0 %1478
        %1480 = vrot.lane.b32.xlu0 %v1464, 16
        %v1481 = vpop.permute.xlu0 %1480
        %1482 = vrot.lane.b32.xlu0 %v1465, 16
        %v1483 = vpop.permute.xlu0 %1482
        %1484 = vrot.lane.b32.xlu0 %v1466, 16
        %v1485 = vpop.permute.xlu0 %1484
        %1486 = vrot.lane.b32.xlu0 %v1467, 16
        %v1487 = vpop.permute.xlu0 %1486
        %1488 = vrot.lane.b32.xlu0 %v1468, 16
        %v1489 = vpop.permute.xlu0 %1488
        %vm1490 = vcmask 130048
        %v1491 = vsel %vm1490, %v1477, %v1479
        %v1492 = vsel %vm1490, %v1479, %v1481
        %v1493 = vsel %vm1490, %v1481, %v1483
        %v1494 = vsel %vm1490, %v1483, %v1485
        %v1495 = vsel %vm1490, %v1485, %v1487
        %v1496 = vsel %vm1490, %v1487, %v1489
        %v1503 = vadd.f32 %v1447, %v1491
        %v1504 = vadd.f32 %v1448, %v1492
        %v1505 = vadd.f32 %v1449, %v1493
        %v1506 = vadd.f32 %v1450, %v1494
        %v1507 = vadd.f32 %v1451, %v1495
        %v1508 = vadd.f32 %v1452, %v1496
        %s1509 = scalar_lea.vmem %s1, 84
        %v1510 = vld [vmem:[%s1509] sm:$0x7]
        %1512 = vset.pattern.permute.xlu0 0
        %1513 = vperm.xlu0 %1512, %v1510
        %v1514 = vpop.permute.xlu0 %1513
        %v1516 = vmul.f32 %v1514, %v504
        %v1517 = vmul.f32 %v1514, %v505
        %v1518 = vmul.f32 %v1514, %v506
        %v1519 = vmul.f32 %v1514, %v507
        %v1520 = vmul.f32 %v1514, %v508
        %v1521 = vmul.f32 %v1514, %v509
        %v1522 = vmul.f32 %v1514, %v1460
        %1530 = vrot.lane.b32.xlu0 %v1516, 15
        %v1531 = vpop.permute.xlu0 %1530
        %1532 = vrot.lane.b32.xlu0 %v1517, 15
        %v1533 = vpop.permute.xlu0 %1532
        %1534 = vrot.lane.b32.xlu0 %v1518, 15
        %v1535 = vpop.permute.xlu0 %1534
        %1536 = vrot.lane.b32.xlu0 %v1519, 15
        %v1537 = vpop.permute.xlu0 %1536
        %1538 = vrot.lane.b32.xlu0 %v1520, 15
        %v1539 = vpop.permute.xlu0 %1538
        %1540 = vrot.lane.b32.xlu0 %v1521, 15
        %v1541 = vpop.permute.xlu0 %1540
        %1542 = vrot.lane.b32.xlu0 %v1522, 15
        %v1543 = vpop.permute.xlu0 %1542
        %vm1544 = vcmask 121856
        %v1545 = vsel %vm1544, %v1531, %v1533
        %v1546 = vsel %vm1544, %v1533, %v1535
        %v1547 = vsel %vm1544, %v1535, %v1537
        %v1548 = vsel %vm1544, %v1537, %v1539
        %v1549 = vsel %vm1544, %v1539, %v1541
        %v1550 = vsel %vm1544, %v1541, %v1543
        %v1557 = vadd.f32 %v1503, %v1545
        %v1558 = vadd.f32 %v1504, %v1546
        %v1559 = vadd.f32 %v1505, %v1547
        %v1560 = vadd.f32 %v1506, %v1548
        %v1561 = vadd.f32 %v1507, %v1549
        %v1562 = vadd.f32 %v1508, %v1550
        %s1563 = scalar_lea.vmem %s1, 88
        %v1564 = vld [vmem:[%s1563] sm:$0x7]
        %1566 = vset.pattern.permute.xlu0 0
        %1567 = vperm.xlu0 %1566, %v1564
        %v1568 = vpop.permute.xlu0 %1567
        %v1570 = vmul.f32 %v1568, %v504
        %v1571 = vmul.f32 %v1568, %v505
        %v1572 = vmul.f32 %v1568, %v506
        %v1573 = vmul.f32 %v1568, %v507
        %v1574 = vmul.f32 %v1568, %v508
        %v1575 = vmul.f32 %v1568, %v509
        %v1576 = vmul.f32 %v1568, %v1460
        %1584 = vrot.lane.b32.xlu0 %v1570, 14
        %v1585 = vpop.permute.xlu0 %1584
        %1586 = vrot.lane.b32.xlu0 %v1571, 14
        %v1587 = vpop.permute.xlu0 %1586
        %1588 = vrot.lane.b32.xlu0 %v1572, 14
        %v1589 = vpop.permute.xlu0 %1588
        %1590 = vrot.lane.b32.xlu0 %v1573, 14
        %v1591 = vpop.permute.xlu0 %1590
        %1592 = vrot.lane.b32.xlu0 %v1574, 14
        %v1593 = vpop.permute.xlu0 %1592
        %1594 = vrot.lane.b32.xlu0 %v1575, 14
        %v1595 = vpop.permute.xlu0 %1594
        %1596 = vrot.lane.b32.xlu0 %v1576, 14
        %v1597 = vpop.permute.xlu0 %1596
        %vm1598 = vcmask 113664
        %v1599 = vsel %vm1598, %v1585, %v1587
        %v1600 = vsel %vm1598, %v1587, %v1589
        %v1601 = vsel %vm1598, %v1589, %v1591
        %v1602 = vsel %vm1598, %v1591, %v1593
        %v1603 = vsel %vm1598, %v1593, %v1595
        %v1604 = vsel %vm1598, %v1595, %v1597
        %v1611 = vadd.f32 %v1557, %v1599
        %v1612 = vadd.f32 %v1558, %v1600
        %v1613 = vadd.f32 %v1559, %v1601
        %v1614 = vadd.f32 %v1560, %v1602
        %v1615 = vadd.f32 %v1561, %v1603
        %v1616 = vadd.f32 %v1562, %v1604
        %s1617 = scalar_lea.vmem %s1, 92
        %v1618 = vld [vmem:[%s1617] sm:$0x7]
        %1620 = vset.pattern.permute.xlu0 0
        %1621 = vperm.xlu0 %1620, %v1618
        %v1622 = vpop.permute.xlu0 %1621
        %v1624 = vmul.f32 %v1622, %v504
        %v1625 = vmul.f32 %v1622, %v505
        %v1626 = vmul.f32 %v1622, %v506
        %v1627 = vmul.f32 %v1622, %v507
        %v1628 = vmul.f32 %v1622, %v508
        %v1629 = vmul.f32 %v1622, %v509
        %v1630 = vmul.f32 %v1622, %v1460
        %1638 = vrot.lane.b32.xlu0 %v1624, 13
        %v1639 = vpop.permute.xlu0 %1638
        %1640 = vrot.lane.b32.xlu0 %v1625, 13
        %v1641 = vpop.permute.xlu0 %1640
        %1642 = vrot.lane.b32.xlu0 %v1626, 13
        %v1643 = vpop.permute.xlu0 %1642
        %1644 = vrot.lane.b32.xlu0 %v1627, 13
        %v1645 = vpop.permute.xlu0 %1644
        %1646 = vrot.lane.b32.xlu0 %v1628, 13
        %v1647 = vpop.permute.xlu0 %1646
        %1648 = vrot.lane.b32.xlu0 %v1629, 13
        %v1649 = vpop.permute.xlu0 %1648
        %1650 = vrot.lane.b32.xlu0 %v1630, 13
        %v1651 = vpop.permute.xlu0 %1650
        %vm1652 = vcmask 105472
        %v1653 = vsel %vm1652, %v1639, %v1641
        %v1654 = vsel %vm1652, %v1641, %v1643
        %v1655 = vsel %vm1652, %v1643, %v1645
        %v1656 = vsel %vm1652, %v1645, %v1647
        %v1657 = vsel %vm1652, %v1647, %v1649
        %v1658 = vsel %vm1652, %v1649, %v1651
        %v1665 = vadd.f32 %v1611, %v1653
        %v1666 = vadd.f32 %v1612, %v1654
        %v1667 = vadd.f32 %v1613, %v1655
        %v1668 = vadd.f32 %v1614, %v1656
        %v1669 = vadd.f32 %v1615, %v1657
        %v1670 = vadd.f32 %v1616, %v1658
        %s1671 = scalar_lea.vmem %s1, 96
        %v1672 = vld [vmem:[%s1671] sm:$0x7]
        %1674 = vset.pattern.permute.xlu0 0
        %1675 = vperm.xlu0 %1674, %v1672
        %v1676 = vpop.permute.xlu0 %1675
        %v1678 = vmul.f32 %v1676, %v504
        %v1679 = vmul.f32 %v1676, %v505
        %v1680 = vmul.f32 %v1676, %v506
        %v1681 = vmul.f32 %v1676, %v507
        %v1682 = vmul.f32 %v1676, %v508
        %v1683 = vmul.f32 %v1676, %v509
        %v1684 = vmul.f32 %v1676, %v1460
        %1692 = vrot.lane.b32.xlu0 %v1678, 12
        %v1693 = vpop.permute.xlu0 %1692
        %1694 = vrot.lane.b32.xlu0 %v1679, 12
        %v1695 = vpop.permute.xlu0 %1694
        %1696 = vrot.lane.b32.xlu0 %v1680, 12
        %v1697 = vpop.permute.xlu0 %1696
        %1698 = vrot.lane.b32.xlu0 %v1681, 12
        %v1699 = vpop.permute.xlu0 %1698
        %1700 = vrot.lane.b32.xlu0 %v1682, 12
        %v1701 = vpop.permute.xlu0 %1700
        %1702 = vrot.lane.b32.xlu0 %v1683, 12
        %v1703 = vpop.permute.xlu0 %1702
        %1704 = vrot.lane.b32.xlu0 %v1684, 12
        %v1705 = vpop.permute.xlu0 %1704
        %vm1706 = vcmask 97280
        %v1707 = vsel %vm1706, %v1693, %v1695
        %v1708 = vsel %vm1706, %v1695, %v1697
        %v1709 = vsel %vm1706, %v1697, %v1699
        %v1710 = vsel %vm1706, %v1699, %v1701
        %v1711 = vsel %vm1706, %v1701, %v1703
        %v1712 = vsel %vm1706, %v1703, %v1705
        %v1719 = vadd.f32 %v1665, %v1707
        %v1720 = vadd.f32 %v1666, %v1708
        %v1721 = vadd.f32 %v1667, %v1709
        %v1722 = vadd.f32 %v1668, %v1710
        %v1723 = vadd.f32 %v1669, %v1711
        %v1724 = vadd.f32 %v1670, %v1712
        %v1725 = vld [vmem:[%s2] sm:$0x7]
        %1727 = vset.pattern.permute.xlu0 0
        %1728 = vperm.xlu0 %1727, %v1725
        %v1729 = vpop.permute.xlu0 %1728
        %v1731 = vadd.f32 %v1719, %v1729
        %v1732 = vadd.f32 %v1720, %v1729
        %v1733 = vadd.f32 %v1721, %v1729
        %v1734 = vadd.f32 %v1722, %v1729
        %v1735 = vadd.f32 %v1723, %v1729
        %v1736 = vadd.f32 %v1724, %v1729
        %v1737 = vmax.f32 %v1731, 0.0
        %v1738 = vmax.f32 %v1732, 0.0
        %v1739 = vmax.f32 %v1733, 0.0
        %v1740 = vmax.f32 %v1734, 0.0
        %v1741 = vmax.f32 %v1735, 0.0
        %v1742 = vmax.f32 %v1736, 0.0
        %1748 = vrot.lane.b32.xlu0 %v1737, 127
        %v1749 = vpop.permute.xlu0 %1748
        %1750 = vrot.lane.b32.xlu0 %v1738, 127
        %v1751 = vpop.permute.xlu0 %1750
        %1752 = vrot.lane.b32.xlu0 %v1739, 127
        %v1753 = vpop.permute.xlu0 %1752
        %1754 = vrot.lane.b32.xlu0 %v1740, 127
        %v1755 = vpop.permute.xlu0 %1754
        %1756 = vrot.lane.b32.xlu0 %v1741, 127
        %v1757 = vpop.permute.xlu0 %1756
        %v1758 = vsel %vm553, %v1749, %v1751
        %v1759 = vsel %vm553, %v1751, %v1753
        %v1760 = vsel %vm553, %v1753, %v1755
        %v1761 = vsel %vm553, %v1755, %v1757
        %v1767 = vmax.f32 %v1737, %v1758
        %v1768 = vmax.f32 %v1738, %v1759
        %v1769 = vmax.f32 %v1739, %v1760
        %v1770 = vmax.f32 %v1740, %v1761
        %v1771 = vmax.f32 %v1741, %v1757
        %1772 = vrot.lane.b32.xlu0 %v1737, 126
        %v1773 = vpop.permute.xlu0 %1772
        %1774 = vrot.lane.b32.xlu0 %v1738, 126
        %v1775 = vpop.permute.xlu0 %1774
        %1776 = vrot.lane.b32.xlu0 %v1739, 126
        %v1777 = vpop.permute.xlu0 %1776
        %1778 = vrot.lane.b32.xlu0 %v1740, 126
        %v1779 = vpop.permute.xlu0 %1778
        %1780 = vrot.lane.b32.xlu0 %v1741, 126
        %v1781 = vpop.permute.xlu0 %1780
        %v1782 = vsel %vm602, %v1773, %v1775
        %v1783 = vsel %vm602, %v1775, %v1777
        %v1784 = vsel %vm602, %v1777, %v1779
        %v1785 = vsel %vm602, %v1779, %v1781
        %v1791 = vmax.f32 %v1767, %v1782
        %v1792 = vmax.f32 %v1768, %v1783
        %v1793 = vmax.f32 %v1769, %v1784
        %v1794 = vmax.f32 %v1770, %v1785
        %v1795 = vmax.f32 %v1771, %v1781
        %1796 = vrot.lane.b32.xlu0 %v1737, 125
        %v1797 = vpop.permute.xlu0 %1796
        %1798 = vrot.lane.b32.xlu0 %v1738, 125
        %v1799 = vpop.permute.xlu0 %1798
        %1800 = vrot.lane.b32.xlu0 %v1739, 125
        %v1801 = vpop.permute.xlu0 %1800
        %1802 = vrot.lane.b32.xlu0 %v1740, 125
        %v1803 = vpop.permute.xlu0 %1802
        %1804 = vrot.lane.b32.xlu0 %v1741, 125
        %v1805 = vpop.permute.xlu0 %1804
        %v1806 = vsel %vm651, %v1797, %v1799
        %v1807 = vsel %vm651, %v1799, %v1801
        %v1808 = vsel %vm651, %v1801, %v1803
        %v1809 = vsel %vm651, %v1803, %v1805
        %v1815 = vmax.f32 %v1791, %v1806
        %v1816 = vmax.f32 %v1792, %v1807
        %v1817 = vmax.f32 %v1793, %v1808
        %v1818 = vmax.f32 %v1794, %v1809
        %v1819 = vmax.f32 %v1795, %v1805
        %1820 = vrot.lane.b32.xlu0 %v1737, 100
        %v1821 = vpop.permute.xlu0 %1820
        %1822 = vrot.lane.b32.xlu0 %v1738, 100
        %v1823 = vpop.permute.xlu0 %1822
        %1824 = vrot.lane.b32.xlu0 %v1739, 100
        %v1825 = vpop.permute.xlu0 %1824
        %1826 = vrot.lane.b32.xlu0 %v1740, 100
        %v1827 = vpop.permute.xlu0 %1826
        %1828 = vrot.lane.b32.xlu0 %v1741, 100
        %v1829 = vpop.permute.xlu0 %1828
        %v1830 = vsel %vm749, %v1821, %v1823
        %v1831 = vsel %vm749, %v1823, %v1825
        %v1832 = vsel %vm749, %v1825, %v1827
        %v1833 = vsel %vm749, %v1827, %v1829
        %v1839 = vmax.f32 %v1815, %v1830
        %v1840 = vmax.f32 %v1816, %v1831
        %v1841 = vmax.f32 %v1817, %v1832
        %v1842 = vmax.f32 %v1818, %v1833
        %v1843 = vmax.f32 %v1819, %v1829
        %1844 = vrot.lane.b32.xlu0 %v1737, 99
        %v1845 = vpop.permute.xlu0 %1844
        %1846 = vrot.lane.b32.xlu0 %v1738, 99
        %v1847 = vpop.permute.xlu0 %1846
        %1848 = vrot.lane.b32.xlu0 %v1739, 99
        %v1849 = vpop.permute.xlu0 %1848
        %1850 = vrot.lane.b32.xlu0 %v1740, 99
        %v1851 = vpop.permute.xlu0 %1850
        %1852 = vrot.lane.b32.xlu0 %v1741, 99
        %v1853 = vpop.permute.xlu0 %1852
        %v1854 = vsel %vm798, %v1845, %v1847
        %v1855 = vsel %vm798, %v1847, %v1849
        %v1856 = vsel %vm798, %v1849, %v1851
        %v1857 = vsel %vm798, %v1851, %v1853
        %v1863 = vmax.f32 %v1839, %v1854
        %v1864 = vmax.f32 %v1840, %v1855
        %v1865 = vmax.f32 %v1841, %v1856
        %v1866 = vmax.f32 %v1842, %v1857
        %v1867 = vmax.f32 %v1843, %v1853
        %1868 = vrot.lane.b32.xlu0 %v1737, 98
        %v1869 = vpop.permute.xlu0 %1868
        %1870 = vrot.lane.b32.xlu0 %v1738, 98
        %v1871 = vpop.permute.xlu0 %1870
        %1872 = vrot.lane.b32.xlu0 %v1739, 98
        %v1873 = vpop.permute.xlu0 %1872
        %1874 = vrot.lane.b32.xlu0 %v1740, 98
        %v1875 = vpop.permute.xlu0 %1874
        %1876 = vrot.lane.b32.xlu0 %v1741, 98
        %v1877 = vpop.permute.xlu0 %1876
        %v1878 = vsel %vm847, %v1869, %v1871
        %v1879 = vsel %vm847, %v1871, %v1873
        %v1880 = vsel %vm847, %v1873, %v1875
        %v1881 = vsel %vm847, %v1875, %v1877
        %v1887 = vmax.f32 %v1863, %v1878
        %v1888 = vmax.f32 %v1864, %v1879
        %v1889 = vmax.f32 %v1865, %v1880
        %v1890 = vmax.f32 %v1866, %v1881
        %v1891 = vmax.f32 %v1867, %v1877
        %1892 = vrot.lane.b32.xlu0 %v1737, 97
        %v1893 = vpop.permute.xlu0 %1892
        %1894 = vrot.lane.b32.xlu0 %v1738, 97
        %v1895 = vpop.permute.xlu0 %1894
        %1896 = vrot.lane.b32.xlu0 %v1739, 97
        %v1897 = vpop.permute.xlu0 %1896
        %1898 = vrot.lane.b32.xlu0 %v1740, 97
        %v1899 = vpop.permute.xlu0 %1898
        %1900 = vrot.lane.b32.xlu0 %v1741, 97
        %v1901 = vpop.permute.xlu0 %1900
        %v1902 = vsel %vm896, %v1893, %v1895
        %v1903 = vsel %vm896, %v1895, %v1897
        %v1904 = vsel %vm896, %v1897, %v1899
        %v1905 = vsel %vm896, %v1899, %v1901
        %v1911 = vmax.f32 %v1887, %v1902
        %v1912 = vmax.f32 %v1888, %v1903
        %v1913 = vmax.f32 %v1889, %v1904
        %v1914 = vmax.f32 %v1890, %v1905
        %v1915 = vmax.f32 %v1891, %v1901
        %1916 = vrot.lane.b32.xlu0 %v1737, 72
        %v1917 = vpop.permute.xlu0 %1916
        %1918 = vrot.lane.b32.xlu0 %v1738, 72
        %v1919 = vpop.permute.xlu0 %1918
        %1920 = vrot.lane.b32.xlu0 %v1739, 72
        %v1921 = vpop.permute.xlu0 %1920
        %1922 = vrot.lane.b32.xlu0 %v1740, 72
        %v1923 = vpop.permute.xlu0 %1922
        %1924 = vrot.lane.b32.xlu0 %v1741, 72
        %v1925 = vpop.permute.xlu0 %1924
        %v1926 = vsel %vm994, %v1917, %v1919
        %v1927 = vsel %vm994, %v1919, %v1921
        %v1928 = vsel %vm994, %v1921, %v1923
        %v1929 = vsel %vm994, %v1923, %v1925
        %v1935 = vmax.f32 %v1911, %v1926
        %v1936 = vmax.f32 %v1912, %v1927
        %v1937 = vmax.f32 %v1913, %v1928
        %v1938 = vmax.f32 %v1914, %v1929
        %v1939 = vmax.f32 %v1915, %v1925
        %1940 = vrot.lane.b32.xlu0 %v1737, 71
        %v1941 = vpop.permute.xlu0 %1940
        %1942 = vrot.lane.b32.xlu0 %v1738, 71
        %v1943 = vpop.permute.xlu0 %1942
        %1944 = vrot.lane.b32.xlu0 %v1739, 71
        %v1945 = vpop.permute.xlu0 %1944
        %1946 = vrot.lane.b32.xlu0 %v1740, 71
        %v1947 = vpop.permute.xlu0 %1946
        %1948 = vrot.lane.b32.xlu0 %v1741, 71
        %v1949 = vpop.permute.xlu0 %1948
        %v1950 = vsel %vm1043, %v1941, %v1943
        %v1951 = vsel %vm1043, %v1943, %v1945
        %v1952 = vsel %vm1043, %v1945, %v1947
        %v1953 = vsel %vm1043, %v1947, %v1949
        %v1959 = vmax.f32 %v1935, %v1950
        %v1960 = vmax.f32 %v1936, %v1951
        %v1961 = vmax.f32 %v1937, %v1952
        %v1962 = vmax.f32 %v1938, %v1953
        %v1963 = vmax.f32 %v1939, %v1949
        %1964 = vrot.lane.b32.xlu0 %v1737, 70
        %v1965 = vpop.permute.xlu0 %1964
        %1966 = vrot.lane.b32.xlu0 %v1738, 70
        %v1967 = vpop.permute.xlu0 %1966
        %1968 = vrot.lane.b32.xlu0 %v1739, 70
        %v1969 = vpop.permute.xlu0 %1968
        %1970 = vrot.lane.b32.xlu0 %v1740, 70
        %v1971 = vpop.permute.xlu0 %1970
        %1972 = vrot.lane.b32.xlu0 %v1741, 70
        %v1973 = vpop.permute.xlu0 %1972
        %v1974 = vsel %vm1092, %v1965, %v1967
        %v1975 = vsel %vm1092, %v1967, %v1969
        %v1976 = vsel %vm1092, %v1969, %v1971
        %v1977 = vsel %vm1092, %v1971, %v1973
        %v1983 = vmax.f32 %v1959, %v1974
        %v1984 = vmax.f32 %v1960, %v1975
        %v1985 = vmax.f32 %v1961, %v1976
        %v1986 = vmax.f32 %v1962, %v1977
        %v1987 = vmax.f32 %v1963, %v1973
        %1988 = vrot.lane.b32.xlu0 %v1737, 69
        %v1989 = vpop.permute.xlu0 %1988
        %1990 = vrot.lane.b32.xlu0 %v1738, 69
        %v1991 = vpop.permute.xlu0 %1990
        %1992 = vrot.lane.b32.xlu0 %v1739, 69
        %v1993 = vpop.permute.xlu0 %1992
        %1994 = vrot.lane.b32.xlu0 %v1740, 69
        %v1995 = vpop.permute.xlu0 %1994
        %1996 = vrot.lane.b32.xlu0 %v1741, 69
        %v1997 = vpop.permute.xlu0 %1996
        %v1998 = vsel %vm1141, %v1989, %v1991
        %v1999 = vsel %vm1141, %v1991, %v1993
        %v2000 = vsel %vm1141, %v1993, %v1995
        %v2001 = vsel %vm1141, %v1995, %v1997
        %v2007 = vmax.f32 %v1983, %v1998
        %v2008 = vmax.f32 %v1984, %v1999
        %v2009 = vmax.f32 %v1985, %v2000
        %v2010 = vmax.f32 %v1986, %v2001
        %v2011 = vmax.f32 %v1987, %v1997
        %2013 = vrot.lane.b32.xlu0 %v1737, 44
        %v2014 = vpop.permute.xlu0 %2013
        %2015 = vrot.lane.b32.xlu0 %v1738, 44
        %v2016 = vpop.permute.xlu0 %2015
        %2017 = vrot.lane.b32.xlu0 %v1739, 44
        %v2018 = vpop.permute.xlu0 %2017
        %2019 = vrot.lane.b32.xlu0 %v1740, 44
        %v2020 = vpop.permute.xlu0 %2019
        %2021 = vrot.lane.b32.xlu0 %v1741, 44
        %v2022 = vpop.permute.xlu0 %2021
        %2023 = vrot.lane.b32.xlu0 %v1742, 44
        %v2024 = vpop.permute.xlu0 %2023
        %v2025 = vsel %vm1239, %v2014, %v2016
        %v2026 = vsel %vm1239, %v2016, %v2018
        %v2027 = vsel %vm1239, %v2018, %v2020
        %v2028 = vsel %vm1239, %v2020, %v2022
        %v2029 = vsel %vm1239, %v2022, %v2024
        %v2035 = vmax.f32 %v2007, %v2025
        %v2036 = vmax.f32 %v2008, %v2026
        %v2037 = vmax.f32 %v2009, %v2027
        %v2038 = vmax.f32 %v2010, %v2028
        %v2039 = vmax.f32 %v2011, %v2029
        %2040 = vrot.lane.b32.xlu0 %v1737, 43
        %v2041 = vpop.permute.xlu0 %2040
        %2042 = vrot.lane.b32.xlu0 %v1738, 43
        %v2043 = vpop.permute.xlu0 %2042
        %2044 = vrot.lane.b32.xlu0 %v1739, 43
        %v2045 = vpop.permute.xlu0 %2044
        %2046 = vrot.lane.b32.xlu0 %v1740, 43
        %v2047 = vpop.permute.xlu0 %2046
        %2048 = vrot.lane.b32.xlu0 %v1741, 43
        %v2049 = vpop.permute.xlu0 %2048
        %2050 = vrot.lane.b32.xlu0 %v1742, 43
        %v2051 = vpop.permute.xlu0 %2050
        %v2052 = vsel %vm1288, %v2041, %v2043
        %v2053 = vsel %vm1288, %v2043, %v2045
        %v2054 = vsel %vm1288, %v2045, %v2047
        %v2055 = vsel %vm1288, %v2047, %v2049
        %v2056 = vsel %vm1288, %v2049, %v2051
        %v2062 = vmax.f32 %v2035, %v2052
        %v2063 = vmax.f32 %v2036, %v2053
        %v2064 = vmax.f32 %v2037, %v2054
        %v2065 = vmax.f32 %v2038, %v2055
        %v2066 = vmax.f32 %v2039, %v2056
        %2067 = vrot.lane.b32.xlu0 %v1737, 42
        %v2068 = vpop.permute.xlu0 %2067
        %2069 = vrot.lane.b32.xlu0 %v1738, 42
        %v2070 = vpop.permute.xlu0 %2069
        %2071 = vrot.lane.b32.xlu0 %v1739, 42
        %v2072 = vpop.permute.xlu0 %2071
        %2073 = vrot.lane.b32.xlu0 %v1740, 42
        %v2074 = vpop.permute.xlu0 %2073
        %2075 = vrot.lane.b32.xlu0 %v1741, 42
        %v2076 = vpop.permute.xlu0 %2075
        %2077 = vrot.lane.b32.xlu0 %v1742, 42
        %v2078 = vpop.permute.xlu0 %2077
        %v2079 = vsel %vm1337, %v2068, %v2070
        %v2080 = vsel %vm1337, %v2070, %v2072
        %v2081 = vsel %vm1337, %v2072, %v2074
        %v2082 = vsel %vm1337, %v2074, %v2076
        %v2083 = vsel %vm1337, %v2076, %v2078
        %v2089 = vmax.f32 %v2062, %v2079
        %v2090 = vmax.f32 %v2063, %v2080
        %v2091 = vmax.f32 %v2064, %v2081
        %v2092 = vmax.f32 %v2065, %v2082
        %v2093 = vmax.f32 %v2066, %v2083
        %2094 = vrot.lane.b32.xlu0 %v1737, 41
        %v2095 = vpop.permute.xlu0 %2094
        %2096 = vrot.lane.b32.xlu0 %v1738, 41
        %v2097 = vpop.permute.xlu0 %2096
        %2098 = vrot.lane.b32.xlu0 %v1739, 41
        %v2099 = vpop.permute.xlu0 %2098
        %2100 = vrot.lane.b32.xlu0 %v1740, 41
        %v2101 = vpop.permute.xlu0 %2100
        %2102 = vrot.lane.b32.xlu0 %v1741, 41
        %v2103 = vpop.permute.xlu0 %2102
        %2104 = vrot.lane.b32.xlu0 %v1742, 41
        %v2105 = vpop.permute.xlu0 %2104
        %v2106 = vsel %vm1386, %v2095, %v2097
        %v2107 = vsel %vm1386, %v2097, %v2099
        %v2108 = vsel %vm1386, %v2099, %v2101
        %v2109 = vsel %vm1386, %v2101, %v2103
        %v2110 = vsel %vm1386, %v2103, %v2105
        %v2116 = vmax.f32 %v2089, %v2106
        %v2117 = vmax.f32 %v2090, %v2107
        %v2118 = vmax.f32 %v2091, %v2108
        %v2119 = vmax.f32 %v2092, %v2109
        %v2120 = vmax.f32 %v2093, %v2110
        %v2121 = vld [vmem:[%s3] sm:$0x3f]
        %s2122 = scalar_lea.vmem %s3, 8
        %v2123 = vld [vmem:[%s2122] sm:$0x3f]
        %2128 = vrot.lane.b32.xlu0 %v2116, 127
        %v2129 = vpop.permute.xlu0 %2128
        %2130 = vrot.lane.b32.xlu0 %v2117, 127
        %v2131 = vpop.permute.xlu0 %2130
        %2132 = vrot.lane.b32.xlu0 %v2118, 127
        %v2133 = vpop.permute.xlu0 %2132
        %2134 = vrot.lane.b32.xlu0 %v2119, 127
        %v2135 = vpop.permute.xlu0 %2134
        %v2136 = vsel %vm553, %v2129, %v2131
        %v2137 = vsel %vm553, %v2131, %v2133
        %v2138 = vsel %vm553, %v2133, %v2135
        %vm2139 = vcmask 23552
        %v2141 = vsel %vm2139, %v2123, 0
        %vm2143 = vcmask 1042432
        %v2144 = vsel %vm2143, %v2136, 0
        %v2146 = vsel %vm2143, %v2137, 0
        %v2148 = vsel %vm2143, %v2138, 0
        %v2150 = vsel %vm2143, %v2135, 0
        %2152 = vmatpush.msra.mxu0 0.0
        %2153 = vmatpush.msra.mxu0 0.0
        %2154 = vmatpush.msra.mxu0 0.0
        %2155 = vmatpush.msra.mxu0 0.0
        %2156 = vmatpush.msra.mxu0 0.0
        %2157 = vmatpush.msra.mxu0 0.0
        %2158 = vmatpush.msra.mxu0 0.0
        %2159 = vmatpush.msra.mxu0 0.0
        %2160 = vmatpush.msra.mxu0 0.0
        %2161 = vmatpush.msra.mxu0 0.0
        %2162 = vmatpush.msra.mxu0 0.0
        %2163 = vmatpush.msra.mxu0 0.0
        %2164 = vmatpush.msra.mxu0 0.0
        %2165 = vmatpush.msra.mxu0 0.0
        %2166 = vmatpush.msra.mxu0 0.0
        %2167 = vmatpush.msra.mxu0 %v2144
        %2168 = vmatmul.f32.gmra.mxu0 %v2141
        %v2169 = vpop.f32.mrf.mxu0
        %v2170 = vadd.f32 0.0, %v2169
        %2171 = vdwg.mxu0
        %2172 = vmatpush.msra.mxu0 0.0
        %2173 = vmatpush.msra.mxu0 0.0
        %2174 = vmatpush.msra.mxu0 0.0
        %2175 = vmatpush.msra.mxu0 0.0
        %2176 = vmatpush.msra.mxu0 0.0
        %2177 = vmatpush.msra.mxu0 0.0
        %2178 = vmatpush.msra.mxu0 0.0
        %2179 = vmatpush.msra.mxu0 0.0
        %2180 = vmatpush.msra.mxu0 0.0
        %2181 = vmatpush.msra.mxu0 0.0
        %2182 = vmatpush.msra.mxu0 0.0
        %2183 = vmatpush.msra.mxu0 0.0
        %2184 = vmatpush.msra.mxu0 0.0
        %2185 = vmatpush.msra.mxu0 0.0
        %2186 = vmatpush.msra.mxu0 0.0
        %2187 = vmatpush.msra.mxu0 %v2146
        %2188 = vmatmul.f32.gmra.mxu0 %v2141
        %v2189 = vpop.f32.mrf.mxu0
        %v2190 = vadd.f32 0.0, %v2189
        %2191 = vdwg.mxu0
        %2192 = vmatpush.msra.mxu0 0.0
        %2193 = vmatpush.msra.mxu0 0.0
        %2194 = vmatpush.msra.mxu0 0.0
        %2195 = vmatpush.msra.mxu0 0.0
        %2196 = vmatpush.msra.mxu0 0.0
        %2197 = vmatpush.msra.mxu0 0.0
        %2198 = vmatpush.msra.mxu0 0.0
        %2199 = vmatpush.msra.mxu0 0.0
        %2200 = vmatpush.msra.mxu0 0.0
        %2201 = vmatpush.msra.mxu0 0.0
        %2202 = vmatpush.msra.mxu0 0.0
        %2203 = vmatpush.msra.mxu0 0.0
        %2204 = vmatpush.msra.mxu0 0.0
        %2205 = vmatpush.msra.mxu0 0.0
        %2206 = vmatpush.msra.mxu0 0.0
        %2207 = vmatpush.msra.mxu0 %v2148
        %2208 = vmatmul.f32.gmra.mxu0 %v2141
        %v2209 = vpop.f32.mrf.mxu0
        %v2210 = vadd.f32 0.0, %v2209
        %2211 = vdwg.mxu0
        %2212 = vmatpush.msra.mxu0 0.0
        %2213 = vmatpush.msra.mxu0 0.0
        %2214 = vmatpush.msra.mxu0 0.0
        %2215 = vmatpush.msra.mxu0 0.0
        %2216 = vmatpush.msra.mxu0 0.0
        %2217 = vmatpush.msra.mxu0 0.0
        %2218 = vmatpush.msra.mxu0 0.0
        %2219 = vmatpush.msra.mxu0 0.0
        %2220 = vmatpush.msra.mxu0 0.0
        %2221 = vmatpush.msra.mxu0 0.0
        %2222 = vmatpush.msra.mxu0 0.0
        %2223 = vmatpush.msra.mxu0 0.0
        %2224 = vmatpush.msra.mxu0 0.0
        %2225 = vmatpush.msra.mxu0 0.0
        %2226 = vmatpush.msra.mxu0 0.0
        %2227 = vmatpush.msra.mxu0 %v2150
        %2228 = vmatmul.f32.gmra.mxu0 %v2141
        %v2229 = vpop.f32.mrf.mxu0
        %v2230 = vadd.f32 0.0, %v2229
        %2231 = vdwg.mxu0
        %v2233 = vsel %vm2139, %v2121, 0
        %v2235 = vsel %vm2143, %v2116, 0
        %v2237 = vsel %vm2143, %v2117, 0
        %v2239 = vsel %vm2143, %v2118, 0
        %v2241 = vsel %vm2143, %v2119, 0
        %2243 = vmatpush.msra.mxu0 0.0
        %2244 = vmatpush.msra.mxu0 0.0
        %2245 = vmatpush.msra.mxu0 0.0
        %2246 = vmatpush.msra.mxu0 0.0
        %2247 = vmatpush.msra.mxu0 0.0
        %2248 = vmatpush.msra.mxu0 0.0
        %2249 = vmatpush.msra.mxu0 0.0
        %2250 = vmatpush.msra.mxu0 0.0
        %2251 = vmatpush.msra.mxu0 0.0
        %2252 = vmatpush.msra.mxu0 0.0
        %2253 = vmatpush.msra.mxu0 0.0
        %2254 = vmatpush.msra.mxu0 0.0
        %2255 = vmatpush.msra.mxu0 0.0
        %2256 = vmatpush.msra.mxu0 0.0
        %2257 = vmatpush.msra.mxu0 0.0
        %2258 = vmatpush.msra.mxu0 %v2235
        %2259 = vmatmul.f32.gmra.mxu0 %v2233
        %v2260 = vpop.f32.mrf.mxu0
        %v2261 = vadd.f32 %v2170, %v2260
        %2262 = vdwg.mxu0
        %2263 = vmatpush.msra.mxu0 0.0
        %2264 = vmatpush.msra.mxu0 0.0
        %2265 = vmatpush.msra.mxu0 0.0
        %2266 = vmatpush.msra.mxu0 0.0
        %2267 = vmatpush.msra.mxu0 0.0
        %2268 = vmatpush.msra.mxu0 0.0
        %2269 = vmatpush.msra.mxu0 0.0
        %2270 = vmatpush.msra.mxu0 0.0
        %2271 = vmatpush.msra.mxu0 0.0
        %2272 = vmatpush.msra.mxu0 0.0
        %2273 = vmatpush.msra.mxu0 0.0
        %2274 = vmatpush.msra.mxu0 0.0
        %2275 = vmatpush.msra.mxu0 0.0
        %2276 = vmatpush.msra.mxu0 0.0
        %2277 = vmatpush.msra.mxu0 0.0
        %2278 = vmatpush.msra.mxu0 %v2237
        %2279 = vmatmul.f32.gmra.mxu0 %v2233
        %v2280 = vpop.f32.mrf.mxu0
        %v2281 = vadd.f32 %v2190, %v2280
        %2282 = vdwg.mxu0
        %2283 = vmatpush.msra.mxu0 0.0
        %2284 = vmatpush.msra.mxu0 0.0
        %2285 = vmatpush.msra.mxu0 0.0
        %2286 = vmatpush.msra.mxu0 0.0
        %2287 = vmatpush.msra.mxu0 0.0
        %2288 = vmatpush.msra.mxu0 0.0
        %2289 = vmatpush.msra.mxu0 0.0
        %2290 = vmatpush.msra.mxu0 0.0
        %2291 = vmatpush.msra.mxu0 0.0
        %2292 = vmatpush.msra.mxu0 0.0
        %2293 = vmatpush.msra.mxu0 0.0
        %2294 = vmatpush.msra.mxu0 0.0
        %2295 = vmatpush.msra.mxu0 0.0
        %2296 = vmatpush.msra.mxu0 0.0
        %2297 = vmatpush.msra.mxu0 0.0
        %2298 = vmatpush.msra.mxu0 %v2239
        %2299 = vmatmul.f32.gmra.mxu0 %v2233
        %v2300 = vpop.f32.mrf.mxu0
        %v2301 = vadd.f32 %v2210, %v2300
        %2302 = vdwg.mxu0
        %2303 = vmatpush.msra.mxu0 0.0
        %2304 = vmatpush.msra.mxu0 0.0
        %2305 = vmatpush.msra.mxu0 0.0
        %2306 = vmatpush.msra.mxu0 0.0
        %2307 = vmatpush.msra.mxu0 0.0
        %2308 = vmatpush.msra.mxu0 0.0
        %2309 = vmatpush.msra.mxu0 0.0
        %2310 = vmatpush.msra.mxu0 0.0
        %2311 = vmatpush.msra.mxu0 0.0
        %2312 = vmatpush.msra.mxu0 0.0
        %2313 = vmatpush.msra.mxu0 0.0
        %2314 = vmatpush.msra.mxu0 0.0
        %2315 = vmatpush.msra.mxu0 0.0
        %2316 = vmatpush.msra.mxu0 0.0
        %2317 = vmatpush.msra.mxu0 0.0
        %2318 = vmatpush.msra.mxu0 %v2241
        %2319 = vmatmul.f32.gmra.mxu0 %v2233
        %v2320 = vpop.f32.mrf.mxu0
        %v2321 = vadd.f32 %v2230, %v2320
        %2322 = vdwg.mxu0
        %s2323 = scalar_lea.vmem %s3, 16
        %v2324 = vld [vmem:[%s2323] sm:$0x3f]
        %2325 = vrot.lane.b32.xlu0 %v2116, 126
        %v2326 = vpop.permute.xlu0 %2325
        %2327 = vrot.lane.b32.xlu0 %v2117, 126
        %v2328 = vpop.permute.xlu0 %2327
        %2329 = vrot.lane.b32.xlu0 %v2118, 126
        %v2330 = vpop.permute.xlu0 %2329
        %2331 = vrot.lane.b32.xlu0 %v2119, 126
        %v2332 = vpop.permute.xlu0 %2331
        %v2333 = vsel %vm602, %v2326, %v2328
        %v2334 = vsel %vm602, %v2328, %v2330
        %v2335 = vsel %vm602, %v2330, %v2332
        %v2337 = vsel %vm2139, %v2324, 0
        %v2339 = vsel %vm2143, %v2333, 0
        %v2341 = vsel %vm2143, %v2334, 0
        %v2343 = vsel %vm2143, %v2335, 0
        %v2345 = vsel %vm2143, %v2332, 0
        %2347 = vmatpush.msra.mxu0 0.0
        %2348 = vmatpush.msra.mxu0 0.0
        %2349 = vmatpush.msra.mxu0 0.0
        %2350 = vmatpush.msra.mxu0 0.0
        %2351 = vmatpush.msra.mxu0 0.0
        %2352 = vmatpush.msra.mxu0 0.0
        %2353 = vmatpush.msra.mxu0 0.0
        %2354 = vmatpush.msra.mxu0 0.0
        %2355 = vmatpush.msra.mxu0 0.0
        %2356 = vmatpush.msra.mxu0 0.0
        %2357 = vmatpush.msra.mxu0 0.0
        %2358 = vmatpush.msra.mxu0 0.0
        %2359 = vmatpush.msra.mxu0 0.0
        %2360 = vmatpush.msra.mxu0 0.0
        %2361 = vmatpush.msra.mxu0 0.0
        %2362 = vmatpush.msra.mxu0 %v2339
        %2363 = vmatmul.f32.gmra.mxu0 %v2337
        %v2364 = vpop.f32.mrf.mxu0
        %v2365 = vadd.f32 0.0, %v2364
        %2366 = vdwg.mxu0
        %2367 = vmatpush.msra.mxu0 0.0
        %2368 = vmatpush.msra.mxu0 0.0
        %2369 = vmatpush.msra.mxu0 0.0
        %2370 = vmatpush.msra.mxu0 0.0
        %2371 = vmatpush.msra.mxu0 0.0
        %2372 = vmatpush.msra.mxu0 0.0
        %2373 = vmatpush.msra.mxu0 0.0
        %2374 = vmatpush.msra.mxu0 0.0
        %2375 = vmatpush.msra.mxu0 0.0
        %2376 = vmatpush.msra.mxu0 0.0
        %2377 = vmatpush.msra.mxu0 0.0
        %2378 = vmatpush.msra.mxu0 0.0
        %2379 = vmatpush.msra.mxu0 0.0
        %2380 = vmatpush.msra.mxu0 0.0
        %2381 = vmatpush.msra.mxu0 0.0
        %2382 = vmatpush.msra.mxu0 %v2341
        %2383 = vmatmul.f32.gmra.mxu0 %v2337
        %v2384 = vpop.f32.mrf.mxu0
        %v2385 = vadd.f32 0.0, %v2384
        %2386 = vdwg.mxu0
        %2387 = vmatpush.msra.mxu0 0.0
        %2388 = vmatpush.msra.mxu0 0.0
        %2389 = vmatpush.msra.mxu0 0.0
        %2390 = vmatpush.msra.mxu0 0.0
        %2391 = vmatpush.msra.mxu0 0.0
        %2392 = vmatpush.msra.mxu0 0.0
        %2393 = vmatpush.msra.mxu0 0.0
        %2394 = vmatpush.msra.mxu0 0.0
        %2395 = vmatpush.msra.mxu0 0.0
        %2396 = vmatpush.msra.mxu0 0.0
        %2397 = vmatpush.msra.mxu0 0.0
        %2398 = vmatpush.msra.mxu0 0.0
        %2399 = vmatpush.msra.mxu0 0.0
        %2400 = vmatpush.msra.mxu0 0.0
        %2401 = vmatpush.msra.mxu0 0.0
        %2402 = vmatpush.msra.mxu0 %v2343
        %2403 = vmatmul.f32.gmra.mxu0 %v2337
        %v2404 = vpop.f32.mrf.mxu0
        %v2405 = vadd.f32 0.0, %v2404
        %2406 = vdwg.mxu0
        %2407 = vmatpush.msra.mxu0 0.0
        %2408 = vmatpush.msra.mxu0 0.0
        %2409 = vmatpush.msra.mxu0 0.0
        %2410 = vmatpush.msra.mxu0 0.0
        %2411 = vmatpush.msra.mxu0 0.0
        %2412 = vmatpush.msra.mxu0 0.0
        %2413 = vmatpush.msra.mxu0 0.0
        %2414 = vmatpush.msra.mxu0 0.0
        %2415 = vmatpush.msra.mxu0 0.0
        %2416 = vmatpush.msra.mxu0 0.0
        %2417 = vmatpush.msra.mxu0 0.0
        %2418 = vmatpush.msra.mxu0 0.0
        %2419 = vmatpush.msra.mxu0 0.0
        %2420 = vmatpush.msra.mxu0 0.0
        %2421 = vmatpush.msra.mxu0 0.0
        %2422 = vmatpush.msra.mxu0 %v2345
        %2423 = vmatmul.f32.gmra.mxu0 %v2337
        %v2424 = vpop.f32.mrf.mxu0
        %v2425 = vadd.f32 0.0, %v2424
        %2426 = vdwg.mxu0
        %v2427 = vadd.f32 %v2261, %v2365
        %v2428 = vadd.f32 %v2281, %v2385
        %v2429 = vadd.f32 %v2301, %v2405
        %v2430 = vadd.f32 %v2321, %v2425
        %s2431 = scalar_lea.vmem %s3, 24
        %v2432 = vld [vmem:[%s2431] sm:$0x3f]
        %2433 = vrot.lane.b32.xlu0 %v2116, 125
        %v2434 = vpop.permute.xlu0 %2433
        %2435 = vrot.lane.b32.xlu0 %v2117, 125
        %v2436 = vpop.permute.xlu0 %2435
        %2437 = vrot.lane.b32.xlu0 %v2118, 125
        %v2438 = vpop.permute.xlu0 %2437
        %2439 = vrot.lane.b32.xlu0 %v2119, 125
        %v2440 = vpop.permute.xlu0 %2439
        %v2441 = vsel %vm651, %v2434, %v2436
        %v2442 = vsel %vm651, %v2436, %v2438
        %v2443 = vsel %vm651, %v2438, %v2440
        %v2445 = vsel %vm2139, %v2432, 0
        %v2447 = vsel %vm2143, %v2441, 0
        %v2449 = vsel %vm2143, %v2442, 0
        %v2451 = vsel %vm2143, %v2443, 0
        %v2453 = vsel %vm2143, %v2440, 0
        %2455 = vmatpush.msra.mxu0 0.0
        %2456 = vmatpush.msra.mxu0 0.0
        %2457 = vmatpush.msra.mxu0 0.0
        %2458 = vmatpush.msra.mxu0 0.0
        %2459 = vmatpush.msra.mxu0 0.0
        %2460 = vmatpush.msra.mxu0 0.0
        %2461 = vmatpush.msra.mxu0 0.0
        %2462 = vmatpush.msra.mxu0 0.0
        %2463 = vmatpush.msra.mxu0 0.0
        %2464 = vmatpush.msra.mxu0 0.0
        %2465 = vmatpush.msra.mxu0 0.0
        %2466 = vmatpush.msra.mxu0 0.0
        %2467 = vmatpush.msra.mxu0 0.0
        %2468 = vmatpush.msra.mxu0 0.0
        %2469 = vmatpush.msra.mxu0 0.0
        %2470 = vmatpush.msra.mxu0 %v2447
        %2471 = vmatmul.f32.gmra.mxu0 %v2445
        %v2472 = vpop.f32.mrf.mxu0
        %v2473 = vadd.f32 0.0, %v2472
        %2474 = vdwg.mxu0
        %2475 = vmatpush.msra.mxu0 0.0
        %2476 = vmatpush.msra.mxu0 0.0
        %2477 = vmatpush.msra.mxu0 0.0
        %2478 = vmatpush.msra.mxu0 0.0
        %2479 = vmatpush.msra.mxu0 0.0
        %2480 = vmatpush.msra.mxu0 0.0
        %2481 = vmatpush.msra.mxu0 0.0
        %2482 = vmatpush.msra.mxu0 0.0
        %2483 = vmatpush.msra.mxu0 0.0
        %2484 = vmatpush.msra.mxu0 0.0
        %2485 = vmatpush.msra.mxu0 0.0
        %2486 = vmatpush.msra.mxu0 0.0
        %2487 = vmatpush.msra.mxu0 0.0
        %2488 = vmatpush.msra.mxu0 0.0
        %2489 = vmatpush.msra.mxu0 0.0
        %2490 = vmatpush.msra.mxu0 %v2449
        %2491 = vmatmul.f32.gmra.mxu0 %v2445
        %v2492 = vpop.f32.mrf.mxu0
        %v2493 = vadd.f32 0.0, %v2492
        %2494 = vdwg.mxu0
        %2495 = vmatpush.msra.mxu0 0.0
        %2496 = vmatpush.msra.mxu0 0.0
        %2497 = vmatpush.msra.mxu0 0.0
        %2498 = vmatpush.msra.mxu0 0.0
        %2499 = vmatpush.msra.mxu0 0.0
        %2500 = vmatpush.msra.mxu0 0.0
        %2501 = vmatpush.msra.mxu0 0.0
        %2502 = vmatpush.msra.mxu0 0.0
        %2503 = vmatpush.msra.mxu0 0.0
        %2504 = vmatpush.msra.mxu0 0.0
        %2505 = vmatpush.msra.mxu0 0.0
        %2506 = vmatpush.msra.mxu0 0.0
        %2507 = vmatpush.msra.mxu0 0.0
        %2508 = vmatpush.msra.mxu0 0.0
        %2509 = vmatpush.msra.mxu0 0.0
        %2510 = vmatpush.msra.mxu0 %v2451
        %2511 = vmatmul.f32.gmra.mxu0 %v2445
        %v2512 = vpop.f32.mrf.mxu0
        %v2513 = vadd.f32 0.0, %v2512
        %2514 = vdwg.mxu0
        %2515 = vmatpush.msra.mxu0 0.0
        %2516 = vmatpush.msra.mxu0 0.0
        %2517 = vmatpush.msra.mxu0 0.0
        %2518 = vmatpush.msra.mxu0 0.0
        %2519 = vmatpush.msra.mxu0 0.0
        %2520 = vmatpush.msra.mxu0 0.0
        %2521 = vmatpush.msra.mxu0 0.0
        %2522 = vmatpush.msra.mxu0 0.0
        %2523 = vmatpush.msra.mxu0 0.0
        %2524 = vmatpush.msra.mxu0 0.0
        %2525 = vmatpush.msra.mxu0 0.0
        %2526 = vmatpush.msra.mxu0 0.0
        %2527 = vmatpush.msra.mxu0 0.0
        %2528 = vmatpush.msra.mxu0 0.0
        %2529 = vmatpush.msra.mxu0 0.0
        %2530 = vmatpush.msra.mxu0 %v2453
        %2531 = vmatmul.f32.gmra.mxu0 %v2445
        %v2532 = vpop.f32.mrf.mxu0
        %v2533 = vadd.f32 0.0, %v2532
        %2534 = vdwg.mxu0
        %v2535 = vadd.f32 %v2427, %v2473
        %v2536 = vadd.f32 %v2428, %v2493
        %v2537 = vadd.f32 %v2429, %v2513
        %v2538 = vadd.f32 %v2430, %v2533
        %s2539 = scalar_lea.vmem %s3, 32
        %v2540 = vld [vmem:[%s2539] sm:$0x3f]
        %2541 = vrot.lane.b32.xlu0 %v2116, 124
        %v2542 = vpop.permute.xlu0 %2541
        %2543 = vrot.lane.b32.xlu0 %v2117, 124
        %v2544 = vpop.permute.xlu0 %2543
        %2545 = vrot.lane.b32.xlu0 %v2118, 124
        %v2546 = vpop.permute.xlu0 %2545
        %2547 = vrot.lane.b32.xlu0 %v2119, 124
        %v2548 = vpop.permute.xlu0 %2547
        %v2549 = vsel %vm700, %v2542, %v2544
        %v2550 = vsel %vm700, %v2544, %v2546
        %v2551 = vsel %vm700, %v2546, %v2548
        %v2553 = vsel %vm2139, %v2540, 0
        %v2555 = vsel %vm2143, %v2549, 0
        %v2557 = vsel %vm2143, %v2550, 0
        %v2559 = vsel %vm2143, %v2551, 0
        %v2561 = vsel %vm2143, %v2548, 0
        %2563 = vmatpush.msra.mxu0 0.0
        %2564 = vmatpush.msra.mxu0 0.0
        %2565 = vmatpush.msra.mxu0 0.0
        %2566 = vmatpush.msra.mxu0 0.0
        %2567 = vmatpush.msra.mxu0 0.0
        %2568 = vmatpush.msra.mxu0 0.0
        %2569 = vmatpush.msra.mxu0 0.0
        %2570 = vmatpush.msra.mxu0 0.0
        %2571 = vmatpush.msra.mxu0 0.0
        %2572 = vmatpush.msra.mxu0 0.0
        %2573 = vmatpush.msra.mxu0 0.0
        %2574 = vmatpush.msra.mxu0 0.0
        %2575 = vmatpush.msra.mxu0 0.0
        %2576 = vmatpush.msra.mxu0 0.0
        %2577 = vmatpush.msra.mxu0 0.0
        %2578 = vmatpush.msra.mxu0 %v2555
        %2579 = vmatmul.f32.gmra.mxu0 %v2553
        %v2580 = vpop.f32.mrf.mxu0
        %v2581 = vadd.f32 0.0, %v2580
        %2582 = vdwg.mxu0
        %2583 = vmatpush.msra.mxu0 0.0
        %2584 = vmatpush.msra.mxu0 0.0
        %2585 = vmatpush.msra.mxu0 0.0
        %2586 = vmatpush.msra.mxu0 0.0
        %2587 = vmatpush.msra.mxu0 0.0
        %2588 = vmatpush.msra.mxu0 0.0
        %2589 = vmatpush.msra.mxu0 0.0
        %2590 = vmatpush.msra.mxu0 0.0
        %2591 = vmatpush.msra.mxu0 0.0
        %2592 = vmatpush.msra.mxu0 0.0
        %2593 = vmatpush.msra.mxu0 0.0
        %2594 = vmatpush.msra.mxu0 0.0
        %2595 = vmatpush.msra.mxu0 0.0
        %2596 = vmatpush.msra.mxu0 0.0
        %2597 = vmatpush.msra.mxu0 0.0
        %2598 = vmatpush.msra.mxu0 %v2557
        %2599 = vmatmul.f32.gmra.mxu0 %v2553
        %v2600 = vpop.f32.mrf.mxu0
        %v2601 = vadd.f32 0.0, %v2600
        %2602 = vdwg.mxu0
        %2603 = vmatpush.msra.mxu0 0.0
        %2604 = vmatpush.msra.mxu0 0.0
        %2605 = vmatpush.msra.mxu0 0.0
        %2606 = vmatpush.msra.mxu0 0.0
        %2607 = vmatpush.msra.mxu0 0.0
        %2608 = vmatpush.msra.mxu0 0.0
        %2609 = vmatpush.msra.mxu0 0.0
        %2610 = vmatpush.msra.mxu0 0.0
        %2611 = vmatpush.msra.mxu0 0.0
        %2612 = vmatpush.msra.mxu0 0.0
        %2613 = vmatpush.msra.mxu0 0.0
        %2614 = vmatpush.msra.mxu0 0.0
        %2615 = vmatpush.msra.mxu0 0.0
        %2616 = vmatpush.msra.mxu0 0.0
        %2617 = vmatpush.msra.mxu0 0.0
        %2618 = vmatpush.msra.mxu0 %v2559
        %2619 = vmatmul.f32.gmra.mxu0 %v2553
        %v2620 = vpop.f32.mrf.mxu0
        %v2621 = vadd.f32 0.0, %v2620
        %2622 = vdwg.mxu0
        %2623 = vmatpush.msra.mxu0 0.0
        %2624 = vmatpush.msra.mxu0 0.0
        %2625 = vmatpush.msra.mxu0 0.0
        %2626 = vmatpush.msra.mxu0 0.0
        %2627 = vmatpush.msra.mxu0 0.0
        %2628 = vmatpush.msra.mxu0 0.0
        %2629 = vmatpush.msra.mxu0 0.0
        %2630 = vmatpush.msra.mxu0 0.0
        %2631 = vmatpush.msra.mxu0 0.0
        %2632 = vmatpush.msra.mxu0 0.0
        %2633 = vmatpush.msra.mxu0 0.0
        %2634 = vmatpush.msra.mxu0 0.0
        %2635 = vmatpush.msra.mxu0 0.0
        %2636 = vmatpush.msra.mxu0 0.0
        %2637 = vmatpush.msra.mxu0 0.0
        %2638 = vmatpush.msra.mxu0 %v2561
        %2639 = vmatmul.f32.gmra.mxu0 %v2553
        %v2640 = vpop.f32.mrf.mxu0
        %v2641 = vadd.f32 0.0, %v2640
        %2642 = vdwg.mxu0
        %v2643 = vadd.f32 %v2535, %v2581
        %v2644 = vadd.f32 %v2536, %v2601
        %v2645 = vadd.f32 %v2537, %v2621
        %v2646 = vadd.f32 %v2538, %v2641
        %s2647 = scalar_lea.vmem %s3, 40
        %v2648 = vld [vmem:[%s2647] sm:$0x3f]
        %2649 = vrot.lane.b32.xlu0 %v2116, 100
        %v2650 = vpop.permute.xlu0 %2649
        %2651 = vrot.lane.b32.xlu0 %v2117, 100
        %v2652 = vpop.permute.xlu0 %2651
        %2653 = vrot.lane.b32.xlu0 %v2118, 100
        %v2654 = vpop.permute.xlu0 %2653
        %2655 = vrot.lane.b32.xlu0 %v2119, 100
        %v2656 = vpop.permute.xlu0 %2655
        %v2657 = vsel %vm749, %v2650, %v2652
        %v2658 = vsel %vm749, %v2652, %v2654
        %v2659 = vsel %vm749, %v2654, %v2656
        %v2661 = vsel %vm2139, %v2648, 0
        %v2663 = vsel %vm2143, %v2657, 0
        %v2665 = vsel %vm2143, %v2658, 0
        %v2667 = vsel %vm2143, %v2659, 0
        %v2669 = vsel %vm2143, %v2656, 0
        %2671 = vmatpush.msra.mxu0 0.0
        %2672 = vmatpush.msra.mxu0 0.0
        %2673 = vmatpush.msra.mxu0 0.0
        %2674 = vmatpush.msra.mxu0 0.0
        %2675 = vmatpush.msra.mxu0 0.0
        %2676 = vmatpush.msra.mxu0 0.0
        %2677 = vmatpush.msra.mxu0 0.0
        %2678 = vmatpush.msra.mxu0 0.0
        %2679 = vmatpush.msra.mxu0 0.0
        %2680 = vmatpush.msra.mxu0 0.0
        %2681 = vmatpush.msra.mxu0 0.0
        %2682 = vmatpush.msra.mxu0 0.0
        %2683 = vmatpush.msra.mxu0 0.0
        %2684 = vmatpush.msra.mxu0 0.0
        %2685 = vmatpush.msra.mxu0 0.0
        %2686 = vmatpush.msra.mxu0 %v2663
        %2687 = vmatmul.f32.gmra.mxu0 %v2661
        %v2688 = vpop.f32.mrf.mxu0
        %v2689 = vadd.f32 0.0, %v2688
        %2690 = vdwg.mxu0
        %2691 = vmatpush.msra.mxu0 0.0
        %2692 = vmatpush.msra.mxu0 0.0
        %2693 = vmatpush.msra.mxu0 0.0
        %2694 = vmatpush.msra.mxu0 0.0
        %2695 = vmatpush.msra.mxu0 0.0
        %2696 = vmatpush.msra.mxu0 0.0
        %2697 = vmatpush.msra.mxu0 0.0
        %2698 = vmatpush.msra.mxu0 0.0
        %2699 = vmatpush.msra.mxu0 0.0
        %2700 = vmatpush.msra.mxu0 0.0
        %2701 = vmatpush.msra.mxu0 0.0
        %2702 = vmatpush.msra.mxu0 0.0
        %2703 = vmatpush.msra.mxu0 0.0
        %2704 = vmatpush.msra.mxu0 0.0
        %2705 = vmatpush.msra.mxu0 0.0
        %2706 = vmatpush.msra.mxu0 %v2665
        %2707 = vmatmul.f32.gmra.mxu0 %v2661
        %v2708 = vpop.f32.mrf.mxu0
        %v2709 = vadd.f32 0.0, %v2708
        %2710 = vdwg.mxu0
        %2711 = vmatpush.msra.mxu0 0.0
        %2712 = vmatpush.msra.mxu0 0.0
        %2713 = vmatpush.msra.mxu0 0.0
        %2714 = vmatpush.msra.mxu0 0.0
        %2715 = vmatpush.msra.mxu0 0.0
        %2716 = vmatpush.msra.mxu0 0.0
        %2717 = vmatpush.msra.mxu0 0.0
        %2718 = vmatpush.msra.mxu0 0.0
        %2719 = vmatpush.msra.mxu0 0.0
        %2720 = vmatpush.msra.mxu0 0.0
        %2721 = vmatpush.msra.mxu0 0.0
        %2722 = vmatpush.msra.mxu0 0.0
        %2723 = vmatpush.msra.mxu0 0.0
        %2724 = vmatpush.msra.mxu0 0.0
        %2725 = vmatpush.msra.mxu0 0.0
        %2726 = vmatpush.msra.mxu0 %v2667
        %2727 = vmatmul.f32.gmra.mxu0 %v2661
        %v2728 = vpop.f32.mrf.mxu0
        %v2729 = vadd.f32 0.0, %v2728
        %2730 = vdwg.mxu0
        %2731 = vmatpush.msra.mxu0 0.0
        %2732 = vmatpush.msra.mxu0 0.0
        %2733 = vmatpush.msra.mxu0 0.0
        %2734 = vmatpush.msra.mxu0 0.0
        %2735 = vmatpush.msra.mxu0 0.0
        %2736 = vmatpush.msra.mxu0 0.0
        %2737 = vmatpush.msra.mxu0 0.0
        %2738 = vmatpush.msra.mxu0 0.0
        %2739 = vmatpush.msra.mxu0 0.0
        %2740 = vmatpush.msra.mxu0 0.0
        %2741 = vmatpush.msra.mxu0 0.0
        %2742 = vmatpush.msra.mxu0 0.0
        %2743 = vmatpush.msra.mxu0 0.0
        %2744 = vmatpush.msra.mxu0 0.0
        %2745 = vmatpush.msra.mxu0 0.0
        %2746 = vmatpush.msra.mxu0 %v2669
        %2747 = vmatmul.f32.gmra.mxu0 %v2661
        %v2748 = vpop.f32.mrf.mxu0
        %v2749 = vadd.f32 0.0, %v2748
        %2750 = vdwg.mxu0
        %v2751 = vadd.f32 %v2643, %v2689
        %v2752 = vadd.f32 %v2644, %v2709
        %v2753 = vadd.f32 %v2645, %v2729
        %v2754 = vadd.f32 %v2646, %v2749
        %s2755 = scalar_lea.vmem %s3, 48
        %v2756 = vld [vmem:[%s2755] sm:$0x3f]
        %2757 = vrot.lane.b32.xlu0 %v2116, 99
        %v2758 = vpop.permute.xlu0 %2757
        %2759 = vrot.lane.b32.xlu0 %v2117, 99
        %v2760 = vpop.permute.xlu0 %2759
        %2761 = vrot.lane.b32.xlu0 %v2118, 99
        %v2762 = vpop.permute.xlu0 %2761
        %2763 = vrot.lane.b32.xlu0 %v2119, 99
        %v2764 = vpop.permute.xlu0 %2763
        %v2765 = vsel %vm798, %v2758, %v2760
        %v2766 = vsel %vm798, %v2760, %v2762
        %v2767 = vsel %vm798, %v2762, %v2764
        %v2769 = vsel %vm2139, %v2756, 0
        %v2771 = vsel %vm2143, %v2765, 0
        %v2773 = vsel %vm2143, %v2766, 0
        %v2775 = vsel %vm2143, %v2767, 0
        %v2777 = vsel %vm2143, %v2764, 0
        %2779 = vmatpush.msra.mxu0 0.0
        %2780 = vmatpush.msra.mxu0 0.0
        %2781 = vmatpush.msra.mxu0 0.0
        %2782 = vmatpush.msra.mxu0 0.0
        %2783 = vmatpush.msra.mxu0 0.0
        %2784 = vmatpush.msra.mxu0 0.0
        %2785 = vmatpush.msra.mxu0 0.0
        %2786 = vmatpush.msra.mxu0 0.0
        %2787 = vmatpush.msra.mxu0 0.0
        %2788 = vmatpush.msra.mxu0 0.0
        %2789 = vmatpush.msra.mxu0 0.0
        %2790 = vmatpush.msra.mxu0 0.0
        %2791 = vmatpush.msra.mxu0 0.0
        %2792 = vmatpush.msra.mxu0 0.0
        %2793 = vmatpush.msra.mxu0 0.0
        %2794 = vmatpush.msra.mxu0 %v2771
        %2795 = vmatmul.f32.gmra.mxu0 %v2769
        %v2796 = vpop.f32.mrf.mxu0
        %v2797 = vadd.f32 0.0, %v2796
        %2798 = vdwg.mxu0
        %2799 = vmatpush.msra.mxu0 0.0
        %2800 = vmatpush.msra.mxu0 0.0
        %2801 = vmatpush.msra.mxu0 0.0
        %2802 = vmatpush.msra.mxu0 0.0
        %2803 = vmatpush.msra.mxu0 0.0
        %2804 = vmatpush.msra.mxu0 0.0
        %2805 = vmatpush.msra.mxu0 0.0
        %2806 = vmatpush.msra.mxu0 0.0
        %2807 = vmatpush.msra.mxu0 0.0
        %2808 = vmatpush.msra.mxu0 0.0
        %2809 = vmatpush.msra.mxu0 0.0
        %2810 = vmatpush.msra.mxu0 0.0
        %2811 = vmatpush.msra.mxu0 0.0
        %2812 = vmatpush.msra.mxu0 0.0
        %2813 = vmatpush.msra.mxu0 0.0
        %2814 = vmatpush.msra.mxu0 %v2773
        %2815 = vmatmul.f32.gmra.mxu0 %v2769
        %v2816 = vpop.f32.mrf.mxu0
        %v2817 = vadd.f32 0.0, %v2816
        %2818 = vdwg.mxu0
        %2819 = vmatpush.msra.mxu0 0.0
        %2820 = vmatpush.msra.mxu0 0.0
        %2821 = vmatpush.msra.mxu0 0.0
        %2822 = vmatpush.msra.mxu0 0.0
        %2823 = vmatpush.msra.mxu0 0.0
        %2824 = vmatpush.msra.mxu0 0.0
        %2825 = vmatpush.msra.mxu0 0.0
        %2826 = vmatpush.msra.mxu0 0.0
        %2827 = vmatpush.msra.mxu0 0.0
        %2828 = vmatpush.msra.mxu0 0.0
        %2829 = vmatpush.msra.mxu0 0.0
        %2830 = vmatpush.msra.mxu0 0.0
        %2831 = vmatpush.msra.mxu0 0.0
        %2832 = vmatpush.msra.mxu0 0.0
        %2833 = vmatpush.msra.mxu0 0.0
        %2834 = vmatpush.msra.mxu0 %v2775
        %2835 = vmatmul.f32.gmra.mxu0 %v2769
        %v2836 = vpop.f32.mrf.mxu0
        %v2837 = vadd.f32 0.0, %v2836
        %2838 = vdwg.mxu0
        %2839 = vmatpush.msra.mxu0 0.0
        %2840 = vmatpush.msra.mxu0 0.0
        %2841 = vmatpush.msra.mxu0 0.0
        %2842 = vmatpush.msra.mxu0 0.0
        %2843 = vmatpush.msra.mxu0 0.0
        %2844 = vmatpush.msra.mxu0 0.0
        %2845 = vmatpush.msra.mxu0 0.0
        %2846 = vmatpush.msra.mxu0 0.0
        %2847 = vmatpush.msra.mxu0 0.0
        %2848 = vmatpush.msra.mxu0 0.0
        %2849 = vmatpush.msra.mxu0 0.0
        %2850 = vmatpush.msra.mxu0 0.0
        %2851 = vmatpush.msra.mxu0 0.0
        %2852 = vmatpush.msra.mxu0 0.0
        %2853 = vmatpush.msra.mxu0 0.0
        %2854 = vmatpush.msra.mxu0 %v2777
        %2855 = vmatmul.f32.gmra.mxu0 %v2769
        %v2856 = vpop.f32.mrf.mxu0
        %v2857 = vadd.f32 0.0, %v2856
        %2858 = vdwg.mxu0
        %v2859 = vadd.f32 %v2751, %v2797
        %v2860 = vadd.f32 %v2752, %v2817
        %v2861 = vadd.f32 %v2753, %v2837
        %v2862 = vadd.f32 %v2754, %v2857
        %s2863 = scalar_lea.vmem %s3, 56
        %v2864 = vld [vmem:[%s2863] sm:$0x3f]
        %2865 = vrot.lane.b32.xlu0 %v2116, 98
        %v2866 = vpop.permute.xlu0 %2865
        %2867 = vrot.lane.b32.xlu0 %v2117, 98
        %v2868 = vpop.permute.xlu0 %2867
        %2869 = vrot.lane.b32.xlu0 %v2118, 98
        %v2870 = vpop.permute.xlu0 %2869
        %2871 = vrot.lane.b32.xlu0 %v2119, 98
        %v2872 = vpop.permute.xlu0 %2871
        %v2873 = vsel %vm847, %v2866, %v2868
        %v2874 = vsel %vm847, %v2868, %v2870
        %v2875 = vsel %vm847, %v2870, %v2872
        %v2877 = vsel %vm2139, %v2864, 0
        %v2879 = vsel %vm2143, %v2873, 0
        %v2881 = vsel %vm2143, %v2874, 0
        %v2883 = vsel %vm2143, %v2875, 0
        %v2885 = vsel %vm2143, %v2872, 0
        %2887 = vmatpush.msra.mxu0 0.0
        %2888 = vmatpush.msra.mxu0 0.0
        %2889 = vmatpush.msra.mxu0 0.0
        %2890 = vmatpush.msra.mxu0 0.0
        %2891 = vmatpush.msra.mxu0 0.0
        %2892 = vmatpush.msra.mxu0 0.0
        %2893 = vmatpush.msra.mxu0 0.0
        %2894 = vmatpush.msra.mxu0 0.0
        %2895 = vmatpush.msra.mxu0 0.0
        %2896 = vmatpush.msra.mxu0 0.0
        %2897 = vmatpush.msra.mxu0 0.0
        %2898 = vmatpush.msra.mxu0 0.0
        %2899 = vmatpush.msra.mxu0 0.0
        %2900 = vmatpush.msra.mxu0 0.0
        %2901 = vmatpush.msra.mxu0 0.0
        %2902 = vmatpush.msra.mxu0 %v2879
        %2903 = vmatmul.f32.gmra.mxu0 %v2877
        %v2904 = vpop.f32.mrf.mxu0
        %v2905 = vadd.f32 0.0, %v2904
        %2906 = vdwg.mxu0
        %2907 = vmatpush.msra.mxu0 0.0
        %2908 = vmatpush.msra.mxu0 0.0
        %2909 = vmatpush.msra.mxu0 0.0
        %2910 = vmatpush.msra.mxu0 0.0
        %2911 = vmatpush.msra.mxu0 0.0
        %2912 = vmatpush.msra.mxu0 0.0
        %2913 = vmatpush.msra.mxu0 0.0
        %2914 = vmatpush.msra.mxu0 0.0
        %2915 = vmatpush.msra.mxu0 0.0
        %2916 = vmatpush.msra.mxu0 0.0
        %2917 = vmatpush.msra.mxu0 0.0
        %2918 = vmatpush.msra.mxu0 0.0
        %2919 = vmatpush.msra.mxu0 0.0
        %2920 = vmatpush.msra.mxu0 0.0
        %2921 = vmatpush.msra.mxu0 0.0
        %2922 = vmatpush.msra.mxu0 %v2881
        %2923 = vmatmul.f32.gmra.mxu0 %v2877
        %v2924 = vpop.f32.mrf.mxu0
        %v2925 = vadd.f32 0.0, %v2924
        %2926 = vdwg.mxu0
        %2927 = vmatpush.msra.mxu0 0.0
        %2928 = vmatpush.msra.mxu0 0.0
        %2929 = vmatpush.msra.mxu0 0.0
        %2930 = vmatpush.msra.mxu0 0.0
        %2931 = vmatpush.msra.mxu0 0.0
        %2932 = vmatpush.msra.mxu0 0.0
        %2933 = vmatpush.msra.mxu0 0.0
        %2934 = vmatpush.msra.mxu0 0.0
        %2935 = vmatpush.msra.mxu0 0.0
        %2936 = vmatpush.msra.mxu0 0.0
        %2937 = vmatpush.msra.mxu0 0.0
        %2938 = vmatpush.msra.mxu0 0.0
        %2939 = vmatpush.msra.mxu0 0.0
        %2940 = vmatpush.msra.mxu0 0.0
        %2941 = vmatpush.msra.mxu0 0.0
        %2942 = vmatpush.msra.mxu0 %v2883
        %2943 = vmatmul.f32.gmra.mxu0 %v2877
        %v2944 = vpop.f32.mrf.mxu0
        %v2945 = vadd.f32 0.0, %v2944
        %2946 = vdwg.mxu0
        %2947 = vmatpush.msra.mxu0 0.0
        %2948 = vmatpush.msra.mxu0 0.0
        %2949 = vmatpush.msra.mxu0 0.0
        %2950 = vmatpush.msra.mxu0 0.0
        %2951 = vmatpush.msra.mxu0 0.0
        %2952 = vmatpush.msra.mxu0 0.0
        %2953 = vmatpush.msra.mxu0 0.0
        %2954 = vmatpush.msra.mxu0 0.0
        %2955 = vmatpush.msra.mxu0 0.0
        %2956 = vmatpush.msra.mxu0 0.0
        %2957 = vmatpush.msra.mxu0 0.0
        %2958 = vmatpush.msra.mxu0 0.0
        %2959 = vmatpush.msra.mxu0 0.0
        %2960 = vmatpush.msra.mxu0 0.0
        %2961 = vmatpush.msra.mxu0 0.0
        %2962 = vmatpush.msra.mxu0 %v2885
        %2963 = vmatmul.f32.gmra.mxu0 %v2877
        %v2964 = vpop.f32.mrf.mxu0
        %v2965 = vadd.f32 0.0, %v2964
        %2966 = vdwg.mxu0
        %v2967 = vadd.f32 %v2859, %v2905
        %v2968 = vadd.f32 %v2860, %v2925
        %v2969 = vadd.f32 %v2861, %v2945
        %v2970 = vadd.f32 %v2862, %v2965
        %s2971 = scalar_lea.vmem %s3, 64
        %v2972 = vld [vmem:[%s2971] sm:$0x3f]
        %2973 = vrot.lane.b32.xlu0 %v2116, 97
        %v2974 = vpop.permute.xlu0 %2973
        %2975 = vrot.lane.b32.xlu0 %v2117, 97
        %v2976 = vpop.permute.xlu0 %2975
        %2977 = vrot.lane.b32.xlu0 %v2118, 97
        %v2978 = vpop.permute.xlu0 %2977
        %2979 = vrot.lane.b32.xlu0 %v2119, 97
        %v2980 = vpop.permute.xlu0 %2979
        %v2981 = vsel %vm896, %v2974, %v2976
        %v2982 = vsel %vm896, %v2976, %v2978
        %v2983 = vsel %vm896, %v2978, %v2980
        %v2985 = vsel %vm2139, %v2972, 0
        %v2987 = vsel %vm2143, %v2981, 0
        %v2989 = vsel %vm2143, %v2982, 0
        %v2991 = vsel %vm2143, %v2983, 0
        %v2993 = vsel %vm2143, %v2980, 0
        %2995 = vmatpush.msra.mxu0 0.0
        %2996 = vmatpush.msra.mxu0 0.0
        %2997 = vmatpush.msra.mxu0 0.0
        %2998 = vmatpush.msra.mxu0 0.0
        %2999 = vmatpush.msra.mxu0 0.0
        %3000 = vmatpush.msra.mxu0 0.0
        %3001 = vmatpush.msra.mxu0 0.0
        %3002 = vmatpush.msra.mxu0 0.0
        %3003 = vmatpush.msra.mxu0 0.0
        %3004 = vmatpush.msra.mxu0 0.0
        %3005 = vmatpush.msra.mxu0 0.0
        %3006 = vmatpush.msra.mxu0 0.0
        %3007 = vmatpush.msra.mxu0 0.0
        %3008 = vmatpush.msra.mxu0 0.0
        %3009 = vmatpush.msra.mxu0 0.0
        %3010 = vmatpush.msra.mxu0 %v2987
        %3011 = vmatmul.f32.gmra.mxu0 %v2985
        %v3012 = vpop.f32.mrf.mxu0
        %v3013 = vadd.f32 0.0, %v3012
        %3014 = vdwg.mxu0
        %3015 = vmatpush.msra.mxu0 0.0
        %3016 = vmatpush.msra.mxu0 0.0
        %3017 = vmatpush.msra.mxu0 0.0
        %3018 = vmatpush.msra.mxu0 0.0
        %3019 = vmatpush.msra.mxu0 0.0
        %3020 = vmatpush.msra.mxu0 0.0
        %3021 = vmatpush.msra.mxu0 0.0
        %3022 = vmatpush.msra.mxu0 0.0
        %3023 = vmatpush.msra.mxu0 0.0
        %3024 = vmatpush.msra.mxu0 0.0
        %3025 = vmatpush.msra.mxu0 0.0
        %3026 = vmatpush.msra.mxu0 0.0
        %3027 = vmatpush.msra.mxu0 0.0
        %3028 = vmatpush.msra.mxu0 0.0
        %3029 = vmatpush.msra.mxu0 0.0
        %3030 = vmatpush.msra.mxu0 %v2989
        %3031 = vmatmul.f32.gmra.mxu0 %v2985
        %v3032 = vpop.f32.mrf.mxu0
        %v3033 = vadd.f32 0.0, %v3032
        %3034 = vdwg.mxu0
        %3035 = vmatpush.msra.mxu0 0.0
        %3036 = vmatpush.msra.mxu0 0.0
        %3037 = vmatpush.msra.mxu0 0.0
        %3038 = vmatpush.msra.mxu0 0.0
        %3039 = vmatpush.msra.mxu0 0.0
        %3040 = vmatpush.msra.mxu0 0.0
        %3041 = vmatpush.msra.mxu0 0.0
        %3042 = vmatpush.msra.mxu0 0.0
        %3043 = vmatpush.msra.mxu0 0.0
        %3044 = vmatpush.msra.mxu0 0.0
        %3045 = vmatpush.msra.mxu0 0.0
        %3046 = vmatpush.msra.mxu0 0.0
        %3047 = vmatpush.msra.mxu0 0.0
        %3048 = vmatpush.msra.mxu0 0.0
        %3049 = vmatpush.msra.mxu0 0.0
        %3050 = vmatpush.msra.mxu0 %v2991
        %3051 = vmatmul.f32.gmra.mxu0 %v2985
        %v3052 = vpop.f32.mrf.mxu0
        %v3053 = vadd.f32 0.0, %v3052
        %3054 = vdwg.mxu0
        %3055 = vmatpush.msra.mxu0 0.0
        %3056 = vmatpush.msra.mxu0 0.0
        %3057 = vmatpush.msra.mxu0 0.0
        %3058 = vmatpush.msra.mxu0 0.0
        %3059 = vmatpush.msra.mxu0 0.0
        %3060 = vmatpush.msra.mxu0 0.0
        %3061 = vmatpush.msra.mxu0 0.0
        %3062 = vmatpush.msra.mxu0 0.0
        %3063 = vmatpush.msra.mxu0 0.0
        %3064 = vmatpush.msra.mxu0 0.0
        %3065 = vmatpush.msra.mxu0 0.0
        %3066 = vmatpush.msra.mxu0 0.0
        %3067 = vmatpush.msra.mxu0 0.0
        %3068 = vmatpush.msra.mxu0 0.0
        %3069 = vmatpush.msra.mxu0 0.0
        %3070 = vmatpush.msra.mxu0 %v2993
        %3071 = vmatmul.f32.gmra.mxu0 %v2985
        %v3072 = vpop.f32.mrf.mxu0
        %v3073 = vadd.f32 0.0, %v3072
        %3074 = vdwg.mxu0
        %v3075 = vadd.f32 %v2967, %v3013
        %v3076 = vadd.f32 %v2968, %v3033
        %v3077 = vadd.f32 %v2969, %v3053
        %v3078 = vadd.f32 %v2970, %v3073
        %s3079 = scalar_lea.vmem %s3, 72
        %v3080 = vld [vmem:[%s3079] sm:$0x3f]
        %3081 = vrot.lane.b32.xlu0 %v2116, 96
        %v3082 = vpop.permute.xlu0 %3081
        %3083 = vrot.lane.b32.xlu0 %v2117, 96
        %v3084 = vpop.permute.xlu0 %3083
        %3085 = vrot.lane.b32.xlu0 %v2118, 96
        %v3086 = vpop.permute.xlu0 %3085
        %3087 = vrot.lane.b32.xlu0 %v2119, 96
        %v3088 = vpop.permute.xlu0 %3087
        %v3089 = vsel %vm945, %v3082, %v3084
        %v3090 = vsel %vm945, %v3084, %v3086
        %v3091 = vsel %vm945, %v3086, %v3088
        %v3093 = vsel %vm2139, %v3080, 0
        %v3095 = vsel %vm2143, %v3089, 0
        %v3097 = vsel %vm2143, %v3090, 0
        %v3099 = vsel %vm2143, %v3091, 0
        %v3101 = vsel %vm2143, %v3088, 0
        %3103 = vmatpush.msra.mxu0 0.0
        %3104 = vmatpush.msra.mxu0 0.0
        %3105 = vmatpush.msra.mxu0 0.0
        %3106 = vmatpush.msra.mxu0 0.0
        %3107 = vmatpush.msra.mxu0 0.0
        %3108 = vmatpush.msra.mxu0 0.0
        %3109 = vmatpush.msra.mxu0 0.0
        %3110 = vmatpush.msra.mxu0 0.0
        %3111 = vmatpush.msra.mxu0 0.0
        %3112 = vmatpush.msra.mxu0 0.0
        %3113 = vmatpush.msra.mxu0 0.0
        %3114 = vmatpush.msra.mxu0 0.0
        %3115 = vmatpush.msra.mxu0 0.0
        %3116 = vmatpush.msra.mxu0 0.0
        %3117 = vmatpush.msra.mxu0 0.0
        %3118 = vmatpush.msra.mxu0 %v3095
        %3119 = vmatmul.f32.gmra.mxu0 %v3093
        %v3120 = vpop.f32.mrf.mxu0
        %v3121 = vadd.f32 0.0, %v3120
        %3122 = vdwg.mxu0
        %3123 = vmatpush.msra.mxu0 0.0
        %3124 = vmatpush.msra.mxu0 0.0
        %3125 = vmatpush.msra.mxu0 0.0
        %3126 = vmatpush.msra.mxu0 0.0
        %3127 = vmatpush.msra.mxu0 0.0
        %3128 = vmatpush.msra.mxu0 0.0
        %3129 = vmatpush.msra.mxu0 0.0
        %3130 = vmatpush.msra.mxu0 0.0
        %3131 = vmatpush.msra.mxu0 0.0
        %3132 = vmatpush.msra.mxu0 0.0
        %3133 = vmatpush.msra.mxu0 0.0
        %3134 = vmatpush.msra.mxu0 0.0
        %3135 = vmatpush.msra.mxu0 0.0
        %3136 = vmatpush.msra.mxu0 0.0
        %3137 = vmatpush.msra.mxu0 0.0
        %3138 = vmatpush.msra.mxu0 %v3097
        %3139 = vmatmul.f32.gmra.mxu0 %v3093
        %v3140 = vpop.f32.mrf.mxu0
        %v3141 = vadd.f32 0.0, %v3140
        %3142 = vdwg.mxu0
        %3143 = vmatpush.msra.mxu0 0.0
        %3144 = vmatpush.msra.mxu0 0.0
        %3145 = vmatpush.msra.mxu0 0.0
        %3146 = vmatpush.msra.mxu0 0.0
        %3147 = vmatpush.msra.mxu0 0.0
        %3148 = vmatpush.msra.mxu0 0.0
        %3149 = vmatpush.msra.mxu0 0.0
        %3150 = vmatpush.msra.mxu0 0.0
        %3151 = vmatpush.msra.mxu0 0.0
        %3152 = vmatpush.msra.mxu0 0.0
        %3153 = vmatpush.msra.mxu0 0.0
        %3154 = vmatpush.msra.mxu0 0.0
        %3155 = vmatpush.msra.mxu0 0.0
        %3156 = vmatpush.msra.mxu0 0.0
        %3157 = vmatpush.msra.mxu0 0.0
        %3158 = vmatpush.msra.mxu0 %v3099
        %3159 = vmatmul.f32.gmra.mxu0 %v3093
        %v3160 = vpop.f32.mrf.mxu0
        %v3161 = vadd.f32 0.0, %v3160
        %3162 = vdwg.mxu0
        %3163 = vmatpush.msra.mxu0 0.0
        %3164 = vmatpush.msra.mxu0 0.0
        %3165 = vmatpush.msra.mxu0 0.0
        %3166 = vmatpush.msra.mxu0 0.0
        %3167 = vmatpush.msra.mxu0 0.0
        %3168 = vmatpush.msra.mxu0 0.0
        %3169 = vmatpush.msra.mxu0 0.0
        %3170 = vmatpush.msra.mxu0 0.0
        %3171 = vmatpush.msra.mxu0 0.0
        %3172 = vmatpush.msra.mxu0 0.0
        %3173 = vmatpush.msra.mxu0 0.0
        %3174 = vmatpush.msra.mxu0 0.0
        %3175 = vmatpush.msra.mxu0 0.0
        %3176 = vmatpush.msra.mxu0 0.0
        %3177 = vmatpush.msra.mxu0 0.0
        %3178 = vmatpush.msra.mxu0 %v3101
        %3179 = vmatmul.f32.gmra.mxu0 %v3093
        %v3180 = vpop.f32.mrf.mxu0
        %v3181 = vadd.f32 0.0, %v3180
        %3182 = vdwg.mxu0
        %v3183 = vadd.f32 %v3075, %v3121
        %v3184 = vadd.f32 %v3076, %v3141
        %v3185 = vadd.f32 %v3077, %v3161
        %v3186 = vadd.f32 %v3078, %v3181
        %s3187 = scalar_lea.vmem %s3, 80
        %v3188 = vld [vmem:[%s3187] sm:$0x3f]
        %3190 = vrot.lane.b32.xlu0 %v2116, 72
        %v3191 = vpop.permute.xlu0 %3190
        %3192 = vrot.lane.b32.xlu0 %v2117, 72
        %v3193 = vpop.permute.xlu0 %3192
        %3194 = vrot.lane.b32.xlu0 %v2118, 72
        %v3195 = vpop.permute.xlu0 %3194
        %3196 = vrot.lane.b32.xlu0 %v2119, 72
        %v3197 = vpop.permute.xlu0 %3196
        %3198 = vrot.lane.b32.xlu0 %v2120, 72
        %v3199 = vpop.permute.xlu0 %3198
        %v3200 = vsel %vm994, %v3191, %v3193
        %v3201 = vsel %vm994, %v3193, %v3195
        %v3202 = vsel %vm994, %v3195, %v3197
        %v3203 = vsel %vm994, %v3197, %v3199
        %v3205 = vsel %vm2139, %v3188, 0
        %v3207 = vsel %vm2143, %v3200, 0
        %v3209 = vsel %vm2143, %v3201, 0
        %v3211 = vsel %vm2143, %v3202, 0
        %v3213 = vsel %vm2143, %v3203, 0
        %3215 = vmatpush.msra.mxu0 0.0
        %3216 = vmatpush.msra.mxu0 0.0
        %3217 = vmatpush.msra.mxu0 0.0
        %3218 = vmatpush.msra.mxu0 0.0
        %3219 = vmatpush.msra.mxu0 0.0
        %3220 = vmatpush.msra.mxu0 0.0
        %3221 = vmatpush.msra.mxu0 0.0
        %3222 = vmatpush.msra.mxu0 0.0
        %3223 = vmatpush.msra.mxu0 0.0
        %3224 = vmatpush.msra.mxu0 0.0
        %3225 = vmatpush.msra.mxu0 0.0
        %3226 = vmatpush.msra.mxu0 0.0
        %3227 = vmatpush.msra.mxu0 0.0
        %3228 = vmatpush.msra.mxu0 0.0
        %3229 = vmatpush.msra.mxu0 0.0
        %3230 = vmatpush.msra.mxu0 %v3207
        %3231 = vmatmul.f32.gmra.mxu0 %v3205
        %v3232 = vpop.f32.mrf.mxu0
        %v3233 = vadd.f32 0.0, %v3232
        %3234 = vdwg.mxu0
        %3235 = vmatpush.msra.mxu0 0.0
        %3236 = vmatpush.msra.mxu0 0.0
        %3237 = vmatpush.msra.mxu0 0.0
        %3238 = vmatpush.msra.mxu0 0.0
        %3239 = vmatpush.msra.mxu0 0.0
        %3240 = vmatpush.msra.mxu0 0.0
        %3241 = vmatpush.msra.mxu0 0.0
        %3242 = vmatpush.msra.mxu0 0.0
        %3243 = vmatpush.msra.mxu0 0.0
        %3244 = vmatpush.msra.mxu0 0.0
        %3245 = vmatpush.msra.mxu0 0.0
        %3246 = vmatpush.msra.mxu0 0.0
        %3247 = vmatpush.msra.mxu0 0.0
        %3248 = vmatpush.msra.mxu0 0.0
        %3249 = vmatpush.msra.mxu0 0.0
        %3250 = vmatpush.msra.mxu0 %v3209
        %3251 = vmatmul.f32.gmra.mxu0 %v3205
        %v3252 = vpop.f32.mrf.mxu0
        %v3253 = vadd.f32 0.0, %v3252
        %3254 = vdwg.mxu0
        %3255 = vmatpush.msra.mxu0 0.0
        %3256 = vmatpush.msra.mxu0 0.0
        %3257 = vmatpush.msra.mxu0 0.0
        %3258 = vmatpush.msra.mxu0 0.0
        %3259 = vmatpush.msra.mxu0 0.0
        %3260 = vmatpush.msra.mxu0 0.0
        %3261 = vmatpush.msra.mxu0 0.0
        %3262 = vmatpush.msra.mxu0 0.0
        %3263 = vmatpush.msra.mxu0 0.0
        %3264 = vmatpush.msra.mxu0 0.0
        %3265 = vmatpush.msra.mxu0 0.0
        %3266 = vmatpush.msra.mxu0 0.0
        %3267 = vmatpush.msra.mxu0 0.0
        %3268 = vmatpush.msra.mxu0 0.0
        %3269 = vmatpush.msra.mxu0 0.0
        %3270 = vmatpush.msra.mxu0 %v3211
        %3271 = vmatmul.f32.gmra.mxu0 %v3205
        %v3272 = vpop.f32.mrf.mxu0
        %v3273 = vadd.f32 0.0, %v3272
        %3274 = vdwg.mxu0
        %3275 = vmatpush.msra.mxu0 0.0
        %3276 = vmatpush.msra.mxu0 0.0
        %3277 = vmatpush.msra.mxu0 0.0
        %3278 = vmatpush.msra.mxu0 0.0
        %3279 = vmatpush.msra.mxu0 0.0
        %3280 = vmatpush.msra.mxu0 0.0
        %3281 = vmatpush.msra.mxu0 0.0
        %3282 = vmatpush.msra.mxu0 0.0
        %3283 = vmatpush.msra.mxu0 0.0
        %3284 = vmatpush.msra.mxu0 0.0
        %3285 = vmatpush.msra.mxu0 0.0
        %3286 = vmatpush.msra.mxu0 0.0
        %3287 = vmatpush.msra.mxu0 0.0
        %3288 = vmatpush.msra.mxu0 0.0
        %3289 = vmatpush.msra.mxu0 0.0
        %3290 = vmatpush.msra.mxu0 %v3213
        %3291 = vmatmul.f32.gmra.mxu0 %v3205
        %v3292 = vpop.f32.mrf.mxu0
        %v3293 = vadd.f32 0.0, %v3292
        %3294 = vdwg.mxu0
        %v3295 = vadd.f32 %v3183, %v3233
        %v3296 = vadd.f32 %v3184, %v3253
        %v3297 = vadd.f32 %v3185, %v3273
        %v3298 = vadd.f32 %v3186, %v3293
        %s3299 = scalar_lea.vmem %s3, 88
        %v3300 = vld [vmem:[%s3299] sm:$0x3f]
        %3301 = vrot.lane.b32.xlu0 %v2116, 71
        %v3302 = vpop.permute.xlu0 %3301
        %3303 = vrot.lane.b32.xlu0 %v2117, 71
        %v3304 = vpop.permute.xlu0 %3303
        %3305 = vrot.lane.b32.xlu0 %v2118, 71
        %v3306 = vpop.permute.xlu0 %3305
        %3307 = vrot.lane.b32.xlu0 %v2119, 71
        %v3308 = vpop.permute.xlu0 %3307
        %3309 = vrot.lane.b32.xlu0 %v2120, 71
        %v3310 = vpop.permute.xlu0 %3309
        %v3311 = vsel %vm1043, %v3302, %v3304
        %v3312 = vsel %vm1043, %v3304, %v3306
        %v3313 = vsel %vm1043, %v3306, %v3308
        %v3314 = vsel %vm1043, %v3308, %v3310
        %v3316 = vsel %vm2139, %v3300, 0
        %v3318 = vsel %vm2143, %v3311, 0
        %v3320 = vsel %vm2143, %v3312, 0
        %v3322 = vsel %vm2143, %v3313, 0
        %v3324 = vsel %vm2143, %v3314, 0
        %3326 = vmatpush.msra.mxu0 0.0
        %3327 = vmatpush.msra.mxu0 0.0
        %3328 = vmatpush.msra.mxu0 0.0
        %3329 = vmatpush.msra.mxu0 0.0
        %3330 = vmatpush.msra.mxu0 0.0
        %3331 = vmatpush.msra.mxu0 0.0
        %3332 = vmatpush.msra.mxu0 0.0
        %3333 = vmatpush.msra.mxu0 0.0
        %3334 = vmatpush.msra.mxu0 0.0
        %3335 = vmatpush.msra.mxu0 0.0
        %3336 = vmatpush.msra.mxu0 0.0
        %3337 = vmatpush.msra.mxu0 0.0
        %3338 = vmatpush.msra.mxu0 0.0
        %3339 = vmatpush.msra.mxu0 0.0
        %3340 = vmatpush.msra.mxu0 0.0
        %3341 = vmatpush.msra.mxu0 %v3318
        %3342 = vmatmul.f32.gmra.mxu0 %v3316
        %v3343 = vpop.f32.mrf.mxu0
        %v3344 = vadd.f32 0.0, %v3343
        %3345 = vdwg.mxu0
        %3346 = vmatpush.msra.mxu0 0.0
        %3347 = vmatpush.msra.mxu0 0.0
        %3348 = vmatpush.msra.mxu0 0.0
        %3349 = vmatpush.msra.mxu0 0.0
        %3350 = vmatpush.msra.mxu0 0.0
        %3351 = vmatpush.msra.mxu0 0.0
        %3352 = vmatpush.msra.mxu0 0.0
        %3353 = vmatpush.msra.mxu0 0.0
        %3354 = vmatpush.msra.mxu0 0.0
        %3355 = vmatpush.msra.mxu0 0.0
        %3356 = vmatpush.msra.mxu0 0.0
        %3357 = vmatpush.msra.mxu0 0.0
        %3358 = vmatpush.msra.mxu0 0.0
        %3359 = vmatpush.msra.mxu0 0.0
        %3360 = vmatpush.msra.mxu0 0.0
        %3361 = vmatpush.msra.mxu0 %v3320
        %3362 = vmatmul.f32.gmra.mxu0 %v3316
        %v3363 = vpop.f32.mrf.mxu0
        %v3364 = vadd.f32 0.0, %v3363
        %3365 = vdwg.mxu0
        %3366 = vmatpush.msra.mxu0 0.0
        %3367 = vmatpush.msra.mxu0 0.0
        %3368 = vmatpush.msra.mxu0 0.0
        %3369 = vmatpush.msra.mxu0 0.0
        %3370 = vmatpush.msra.mxu0 0.0
        %3371 = vmatpush.msra.mxu0 0.0
        %3372 = vmatpush.msra.mxu0 0.0
        %3373 = vmatpush.msra.mxu0 0.0
        %3374 = vmatpush.msra.mxu0 0.0
        %3375 = vmatpush.msra.mxu0 0.0
        %3376 = vmatpush.msra.mxu0 0.0
        %3377 = vmatpush.msra.mxu0 0.0
        %3378 = vmatpush.msra.mxu0 0.0
        %3379 = vmatpush.msra.mxu0 0.0
        %3380 = vmatpush.msra.mxu0 0.0
        %3381 = vmatpush.msra.mxu0 %v3322
        %3382 = vmatmul.f32.gmra.mxu0 %v3316
        %v3383 = vpop.f32.mrf.mxu0
        %v3384 = vadd.f32 0.0, %v3383
        %3385 = vdwg.mxu0
        %3386 = vmatpush.msra.mxu0 0.0
        %3387 = vmatpush.msra.mxu0 0.0
        %3388 = vmatpush.msra.mxu0 0.0
        %3389 = vmatpush.msra.mxu0 0.0
        %3390 = vmatpush.msra.mxu0 0.0
        %3391 = vmatpush.msra.mxu0 0.0
        %3392 = vmatpush.msra.mxu0 0.0
        %3393 = vmatpush.msra.mxu0 0.0
        %3394 = vmatpush.msra.mxu0 0.0
        %3395 = vmatpush.msra.mxu0 0.0
        %3396 = vmatpush.msra.mxu0 0.0
        %3397 = vmatpush.msra.mxu0 0.0
        %3398 = vmatpush.msra.mxu0 0.0
        %3399 = vmatpush.msra.mxu0 0.0
        %3400 = vmatpush.msra.mxu0 0.0
        %3401 = vmatpush.msra.mxu0 %v3324
        %3402 = vmatmul.f32.gmra.mxu0 %v3316
        %v3403 = vpop.f32.mrf.mxu0
        %v3404 = vadd.f32 0.0, %v3403
        %3405 = vdwg.mxu0
        %v3406 = vadd.f32 %v3295, %v3344
        %v3407 = vadd.f32 %v3296, %v3364
        %v3408 = vadd.f32 %v3297, %v3384
        %v3409 = vadd.f32 %v3298, %v3404
        %s3410 = scalar_lea.vmem %s3, 96
        %v3411 = vld [vmem:[%s3410] sm:$0x3f]
        %3412 = vrot.lane.b32.xlu0 %v2116, 70
        %v3413 = vpop.permute.xlu0 %3412
        %3414 = vrot.lane.b32.xlu0 %v2117, 70
        %v3415 = vpop.permute.xlu0 %3414
        %3416 = vrot.lane.b32.xlu0 %v2118, 70
        %v3417 = vpop.permute.xlu0 %3416
        %3418 = vrot.lane.b32.xlu0 %v2119, 70
        %v3419 = vpop.permute.xlu0 %3418
        %3420 = vrot.lane.b32.xlu0 %v2120, 70
        %v3421 = vpop.permute.xlu0 %3420
        %v3422 = vsel %vm1092, %v3413, %v3415
        %v3423 = vsel %vm1092, %v3415, %v3417
        %v3424 = vsel %vm1092, %v3417, %v3419
        %v3425 = vsel %vm1092, %v3419, %v3421
        %v3427 = vsel %vm2139, %v3411, 0
        %v3429 = vsel %vm2143, %v3422, 0
        %v3431 = vsel %vm2143, %v3423, 0
        %v3433 = vsel %vm2143, %v3424, 0
        %v3435 = vsel %vm2143, %v3425, 0
        %3437 = vmatpush.msra.mxu0 0.0
        %3438 = vmatpush.msra.mxu0 0.0
        %3439 = vmatpush.msra.mxu0 0.0
        %3440 = vmatpush.msra.mxu0 0.0
        %3441 = vmatpush.msra.mxu0 0.0
        %3442 = vmatpush.msra.mxu0 0.0
        %3443 = vmatpush.msra.mxu0 0.0
        %3444 = vmatpush.msra.mxu0 0.0
        %3445 = vmatpush.msra.mxu0 0.0
        %3446 = vmatpush.msra.mxu0 0.0
        %3447 = vmatpush.msra.mxu0 0.0
        %3448 = vmatpush.msra.mxu0 0.0
        %3449 = vmatpush.msra.mxu0 0.0
        %3450 = vmatpush.msra.mxu0 0.0
        %3451 = vmatpush.msra.mxu0 0.0
        %3452 = vmatpush.msra.mxu0 %v3429
        %3453 = vmatmul.f32.gmra.mxu0 %v3427
        %v3454 = vpop.f32.mrf.mxu0
        %v3455 = vadd.f32 0.0, %v3454
        %3456 = vdwg.mxu0
        %3457 = vmatpush.msra.mxu0 0.0
        %3458 = vmatpush.msra.mxu0 0.0
        %3459 = vmatpush.msra.mxu0 0.0
        %3460 = vmatpush.msra.mxu0 0.0
        %3461 = vmatpush.msra.mxu0 0.0
        %3462 = vmatpush.msra.mxu0 0.0
        %3463 = vmatpush.msra.mxu0 0.0
        %3464 = vmatpush.msra.mxu0 0.0
        %3465 = vmatpush.msra.mxu0 0.0
        %3466 = vmatpush.msra.mxu0 0.0
        %3467 = vmatpush.msra.mxu0 0.0
        %3468 = vmatpush.msra.mxu0 0.0
        %3469 = vmatpush.msra.mxu0 0.0
        %3470 = vmatpush.msra.mxu0 0.0
        %3471 = vmatpush.msra.mxu0 0.0
        %3472 = vmatpush.msra.mxu0 %v3431
        %3473 = vmatmul.f32.gmra.mxu0 %v3427
        %v3474 = vpop.f32.mrf.mxu0
        %v3475 = vadd.f32 0.0, %v3474
        %3476 = vdwg.mxu0
        %3477 = vmatpush.msra.mxu0 0.0
        %3478 = vmatpush.msra.mxu0 0.0
        %3479 = vmatpush.msra.mxu0 0.0
        %3480 = vmatpush.msra.mxu0 0.0
        %3481 = vmatpush.msra.mxu0 0.0
        %3482 = vmatpush.msra.mxu0 0.0
        %3483 = vmatpush.msra.mxu0 0.0
        %3484 = vmatpush.msra.mxu0 0.0
        %3485 = vmatpush.msra.mxu0 0.0
        %3486 = vmatpush.msra.mxu0 0.0
        %3487 = vmatpush.msra.mxu0 0.0
        %3488 = vmatpush.msra.mxu0 0.0
        %3489 = vmatpush.msra.mxu0 0.0
        %3490 = vmatpush.msra.mxu0 0.0
        %3491 = vmatpush.msra.mxu0 0.0
        %3492 = vmatpush.msra.mxu0 %v3433
        %3493 = vmatmul.f32.gmra.mxu0 %v3427
        %v3494 = vpop.f32.mrf.mxu0
        %v3495 = vadd.f32 0.0, %v3494
        %3496 = vdwg.mxu0
        %3497 = vmatpush.msra.mxu0 0.0
        %3498 = vmatpush.msra.mxu0 0.0
        %3499 = vmatpush.msra.mxu0 0.0
        %3500 = vmatpush.msra.mxu0 0.0
        %3501 = vmatpush.msra.mxu0 0.0
        %3502 = vmatpush.msra.mxu0 0.0
        %3503 = vmatpush.msra.mxu0 0.0
        %3504 = vmatpush.msra.mxu0 0.0
        %3505 = vmatpush.msra.mxu0 0.0
        %3506 = vmatpush.msra.mxu0 0.0
        %3507 = vmatpush.msra.mxu0 0.0
        %3508 = vmatpush.msra.mxu0 0.0
        %3509 = vmatpush.msra.mxu0 0.0
        %3510 = vmatpush.msra.mxu0 0.0
        %3511 = vmatpush.msra.mxu0 0.0
        %3512 = vmatpush.msra.mxu0 %v3435
        %3513 = vmatmul.f32.gmra.mxu0 %v3427
        %v3514 = vpop.f32.mrf.mxu0
        %v3515 = vadd.f32 0.0, %v3514
        %3516 = vdwg.mxu0
        %v3517 = vadd.f32 %v3406, %v3455
        %v3518 = vadd.f32 %v3407, %v3475
        %v3519 = vadd.f32 %v3408, %v3495
        %v3520 = vadd.f32 %v3409, %v3515
        %s3521 = scalar_lea.vmem %s3, 104
        %v3522 = vld [vmem:[%s3521] sm:$0x3f]
        %3523 = vrot.lane.b32.xlu0 %v2116, 69
        %v3524 = vpop.permute.xlu0 %3523
        %3525 = vrot.lane.b32.xlu0 %v2117, 69
        %v3526 = vpop.permute.xlu0 %3525
        %3527 = vrot.lane.b32.xlu0 %v2118, 69
        %v3528 = vpop.permute.xlu0 %3527
        %3529 = vrot.lane.b32.xlu0 %v2119, 69
        %v3530 = vpop.permute.xlu0 %3529
        %3531 = vrot.lane.b32.xlu0 %v2120, 69
        %v3532 = vpop.permute.xlu0 %3531
        %v3533 = vsel %vm1141, %v3524, %v3526
        %v3534 = vsel %vm1141, %v3526, %v3528
        %v3535 = vsel %vm1141, %v3528, %v3530
        %v3536 = vsel %vm1141, %v3530, %v3532
        %v3538 = vsel %vm2139, %v3522, 0
        %v3540 = vsel %vm2143, %v3533, 0
        %v3542 = vsel %vm2143, %v3534, 0
        %v3544 = vsel %vm2143, %v3535, 0
        %v3546 = vsel %vm2143, %v3536, 0
        %3548 = vmatpush.msra.mxu0 0.0
        %3549 = vmatpush.msra.mxu0 0.0
        %3550 = vmatpush.msra.mxu0 0.0
        %3551 = vmatpush.msra.mxu0 0.0
        %3552 = vmatpush.msra.mxu0 0.0
        %3553 = vmatpush.msra.mxu0 0.0
        %3554 = vmatpush.msra.mxu0 0.0
        %3555 = vmatpush.msra.mxu0 0.0
        %3556 = vmatpush.msra.mxu0 0.0
        %3557 = vmatpush.msra.mxu0 0.0
        %3558 = vmatpush.msra.mxu0 0.0
        %3559 = vmatpush.msra.mxu0 0.0
        %3560 = vmatpush.msra.mxu0 0.0
        %3561 = vmatpush.msra.mxu0 0.0
        %3562 = vmatpush.msra.mxu0 0.0
        %3563 = vmatpush.msra.mxu0 %v3540
        %3564 = vmatmul.f32.gmra.mxu0 %v3538
        %v3565 = vpop.f32.mrf.mxu0
        %v3566 = vadd.f32 0.0, %v3565
        %3567 = vdwg.mxu0
        %3568 = vmatpush.msra.mxu0 0.0
        %3569 = vmatpush.msra.mxu0 0.0
        %3570 = vmatpush.msra.mxu0 0.0
        %3571 = vmatpush.msra.mxu0 0.0
        %3572 = vmatpush.msra.mxu0 0.0
        %3573 = vmatpush.msra.mxu0 0.0
        %3574 = vmatpush.msra.mxu0 0.0
        %3575 = vmatpush.msra.mxu0 0.0
        %3576 = vmatpush.msra.mxu0 0.0
        %3577 = vmatpush.msra.mxu0 0.0
        %3578 = vmatpush.msra.mxu0 0.0
        %3579 = vmatpush.msra.mxu0 0.0
        %3580 = vmatpush.msra.mxu0 0.0
        %3581 = vmatpush.msra.mxu0 0.0
        %3582 = vmatpush.msra.mxu0 0.0
        %3583 = vmatpush.msra.mxu0 %v3542
        %3584 = vmatmul.f32.gmra.mxu0 %v3538
        %v3585 = vpop.f32.mrf.mxu0
        %v3586 = vadd.f32 0.0, %v3585
        %3587 = vdwg.mxu0
        %3588 = vmatpush.msra.mxu0 0.0
        %3589 = vmatpush.msra.mxu0 0.0
        %3590 = vmatpush.msra.mxu0 0.0
        %3591 = vmatpush.msra.mxu0 0.0
        %3592 = vmatpush.msra.mxu0 0.0
        %3593 = vmatpush.msra.mxu0 0.0
        %3594 = vmatpush.msra.mxu0 0.0
        %3595 = vmatpush.msra.mxu0 0.0
        %3596 = vmatpush.msra.mxu0 0.0
        %3597 = vmatpush.msra.mxu0 0.0
        %3598 = vmatpush.msra.mxu0 0.0
        %3599 = vmatpush.msra.mxu0 0.0
        %3600 = vmatpush.msra.mxu0 0.0
        %3601 = vmatpush.msra.mxu0 0.0
        %3602 = vmatpush.msra.mxu0 0.0
        %3603 = vmatpush.msra.mxu0 %v3544
        %3604 = vmatmul.f32.gmra.mxu0 %v3538
        %v3605 = vpop.f32.mrf.mxu0
        %v3606 = vadd.f32 0.0, %v3605
        %3607 = vdwg.mxu0
        %3608 = vmatpush.msra.mxu0 0.0
        %3609 = vmatpush.msra.mxu0 0.0
        %3610 = vmatpush.msra.mxu0 0.0
        %3611 = vmatpush.msra.mxu0 0.0
        %3612 = vmatpush.msra.mxu0 0.0
        %3613 = vmatpush.msra.mxu0 0.0
        %3614 = vmatpush.msra.mxu0 0.0
        %3615 = vmatpush.msra.mxu0 0.0
        %3616 = vmatpush.msra.mxu0 0.0
        %3617 = vmatpush.msra.mxu0 0.0
        %3618 = vmatpush.msra.mxu0 0.0
        %3619 = vmatpush.msra.mxu0 0.0
        %3620 = vmatpush.msra.mxu0 0.0
        %3621 = vmatpush.msra.mxu0 0.0
        %3622 = vmatpush.msra.mxu0 0.0
        %3623 = vmatpush.msra.mxu0 %v3546
        %3624 = vmatmul.f32.gmra.mxu0 %v3538
        %v3625 = vpop.f32.mrf.mxu0
        %v3626 = vadd.f32 0.0, %v3625
        %3627 = vdwg.mxu0
        %v3628 = vadd.f32 %v3517, %v3566
        %v3629 = vadd.f32 %v3518, %v3586
        %v3630 = vadd.f32 %v3519, %v3606
        %v3631 = vadd.f32 %v3520, %v3626
        %s3632 = scalar_lea.vmem %s3, 112
        %v3633 = vld [vmem:[%s3632] sm:$0x3f]
        %3634 = vrot.lane.b32.xlu0 %v2116, 68
        %v3635 = vpop.permute.xlu0 %3634
        %3636 = vrot.lane.b32.xlu0 %v2117, 68
        %v3637 = vpop.permute.xlu0 %3636
        %3638 = vrot.lane.b32.xlu0 %v2118, 68
        %v3639 = vpop.permute.xlu0 %3638
        %3640 = vrot.lane.b32.xlu0 %v2119, 68
        %v3641 = vpop.permute.xlu0 %3640
        %3642 = vrot.lane.b32.xlu0 %v2120, 68
        %v3643 = vpop.permute.xlu0 %3642
        %v3644 = vsel %vm1190, %v3635, %v3637
        %v3645 = vsel %vm1190, %v3637, %v3639
        %v3646 = vsel %vm1190, %v3639, %v3641
        %v3647 = vsel %vm1190, %v3641, %v3643
        %v3649 = vsel %vm2139, %v3633, 0
        %v3651 = vsel %vm2143, %v3644, 0
        %v3653 = vsel %vm2143, %v3645, 0
        %v3655 = vsel %vm2143, %v3646, 0
        %v3657 = vsel %vm2143, %v3647, 0
        %3659 = vmatpush.msra.mxu0 0.0
        %3660 = vmatpush.msra.mxu0 0.0
        %3661 = vmatpush.msra.mxu0 0.0
        %3662 = vmatpush.msra.mxu0 0.0
        %3663 = vmatpush.msra.mxu0 0.0
        %3664 = vmatpush.msra.mxu0 0.0
        %3665 = vmatpush.msra.mxu0 0.0
        %3666 = vmatpush.msra.mxu0 0.0
        %3667 = vmatpush.msra.mxu0 0.0
        %3668 = vmatpush.msra.mxu0 0.0
        %3669 = vmatpush.msra.mxu0 0.0
        %3670 = vmatpush.msra.mxu0 0.0
        %3671 = vmatpush.msra.mxu0 0.0
        %3672 = vmatpush.msra.mxu0 0.0
        %3673 = vmatpush.msra.mxu0 0.0
        %3674 = vmatpush.msra.mxu0 %v3651
        %3675 = vmatmul.f32.gmra.mxu0 %v3649
        %v3676 = vpop.f32.mrf.mxu0
        %v3677 = vadd.f32 0.0, %v3676
        %3678 = vdwg.mxu0
        %3679 = vmatpush.msra.mxu0 0.0
        %3680 = vmatpush.msra.mxu0 0.0
        %3681 = vmatpush.msra.mxu0 0.0
        %3682 = vmatpush.msra.mxu0 0.0
        %3683 = vmatpush.msra.mxu0 0.0
        %3684 = vmatpush.msra.mxu0 0.0
        %3685 = vmatpush.msra.mxu0 0.0
        %3686 = vmatpush.msra.mxu0 0.0
        %3687 = vmatpush.msra.mxu0 0.0
        %3688 = vmatpush.msra.mxu0 0.0
        %3689 = vmatpush.msra.mxu0 0.0
        %3690 = vmatpush.msra.mxu0 0.0
        %3691 = vmatpush.msra.mxu0 0.0
        %3692 = vmatpush.msra.mxu0 0.0
        %3693 = vmatpush.msra.mxu0 0.0
        %3694 = vmatpush.msra.mxu0 %v3653
        %3695 = vmatmul.f32.gmra.mxu0 %v3649
        %v3696 = vpop.f32.mrf.mxu0
        %v3697 = vadd.f32 0.0, %v3696
        %3698 = vdwg.mxu0
        %3699 = vmatpush.msra.mxu0 0.0
        %3700 = vmatpush.msra.mxu0 0.0
        %3701 = vmatpush.msra.mxu0 0.0
        %3702 = vmatpush.msra.mxu0 0.0
        %3703 = vmatpush.msra.mxu0 0.0
        %3704 = vmatpush.msra.mxu0 0.0
        %3705 = vmatpush.msra.mxu0 0.0
        %3706 = vmatpush.msra.mxu0 0.0
        %3707 = vmatpush.msra.mxu0 0.0
        %3708 = vmatpush.msra.mxu0 0.0
        %3709 = vmatpush.msra.mxu0 0.0
        %3710 = vmatpush.msra.mxu0 0.0
        %3711 = vmatpush.msra.mxu0 0.0
        %3712 = vmatpush.msra.mxu0 0.0
        %3713 = vmatpush.msra.mxu0 0.0
        %3714 = vmatpush.msra.mxu0 %v3655
        %3715 = vmatmul.f32.gmra.mxu0 %v3649
        %v3716 = vpop.f32.mrf.mxu0
        %v3717 = vadd.f32 0.0, %v3716
        %3718 = vdwg.mxu0
        %3719 = vmatpush.msra.mxu0 0.0
        %3720 = vmatpush.msra.mxu0 0.0
        %3721 = vmatpush.msra.mxu0 0.0
        %3722 = vmatpush.msra.mxu0 0.0
        %3723 = vmatpush.msra.mxu0 0.0
        %3724 = vmatpush.msra.mxu0 0.0
        %3725 = vmatpush.msra.mxu0 0.0
        %3726 = vmatpush.msra.mxu0 0.0
        %3727 = vmatpush.msra.mxu0 0.0
        %3728 = vmatpush.msra.mxu0 0.0
        %3729 = vmatpush.msra.mxu0 0.0
        %3730 = vmatpush.msra.mxu0 0.0
        %3731 = vmatpush.msra.mxu0 0.0
        %3732 = vmatpush.msra.mxu0 0.0
        %3733 = vmatpush.msra.mxu0 0.0
        %3734 = vmatpush.msra.mxu0 %v3657
        %3735 = vmatmul.f32.gmra.mxu0 %v3649
        %v3736 = vpop.f32.mrf.mxu0
        %v3737 = vadd.f32 0.0, %v3736
        %3738 = vdwg.mxu0
        %v3739 = vadd.f32 %v3628, %v3677
        %v3740 = vadd.f32 %v3629, %v3697
        %v3741 = vadd.f32 %v3630, %v3717
        %v3742 = vadd.f32 %v3631, %v3737
        %s3743 = scalar_lea.vmem %s3, 120
        %v3744 = vld [vmem:[%s3743] sm:$0x3f]
        %3745 = vrot.lane.b32.xlu0 %v2116, 44
        %v3746 = vpop.permute.xlu0 %3745
        %3747 = vrot.lane.b32.xlu0 %v2117, 44
        %v3748 = vpop.permute.xlu0 %3747
        %3749 = vrot.lane.b32.xlu0 %v2118, 44
        %v3750 = vpop.permute.xlu0 %3749
        %3751 = vrot.lane.b32.xlu0 %v2119, 44
        %v3752 = vpop.permute.xlu0 %3751
        %3753 = vrot.lane.b32.xlu0 %v2120, 44
        %v3754 = vpop.permute.xlu0 %3753
        %v3755 = vsel %vm1239, %v3746, %v3748
        %v3756 = vsel %vm1239, %v3748, %v3750
        %v3757 = vsel %vm1239, %v3750, %v3752
        %v3758 = vsel %vm1239, %v3752, %v3754
        %v3760 = vsel %vm2139, %v3744, 0
        %v3762 = vsel %vm2143, %v3755, 0
        %v3764 = vsel %vm2143, %v3756, 0
        %v3766 = vsel %vm2143, %v3757, 0
        %v3768 = vsel %vm2143, %v3758, 0
        %3770 = vmatpush.msra.mxu0 0.0
        %3771 = vmatpush.msra.mxu0 0.0
        %3772 = vmatpush.msra.mxu0 0.0
        %3773 = vmatpush.msra.mxu0 0.0
        %3774 = vmatpush.msra.mxu0 0.0
        %3775 = vmatpush.msra.mxu0 0.0
        %3776 = vmatpush.msra.mxu0 0.0
        %3777 = vmatpush.msra.mxu0 0.0
        %3778 = vmatpush.msra.mxu0 0.0
        %3779 = vmatpush.msra.mxu0 0.0
        %3780 = vmatpush.msra.mxu0 0.0
        %3781 = vmatpush.msra.mxu0 0.0
        %3782 = vmatpush.msra.mxu0 0.0
        %3783 = vmatpush.msra.mxu0 0.0
        %3784 = vmatpush.msra.mxu0 0.0
        %3785 = vmatpush.msra.mxu0 %v3762
        %3786 = vmatmul.f32.gmra.mxu0 %v3760
        %v3787 = vpop.f32.mrf.mxu0
        %v3788 = vadd.f32 0.0, %v3787
        %3789 = vdwg.mxu0
        %3790 = vmatpush.msra.mxu0 0.0
        %3791 = vmatpush.msra.mxu0 0.0
        %3792 = vmatpush.msra.mxu0 0.0
        %3793 = vmatpush.msra.mxu0 0.0
        %3794 = vmatpush.msra.mxu0 0.0
        %3795 = vmatpush.msra.mxu0 0.0
        %3796 = vmatpush.msra.mxu0 0.0
        %3797 = vmatpush.msra.mxu0 0.0
        %3798 = vmatpush.msra.mxu0 0.0
        %3799 = vmatpush.msra.mxu0 0.0
        %3800 = vmatpush.msra.mxu0 0.0
        %3801 = vmatpush.msra.mxu0 0.0
        %3802 = vmatpush.msra.mxu0 0.0
        %3803 = vmatpush.msra.mxu0 0.0
        %3804 = vmatpush.msra.mxu0 0.0
        %3805 = vmatpush.msra.mxu0 %v3764
        %3806 = vmatmul.f32.gmra.mxu0 %v3760
        %v3807 = vpop.f32.mrf.mxu0
        %v3808 = vadd.f32 0.0, %v3807
        %3809 = vdwg.mxu0
        %3810 = vmatpush.msra.mxu0 0.0
        %3811 = vmatpush.msra.mxu0 0.0
        %3812 = vmatpush.msra.mxu0 0.0
        %3813 = vmatpush.msra.mxu0 0.0
        %3814 = vmatpush.msra.mxu0 0.0
        %3815 = vmatpush.msra.mxu0 0.0
        %3816 = vmatpush.msra.mxu0 0.0
        %3817 = vmatpush.msra.mxu0 0.0
        %3818 = vmatpush.msra.mxu0 0.0
        %3819 = vmatpush.msra.mxu0 0.0
        %3820 = vmatpush.msra.mxu0 0.0
        %3821 = vmatpush.msra.mxu0 0.0
        %3822 = vmatpush.msra.mxu0 0.0
        %3823 = vmatpush.msra.mxu0 0.0
        %3824 = vmatpush.msra.mxu0 0.0
        %3825 = vmatpush.msra.mxu0 %v3766
        %3826 = vmatmul.f32.gmra.mxu0 %v3760
        %v3827 = vpop.f32.mrf.mxu0
        %v3828 = vadd.f32 0.0, %v3827
        %3829 = vdwg.mxu0
        %3830 = vmatpush.msra.mxu0 0.0
        %3831 = vmatpush.msra.mxu0 0.0
        %3832 = vmatpush.msra.mxu0 0.0
        %3833 = vmatpush.msra.mxu0 0.0
        %3834 = vmatpush.msra.mxu0 0.0
        %3835 = vmatpush.msra.mxu0 0.0
        %3836 = vmatpush.msra.mxu0 0.0
        %3837 = vmatpush.msra.mxu0 0.0
        %3838 = vmatpush.msra.mxu0 0.0
        %3839 = vmatpush.msra.mxu0 0.0
        %3840 = vmatpush.msra.mxu0 0.0
        %3841 = vmatpush.msra.mxu0 0.0
        %3842 = vmatpush.msra.mxu0 0.0
        %3843 = vmatpush.msra.mxu0 0.0
        %3844 = vmatpush.msra.mxu0 0.0
        %3845 = vmatpush.msra.mxu0 %v3768
        %3846 = vmatmul.f32.gmra.mxu0 %v3760
        %v3847 = vpop.f32.mrf.mxu0
        %v3848 = vadd.f32 0.0, %v3847
        %3849 = vdwg.mxu0
        %v3850 = vadd.f32 %v3739, %v3788
        %v3851 = vadd.f32 %v3740, %v3808
        %v3852 = vadd.f32 %v3741, %v3828
        %v3853 = vadd.f32 %v3742, %v3848
        %s3854 = scalar_lea.vmem %s3, 128
        %v3855 = vld [vmem:[%s3854] sm:$0x3f]
        %3856 = vrot.lane.b32.xlu0 %v2116, 43
        %v3857 = vpop.permute.xlu0 %3856
        %3858 = vrot.lane.b32.xlu0 %v2117, 43
        %v3859 = vpop.permute.xlu0 %3858
        %3860 = vrot.lane.b32.xlu0 %v2118, 43
        %v3861 = vpop.permute.xlu0 %3860
        %3862 = vrot.lane.b32.xlu0 %v2119, 43
        %v3863 = vpop.permute.xlu0 %3862
        %3864 = vrot.lane.b32.xlu0 %v2120, 43
        %v3865 = vpop.permute.xlu0 %3864
        %v3866 = vsel %vm1288, %v3857, %v3859
        %v3867 = vsel %vm1288, %v3859, %v3861
        %v3868 = vsel %vm1288, %v3861, %v3863
        %v3869 = vsel %vm1288, %v3863, %v3865
        %v3871 = vsel %vm2139, %v3855, 0
        %v3873 = vsel %vm2143, %v3866, 0
        %v3875 = vsel %vm2143, %v3867, 0
        %v3877 = vsel %vm2143, %v3868, 0
        %v3879 = vsel %vm2143, %v3869, 0
        %3881 = vmatpush.msra.mxu0 0.0
        %3882 = vmatpush.msra.mxu0 0.0
        %3883 = vmatpush.msra.mxu0 0.0
        %3884 = vmatpush.msra.mxu0 0.0
        %3885 = vmatpush.msra.mxu0 0.0
        %3886 = vmatpush.msra.mxu0 0.0
        %3887 = vmatpush.msra.mxu0 0.0
        %3888 = vmatpush.msra.mxu0 0.0
        %3889 = vmatpush.msra.mxu0 0.0
        %3890 = vmatpush.msra.mxu0 0.0
        %3891 = vmatpush.msra.mxu0 0.0
        %3892 = vmatpush.msra.mxu0 0.0
        %3893 = vmatpush.msra.mxu0 0.0
        %3894 = vmatpush.msra.mxu0 0.0
        %3895 = vmatpush.msra.mxu0 0.0
        %3896 = vmatpush.msra.mxu0 %v3873
        %3897 = vmatmul.f32.gmra.mxu0 %v3871
        %v3898 = vpop.f32.mrf.mxu0
        %v3899 = vadd.f32 0.0, %v3898
        %3900 = vdwg.mxu0
        %3901 = vmatpush.msra.mxu0 0.0
        %3902 = vmatpush.msra.mxu0 0.0
        %3903 = vmatpush.msra.mxu0 0.0
        %3904 = vmatpush.msra.mxu0 0.0
        %3905 = vmatpush.msra.mxu0 0.0
        %3906 = vmatpush.msra.mxu0 0.0
        %3907 = vmatpush.msra.mxu0 0.0
        %3908 = vmatpush.msra.mxu0 0.0
        %3909 = vmatpush.msra.mxu0 0.0
        %3910 = vmatpush.msra.mxu0 0.0
        %3911 = vmatpush.msra.mxu0 0.0
        %3912 = vmatpush.msra.mxu0 0.0
        %3913 = vmatpush.msra.mxu0 0.0
        %3914 = vmatpush.msra.mxu0 0.0
        %3915 = vmatpush.msra.mxu0 0.0
        %3916 = vmatpush.msra.mxu0 %v3875
        %3917 = vmatmul.f32.gmra.mxu0 %v3871
        %v3918 = vpop.f32.mrf.mxu0
        %v3919 = vadd.f32 0.0, %v3918
        %3920 = vdwg.mxu0
        %3921 = vmatpush.msra.mxu0 0.0
        %3922 = vmatpush.msra.mxu0 0.0
        %3923 = vmatpush.msra.mxu0 0.0
        %3924 = vmatpush.msra.mxu0 0.0
        %3925 = vmatpush.msra.mxu0 0.0
        %3926 = vmatpush.msra.mxu0 0.0
        %3927 = vmatpush.msra.mxu0 0.0
        %3928 = vmatpush.msra.mxu0 0.0
        %3929 = vmatpush.msra.mxu0 0.0
        %3930 = vmatpush.msra.mxu0 0.0
        %3931 = vmatpush.msra.mxu0 0.0
        %3932 = vmatpush.msra.mxu0 0.0
        %3933 = vmatpush.msra.mxu0 0.0
        %3934 = vmatpush.msra.mxu0 0.0
        %3935 = vmatpush.msra.mxu0 0.0
        %3936 = vmatpush.msra.mxu0 %v3877
        %3937 = vmatmul.f32.gmra.mxu0 %v3871
        %v3938 = vpop.f32.mrf.mxu0
        %v3939 = vadd.f32 0.0, %v3938
        %3940 = vdwg.mxu0
        %3941 = vmatpush.msra.mxu0 0.0
        %3942 = vmatpush.msra.mxu0 0.0
        %3943 = vmatpush.msra.mxu0 0.0
        %3944 = vmatpush.msra.mxu0 0.0
        %3945 = vmatpush.msra.mxu0 0.0
        %3946 = vmatpush.msra.mxu0 0.0
        %3947 = vmatpush.msra.mxu0 0.0
        %3948 = vmatpush.msra.mxu0 0.0
        %3949 = vmatpush.msra.mxu0 0.0
        %3950 = vmatpush.msra.mxu0 0.0
        %3951 = vmatpush.msra.mxu0 0.0
        %3952 = vmatpush.msra.mxu0 0.0
        %3953 = vmatpush.msra.mxu0 0.0
        %3954 = vmatpush.msra.mxu0 0.0
        %3955 = vmatpush.msra.mxu0 0.0
        %3956 = vmatpush.msra.mxu0 %v3879
        %3957 = vmatmul.f32.gmra.mxu0 %v3871
        %v3958 = vpop.f32.mrf.mxu0
        %v3959 = vadd.f32 0.0, %v3958
        %3960 = vdwg.mxu0
        %v3961 = vadd.f32 %v3850, %v3899
        %v3962 = vadd.f32 %v3851, %v3919
        %v3963 = vadd.f32 %v3852, %v3939
        %v3964 = vadd.f32 %v3853, %v3959
        %s3965 = scalar_lea.vmem %s3, 136
        %v3966 = vld [vmem:[%s3965] sm:$0x3f]
        %3967 = vrot.lane.b32.xlu0 %v2116, 42
        %v3968 = vpop.permute.xlu0 %3967
        %3969 = vrot.lane.b32.xlu0 %v2117, 42
        %v3970 = vpop.permute.xlu0 %3969
        %3971 = vrot.lane.b32.xlu0 %v2118, 42
        %v3972 = vpop.permute.xlu0 %3971
        %3973 = vrot.lane.b32.xlu0 %v2119, 42
        %v3974 = vpop.permute.xlu0 %3973
        %3975 = vrot.lane.b32.xlu0 %v2120, 42
        %v3976 = vpop.permute.xlu0 %3975
        %v3977 = vsel %vm1337, %v3968, %v3970
        %v3978 = vsel %vm1337, %v3970, %v3972
        %v3979 = vsel %vm1337, %v3972, %v3974
        %v3980 = vsel %vm1337, %v3974, %v3976
        %v3982 = vsel %vm2139, %v3966, 0
        %v3984 = vsel %vm2143, %v3977, 0
        %v3986 = vsel %vm2143, %v3978, 0
        %v3988 = vsel %vm2143, %v3979, 0
        %v3990 = vsel %vm2143, %v3980, 0
        %3992 = vmatpush.msra.mxu0 0.0
        %3993 = vmatpush.msra.mxu0 0.0
        %3994 = vmatpush.msra.mxu0 0.0
        %3995 = vmatpush.msra.mxu0 0.0
        %3996 = vmatpush.msra.mxu0 0.0
        %3997 = vmatpush.msra.mxu0 0.0
        %3998 = vmatpush.msra.mxu0 0.0
        %3999 = vmatpush.msra.mxu0 0.0
        %4000 = vmatpush.msra.mxu0 0.0
        %4001 = vmatpush.msra.mxu0 0.0
        %4002 = vmatpush.msra.mxu0 0.0
        %4003 = vmatpush.msra.mxu0 0.0
        %4004 = vmatpush.msra.mxu0 0.0
        %4005 = vmatpush.msra.mxu0 0.0
        %4006 = vmatpush.msra.mxu0 0.0
        %4007 = vmatpush.msra.mxu0 %v3984
        %4008 = vmatmul.f32.gmra.mxu0 %v3982
        %v4009 = vpop.f32.mrf.mxu0
        %v4010 = vadd.f32 0.0, %v4009
        %4011 = vdwg.mxu0
        %4012 = vmatpush.msra.mxu0 0.0
        %4013 = vmatpush.msra.mxu0 0.0
        %4014 = vmatpush.msra.mxu0 0.0
        %4015 = vmatpush.msra.mxu0 0.0
        %4016 = vmatpush.msra.mxu0 0.0
        %4017 = vmatpush.msra.mxu0 0.0
        %4018 = vmatpush.msra.mxu0 0.0
        %4019 = vmatpush.msra.mxu0 0.0
        %4020 = vmatpush.msra.mxu0 0.0
        %4021 = vmatpush.msra.mxu0 0.0
        %4022 = vmatpush.msra.mxu0 0.0
        %4023 = vmatpush.msra.mxu0 0.0
        %4024 = vmatpush.msra.mxu0 0.0
        %4025 = vmatpush.msra.mxu0 0.0
        %4026 = vmatpush.msra.mxu0 0.0
        %4027 = vmatpush.msra.mxu0 %v3986
        %4028 = vmatmul.f32.gmra.mxu0 %v3982
        %v4029 = vpop.f32.mrf.mxu0
        %v4030 = vadd.f32 0.0, %v4029
        %4031 = vdwg.mxu0
        %4032 = vmatpush.msra.mxu0 0.0
        %4033 = vmatpush.msra.mxu0 0.0
        %4034 = vmatpush.msra.mxu0 0.0
        %4035 = vmatpush.msra.mxu0 0.0
        %4036 = vmatpush.msra.mxu0 0.0
        %4037 = vmatpush.msra.mxu0 0.0
        %4038 = vmatpush.msra.mxu0 0.0
        %4039 = vmatpush.msra.mxu0 0.0
        %4040 = vmatpush.msra.mxu0 0.0
        %4041 = vmatpush.msra.mxu0 0.0
        %4042 = vmatpush.msra.mxu0 0.0
        %4043 = vmatpush.msra.mxu0 0.0
        %4044 = vmatpush.msra.mxu0 0.0
        %4045 = vmatpush.msra.mxu0 0.0
        %4046 = vmatpush.msra.mxu0 0.0
        %4047 = vmatpush.msra.mxu0 %v3988
        %4048 = vmatmul.f32.gmra.mxu0 %v3982
        %v4049 = vpop.f32.mrf.mxu0
        %v4050 = vadd.f32 0.0, %v4049
        %4051 = vdwg.mxu0
        %4052 = vmatpush.msra.mxu0 0.0
        %4053 = vmatpush.msra.mxu0 0.0
        %4054 = vmatpush.msra.mxu0 0.0
        %4055 = vmatpush.msra.mxu0 0.0
        %4056 = vmatpush.msra.mxu0 0.0
        %4057 = vmatpush.msra.mxu0 0.0
        %4058 = vmatpush.msra.mxu0 0.0
        %4059 = vmatpush.msra.mxu0 0.0
        %4060 = vmatpush.msra.mxu0 0.0
        %4061 = vmatpush.msra.mxu0 0.0
        %4062 = vmatpush.msra.mxu0 0.0
        %4063 = vmatpush.msra.mxu0 0.0
        %4064 = vmatpush.msra.mxu0 0.0
        %4065 = vmatpush.msra.mxu0 0.0
        %4066 = vmatpush.msra.mxu0 0.0
        %4067 = vmatpush.msra.mxu0 %v3990
        %4068 = vmatmul.f32.gmra.mxu0 %v3982
        %v4069 = vpop.f32.mrf.mxu0
        %v4070 = vadd.f32 0.0, %v4069
        %4071 = vdwg.mxu0
        %v4072 = vadd.f32 %v3961, %v4010
        %v4073 = vadd.f32 %v3962, %v4030
        %v4074 = vadd.f32 %v3963, %v4050
        %v4075 = vadd.f32 %v3964, %v4070
        %s4076 = scalar_lea.vmem %s3, 144
        %v4077 = vld [vmem:[%s4076] sm:$0x3f]
        %4078 = vrot.lane.b32.xlu0 %v2116, 41
        %v4079 = vpop.permute.xlu0 %4078
        %4080 = vrot.lane.b32.xlu0 %v2117, 41
        %v4081 = vpop.permute.xlu0 %4080
        %4082 = vrot.lane.b32.xlu0 %v2118, 41
        %v4083 = vpop.permute.xlu0 %4082
        %4084 = vrot.lane.b32.xlu0 %v2119, 41
        %v4085 = vpop.permute.xlu0 %4084
        %4086 = vrot.lane.b32.xlu0 %v2120, 41
        %v4087 = vpop.permute.xlu0 %4086
        %v4088 = vsel %vm1386, %v4079, %v4081
        %v4089 = vsel %vm1386, %v4081, %v4083
        %v4090 = vsel %vm1386, %v4083, %v4085
        %v4091 = vsel %vm1386, %v4085, %v4087
        %v4093 = vsel %vm2139, %v4077, 0
        %v4095 = vsel %vm2143, %v4088, 0
        %v4097 = vsel %vm2143, %v4089, 0
        %v4099 = vsel %vm2143, %v4090, 0
        %v4101 = vsel %vm2143, %v4091, 0
        %4103 = vmatpush.msra.mxu0 0.0
        %4104 = vmatpush.msra.mxu0 0.0
        %4105 = vmatpush.msra.mxu0 0.0
        %4106 = vmatpush.msra.mxu0 0.0
        %4107 = vmatpush.msra.mxu0 0.0
        %4108 = vmatpush.msra.mxu0 0.0
        %4109 = vmatpush.msra.mxu0 0.0
        %4110 = vmatpush.msra.mxu0 0.0
        %4111 = vmatpush.msra.mxu0 0.0
        %4112 = vmatpush.msra.mxu0 0.0
        %4113 = vmatpush.msra.mxu0 0.0
        %4114 = vmatpush.msra.mxu0 0.0
        %4115 = vmatpush.msra.mxu0 0.0
        %4116 = vmatpush.msra.mxu0 0.0
        %4117 = vmatpush.msra.mxu0 0.0
        %4118 = vmatpush.msra.mxu0 %v4095
        %4119 = vmatmul.f32.gmra.mxu0 %v4093
        %v4120 = vpop.f32.mrf.mxu0
        %v4121 = vadd.f32 0.0, %v4120
        %4122 = vdwg.mxu0
        %4123 = vmatpush.msra.mxu0 0.0
        %4124 = vmatpush.msra.mxu0 0.0
        %4125 = vmatpush.msra.mxu0 0.0
        %4126 = vmatpush.msra.mxu0 0.0
        %4127 = vmatpush.msra.mxu0 0.0
        %4128 = vmatpush.msra.mxu0 0.0
        %4129 = vmatpush.msra.mxu0 0.0
        %4130 = vmatpush.msra.mxu0 0.0
        %4131 = vmatpush.msra.mxu0 0.0
        %4132 = vmatpush.msra.mxu0 0.0
        %4133 = vmatpush.msra.mxu0 0.0
        %4134 = vmatpush.msra.mxu0 0.0
        %4135 = vmatpush.msra.mxu0 0.0
        %4136 = vmatpush.msra.mxu0 0.0
        %4137 = vmatpush.msra.mxu0 0.0
        %4138 = vmatpush.msra.mxu0 %v4097
        %4139 = vmatmul.f32.gmra.mxu0 %v4093
        %v4140 = vpop.f32.mrf.mxu0
        %v4141 = vadd.f32 0.0, %v4140
        %4142 = vdwg.mxu0
        %4143 = vmatpush.msra.mxu0 0.0
        %4144 = vmatpush.msra.mxu0 0.0
        %4145 = vmatpush.msra.mxu0 0.0
        %4146 = vmatpush.msra.mxu0 0.0
        %4147 = vmatpush.msra.mxu0 0.0
        %4148 = vmatpush.msra.mxu0 0.0
        %4149 = vmatpush.msra.mxu0 0.0
        %4150 = vmatpush.msra.mxu0 0.0
        %4151 = vmatpush.msra.mxu0 0.0
        %4152 = vmatpush.msra.mxu0 0.0
        %4153 = vmatpush.msra.mxu0 0.0
        %4154 = vmatpush.msra.mxu0 0.0
        %4155 = vmatpush.msra.mxu0 0.0
        %4156 = vmatpush.msra.mxu0 0.0
        %4157 = vmatpush.msra.mxu0 0.0
        %4158 = vmatpush.msra.mxu0 %v4099
        %4159 = vmatmul.f32.gmra.mxu0 %v4093
        %v4160 = vpop.f32.mrf.mxu0
        %v4161 = vadd.f32 0.0, %v4160
        %4162 = vdwg.mxu0
        %4163 = vmatpush.msra.mxu0 0.0
        %4164 = vmatpush.msra.mxu0 0.0
        %4165 = vmatpush.msra.mxu0 0.0
        %4166 = vmatpush.msra.mxu0 0.0
        %4167 = vmatpush.msra.mxu0 0.0
        %4168 = vmatpush.msra.mxu0 0.0
        %4169 = vmatpush.msra.mxu0 0.0
        %4170 = vmatpush.msra.mxu0 0.0
        %4171 = vmatpush.msra.mxu0 0.0
        %4172 = vmatpush.msra.mxu0 0.0
        %4173 = vmatpush.msra.mxu0 0.0
        %4174 = vmatpush.msra.mxu0 0.0
        %4175 = vmatpush.msra.mxu0 0.0
        %4176 = vmatpush.msra.mxu0 0.0
        %4177 = vmatpush.msra.mxu0 0.0
        %4178 = vmatpush.msra.mxu0 %v4101
        %4179 = vmatmul.f32.gmra.mxu0 %v4093
        %v4180 = vpop.f32.mrf.mxu0
        %v4181 = vadd.f32 0.0, %v4180
        %4182 = vdwg.mxu0
        %v4183 = vadd.f32 %v4072, %v4121
        %v4184 = vadd.f32 %v4073, %v4141
        %v4185 = vadd.f32 %v4074, %v4161
        %v4186 = vadd.f32 %v4075, %v4181
        %s4187 = scalar_lea.vmem %s3, 152
        %v4188 = vld [vmem:[%s4187] sm:$0x3f]
        %4189 = vrot.lane.b32.xlu0 %v2116, 40
        %v4190 = vpop.permute.xlu0 %4189
        %4191 = vrot.lane.b32.xlu0 %v2117, 40
        %v4192 = vpop.permute.xlu0 %4191
        %4193 = vrot.lane.b32.xlu0 %v2118, 40
        %v4194 = vpop.permute.xlu0 %4193
        %4195 = vrot.lane.b32.xlu0 %v2119, 40
        %v4196 = vpop.permute.xlu0 %4195
        %4197 = vrot.lane.b32.xlu0 %v2120, 40
        %v4198 = vpop.permute.xlu0 %4197
        %v4199 = vsel %vm1435, %v4190, %v4192
        %v4200 = vsel %vm1435, %v4192, %v4194
        %v4201 = vsel %vm1435, %v4194, %v4196
        %v4202 = vsel %vm1435, %v4196, %v4198
        %v4204 = vsel %vm2139, %v4188, 0
        %v4206 = vsel %vm2143, %v4199, 0
        %v4208 = vsel %vm2143, %v4200, 0
        %v4210 = vsel %vm2143, %v4201, 0
        %v4212 = vsel %vm2143, %v4202, 0
        %4214 = vmatpush.msra.mxu0 0.0
        %4215 = vmatpush.msra.mxu0 0.0
        %4216 = vmatpush.msra.mxu0 0.0
        %4217 = vmatpush.msra.mxu0 0.0
        %4218 = vmatpush.msra.mxu0 0.0
        %4219 = vmatpush.msra.mxu0 0.0
        %4220 = vmatpush.msra.mxu0 0.0
        %4221 = vmatpush.msra.mxu0 0.0
        %4222 = vmatpush.msra.mxu0 0.0
        %4223 = vmatpush.msra.mxu0 0.0
        %4224 = vmatpush.msra.mxu0 0.0
        %4225 = vmatpush.msra.mxu0 0.0
        %4226 = vmatpush.msra.mxu0 0.0
        %4227 = vmatpush.msra.mxu0 0.0
        %4228 = vmatpush.msra.mxu0 0.0
        %4229 = vmatpush.msra.mxu0 %v4206
        %4230 = vmatmul.f32.gmra.mxu0 %v4204
        %v4231 = vpop.f32.mrf.mxu0
        %v4232 = vadd.f32 0.0, %v4231
        %4233 = vdwg.mxu0
        %4234 = vmatpush.msra.mxu0 0.0
        %4235 = vmatpush.msra.mxu0 0.0
        %4236 = vmatpush.msra.mxu0 0.0
        %4237 = vmatpush.msra.mxu0 0.0
        %4238 = vmatpush.msra.mxu0 0.0
        %4239 = vmatpush.msra.mxu0 0.0
        %4240 = vmatpush.msra.mxu0 0.0
        %4241 = vmatpush.msra.mxu0 0.0
        %4242 = vmatpush.msra.mxu0 0.0
        %4243 = vmatpush.msra.mxu0 0.0
        %4244 = vmatpush.msra.mxu0 0.0
        %4245 = vmatpush.msra.mxu0 0.0
        %4246 = vmatpush.msra.mxu0 0.0
        %4247 = vmatpush.msra.mxu0 0.0
        %4248 = vmatpush.msra.mxu0 0.0
        %4249 = vmatpush.msra.mxu0 %v4208
        %4250 = vmatmul.f32.gmra.mxu0 %v4204
        %v4251 = vpop.f32.mrf.mxu0
        %v4252 = vadd.f32 0.0, %v4251
        %4253 = vdwg.mxu0
        %4254 = vmatpush.msra.mxu0 0.0
        %4255 = vmatpush.msra.mxu0 0.0
        %4256 = vmatpush.msra.mxu0 0.0
        %4257 = vmatpush.msra.mxu0 0.0
        %4258 = vmatpush.msra.mxu0 0.0
        %4259 = vmatpush.msra.mxu0 0.0
        %4260 = vmatpush.msra.mxu0 0.0
        %4261 = vmatpush.msra.mxu0 0.0
        %4262 = vmatpush.msra.mxu0 0.0
        %4263 = vmatpush.msra.mxu0 0.0
        %4264 = vmatpush.msra.mxu0 0.0
        %4265 = vmatpush.msra.mxu0 0.0
        %4266 = vmatpush.msra.mxu0 0.0
        %4267 = vmatpush.msra.mxu0 0.0
        %4268 = vmatpush.msra.mxu0 0.0
        %4269 = vmatpush.msra.mxu0 %v4210
        %4270 = vmatmul.f32.gmra.mxu0 %v4204
        %v4271 = vpop.f32.mrf.mxu0
        %v4272 = vadd.f32 0.0, %v4271
        %4273 = vdwg.mxu0
        %4274 = vmatpush.msra.mxu0 0.0
        %4275 = vmatpush.msra.mxu0 0.0
        %4276 = vmatpush.msra.mxu0 0.0
        %4277 = vmatpush.msra.mxu0 0.0
        %4278 = vmatpush.msra.mxu0 0.0
        %4279 = vmatpush.msra.mxu0 0.0
        %4280 = vmatpush.msra.mxu0 0.0
        %4281 = vmatpush.msra.mxu0 0.0
        %4282 = vmatpush.msra.mxu0 0.0
        %4283 = vmatpush.msra.mxu0 0.0
        %4284 = vmatpush.msra.mxu0 0.0
        %4285 = vmatpush.msra.mxu0 0.0
        %4286 = vmatpush.msra.mxu0 0.0
        %4287 = vmatpush.msra.mxu0 0.0
        %4288 = vmatpush.msra.mxu0 0.0
        %4289 = vmatpush.msra.mxu0 %v4212
        %4290 = vmatmul.f32.gmra.mxu0 %v4204
        %v4291 = vpop.f32.mrf.mxu0
        %v4292 = vadd.f32 0.0, %v4291
        %4293 = vdwg.mxu0
        %v4294 = vadd.f32 %v4183, %v4232
        %v4295 = vadd.f32 %v4184, %v4252
        %v4296 = vadd.f32 %v4185, %v4272
        %v4297 = vadd.f32 %v4186, %v4292
        %s4298 = scalar_lea.vmem %s3, 160
        %v4299 = vld [vmem:[%s4298] sm:$0x3f]
        %4300 = vrot.lane.b32.xlu0 %v2116, 16
        %v4301 = vpop.permute.xlu0 %4300
        %4302 = vrot.lane.b32.xlu0 %v2117, 16
        %v4303 = vpop.permute.xlu0 %4302
        %4304 = vrot.lane.b32.xlu0 %v2118, 16
        %v4305 = vpop.permute.xlu0 %4304
        %4306 = vrot.lane.b32.xlu0 %v2119, 16
        %v4307 = vpop.permute.xlu0 %4306
        %4308 = vrot.lane.b32.xlu0 %v2120, 16
        %v4309 = vpop.permute.xlu0 %4308
        %v4310 = vsel %vm1490, %v4301, %v4303
        %v4311 = vsel %vm1490, %v4303, %v4305
        %v4312 = vsel %vm1490, %v4305, %v4307
        %v4313 = vsel %vm1490, %v4307, %v4309
        %v4315 = vsel %vm2139, %v4299, 0
        %v4317 = vsel %vm2143, %v4310, 0
        %v4319 = vsel %vm2143, %v4311, 0
        %v4321 = vsel %vm2143, %v4312, 0
        %v4323 = vsel %vm2143, %v4313, 0
        %4325 = vmatpush.msra.mxu0 0.0
        %4326 = vmatpush.msra.mxu0 0.0
        %4327 = vmatpush.msra.mxu0 0.0
        %4328 = vmatpush.msra.mxu0 0.0
        %4329 = vmatpush.msra.mxu0 0.0
        %4330 = vmatpush.msra.mxu0 0.0
        %4331 = vmatpush.msra.mxu0 0.0
        %4332 = vmatpush.msra.mxu0 0.0
        %4333 = vmatpush.msra.mxu0 0.0
        %4334 = vmatpush.msra.mxu0 0.0
        %4335 = vmatpush.msra.mxu0 0.0
        %4336 = vmatpush.msra.mxu0 0.0
        %4337 = vmatpush.msra.mxu0 0.0
        %4338 = vmatpush.msra.mxu0 0.0
        %4339 = vmatpush.msra.mxu0 0.0
        %4340 = vmatpush.msra.mxu0 %v4317
        %4341 = vmatmul.f32.gmra.mxu0 %v4315
        %v4342 = vpop.f32.mrf.mxu0
        %v4343 = vadd.f32 0.0, %v4342
        %4344 = vdwg.mxu0
        %4345 = vmatpush.msra.mxu0 0.0
        %4346 = vmatpush.msra.mxu0 0.0
        %4347 = vmatpush.msra.mxu0 0.0
        %4348 = vmatpush.msra.mxu0 0.0
        %4349 = vmatpush.msra.mxu0 0.0
        %4350 = vmatpush.msra.mxu0 0.0
        %4351 = vmatpush.msra.mxu0 0.0
        %4352 = vmatpush.msra.mxu0 0.0
        %4353 = vmatpush.msra.mxu0 0.0
        %4354 = vmatpush.msra.mxu0 0.0
        %4355 = vmatpush.msra.mxu0 0.0
        %4356 = vmatpush.msra.mxu0 0.0
        %4357 = vmatpush.msra.mxu0 0.0
        %4358 = vmatpush.msra.mxu0 0.0
        %4359 = vmatpush.msra.mxu0 0.0
        %4360 = vmatpush.msra.mxu0 %v4319
        %4361 = vmatmul.f32.gmra.mxu0 %v4315
        %v4362 = vpop.f32.mrf.mxu0
        %v4363 = vadd.f32 0.0, %v4362
        %4364 = vdwg.mxu0
        %4365 = vmatpush.msra.mxu0 0.0
        %4366 = vmatpush.msra.mxu0 0.0
        %4367 = vmatpush.msra.mxu0 0.0
        %4368 = vmatpush.msra.mxu0 0.0
        %4369 = vmatpush.msra.mxu0 0.0
        %4370 = vmatpush.msra.mxu0 0.0
        %4371 = vmatpush.msra.mxu0 0.0
        %4372 = vmatpush.msra.mxu0 0.0
        %4373 = vmatpush.msra.mxu0 0.0
        %4374 = vmatpush.msra.mxu0 0.0
        %4375 = vmatpush.msra.mxu0 0.0
        %4376 = vmatpush.msra.mxu0 0.0
        %4377 = vmatpush.msra.mxu0 0.0
        %4378 = vmatpush.msra.mxu0 0.0
        %4379 = vmatpush.msra.mxu0 0.0
        %4380 = vmatpush.msra.mxu0 %v4321
        %4381 = vmatmul.f32.gmra.mxu0 %v4315
        %v4382 = vpop.f32.mrf.mxu0
        %v4383 = vadd.f32 0.0, %v4382
        %4384 = vdwg.mxu0
        %4385 = vmatpush.msra.mxu0 0.0
        %4386 = vmatpush.msra.mxu0 0.0
        %4387 = vmatpush.msra.mxu0 0.0
        %4388 = vmatpush.msra.mxu0 0.0
        %4389 = vmatpush.msra.mxu0 0.0
        %4390 = vmatpush.msra.mxu0 0.0
        %4391 = vmatpush.msra.mxu0 0.0
        %4392 = vmatpush.msra.mxu0 0.0
        %4393 = vmatpush.msra.mxu0 0.0
        %4394 = vmatpush.msra.mxu0 0.0
        %4395 = vmatpush.msra.mxu0 0.0
        %4396 = vmatpush.msra.mxu0 0.0
        %4397 = vmatpush.msra.mxu0 0.0
        %4398 = vmatpush.msra.mxu0 0.0
        %4399 = vmatpush.msra.mxu0 0.0
        %4400 = vmatpush.msra.mxu0 %v4323
        %4401 = vmatmul.f32.gmra.mxu0 %v4315
        %v4402 = vpop.f32.mrf.mxu0
        %v4403 = vadd.f32 0.0, %v4402
        %4404 = vdwg.mxu0
        %v4405 = vadd.f32 %v4294, %v4343
        %v4406 = vadd.f32 %v4295, %v4363
        %v4407 = vadd.f32 %v4296, %v4383
        %v4408 = vadd.f32 %v4297, %v4403
        %s4409 = scalar_lea.vmem %s3, 168
        %v4410 = vld [vmem:[%s4409] sm:$0x3f]
        %4411 = vrot.lane.b32.xlu0 %v2116, 15
        %v4412 = vpop.permute.xlu0 %4411
        %4413 = vrot.lane.b32.xlu0 %v2117, 15
        %v4414 = vpop.permute.xlu0 %4413
        %4415 = vrot.lane.b32.xlu0 %v2118, 15
        %v4416 = vpop.permute.xlu0 %4415
        %4417 = vrot.lane.b32.xlu0 %v2119, 15
        %v4418 = vpop.permute.xlu0 %4417
        %4419 = vrot.lane.b32.xlu0 %v2120, 15
        %v4420 = vpop.permute.xlu0 %4419
        %v4421 = vsel %vm1544, %v4412, %v4414
        %v4422 = vsel %vm1544, %v4414, %v4416
        %v4423 = vsel %vm1544, %v4416, %v4418
        %v4424 = vsel %vm1544, %v4418, %v4420
        %v4426 = vsel %vm2139, %v4410, 0
        %v4428 = vsel %vm2143, %v4421, 0
        %v4430 = vsel %vm2143, %v4422, 0
        %v4432 = vsel %vm2143, %v4423, 0
        %v4434 = vsel %vm2143, %v4424, 0
        %4436 = vmatpush.msra.mxu0 0.0
        %4437 = vmatpush.msra.mxu0 0.0
        %4438 = vmatpush.msra.mxu0 0.0
        %4439 = vmatpush.msra.mxu0 0.0
        %4440 = vmatpush.msra.mxu0 0.0
        %4441 = vmatpush.msra.mxu0 0.0
        %4442 = vmatpush.msra.mxu0 0.0
        %4443 = vmatpush.msra.mxu0 0.0
        %4444 = vmatpush.msra.mxu0 0.0
        %4445 = vmatpush.msra.mxu0 0.0
        %4446 = vmatpush.msra.mxu0 0.0
        %4447 = vmatpush.msra.mxu0 0.0
        %4448 = vmatpush.msra.mxu0 0.0
        %4449 = vmatpush.msra.mxu0 0.0
        %4450 = vmatpush.msra.mxu0 0.0
        %4451 = vmatpush.msra.mxu0 %v4428
        %4452 = vmatmul.f32.gmra.mxu0 %v4426
        %v4453 = vpop.f32.mrf.mxu0
        %v4454 = vadd.f32 0.0, %v4453
        %4455 = vdwg.mxu0
        %4456 = vmatpush.msra.mxu0 0.0
        %4457 = vmatpush.msra.mxu0 0.0
        %4458 = vmatpush.msra.mxu0 0.0
        %4459 = vmatpush.msra.mxu0 0.0
        %4460 = vmatpush.msra.mxu0 0.0
        %4461 = vmatpush.msra.mxu0 0.0
        %4462 = vmatpush.msra.mxu0 0.0
        %4463 = vmatpush.msra.mxu0 0.0
        %4464 = vmatpush.msra.mxu0 0.0
        %4465 = vmatpush.msra.mxu0 0.0
        %4466 = vmatpush.msra.mxu0 0.0
        %4467 = vmatpush.msra.mxu0 0.0
        %4468 = vmatpush.msra.mxu0 0.0
        %4469 = vmatpush.msra.mxu0 0.0
        %4470 = vmatpush.msra.mxu0 0.0
        %4471 = vmatpush.msra.mxu0 %v4430
        %4472 = vmatmul.f32.gmra.mxu0 %v4426
        %v4473 = vpop.f32.mrf.mxu0
        %v4474 = vadd.f32 0.0, %v4473
        %4475 = vdwg.mxu0
        %4476 = vmatpush.msra.mxu0 0.0
        %4477 = vmatpush.msra.mxu0 0.0
        %4478 = vmatpush.msra.mxu0 0.0
        %4479 = vmatpush.msra.mxu0 0.0
        %4480 = vmatpush.msra.mxu0 0.0
        %4481 = vmatpush.msra.mxu0 0.0
        %4482 = vmatpush.msra.mxu0 0.0
        %4483 = vmatpush.msra.mxu0 0.0
        %4484 = vmatpush.msra.mxu0 0.0
        %4485 = vmatpush.msra.mxu0 0.0
        %4486 = vmatpush.msra.mxu0 0.0
        %4487 = vmatpush.msra.mxu0 0.0
        %4488 = vmatpush.msra.mxu0 0.0
        %4489 = vmatpush.msra.mxu0 0.0
        %4490 = vmatpush.msra.mxu0 0.0
        %4491 = vmatpush.msra.mxu0 %v4432
        %4492 = vmatmul.f32.gmra.mxu0 %v4426
        %v4493 = vpop.f32.mrf.mxu0
        %v4494 = vadd.f32 0.0, %v4493
        %4495 = vdwg.mxu0
        %4496 = vmatpush.msra.mxu0 0.0
        %4497 = vmatpush.msra.mxu0 0.0
        %4498 = vmatpush.msra.mxu0 0.0
        %4499 = vmatpush.msra.mxu0 0.0
        %4500 = vmatpush.msra.mxu0 0.0
        %4501 = vmatpush.msra.mxu0 0.0
        %4502 = vmatpush.msra.mxu0 0.0
        %4503 = vmatpush.msra.mxu0 0.0
        %4504 = vmatpush.msra.mxu0 0.0
        %4505 = vmatpush.msra.mxu0 0.0
        %4506 = vmatpush.msra.mxu0 0.0
        %4507 = vmatpush.msra.mxu0 0.0
        %4508 = vmatpush.msra.mxu0 0.0
        %4509 = vmatpush.msra.mxu0 0.0
        %4510 = vmatpush.msra.mxu0 0.0
        %4511 = vmatpush.msra.mxu0 %v4434
        %4512 = vmatmul.f32.gmra.mxu0 %v4426
        %v4513 = vpop.f32.mrf.mxu0
        %v4514 = vadd.f32 0.0, %v4513
        %4515 = vdwg.mxu0
        %v4516 = vadd.f32 %v4405, %v4454
        %v4517 = vadd.f32 %v4406, %v4474
        %v4518 = vadd.f32 %v4407, %v4494
        %v4519 = vadd.f32 %v4408, %v4514
        %s4520 = scalar_lea.vmem %s3, 176
        %v4521 = vld [vmem:[%s4520] sm:$0x3f]
        %4522 = vrot.lane.b32.xlu0 %v2116, 14
        %v4523 = vpop.permute.xlu0 %4522
        %4524 = vrot.lane.b32.xlu0 %v2117, 14
        %v4525 = vpop.permute.xlu0 %4524
        %4526 = vrot.lane.b32.xlu0 %v2118, 14
        %v4527 = vpop.permute.xlu0 %4526
        %4528 = vrot.lane.b32.xlu0 %v2119, 14
        %v4529 = vpop.permute.xlu0 %4528
        %4530 = vrot.lane.b32.xlu0 %v2120, 14
        %v4531 = vpop.permute.xlu0 %4530
        %v4532 = vsel %vm1598, %v4523, %v4525
        %v4533 = vsel %vm1598, %v4525, %v4527
        %v4534 = vsel %vm1598, %v4527, %v4529
        %v4535 = vsel %vm1598, %v4529, %v4531
        %v4537 = vsel %vm2139, %v4521, 0
        %v4539 = vsel %vm2143, %v4532, 0
        %v4541 = vsel %vm2143, %v4533, 0
        %v4543 = vsel %vm2143, %v4534, 0
        %v4545 = vsel %vm2143, %v4535, 0
        %4547 = vmatpush.msra.mxu0 0.0
        %4548 = vmatpush.msra.mxu0 0.0
        %4549 = vmatpush.msra.mxu0 0.0
        %4550 = vmatpush.msra.mxu0 0.0
        %4551 = vmatpush.msra.mxu0 0.0
        %4552 = vmatpush.msra.mxu0 0.0
        %4553 = vmatpush.msra.mxu0 0.0
        %4554 = vmatpush.msra.mxu0 0.0
        %4555 = vmatpush.msra.mxu0 0.0
        %4556 = vmatpush.msra.mxu0 0.0
        %4557 = vmatpush.msra.mxu0 0.0
        %4558 = vmatpush.msra.mxu0 0.0
        %4559 = vmatpush.msra.mxu0 0.0
        %4560 = vmatpush.msra.mxu0 0.0
        %4561 = vmatpush.msra.mxu0 0.0
        %4562 = vmatpush.msra.mxu0 %v4539
        %4563 = vmatmul.f32.gmra.mxu0 %v4537
        %v4564 = vpop.f32.mrf.mxu0
        %v4565 = vadd.f32 0.0, %v4564
        %4566 = vdwg.mxu0
        %4567 = vmatpush.msra.mxu0 0.0
        %4568 = vmatpush.msra.mxu0 0.0
        %4569 = vmatpush.msra.mxu0 0.0
        %4570 = vmatpush.msra.mxu0 0.0
        %4571 = vmatpush.msra.mxu0 0.0
        %4572 = vmatpush.msra.mxu0 0.0
        %4573 = vmatpush.msra.mxu0 0.0
        %4574 = vmatpush.msra.mxu0 0.0
        %4575 = vmatpush.msra.mxu0 0.0
        %4576 = vmatpush.msra.mxu0 0.0
        %4577 = vmatpush.msra.mxu0 0.0
        %4578 = vmatpush.msra.mxu0 0.0
        %4579 = vmatpush.msra.mxu0 0.0
        %4580 = vmatpush.msra.mxu0 0.0
        %4581 = vmatpush.msra.mxu0 0.0
        %4582 = vmatpush.msra.mxu0 %v4541
        %4583 = vmatmul.f32.gmra.mxu0 %v4537
        %v4584 = vpop.f32.mrf.mxu0
        %v4585 = vadd.f32 0.0, %v4584
        %4586 = vdwg.mxu0
        %4587 = vmatpush.msra.mxu0 0.0
        %4588 = vmatpush.msra.mxu0 0.0
        %4589 = vmatpush.msra.mxu0 0.0
        %4590 = vmatpush.msra.mxu0 0.0
        %4591 = vmatpush.msra.mxu0 0.0
        %4592 = vmatpush.msra.mxu0 0.0
        %4593 = vmatpush.msra.mxu0 0.0
        %4594 = vmatpush.msra.mxu0 0.0
        %4595 = vmatpush.msra.mxu0 0.0
        %4596 = vmatpush.msra.mxu0 0.0
        %4597 = vmatpush.msra.mxu0 0.0
        %4598 = vmatpush.msra.mxu0 0.0
        %4599 = vmatpush.msra.mxu0 0.0
        %4600 = vmatpush.msra.mxu0 0.0
        %4601 = vmatpush.msra.mxu0 0.0
        %4602 = vmatpush.msra.mxu0 %v4543
        %4603 = vmatmul.f32.gmra.mxu0 %v4537
        %v4604 = vpop.f32.mrf.mxu0
        %v4605 = vadd.f32 0.0, %v4604
        %4606 = vdwg.mxu0
        %4607 = vmatpush.msra.mxu0 0.0
        %4608 = vmatpush.msra.mxu0 0.0
        %4609 = vmatpush.msra.mxu0 0.0
        %4610 = vmatpush.msra.mxu0 0.0
        %4611 = vmatpush.msra.mxu0 0.0
        %4612 = vmatpush.msra.mxu0 0.0
        %4613 = vmatpush.msra.mxu0 0.0
        %4614 = vmatpush.msra.mxu0 0.0
        %4615 = vmatpush.msra.mxu0 0.0
        %4616 = vmatpush.msra.mxu0 0.0
        %4617 = vmatpush.msra.mxu0 0.0
        %4618 = vmatpush.msra.mxu0 0.0
        %4619 = vmatpush.msra.mxu0 0.0
        %4620 = vmatpush.msra.mxu0 0.0
        %4621 = vmatpush.msra.mxu0 0.0
        %4622 = vmatpush.msra.mxu0 %v4545
        %4623 = vmatmul.f32.gmra.mxu0 %v4537
        %v4624 = vpop.f32.mrf.mxu0
        %v4625 = vadd.f32 0.0, %v4624
        %4626 = vdwg.mxu0
        %v4627 = vadd.f32 %v4516, %v4565
        %v4628 = vadd.f32 %v4517, %v4585
        %v4629 = vadd.f32 %v4518, %v4605
        %v4630 = vadd.f32 %v4519, %v4625
        %s4631 = scalar_lea.vmem %s3, 184
        %v4632 = vld [vmem:[%s4631] sm:$0x3f]
        %4633 = vrot.lane.b32.xlu0 %v2116, 13
        %v4634 = vpop.permute.xlu0 %4633
        %4635 = vrot.lane.b32.xlu0 %v2117, 13
        %v4636 = vpop.permute.xlu0 %4635
        %4637 = vrot.lane.b32.xlu0 %v2118, 13
        %v4638 = vpop.permute.xlu0 %4637
        %4639 = vrot.lane.b32.xlu0 %v2119, 13
        %v4640 = vpop.permute.xlu0 %4639
        %4641 = vrot.lane.b32.xlu0 %v2120, 13
        %v4642 = vpop.permute.xlu0 %4641
        %v4643 = vsel %vm1652, %v4634, %v4636
        %v4644 = vsel %vm1652, %v4636, %v4638
        %v4645 = vsel %vm1652, %v4638, %v4640
        %v4646 = vsel %vm1652, %v4640, %v4642
        %v4648 = vsel %vm2139, %v4632, 0
        %v4650 = vsel %vm2143, %v4643, 0
        %v4652 = vsel %vm2143, %v4644, 0
        %v4654 = vsel %vm2143, %v4645, 0
        %v4656 = vsel %vm2143, %v4646, 0
        %4658 = vmatpush.msra.mxu0 0.0
        %4659 = vmatpush.msra.mxu0 0.0
        %4660 = vmatpush.msra.mxu0 0.0
        %4661 = vmatpush.msra.mxu0 0.0
        %4662 = vmatpush.msra.mxu0 0.0
        %4663 = vmatpush.msra.mxu0 0.0
        %4664 = vmatpush.msra.mxu0 0.0
        %4665 = vmatpush.msra.mxu0 0.0
        %4666 = vmatpush.msra.mxu0 0.0
        %4667 = vmatpush.msra.mxu0 0.0
        %4668 = vmatpush.msra.mxu0 0.0
        %4669 = vmatpush.msra.mxu0 0.0
        %4670 = vmatpush.msra.mxu0 0.0
        %4671 = vmatpush.msra.mxu0 0.0
        %4672 = vmatpush.msra.mxu0 0.0
        %4673 = vmatpush.msra.mxu0 %v4650
        %4674 = vmatmul.f32.gmra.mxu0 %v4648
        %v4675 = vpop.f32.mrf.mxu0
        %v4676 = vadd.f32 0.0, %v4675
        %4677 = vdwg.mxu0
        %4678 = vmatpush.msra.mxu0 0.0
        %4679 = vmatpush.msra.mxu0 0.0
        %4680 = vmatpush.msra.mxu0 0.0
        %4681 = vmatpush.msra.mxu0 0.0
        %4682 = vmatpush.msra.mxu0 0.0
        %4683 = vmatpush.msra.mxu0 0.0
        %4684 = vmatpush.msra.mxu0 0.0
        %4685 = vmatpush.msra.mxu0 0.0
        %4686 = vmatpush.msra.mxu0 0.0
        %4687 = vmatpush.msra.mxu0 0.0
        %4688 = vmatpush.msra.mxu0 0.0
        %4689 = vmatpush.msra.mxu0 0.0
        %4690 = vmatpush.msra.mxu0 0.0
        %4691 = vmatpush.msra.mxu0 0.0
        %4692 = vmatpush.msra.mxu0 0.0
        %4693 = vmatpush.msra.mxu0 %v4652
        %4694 = vmatmul.f32.gmra.mxu0 %v4648
        %v4695 = vpop.f32.mrf.mxu0
        %v4696 = vadd.f32 0.0, %v4695
        %4697 = vdwg.mxu0
        %4698 = vmatpush.msra.mxu0 0.0
        %4699 = vmatpush.msra.mxu0 0.0
        %4700 = vmatpush.msra.mxu0 0.0
        %4701 = vmatpush.msra.mxu0 0.0
        %4702 = vmatpush.msra.mxu0 0.0
        %4703 = vmatpush.msra.mxu0 0.0
        %4704 = vmatpush.msra.mxu0 0.0
        %4705 = vmatpush.msra.mxu0 0.0
        %4706 = vmatpush.msra.mxu0 0.0
        %4707 = vmatpush.msra.mxu0 0.0
        %4708 = vmatpush.msra.mxu0 0.0
        %4709 = vmatpush.msra.mxu0 0.0
        %4710 = vmatpush.msra.mxu0 0.0
        %4711 = vmatpush.msra.mxu0 0.0
        %4712 = vmatpush.msra.mxu0 0.0
        %4713 = vmatpush.msra.mxu0 %v4654
        %4714 = vmatmul.f32.gmra.mxu0 %v4648
        %v4715 = vpop.f32.mrf.mxu0
        %v4716 = vadd.f32 0.0, %v4715
        %4717 = vdwg.mxu0
        %4718 = vmatpush.msra.mxu0 0.0
        %4719 = vmatpush.msra.mxu0 0.0
        %4720 = vmatpush.msra.mxu0 0.0
        %4721 = vmatpush.msra.mxu0 0.0
        %4722 = vmatpush.msra.mxu0 0.0
        %4723 = vmatpush.msra.mxu0 0.0
        %4724 = vmatpush.msra.mxu0 0.0
        %4725 = vmatpush.msra.mxu0 0.0
        %4726 = vmatpush.msra.mxu0 0.0
        %4727 = vmatpush.msra.mxu0 0.0
        %4728 = vmatpush.msra.mxu0 0.0
        %4729 = vmatpush.msra.mxu0 0.0
        %4730 = vmatpush.msra.mxu0 0.0
        %4731 = vmatpush.msra.mxu0 0.0
        %4732 = vmatpush.msra.mxu0 0.0
        %4733 = vmatpush.msra.mxu0 %v4656
        %4734 = vmatmul.f32.gmra.mxu0 %v4648
        %v4735 = vpop.f32.mrf.mxu0
        %v4736 = vadd.f32 0.0, %v4735
        %4737 = vdwg.mxu0
        %v4738 = vadd.f32 %v4627, %v4676
        %v4739 = vadd.f32 %v4628, %v4696
        %v4740 = vadd.f32 %v4629, %v4716
        %v4741 = vadd.f32 %v4630, %v4736
        %s4742 = scalar_lea.vmem %s3, 192
        %v4743 = vld [vmem:[%s4742] sm:$0x3f]
        %4744 = vrot.lane.b32.xlu0 %v2116, 12
        %v4745 = vpop.permute.xlu0 %4744
        %4746 = vrot.lane.b32.xlu0 %v2117, 12
        %v4747 = vpop.permute.xlu0 %4746
        %4748 = vrot.lane.b32.xlu0 %v2118, 12
        %v4749 = vpop.permute.xlu0 %4748
        %4750 = vrot.lane.b32.xlu0 %v2119, 12
        %v4751 = vpop.permute.xlu0 %4750
        %4752 = vrot.lane.b32.xlu0 %v2120, 12
        %v4753 = vpop.permute.xlu0 %4752
        %v4754 = vsel %vm1706, %v4745, %v4747
        %v4755 = vsel %vm1706, %v4747, %v4749
        %v4756 = vsel %vm1706, %v4749, %v4751
        %v4757 = vsel %vm1706, %v4751, %v4753
        %v4759 = vsel %vm2139, %v4743, 0
        %v4761 = vsel %vm2143, %v4754, 0
        %v4763 = vsel %vm2143, %v4755, 0
        %v4765 = vsel %vm2143, %v4756, 0
        %v4767 = vsel %vm2143, %v4757, 0
        %4769 = vmatpush.msra.mxu0 0.0
        %4770 = vmatpush.msra.mxu0 0.0
        %4771 = vmatpush.msra.mxu0 0.0
        %4772 = vmatpush.msra.mxu0 0.0
        %4773 = vmatpush.msra.mxu0 0.0
        %4774 = vmatpush.msra.mxu0 0.0
        %4775 = vmatpush.msra.mxu0 0.0
        %4776 = vmatpush.msra.mxu0 0.0
        %4777 = vmatpush.msra.mxu0 0.0
        %4778 = vmatpush.msra.mxu0 0.0
        %4779 = vmatpush.msra.mxu0 0.0
        %4780 = vmatpush.msra.mxu0 0.0
        %4781 = vmatpush.msra.mxu0 0.0
        %4782 = vmatpush.msra.mxu0 0.0
        %4783 = vmatpush.msra.mxu0 0.0
        %4784 = vmatpush.msra.mxu0 %v4761
        %4785 = vmatmul.f32.gmra.mxu0 %v4759
        %v4786 = vpop.f32.mrf.mxu0
        %v4787 = vadd.f32 0.0, %v4786
        %4788 = vdwg.mxu0
        %4789 = vmatpush.msra.mxu0 0.0
        %4790 = vmatpush.msra.mxu0 0.0
        %4791 = vmatpush.msra.mxu0 0.0
        %4792 = vmatpush.msra.mxu0 0.0
        %4793 = vmatpush.msra.mxu0 0.0
        %4794 = vmatpush.msra.mxu0 0.0
        %4795 = vmatpush.msra.mxu0 0.0
        %4796 = vmatpush.msra.mxu0 0.0
        %4797 = vmatpush.msra.mxu0 0.0
        %4798 = vmatpush.msra.mxu0 0.0
        %4799 = vmatpush.msra.mxu0 0.0
        %4800 = vmatpush.msra.mxu0 0.0
        %4801 = vmatpush.msra.mxu0 0.0
        %4802 = vmatpush.msra.mxu0 0.0
        %4803 = vmatpush.msra.mxu0 0.0
        %4804 = vmatpush.msra.mxu0 %v4763
        %4805 = vmatmul.f32.gmra.mxu0 %v4759
        %v4806 = vpop.f32.mrf.mxu0
        %v4807 = vadd.f32 0.0, %v4806
        %4808 = vdwg.mxu0
        %4809 = vmatpush.msra.mxu0 0.0
        %4810 = vmatpush.msra.mxu0 0.0
        %4811 = vmatpush.msra.mxu0 0.0
        %4812 = vmatpush.msra.mxu0 0.0
        %4813 = vmatpush.msra.mxu0 0.0
        %4814 = vmatpush.msra.mxu0 0.0
        %4815 = vmatpush.msra.mxu0 0.0
        %4816 = vmatpush.msra.mxu0 0.0
        %4817 = vmatpush.msra.mxu0 0.0
        %4818 = vmatpush.msra.mxu0 0.0
        %4819 = vmatpush.msra.mxu0 0.0
        %4820 = vmatpush.msra.mxu0 0.0
        %4821 = vmatpush.msra.mxu0 0.0
        %4822 = vmatpush.msra.mxu0 0.0
        %4823 = vmatpush.msra.mxu0 0.0
        %4824 = vmatpush.msra.mxu0 %v4765
        %4825 = vmatmul.f32.gmra.mxu0 %v4759
        %v4826 = vpop.f32.mrf.mxu0
        %v4827 = vadd.f32 0.0, %v4826
        %4828 = vdwg.mxu0
        %4829 = vmatpush.msra.mxu0 0.0
        %4830 = vmatpush.msra.mxu0 0.0
        %4831 = vmatpush.msra.mxu0 0.0
        %4832 = vmatpush.msra.mxu0 0.0
        %4833 = vmatpush.msra.mxu0 0.0
        %4834 = vmatpush.msra.mxu0 0.0
        %4835 = vmatpush.msra.mxu0 0.0
        %4836 = vmatpush.msra.mxu0 0.0
        %4837 = vmatpush.msra.mxu0 0.0
        %4838 = vmatpush.msra.mxu0 0.0
        %4839 = vmatpush.msra.mxu0 0.0
        %4840 = vmatpush.msra.mxu0 0.0
        %4841 = vmatpush.msra.mxu0 0.0
        %4842 = vmatpush.msra.mxu0 0.0
        %4843 = vmatpush.msra.mxu0 0.0
        %4844 = vmatpush.msra.mxu0 %v4767
        %4845 = vmatmul.f32.gmra.mxu0 %v4759
        %v4846 = vpop.f32.mrf.mxu0
        %v4847 = vadd.f32 0.0, %v4846
        %4848 = vdwg.mxu0
        %v4849 = vadd.f32 %v4738, %v4787
        %v4850 = vadd.f32 %v4739, %v4807
        %v4851 = vadd.f32 %v4740, %v4827
        %v4852 = vadd.f32 %v4741, %v4847
        %v4853 = vld [vmem:[%s4] sm:$0x3f]
        %4855 = vset.pattern.permute.xlu0 0
        %4856 = vperm.xlu0 %4855, %v4853
        %v4857 = vpop.permute.xlu0 %4856
        %v4859 = vadd.f32 %v4849, %v4857
        %v4860 = vadd.f32 %v4850, %v4857
        %v4861 = vadd.f32 %v4851, %v4857
        %v4862 = vadd.f32 %v4852, %v4857
        %v4863 = vmax.f32 %v4859, 0.0
        %v4864 = vmax.f32 %v4860, 0.0
        %v4865 = vmax.f32 %v4861, 0.0
        %v4866 = vmax.f32 %v4862, 0.0
        %4870 = vrot.lane.b32.xlu0 %v4863, 127
        %v4871 = vpop.permute.xlu0 %4870
        %4872 = vrot.lane.b32.xlu0 %v4864, 127
        %v4873 = vpop.permute.xlu0 %4872
        %4874 = vrot.lane.b32.xlu0 %v4865, 127
        %v4875 = vpop.permute.xlu0 %4874
        %v4876 = vsel %vm553, %v4871, %v4873
        %v4877 = vsel %vm553, %v4873, %v4875
        %v4881 = vmax.f32 %v4863, %v4876
        %v4882 = vmax.f32 %v4864, %v4877
        %v4883 = vmax.f32 %v4865, %v4875
        %4884 = vrot.lane.b32.xlu0 %v4863, 126
        %v4885 = vpop.permute.xlu0 %4884
        %4886 = vrot.lane.b32.xlu0 %v4864, 126
        %v4887 = vpop.permute.xlu0 %4886
        %4888 = vrot.lane.b32.xlu0 %v4865, 126
        %v4889 = vpop.permute.xlu0 %4888
        %v4890 = vsel %vm602, %v4885, %v4887
        %v4891 = vsel %vm602, %v4887, %v4889
        %v4895 = vmax.f32 %v4881, %v4890
        %v4896 = vmax.f32 %v4882, %v4891
        %v4897 = vmax.f32 %v4883, %v4889
        %4898 = vrot.lane.b32.xlu0 %v4863, 125
        %v4899 = vpop.permute.xlu0 %4898
        %4900 = vrot.lane.b32.xlu0 %v4864, 125
        %v4901 = vpop.permute.xlu0 %4900
        %4902 = vrot.lane.b32.xlu0 %v4865, 125
        %v4903 = vpop.permute.xlu0 %4902
        %v4904 = vsel %vm651, %v4899, %v4901
        %v4905 = vsel %vm651, %v4901, %v4903
        %v4909 = vmax.f32 %v4895, %v4904
        %v4910 = vmax.f32 %v4896, %v4905
        %v4911 = vmax.f32 %v4897, %v4903
        %4913 = vrot.lane.b32.xlu0 %v4863, 100
        %v4914 = vpop.permute.xlu0 %4913
        %4915 = vrot.lane.b32.xlu0 %v4864, 100
        %v4916 = vpop.permute.xlu0 %4915
        %4917 = vrot.lane.b32.xlu0 %v4865, 100
        %v4918 = vpop.permute.xlu0 %4917
        %4919 = vrot.lane.b32.xlu0 %v4866, 100
        %v4920 = vpop.permute.xlu0 %4919
        %v4921 = vsel %vm749, %v4914, %v4916
        %v4922 = vsel %vm749, %v4916, %v4918
        %v4923 = vsel %vm749, %v4918, %v4920
        %v4927 = vmax.f32 %v4909, %v4921
        %v4928 = vmax.f32 %v4910, %v4922
        %v4929 = vmax.f32 %v4911, %v4923
        %4930 = vrot.lane.b32.xlu0 %v4863, 99
        %v4931 = vpop.permute.xlu0 %4930
        %4932 = vrot.lane.b32.xlu0 %v4864, 99
        %v4933 = vpop.permute.xlu0 %4932
        %4934 = vrot.lane.b32.xlu0 %v4865, 99
        %v4935 = vpop.permute.xlu0 %4934
        %4936 = vrot.lane.b32.xlu0 %v4866, 99
        %v4937 = vpop.permute.xlu0 %4936
        %v4938 = vsel %vm798, %v4931, %v4933
        %v4939 = vsel %vm798, %v4933, %v4935
        %v4940 = vsel %vm798, %v4935, %v4937
        %v4944 = vmax.f32 %v4927, %v4938
        %v4945 = vmax.f32 %v4928, %v4939
        %v4946 = vmax.f32 %v4929, %v4940
        %4947 = vrot.lane.b32.xlu0 %v4863, 98
        %v4948 = vpop.permute.xlu0 %4947
        %4949 = vrot.lane.b32.xlu0 %v4864, 98
        %v4950 = vpop.permute.xlu0 %4949
        %4951 = vrot.lane.b32.xlu0 %v4865, 98
        %v4952 = vpop.permute.xlu0 %4951
        %4953 = vrot.lane.b32.xlu0 %v4866, 98
        %v4954 = vpop.permute.xlu0 %4953
        %v4955 = vsel %vm847, %v4948, %v4950
        %v4956 = vsel %vm847, %v4950, %v4952
        %v4957 = vsel %vm847, %v4952, %v4954
        %v4961 = vmax.f32 %v4944, %v4955
        %v4962 = vmax.f32 %v4945, %v4956
        %v4963 = vmax.f32 %v4946, %v4957
        %4964 = vrot.lane.b32.xlu0 %v4863, 97
        %v4965 = vpop.permute.xlu0 %4964
        %4966 = vrot.lane.b32.xlu0 %v4864, 97
        %v4967 = vpop.permute.xlu0 %4966
        %4968 = vrot.lane.b32.xlu0 %v4865, 97
        %v4969 = vpop.permute.xlu0 %4968
        %4970 = vrot.lane.b32.xlu0 %v4866, 97
        %v4971 = vpop.permute.xlu0 %4970
        %v4972 = vsel %vm896, %v4965, %v4967
        %v4973 = vsel %vm896, %v4967, %v4969
        %v4974 = vsel %vm896, %v4969, %v4971
        %v4978 = vmax.f32 %v4961, %v4972
        %v4979 = vmax.f32 %v4962, %v4973
        %v4980 = vmax.f32 %v4963, %v4974
        %4981 = vrot.lane.b32.xlu0 %v4863, 72
        %v4982 = vpop.permute.xlu0 %4981
        %4983 = vrot.lane.b32.xlu0 %v4864, 72
        %v4984 = vpop.permute.xlu0 %4983
        %4985 = vrot.lane.b32.xlu0 %v4865, 72
        %v4986 = vpop.permute.xlu0 %4985
        %4987 = vrot.lane.b32.xlu0 %v4866, 72
        %v4988 = vpop.permute.xlu0 %4987
        %v4989 = vsel %vm994, %v4982, %v4984
        %v4990 = vsel %vm994, %v4984, %v4986
        %v4991 = vsel %vm994, %v4986, %v4988
        %v4995 = vmax.f32 %v4978, %v4989
        %v4996 = vmax.f32 %v4979, %v4990
        %v4997 = vmax.f32 %v4980, %v4991
        %4998 = vrot.lane.b32.xlu0 %v4863, 71
        %v4999 = vpop.permute.xlu0 %4998
        %5000 = vrot.lane.b32.xlu0 %v4864, 71
        %v5001 = vpop.permute.xlu0 %5000
        %5002 = vrot.lane.b32.xlu0 %v4865, 71
        %v5003 = vpop.permute.xlu0 %5002
        %5004 = vrot.lane.b32.xlu0 %v4866, 71
        %v5005 = vpop.permute.xlu0 %5004
        %v5006 = vsel %vm1043, %v4999, %v5001
        %v5007 = vsel %vm1043, %v5001, %v5003
        %v5008 = vsel %vm1043, %v5003, %v5005
        %v5012 = vmax.f32 %v4995, %v5006
        %v5013 = vmax.f32 %v4996, %v5007
        %v5014 = vmax.f32 %v4997, %v5008
        %5015 = vrot.lane.b32.xlu0 %v4863, 70
        %v5016 = vpop.permute.xlu0 %5015
        %5017 = vrot.lane.b32.xlu0 %v4864, 70
        %v5018 = vpop.permute.xlu0 %5017
        %5019 = vrot.lane.b32.xlu0 %v4865, 70
        %v5020 = vpop.permute.xlu0 %5019
        %5021 = vrot.lane.b32.xlu0 %v4866, 70
        %v5022 = vpop.permute.xlu0 %5021
        %v5023 = vsel %vm1092, %v5016, %v5018
        %v5024 = vsel %vm1092, %v5018, %v5020
        %v5025 = vsel %vm1092, %v5020, %v5022
        %v5029 = vmax.f32 %v5012, %v5023
        %v5030 = vmax.f32 %v5013, %v5024
        %v5031 = vmax.f32 %v5014, %v5025
        %5032 = vrot.lane.b32.xlu0 %v4863, 69
        %v5033 = vpop.permute.xlu0 %5032
        %5034 = vrot.lane.b32.xlu0 %v4864, 69
        %v5035 = vpop.permute.xlu0 %5034
        %5036 = vrot.lane.b32.xlu0 %v4865, 69
        %v5037 = vpop.permute.xlu0 %5036
        %5038 = vrot.lane.b32.xlu0 %v4866, 69
        %v5039 = vpop.permute.xlu0 %5038
        %v5040 = vsel %vm1141, %v5033, %v5035
        %v5041 = vsel %vm1141, %v5035, %v5037
        %v5042 = vsel %vm1141, %v5037, %v5039
        %v5046 = vmax.f32 %v5029, %v5040
        %v5047 = vmax.f32 %v5030, %v5041
        %v5048 = vmax.f32 %v5031, %v5042
        %5049 = vrot.lane.b32.xlu0 %v4863, 44
        %v5050 = vpop.permute.xlu0 %5049
        %5051 = vrot.lane.b32.xlu0 %v4864, 44
        %v5052 = vpop.permute.xlu0 %5051
        %5053 = vrot.lane.b32.xlu0 %v4865, 44
        %v5054 = vpop.permute.xlu0 %5053
        %5055 = vrot.lane.b32.xlu0 %v4866, 44
        %v5056 = vpop.permute.xlu0 %5055
        %v5057 = vsel %vm1239, %v5050, %v5052
        %v5058 = vsel %vm1239, %v5052, %v5054
        %v5059 = vsel %vm1239, %v5054, %v5056
        %v5063 = vmax.f32 %v5046, %v5057
        %v5064 = vmax.f32 %v5047, %v5058
        %v5065 = vmax.f32 %v5048, %v5059
        %5066 = vrot.lane.b32.xlu0 %v4863, 43
        %v5067 = vpop.permute.xlu0 %5066
        %5068 = vrot.lane.b32.xlu0 %v4864, 43
        %v5069 = vpop.permute.xlu0 %5068
        %5070 = vrot.lane.b32.xlu0 %v4865, 43
        %v5071 = vpop.permute.xlu0 %5070
        %5072 = vrot.lane.b32.xlu0 %v4866, 43
        %v5073 = vpop.permute.xlu0 %5072
        %v5074 = vsel %vm1288, %v5067, %v5069
        %v5075 = vsel %vm1288, %v5069, %v5071
        %v5076 = vsel %vm1288, %v5071, %v5073
        %v5080 = vmax.f32 %v5063, %v5074
        %v5081 = vmax.f32 %v5064, %v5075
        %v5082 = vmax.f32 %v5065, %v5076
        %5083 = vrot.lane.b32.xlu0 %v4863, 42
        %v5084 = vpop.permute.xlu0 %5083
        %5085 = vrot.lane.b32.xlu0 %v4864, 42
        %v5086 = vpop.permute.xlu0 %5085
        %5087 = vrot.lane.b32.xlu0 %v4865, 42
        %v5088 = vpop.permute.xlu0 %5087
        %5089 = vrot.lane.b32.xlu0 %v4866, 42
        %v5090 = vpop.permute.xlu0 %5089
        %v5091 = vsel %vm1337, %v5084, %v5086
        %v5092 = vsel %vm1337, %v5086, %v5088
        %v5093 = vsel %vm1337, %v5088, %v5090
        %v5097 = vmax.f32 %v5080, %v5091
        %v5098 = vmax.f32 %v5081, %v5092
        %v5099 = vmax.f32 %v5082, %v5093
        %5100 = vrot.lane.b32.xlu0 %v4863, 41
        %v5101 = vpop.permute.xlu0 %5100
        %5102 = vrot.lane.b32.xlu0 %v4864, 41
        %v5103 = vpop.permute.xlu0 %5102
        %5104 = vrot.lane.b32.xlu0 %v4865, 41
        %v5105 = vpop.permute.xlu0 %5104
        %5106 = vrot.lane.b32.xlu0 %v4866, 41
        %v5107 = vpop.permute.xlu0 %5106
        %v5108 = vsel %vm1386, %v5101, %v5103
        %v5109 = vsel %vm1386, %v5103, %v5105
        %v5110 = vsel %vm1386, %v5105, %v5107
        %v5114 = vmax.f32 %v5097, %v5108
        %v5115 = vmax.f32 %v5098, %v5109
        %v5116 = vmax.f32 %v5099, %v5110
        %v5117 = vld [vmem:[%s5] sm:$0xff]
        %v5118 = vld [vmem:[%s5 + $0x8] sm:$0xf]
        %s5119 = scalar_lea.vmem %s5, 16
        %v5120 = vld [vmem:[%s5119] sm:$0xff]
        %v5121 = vld [vmem:[%s5119 + $0x8] sm:$0xf]
        %5125 = vrot.lane.b32.xlu0 %v5114, 127
        %v5126 = vpop.permute.xlu0 %5125
        %5127 = vrot.lane.b32.xlu0 %v5115, 127
        %v5128 = vpop.permute.xlu0 %5127
        %5129 = vrot.lane.b32.xlu0 %v5116, 127
        %v5130 = vpop.permute.xlu0 %5129
        %v5131 = vsel %vm553, %v5126, %v5128
        %v5132 = vsel %vm553, %v5128, %v5130
        %vm5133 = vcmask 48128
        %v5135 = vsel %vm5133, %v5120, 0
        %v5138 = vsel %vm5133, %v5121, 0
        %vm5140 = vcmask 1045504
        %v5141 = vsel %vm5140, %v5131, 0
        %v5143 = vsel %vm5140, %v5132, 0
        %v5145 = vsel %vm5140, %v5130, 0
        %5147 = vmatpush.msra.mxu0 0.0
        %5148 = vmatpush.msra.mxu0 0.0
        %5149 = vmatpush.msra.mxu0 0.0
        %5150 = vmatpush.msra.mxu0 0.0
        %5151 = vmatpush.msra.mxu0 0.0
        %5152 = vmatpush.msra.mxu0 0.0
        %5153 = vmatpush.msra.mxu0 0.0
        %5154 = vmatpush.msra.mxu0 0.0
        %5155 = vmatpush.msra.mxu0 0.0
        %5156 = vmatpush.msra.mxu0 0.0
        %5157 = vmatpush.msra.mxu0 0.0
        %5158 = vmatpush.msra.mxu0 0.0
        %5159 = vmatpush.msra.mxu0 0.0
        %5160 = vmatpush.msra.mxu0 0.0
        %5161 = vmatpush.msra.mxu0 0.0
        %5162 = vmatpush.msra.mxu0 %v5141
        %5163 = vmatmul.f32.gmra.mxu0 %v5135
        %v5164 = vpop.f32.mrf.mxu0
        %v5165 = vadd.f32 0.0, %v5164
        %5166 = vmatmul.f32.gmra.mxu0 %v5138
        %v5167 = vpop.f32.mrf.mxu0
        %v5168 = vadd.f32 0.0, %v5167
        %5169 = vdwg.mxu0
        %5170 = vmatpush.msra.mxu0 0.0
        %5171 = vmatpush.msra.mxu0 0.0
        %5172 = vmatpush.msra.mxu0 0.0
        %5173 = vmatpush.msra.mxu0 0.0
        %5174 = vmatpush.msra.mxu0 0.0
        %5175 = vmatpush.msra.mxu0 0.0
        %5176 = vmatpush.msra.mxu0 0.0
        %5177 = vmatpush.msra.mxu0 0.0
        %5178 = vmatpush.msra.mxu0 0.0
        %5179 = vmatpush.msra.mxu0 0.0
        %5180 = vmatpush.msra.mxu0 0.0
        %5181 = vmatpush.msra.mxu0 0.0
        %5182 = vmatpush.msra.mxu0 0.0
        %5183 = vmatpush.msra.mxu0 0.0
        %5184 = vmatpush.msra.mxu0 0.0
        %5185 = vmatpush.msra.mxu0 %v5143
        %5186 = vmatmul.f32.gmra.mxu0 %v5135
        %v5187 = vpop.f32.mrf.mxu0
        %v5188 = vadd.f32 0.0, %v5187
        %5189 = vmatmul.f32.gmra.mxu0 %v5138
        %v5190 = vpop.f32.mrf.mxu0
        %v5191 = vadd.f32 0.0, %v5190
        %5192 = vdwg.mxu0
        %5193 = vmatpush.msra.mxu0 0.0
        %5194 = vmatpush.msra.mxu0 0.0
        %5195 = vmatpush.msra.mxu0 0.0
        %5196 = vmatpush.msra.mxu0 0.0
        %5197 = vmatpush.msra.mxu0 0.0
        %5198 = vmatpush.msra.mxu0 0.0
        %5199 = vmatpush.msra.mxu0 0.0
        %5200 = vmatpush.msra.mxu0 0.0
        %5201 = vmatpush.msra.mxu0 0.0
        %5202 = vmatpush.msra.mxu0 0.0
        %5203 = vmatpush.msra.mxu0 0.0
        %5204 = vmatpush.msra.mxu0 0.0
        %5205 = vmatpush.msra.mxu0 0.0
        %5206 = vmatpush.msra.mxu0 0.0
        %5207 = vmatpush.msra.mxu0 0.0
        %5208 = vmatpush.msra.mxu0 %v5145
        %5209 = vmatmul.f32.gmra.mxu0 %v5135
        %v5210 = vpop.f32.mrf.mxu0
        %v5211 = vadd.f32 0.0, %v5210
        %5212 = vmatmul.f32.gmra.mxu0 %v5138
        %v5213 = vpop.f32.mrf.mxu0
        %v5214 = vadd.f32 0.0, %v5213
        %5215 = vdwg.mxu0
        %v5217 = vsel %vm5133, %v5117, 0
        %v5220 = vsel %vm5133, %v5118, 0
        %v5222 = vsel %vm5140, %v5114, 0
        %v5224 = vsel %vm5140, %v5115, 0
        %v5226 = vsel %vm5140, %v5116, 0
        %5228 = vmatpush.msra.mxu0 0.0
        %5229 = vmatpush.msra.mxu0 0.0
        %5230 = vmatpush.msra.mxu0 0.0
        %5231 = vmatpush.msra.mxu0 0.0
        %5232 = vmatpush.msra.mxu0 0.0
        %5233 = vmatpush.msra.mxu0 0.0
        %5234 = vmatpush.msra.mxu0 0.0
        %5235 = vmatpush.msra.mxu0 0.0
        %5236 = vmatpush.msra.mxu0 0.0
        %5237 = vmatpush.msra.mxu0 0.0
        %5238 = vmatpush.msra.mxu0 0.0
        %5239 = vmatpush.msra.mxu0 0.0
        %5240 = vmatpush.msra.mxu0 0.0
        %5241 = vmatpush.msra.mxu0 0.0
        %5242 = vmatpush.msra.mxu0 0.0
        %5243 = vmatpush.msra.mxu0 %v5222
        %5244 = vmatmul.f32.gmra.mxu0 %v5217
        %v5245 = vpop.f32.mrf.mxu0
        %v5246 = vadd.f32 %v5165, %v5245
        %5247 = vmatmul.f32.gmra.mxu0 %v5220
        %v5248 = vpop.f32.mrf.mxu0
        %v5249 = vadd.f32 %v5168, %v5248
        %5250 = vdwg.mxu0
        %5251 = vmatpush.msra.mxu0 0.0
        %5252 = vmatpush.msra.mxu0 0.0
        %5253 = vmatpush.msra.mxu0 0.0
        %5254 = vmatpush.msra.mxu0 0.0
        %5255 = vmatpush.msra.mxu0 0.0
        %5256 = vmatpush.msra.mxu0 0.0
        %5257 = vmatpush.msra.mxu0 0.0
        %5258 = vmatpush.msra.mxu0 0.0
        %5259 = vmatpush.msra.mxu0 0.0
        %5260 = vmatpush.msra.mxu0 0.0
        %5261 = vmatpush.msra.mxu0 0.0
        %5262 = vmatpush.msra.mxu0 0.0
        %5263 = vmatpush.msra.mxu0 0.0
        %5264 = vmatpush.msra.mxu0 0.0
        %5265 = vmatpush.msra.mxu0 0.0
        %5266 = vmatpush.msra.mxu0 %v5224
        %5267 = vmatmul.f32.gmra.mxu0 %v5217
        %v5268 = vpop.f32.mrf.mxu0
        %v5269 = vadd.f32 %v5188, %v5268
        %5270 = vmatmul.f32.gmra.mxu0 %v5220
        %v5271 = vpop.f32.mrf.mxu0
        %v5272 = vadd.f32 %v5191, %v5271
        %5273 = vdwg.mxu0
        %5274 = vmatpush.msra.mxu0 0.0
        %5275 = vmatpush.msra.mxu0 0.0
        %5276 = vmatpush.msra.mxu0 0.0
        %5277 = vmatpush.msra.mxu0 0.0
        %5278 = vmatpush.msra.mxu0 0.0
        %5279 = vmatpush.msra.mxu0 0.0
        %5280 = vmatpush.msra.mxu0 0.0
        %5281 = vmatpush.msra.mxu0 0.0
        %5282 = vmatpush.msra.mxu0 0.0
        %5283 = vmatpush.msra.mxu0 0.0
        %5284 = vmatpush.msra.mxu0 0.0
        %5285 = vmatpush.msra.mxu0 0.0
        %5286 = vmatpush.msra.mxu0 0.0
        %5287 = vmatpush.msra.mxu0 0.0
        %5288 = vmatpush.msra.mxu0 0.0
        %5289 = vmatpush.msra.mxu0 %v5226
        %5290 = vmatmul.f32.gmra.mxu0 %v5217
        %v5291 = vpop.f32.mrf.mxu0
        %v5292 = vadd.f32 %v5211, %v5291
        %5293 = vmatmul.f32.gmra.mxu0 %v5220
        %v5294 = vpop.f32.mrf.mxu0
        %v5295 = vadd.f32 %v5214, %v5294
        %5296 = vdwg.mxu0
        %s5297 = scalar_lea.vmem %s5, 32
        %v5298 = vld [vmem:[%s5297] sm:$0xff]
        %v5299 = vld [vmem:[%s5297 + $0x8] sm:$0xf]
        %5300 = vrot.lane.b32.xlu0 %v5114, 126
        %v5301 = vpop.permute.xlu0 %5300
        %5302 = vrot.lane.b32.xlu0 %v5115, 126
        %v5303 = vpop.permute.xlu0 %5302
        %5304 = vrot.lane.b32.xlu0 %v5116, 126
        %v5305 = vpop.permute.xlu0 %5304
        %v5306 = vsel %vm602, %v5301, %v5303
        %v5307 = vsel %vm602, %v5303, %v5305
        %v5309 = vsel %vm5133, %v5298, 0
        %v5312 = vsel %vm5133, %v5299, 0
        %v5314 = vsel %vm5140, %v5306, 0
        %v5316 = vsel %vm5140, %v5307, 0
        %v5318 = vsel %vm5140, %v5305, 0
        %5320 = vmatpush.msra.mxu0 0.0
        %5321 = vmatpush.msra.mxu0 0.0
        %5322 = vmatpush.msra.mxu0 0.0
        %5323 = vmatpush.msra.mxu0 0.0
        %5324 = vmatpush.msra.mxu0 0.0
        %5325 = vmatpush.msra.mxu0 0.0
        %5326 = vmatpush.msra.mxu0 0.0
        %5327 = vmatpush.msra.mxu0 0.0
        %5328 = vmatpush.msra.mxu0 0.0
        %5329 = vmatpush.msra.mxu0 0.0
        %5330 = vmatpush.msra.mxu0 0.0
        %5331 = vmatpush.msra.mxu0 0.0
        %5332 = vmatpush.msra.mxu0 0.0
        %5333 = vmatpush.msra.mxu0 0.0
        %5334 = vmatpush.msra.mxu0 0.0
        %5335 = vmatpush.msra.mxu0 %v5314
        %5336 = vmatmul.f32.gmra.mxu0 %v5309
        %v5337 = vpop.f32.mrf.mxu0
        %v5338 = vadd.f32 0.0, %v5337
        %5339 = vmatmul.f32.gmra.mxu0 %v5312
        %v5340 = vpop.f32.mrf.mxu0
        %v5341 = vadd.f32 0.0, %v5340
        %5342 = vdwg.mxu0
        %5343 = vmatpush.msra.mxu0 0.0
        %5344 = vmatpush.msra.mxu0 0.0
        %5345 = vmatpush.msra.mxu0 0.0
        %5346 = vmatpush.msra.mxu0 0.0
        %5347 = vmatpush.msra.mxu0 0.0
        %5348 = vmatpush.msra.mxu0 0.0
        %5349 = vmatpush.msra.mxu0 0.0
        %5350 = vmatpush.msra.mxu0 0.0
        %5351 = vmatpush.msra.mxu0 0.0
        %5352 = vmatpush.msra.mxu0 0.0
        %5353 = vmatpush.msra.mxu0 0.0
        %5354 = vmatpush.msra.mxu0 0.0
        %5355 = vmatpush.msra.mxu0 0.0
        %5356 = vmatpush.msra.mxu0 0.0
        %5357 = vmatpush.msra.mxu0 0.0
        %5358 = vmatpush.msra.mxu0 %v5316
        %5359 = vmatmul.f32.gmra.mxu0 %v5309
        %v5360 = vpop.f32.mrf.mxu0
        %v5361 = vadd.f32 0.0, %v5360
        %5362 = vmatmul.f32.gmra.mxu0 %v5312
        %v5363 = vpop.f32.mrf.mxu0
        %v5364 = vadd.f32 0.0, %v5363
        %5365 = vdwg.mxu0
        %5366 = vmatpush.msra.mxu0 0.0
        %5367 = vmatpush.msra.mxu0 0.0
        %5368 = vmatpush.msra.mxu0 0.0
        %5369 = vmatpush.msra.mxu0 0.0
        %5370 = vmatpush.msra.mxu0 0.0
        %5371 = vmatpush.msra.mxu0 0.0
        %5372 = vmatpush.msra.mxu0 0.0
        %5373 = vmatpush.msra.mxu0 0.0
        %5374 = vmatpush.msra.mxu0 0.0
        %5375 = vmatpush.msra.mxu0 0.0
        %5376 = vmatpush.msra.mxu0 0.0
        %5377 = vmatpush.msra.mxu0 0.0
        %5378 = vmatpush.msra.mxu0 0.0
        %5379 = vmatpush.msra.mxu0 0.0
        %5380 = vmatpush.msra.mxu0 0.0
        %5381 = vmatpush.msra.mxu0 %v5318
        %5382 = vmatmul.f32.gmra.mxu0 %v5309
        %v5383 = vpop.f32.mrf.mxu0
        %v5384 = vadd.f32 0.0, %v5383
        %5385 = vmatmul.f32.gmra.mxu0 %v5312
        %v5386 = vpop.f32.mrf.mxu0
        %v5387 = vadd.f32 0.0, %v5386
        %5388 = vdwg.mxu0
        %v5389 = vadd.f32 %v5246, %v5338
        %v5390 = vadd.f32 %v5269, %v5361
        %v5391 = vadd.f32 %v5292, %v5384
        %v5392 = vadd.f32 %v5249, %v5341
        %v5393 = vadd.f32 %v5272, %v5364
        %v5394 = vadd.f32 %v5295, %v5387
        %s5395 = scalar_lea.vmem %s5, 48
        %v5396 = vld [vmem:[%s5395] sm:$0xff]
        %v5397 = vld [vmem:[%s5395 + $0x8] sm:$0xf]
        %5398 = vrot.lane.b32.xlu0 %v5114, 125
        %v5399 = vpop.permute.xlu0 %5398
        %5400 = vrot.lane.b32.xlu0 %v5115, 125
        %v5401 = vpop.permute.xlu0 %5400
        %5402 = vrot.lane.b32.xlu0 %v5116, 125
        %v5403 = vpop.permute.xlu0 %5402
        %v5404 = vsel %vm651, %v5399, %v5401
        %v5405 = vsel %vm651, %v5401, %v5403
        %v5407 = vsel %vm5133, %v5396, 0
        %v5410 = vsel %vm5133, %v5397, 0
        %v5412 = vsel %vm5140, %v5404, 0
        %v5414 = vsel %vm5140, %v5405, 0
        %v5416 = vsel %vm5140, %v5403, 0
        %5418 = vmatpush.msra.mxu0 0.0
        %5419 = vmatpush.msra.mxu0 0.0
        %5420 = vmatpush.msra.mxu0 0.0
        %5421 = vmatpush.msra.mxu0 0.0
        %5422 = vmatpush.msra.mxu0 0.0
        %5423 = vmatpush.msra.mxu0 0.0
        %5424 = vmatpush.msra.mxu0 0.0
        %5425 = vmatpush.msra.mxu0 0.0
        %5426 = vmatpush.msra.mxu0 0.0
        %5427 = vmatpush.msra.mxu0 0.0
        %5428 = vmatpush.msra.mxu0 0.0
        %5429 = vmatpush.msra.mxu0 0.0
        %5430 = vmatpush.msra.mxu0 0.0
        %5431 = vmatpush.msra.mxu0 0.0
        %5432 = vmatpush.msra.mxu0 0.0
        %5433 = vmatpush.msra.mxu0 %v5412
        %5434 = vmatmul.f32.gmra.mxu0 %v5407
        %v5435 = vpop.f32.mrf.mxu0
        %v5436 = vadd.f32 0.0, %v5435
        %5437 = vmatmul.f32.gmra.mxu0 %v5410
        %v5438 = vpop.f32.mrf.mxu0
        %v5439 = vadd.f32 0.0, %v5438
        %5440 = vdwg.mxu0
        %5441 = vmatpush.msra.mxu0 0.0
        %5442 = vmatpush.msra.mxu0 0.0
        %5443 = vmatpush.msra.mxu0 0.0
        %5444 = vmatpush.msra.mxu0 0.0
        %5445 = vmatpush.msra.mxu0 0.0
        %5446 = vmatpush.msra.mxu0 0.0
        %5447 = vmatpush.msra.mxu0 0.0
        %5448 = vmatpush.msra.mxu0 0.0
        %5449 = vmatpush.msra.mxu0 0.0
        %5450 = vmatpush.msra.mxu0 0.0
        %5451 = vmatpush.msra.mxu0 0.0
        %5452 = vmatpush.msra.mxu0 0.0
        %5453 = vmatpush.msra.mxu0 0.0
        %5454 = vmatpush.msra.mxu0 0.0
        %5455 = vmatpush.msra.mxu0 0.0
        %5456 = vmatpush.msra.mxu0 %v5414
        %5457 = vmatmul.f32.gmra.mxu0 %v5407
        %v5458 = vpop.f32.mrf.mxu0
        %v5459 = vadd.f32 0.0, %v5458
        %5460 = vmatmul.f32.gmra.mxu0 %v5410
        %v5461 = vpop.f32.mrf.mxu0
        %v5462 = vadd.f32 0.0, %v5461
        %5463 = vdwg.mxu0
        %5464 = vmatpush.msra.mxu0 0.0
        %5465 = vmatpush.msra.mxu0 0.0
        %5466 = vmatpush.msra.mxu0 0.0
        %5467 = vmatpush.msra.mxu0 0.0
        %5468 = vmatpush.msra.mxu0 0.0
        %5469 = vmatpush.msra.mxu0 0.0
        %5470 = vmatpush.msra.mxu0 0.0
        %5471 = vmatpush.msra.mxu0 0.0
        %5472 = vmatpush.msra.mxu0 0.0
        %5473 = vmatpush.msra.mxu0 0.0
        %5474 = vmatpush.msra.mxu0 0.0
        %5475 = vmatpush.msra.mxu0 0.0
        %5476 = vmatpush.msra.mxu0 0.0
        %5477 = vmatpush.msra.mxu0 0.0
        %5478 = vmatpush.msra.mxu0 0.0
        %5479 = vmatpush.msra.mxu0 %v5416
        %5480 = vmatmul.f32.gmra.mxu0 %v5407
        %v5481 = vpop.f32.mrf.mxu0
        %v5482 = vadd.f32 0.0, %v5481
        %5483 = vmatmul.f32.gmra.mxu0 %v5410
        %v5484 = vpop.f32.mrf.mxu0
        %v5485 = vadd.f32 0.0, %v5484
        %5486 = vdwg.mxu0
        %v5487 = vadd.f32 %v5389, %v5436
        %v5488 = vadd.f32 %v5390, %v5459
        %v5489 = vadd.f32 %v5391, %v5482
        %v5490 = vadd.f32 %v5392, %v5439
        %v5491 = vadd.f32 %v5393, %v5462
        %v5492 = vadd.f32 %v5394, %v5485
        %s5493 = scalar_lea.vmem %s5, 64
        %v5494 = vld [vmem:[%s5493] sm:$0xff]
        %v5495 = vld [vmem:[%s5493 + $0x8] sm:$0xf]
        %5496 = vrot.lane.b32.xlu0 %v5114, 124
        %v5497 = vpop.permute.xlu0 %5496
        %5498 = vrot.lane.b32.xlu0 %v5115, 124
        %v5499 = vpop.permute.xlu0 %5498
        %5500 = vrot.lane.b32.xlu0 %v5116, 124
        %v5501 = vpop.permute.xlu0 %5500
        %v5502 = vsel %vm700, %v5497, %v5499
        %v5503 = vsel %vm700, %v5499, %v5501
        %v5505 = vsel %vm5133, %v5494, 0
        %v5508 = vsel %vm5133, %v5495, 0
        %v5510 = vsel %vm5140, %v5502, 0
        %v5512 = vsel %vm5140, %v5503, 0
        %v5514 = vsel %vm5140, %v5501, 0
        %5516 = vmatpush.msra.mxu0 0.0
        %5517 = vmatpush.msra.mxu0 0.0
        %5518 = vmatpush.msra.mxu0 0.0
        %5519 = vmatpush.msra.mxu0 0.0
        %5520 = vmatpush.msra.mxu0 0.0
        %5521 = vmatpush.msra.mxu0 0.0
        %5522 = vmatpush.msra.mxu0 0.0
        %5523 = vmatpush.msra.mxu0 0.0
        %5524 = vmatpush.msra.mxu0 0.0
        %5525 = vmatpush.msra.mxu0 0.0
        %5526 = vmatpush.msra.mxu0 0.0
        %5527 = vmatpush.msra.mxu0 0.0
        %5528 = vmatpush.msra.mxu0 0.0
        %5529 = vmatpush.msra.mxu0 0.0
        %5530 = vmatpush.msra.mxu0 0.0
        %5531 = vmatpush.msra.mxu0 %v5510
        %5532 = vmatmul.f32.gmra.mxu0 %v5505
        %v5533 = vpop.f32.mrf.mxu0
        %v5534 = vadd.f32 0.0, %v5533
        %5535 = vmatmul.f32.gmra.mxu0 %v5508
        %v5536 = vpop.f32.mrf.mxu0
        %v5537 = vadd.f32 0.0, %v5536
        %5538 = vdwg.mxu0
        %5539 = vmatpush.msra.mxu0 0.0
        %5540 = vmatpush.msra.mxu0 0.0
        %5541 = vmatpush.msra.mxu0 0.0
        %5542 = vmatpush.msra.mxu0 0.0
        %5543 = vmatpush.msra.mxu0 0.0
        %5544 = vmatpush.msra.mxu0 0.0
        %5545 = vmatpush.msra.mxu0 0.0
        %5546 = vmatpush.msra.mxu0 0.0
        %5547 = vmatpush.msra.mxu0 0.0
        %5548 = vmatpush.msra.mxu0 0.0
        %5549 = vmatpush.msra.mxu0 0.0
        %5550 = vmatpush.msra.mxu0 0.0
        %5551 = vmatpush.msra.mxu0 0.0
        %5552 = vmatpush.msra.mxu0 0.0
        %5553 = vmatpush.msra.mxu0 0.0
        %5554 = vmatpush.msra.mxu0 %v5512
        %5555 = vmatmul.f32.gmra.mxu0 %v5505
        %v5556 = vpop.f32.mrf.mxu0
        %v5557 = vadd.f32 0.0, %v5556
        %5558 = vmatmul.f32.gmra.mxu0 %v5508
        %v5559 = vpop.f32.mrf.mxu0
        %v5560 = vadd.f32 0.0, %v5559
        %5561 = vdwg.mxu0
        %5562 = vmatpush.msra.mxu0 0.0
        %5563 = vmatpush.msra.mxu0 0.0
        %5564 = vmatpush.msra.mxu0 0.0
        %5565 = vmatpush.msra.mxu0 0.0
        %5566 = vmatpush.msra.mxu0 0.0
        %5567 = vmatpush.msra.mxu0 0.0
        %5568 = vmatpush.msra.mxu0 0.0
        %5569 = vmatpush.msra.mxu0 0.0
        %5570 = vmatpush.msra.mxu0 0.0
        %5571 = vmatpush.msra.mxu0 0.0
        %5572 = vmatpush.msra.mxu0 0.0
        %5573 = vmatpush.msra.mxu0 0.0
        %5574 = vmatpush.msra.mxu0 0.0
        %5575 = vmatpush.msra.mxu0 0.0
        %5576 = vmatpush.msra.mxu0 0.0
        %5577 = vmatpush.msra.mxu0 %v5514
        %5578 = vmatmul.f32.gmra.mxu0 %v5505
        %v5579 = vpop.f32.mrf.mxu0
        %v5580 = vadd.f32 0.0, %v5579
        %5581 = vmatmul.f32.gmra.mxu0 %v5508
        %v5582 = vpop.f32.mrf.mxu0
        %v5583 = vadd.f32 0.0, %v5582
        %5584 = vdwg.mxu0
        %v5585 = vadd.f32 %v5487, %v5534
        %v5586 = vadd.f32 %v5488, %v5557
        %v5587 = vadd.f32 %v5489, %v5580
        %v5588 = vadd.f32 %v5490, %v5537
        %v5589 = vadd.f32 %v5491, %v5560
        %v5590 = vadd.f32 %v5492, %v5583
        %s5591 = scalar_lea.vmem %s5, 80
        %v5592 = vld [vmem:[%s5591] sm:$0xff]
        %v5593 = vld [vmem:[%s5591 + $0x8] sm:$0xf]
        %5594 = vrot.lane.b32.xlu0 %v5114, 100
        %v5595 = vpop.permute.xlu0 %5594
        %5596 = vrot.lane.b32.xlu0 %v5115, 100
        %v5597 = vpop.permute.xlu0 %5596
        %5598 = vrot.lane.b32.xlu0 %v5116, 100
        %v5599 = vpop.permute.xlu0 %5598
        %v5600 = vsel %vm749, %v5595, %v5597
        %v5601 = vsel %vm749, %v5597, %v5599
        %v5603 = vsel %vm5133, %v5592, 0
        %v5606 = vsel %vm5133, %v5593, 0
        %v5608 = vsel %vm5140, %v5600, 0
        %v5610 = vsel %vm5140, %v5601, 0
        %v5612 = vsel %vm5140, %v5599, 0
        %5614 = vmatpush.msra.mxu0 0.0
        %5615 = vmatpush.msra.mxu0 0.0
        %5616 = vmatpush.msra.mxu0 0.0
        %5617 = vmatpush.msra.mxu0 0.0
        %5618 = vmatpush.msra.mxu0 0.0
        %5619 = vmatpush.msra.mxu0 0.0
        %5620 = vmatpush.msra.mxu0 0.0
        %5621 = vmatpush.msra.mxu0 0.0
        %5622 = vmatpush.msra.mxu0 0.0
        %5623 = vmatpush.msra.mxu0 0.0
        %5624 = vmatpush.msra.mxu0 0.0
        %5625 = vmatpush.msra.mxu0 0.0
        %5626 = vmatpush.msra.mxu0 0.0
        %5627 = vmatpush.msra.mxu0 0.0
        %5628 = vmatpush.msra.mxu0 0.0
        %5629 = vmatpush.msra.mxu0 %v5608
        %5630 = vmatmul.f32.gmra.mxu0 %v5603
        %v5631 = vpop.f32.mrf.mxu0
        %v5632 = vadd.f32 0.0, %v5631
        %5633 = vmatmul.f32.gmra.mxu0 %v5606
        %v5634 = vpop.f32.mrf.mxu0
        %v5635 = vadd.f32 0.0, %v5634
        %5636 = vdwg.mxu0
        %5637 = vmatpush.msra.mxu0 0.0
        %5638 = vmatpush.msra.mxu0 0.0
        %5639 = vmatpush.msra.mxu0 0.0
        %5640 = vmatpush.msra.mxu0 0.0
        %5641 = vmatpush.msra.mxu0 0.0
        %5642 = vmatpush.msra.mxu0 0.0
        %5643 = vmatpush.msra.mxu0 0.0
        %5644 = vmatpush.msra.mxu0 0.0
        %5645 = vmatpush.msra.mxu0 0.0
        %5646 = vmatpush.msra.mxu0 0.0
        %5647 = vmatpush.msra.mxu0 0.0
        %5648 = vmatpush.msra.mxu0 0.0
        %5649 = vmatpush.msra.mxu0 0.0
        %5650 = vmatpush.msra.mxu0 0.0
        %5651 = vmatpush.msra.mxu0 0.0
        %5652 = vmatpush.msra.mxu0 %v5610
        %5653 = vmatmul.f32.gmra.mxu0 %v5603
        %v5654 = vpop.f32.mrf.mxu0
        %v5655 = vadd.f32 0.0, %v5654
        %5656 = vmatmul.f32.gmra.mxu0 %v5606
        %v5657 = vpop.f32.mrf.mxu0
        %v5658 = vadd.f32 0.0, %v5657
        %5659 = vdwg.mxu0
        %5660 = vmatpush.msra.mxu0 0.0
        %5661 = vmatpush.msra.mxu0 0.0
        %5662 = vmatpush.msra.mxu0 0.0
        %5663 = vmatpush.msra.mxu0 0.0
        %5664 = vmatpush.msra.mxu0 0.0
        %5665 = vmatpush.msra.mxu0 0.0
        %5666 = vmatpush.msra.mxu0 0.0
        %5667 = vmatpush.msra.mxu0 0.0
        %5668 = vmatpush.msra.mxu0 0.0
        %5669 = vmatpush.msra.mxu0 0.0
        %5670 = vmatpush.msra.mxu0 0.0
        %5671 = vmatpush.msra.mxu0 0.0
        %5672 = vmatpush.msra.mxu0 0.0
        %5673 = vmatpush.msra.mxu0 0.0
        %5674 = vmatpush.msra.mxu0 0.0
        %5675 = vmatpush.msra.mxu0 %v5612
        %5676 = vmatmul.f32.gmra.mxu0 %v5603
        %v5677 = vpop.f32.mrf.mxu0
        %v5678 = vadd.f32 0.0, %v5677
        %5679 = vmatmul.f32.gmra.mxu0 %v5606
        %v5680 = vpop.f32.mrf.mxu0
        %v5681 = vadd.f32 0.0, %v5680
        %5682 = vdwg.mxu0
        %v5683 = vadd.f32 %v5585, %v5632
        %v5684 = vadd.f32 %v5586, %v5655
        %v5685 = vadd.f32 %v5587, %v5678
        %v5686 = vadd.f32 %v5588, %v5635
        %v5687 = vadd.f32 %v5589, %v5658
        %v5688 = vadd.f32 %v5590, %v5681
        %s5689 = scalar_lea.vmem %s5, 96
        %v5690 = vld [vmem:[%s5689] sm:$0xff]
        %v5691 = vld [vmem:[%s5689 + $0x8] sm:$0xf]
        %5692 = vrot.lane.b32.xlu0 %v5114, 99
        %v5693 = vpop.permute.xlu0 %5692
        %5694 = vrot.lane.b32.xlu0 %v5115, 99
        %v5695 = vpop.permute.xlu0 %5694
        %5696 = vrot.lane.b32.xlu0 %v5116, 99
        %v5697 = vpop.permute.xlu0 %5696
        %v5698 = vsel %vm798, %v5693, %v5695
        %v5699 = vsel %vm798, %v5695, %v5697
        %v5701 = vsel %vm5133, %v5690, 0
        %v5704 = vsel %vm5133, %v5691, 0
        %v5706 = vsel %vm5140, %v5698, 0
        %v5708 = vsel %vm5140, %v5699, 0
        %v5710 = vsel %vm5140, %v5697, 0
        %5712 = vmatpush.msra.mxu0 0.0
        %5713 = vmatpush.msra.mxu0 0.0
        %5714 = vmatpush.msra.mxu0 0.0
        %5715 = vmatpush.msra.mxu0 0.0
        %5716 = vmatpush.msra.mxu0 0.0
        %5717 = vmatpush.msra.mxu0 0.0
        %5718 = vmatpush.msra.mxu0 0.0
        %5719 = vmatpush.msra.mxu0 0.0
        %5720 = vmatpush.msra.mxu0 0.0
        %5721 = vmatpush.msra.mxu0 0.0
        %5722 = vmatpush.msra.mxu0 0.0
        %5723 = vmatpush.msra.mxu0 0.0
        %5724 = vmatpush.msra.mxu0 0.0
        %5725 = vmatpush.msra.mxu0 0.0
        %5726 = vmatpush.msra.mxu0 0.0
        %5727 = vmatpush.msra.mxu0 %v5706
        %5728 = vmatmul.f32.gmra.mxu0 %v5701
        %v5729 = vpop.f32.mrf.mxu0
        %v5730 = vadd.f32 0.0, %v5729
        %5731 = vmatmul.f32.gmra.mxu0 %v5704
        %v5732 = vpop.f32.mrf.mxu0
        %v5733 = vadd.f32 0.0, %v5732
        %5734 = vdwg.mxu0
        %5735 = vmatpush.msra.mxu0 0.0
        %5736 = vmatpush.msra.mxu0 0.0
        %5737 = vmatpush.msra.mxu0 0.0
        %5738 = vmatpush.msra.mxu0 0.0
        %5739 = vmatpush.msra.mxu0 0.0
        %5740 = vmatpush.msra.mxu0 0.0
        %5741 = vmatpush.msra.mxu0 0.0
        %5742 = vmatpush.msra.mxu0 0.0
        %5743 = vmatpush.msra.mxu0 0.0
        %5744 = vmatpush.msra.mxu0 0.0
        %5745 = vmatpush.msra.mxu0 0.0
        %5746 = vmatpush.msra.mxu0 0.0
        %5747 = vmatpush.msra.mxu0 0.0
        %5748 = vmatpush.msra.mxu0 0.0
        %5749 = vmatpush.msra.mxu0 0.0
        %5750 = vmatpush.msra.mxu0 %v5708
        %5751 = vmatmul.f32.gmra.mxu0 %v5701
        %v5752 = vpop.f32.mrf.mxu0
        %v5753 = vadd.f32 0.0, %v5752
        %5754 = vmatmul.f32.gmra.mxu0 %v5704
        %v5755 = vpop.f32.mrf.mxu0
        %v5756 = vadd.f32 0.0, %v5755
        %5757 = vdwg.mxu0
        %5758 = vmatpush.msra.mxu0 0.0
        %5759 = vmatpush.msra.mxu0 0.0
        %5760 = vmatpush.msra.mxu0 0.0
        %5761 = vmatpush.msra.mxu0 0.0
        %5762 = vmatpush.msra.mxu0 0.0
        %5763 = vmatpush.msra.mxu0 0.0
        %5764 = vmatpush.msra.mxu0 0.0
        %5765 = vmatpush.msra.mxu0 0.0
        %5766 = vmatpush.msra.mxu0 0.0
        %5767 = vmatpush.msra.mxu0 0.0
        %5768 = vmatpush.msra.mxu0 0.0
        %5769 = vmatpush.msra.mxu0 0.0
        %5770 = vmatpush.msra.mxu0 0.0
        %5771 = vmatpush.msra.mxu0 0.0
        %5772 = vmatpush.msra.mxu0 0.0
        %5773 = vmatpush.msra.mxu0 %v5710
        %5774 = vmatmul.f32.gmra.mxu0 %v5701
        %v5775 = vpop.f32.mrf.mxu0
        %v5776 = vadd.f32 0.0, %v5775
        %5777 = vmatmul.f32.gmra.mxu0 %v5704
        %v5778 = vpop.f32.mrf.mxu0
        %v5779 = vadd.f32 0.0, %v5778
        %5780 = vdwg.mxu0
        %v5781 = vadd.f32 %v5683, %v5730
        %v5782 = vadd.f32 %v5684, %v5753
        %v5783 = vadd.f32 %v5685, %v5776
        %v5784 = vadd.f32 %v5686, %v5733
        %v5785 = vadd.f32 %v5687, %v5756
        %v5786 = vadd.f32 %v5688, %v5779
        %s5787 = scalar_lea.vmem %s5, 112
        %v5788 = vld [vmem:[%s5787] sm:$0xff]
        %v5789 = vld [vmem:[%s5787 + $0x8] sm:$0xf]
        %5790 = vrot.lane.b32.xlu0 %v5114, 98
        %v5791 = vpop.permute.xlu0 %5790
        %5792 = vrot.lane.b32.xlu0 %v5115, 98
        %v5793 = vpop.permute.xlu0 %5792
        %5794 = vrot.lane.b32.xlu0 %v5116, 98
        %v5795 = vpop.permute.xlu0 %5794
        %v5796 = vsel %vm847, %v5791, %v5793
        %v5797 = vsel %vm847, %v5793, %v5795
        %v5799 = vsel %vm5133, %v5788, 0
        %v5802 = vsel %vm5133, %v5789, 0
        %v5804 = vsel %vm5140, %v5796, 0
        %v5806 = vsel %vm5140, %v5797, 0
        %v5808 = vsel %vm5140, %v5795, 0
        %5810 = vmatpush.msra.mxu0 0.0
        %5811 = vmatpush.msra.mxu0 0.0
        %5812 = vmatpush.msra.mxu0 0.0
        %5813 = vmatpush.msra.mxu0 0.0
        %5814 = vmatpush.msra.mxu0 0.0
        %5815 = vmatpush.msra.mxu0 0.0
        %5816 = vmatpush.msra.mxu0 0.0
        %5817 = vmatpush.msra.mxu0 0.0
        %5818 = vmatpush.msra.mxu0 0.0
        %5819 = vmatpush.msra.mxu0 0.0
        %5820 = vmatpush.msra.mxu0 0.0
        %5821 = vmatpush.msra.mxu0 0.0
        %5822 = vmatpush.msra.mxu0 0.0
        %5823 = vmatpush.msra.mxu0 0.0
        %5824 = vmatpush.msra.mxu0 0.0
        %5825 = vmatpush.msra.mxu0 %v5804
        %5826 = vmatmul.f32.gmra.mxu0 %v5799
        %v5827 = vpop.f32.mrf.mxu0
        %v5828 = vadd.f32 0.0, %v5827
        %5829 = vmatmul.f32.gmra.mxu0 %v5802
        %v5830 = vpop.f32.mrf.mxu0
        %v5831 = vadd.f32 0.0, %v5830
        %5832 = vdwg.mxu0
        %5833 = vmatpush.msra.mxu0 0.0
        %5834 = vmatpush.msra.mxu0 0.0
        %5835 = vmatpush.msra.mxu0 0.0
        %5836 = vmatpush.msra.mxu0 0.0
        %5837 = vmatpush.msra.mxu0 0.0
        %5838 = vmatpush.msra.mxu0 0.0
        %5839 = vmatpush.msra.mxu0 0.0
        %5840 = vmatpush.msra.mxu0 0.0
        %5841 = vmatpush.msra.mxu0 0.0
        %5842 = vmatpush.msra.mxu0 0.0
        %5843 = vmatpush.msra.mxu0 0.0
        %5844 = vmatpush.msra.mxu0 0.0
        %5845 = vmatpush.msra.mxu0 0.0
        %5846 = vmatpush.msra.mxu0 0.0
        %5847 = vmatpush.msra.mxu0 0.0
        %5848 = vmatpush.msra.mxu0 %v5806
        %5849 = vmatmul.f32.gmra.mxu0 %v5799
        %v5850 = vpop.f32.mrf.mxu0
        %v5851 = vadd.f32 0.0, %v5850
        %5852 = vmatmul.f32.gmra.mxu0 %v5802
        %v5853 = vpop.f32.mrf.mxu0
        %v5854 = vadd.f32 0.0, %v5853
        %5855 = vdwg.mxu0
        %5856 = vmatpush.msra.mxu0 0.0
        %5857 = vmatpush.msra.mxu0 0.0
        %5858 = vmatpush.msra.mxu0 0.0
        %5859 = vmatpush.msra.mxu0 0.0
        %5860 = vmatpush.msra.mxu0 0.0
        %5861 = vmatpush.msra.mxu0 0.0
        %5862 = vmatpush.msra.mxu0 0.0
        %5863 = vmatpush.msra.mxu0 0.0
        %5864 = vmatpush.msra.mxu0 0.0
        %5865 = vmatpush.msra.mxu0 0.0
        %5866 = vmatpush.msra.mxu0 0.0
        %5867 = vmatpush.msra.mxu0 0.0
        %5868 = vmatpush.msra.mxu0 0.0
        %5869 = vmatpush.msra.mxu0 0.0
        %5870 = vmatpush.msra.mxu0 0.0
        %5871 = vmatpush.msra.mxu0 %v5808
        %5872 = vmatmul.f32.gmra.mxu0 %v5799
        %v5873 = vpop.f32.mrf.mxu0
        %v5874 = vadd.f32 0.0, %v5873
        %5875 = vmatmul.f32.gmra.mxu0 %v5802
        %v5876 = vpop.f32.mrf.mxu0
        %v5877 = vadd.f32 0.0, %v5876
        %5878 = vdwg.mxu0
        %v5879 = vadd.f32 %v5781, %v5828
        %v5880 = vadd.f32 %v5782, %v5851
        %v5881 = vadd.f32 %v5783, %v5874
        %v5882 = vadd.f32 %v5784, %v5831
        %v5883 = vadd.f32 %v5785, %v5854
        %v5884 = vadd.f32 %v5786, %v5877
        %s5885 = scalar_lea.vmem %s5, 128
        %v5886 = vld [vmem:[%s5885] sm:$0xff]
        %v5887 = vld [vmem:[%s5885 + $0x8] sm:$0xf]
        %5888 = vrot.lane.b32.xlu0 %v5114, 97
        %v5889 = vpop.permute.xlu0 %5888
        %5890 = vrot.lane.b32.xlu0 %v5115, 97
        %v5891 = vpop.permute.xlu0 %5890
        %5892 = vrot.lane.b32.xlu0 %v5116, 97
        %v5893 = vpop.permute.xlu0 %5892
        %v5894 = vsel %vm896, %v5889, %v5891
        %v5895 = vsel %vm896, %v5891, %v5893
        %v5897 = vsel %vm5133, %v5886, 0
        %v5900 = vsel %vm5133, %v5887, 0
        %v5902 = vsel %vm5140, %v5894, 0
        %v5904 = vsel %vm5140, %v5895, 0
        %v5906 = vsel %vm5140, %v5893, 0
        %5908 = vmatpush.msra.mxu0 0.0
        %5909 = vmatpush.msra.mxu0 0.0
        %5910 = vmatpush.msra.mxu0 0.0
        %5911 = vmatpush.msra.mxu0 0.0
        %5912 = vmatpush.msra.mxu0 0.0
        %5913 = vmatpush.msra.mxu0 0.0
        %5914 = vmatpush.msra.mxu0 0.0
        %5915 = vmatpush.msra.mxu0 0.0
        %5916 = vmatpush.msra.mxu0 0.0
        %5917 = vmatpush.msra.mxu0 0.0
        %5918 = vmatpush.msra.mxu0 0.0
        %5919 = vmatpush.msra.mxu0 0.0
        %5920 = vmatpush.msra.mxu0 0.0
        %5921 = vmatpush.msra.mxu0 0.0
        %5922 = vmatpush.msra.mxu0 0.0
        %5923 = vmatpush.msra.mxu0 %v5902
        %5924 = vmatmul.f32.gmra.mxu0 %v5897
        %v5925 = vpop.f32.mrf.mxu0
        %v5926 = vadd.f32 0.0, %v5925
        %5927 = vmatmul.f32.gmra.mxu0 %v5900
        %v5928 = vpop.f32.mrf.mxu0
        %v5929 = vadd.f32 0.0, %v5928
        %5930 = vdwg.mxu0
        %5931 = vmatpush.msra.mxu0 0.0
        %5932 = vmatpush.msra.mxu0 0.0
        %5933 = vmatpush.msra.mxu0 0.0
        %5934 = vmatpush.msra.mxu0 0.0
        %5935 = vmatpush.msra.mxu0 0.0
        %5936 = vmatpush.msra.mxu0 0.0
        %5937 = vmatpush.msra.mxu0 0.0
        %5938 = vmatpush.msra.mxu0 0.0
        %5939 = vmatpush.msra.mxu0 0.0
        %5940 = vmatpush.msra.mxu0 0.0
        %5941 = vmatpush.msra.mxu0 0.0
        %5942 = vmatpush.msra.mxu0 0.0
        %5943 = vmatpush.msra.mxu0 0.0
        %5944 = vmatpush.msra.mxu0 0.0
        %5945 = vmatpush.msra.mxu0 0.0
        %5946 = vmatpush.msra.mxu0 %v5904
        %5947 = vmatmul.f32.gmra.mxu0 %v5897
        %v5948 = vpop.f32.mrf.mxu0
        %v5949 = vadd.f32 0.0, %v5948
        %5950 = vmatmul.f32.gmra.mxu0 %v5900
        %v5951 = vpop.f32.mrf.mxu0
        %v5952 = vadd.f32 0.0, %v5951
        %5953 = vdwg.mxu0
        %5954 = vmatpush.msra.mxu0 0.0
        %5955 = vmatpush.msra.mxu0 0.0
        %5956 = vmatpush.msra.mxu0 0.0
        %5957 = vmatpush.msra.mxu0 0.0
        %5958 = vmatpush.msra.mxu0 0.0
        %5959 = vmatpush.msra.mxu0 0.0
        %5960 = vmatpush.msra.mxu0 0.0
        %5961 = vmatpush.msra.mxu0 0.0
        %5962 = vmatpush.msra.mxu0 0.0
        %5963 = vmatpush.msra.mxu0 0.0
        %5964 = vmatpush.msra.mxu0 0.0
        %5965 = vmatpush.msra.mxu0 0.0
        %5966 = vmatpush.msra.mxu0 0.0
        %5967 = vmatpush.msra.mxu0 0.0
        %5968 = vmatpush.msra.mxu0 0.0
        %5969 = vmatpush.msra.mxu0 %v5906
        %5970 = vmatmul.f32.gmra.mxu0 %v5897
        %v5971 = vpop.f32.mrf.mxu0
        %v5972 = vadd.f32 0.0, %v5971
        %5973 = vmatmul.f32.gmra.mxu0 %v5900
        %v5974 = vpop.f32.mrf.mxu0
        %v5975 = vadd.f32 0.0, %v5974
        %5976 = vdwg.mxu0
        %v5977 = vadd.f32 %v5879, %v5926
        %v5978 = vadd.f32 %v5880, %v5949
        %v5979 = vadd.f32 %v5881, %v5972
        %v5980 = vadd.f32 %v5882, %v5929
        %v5981 = vadd.f32 %v5883, %v5952
        %v5982 = vadd.f32 %v5884, %v5975
        %s5983 = scalar_lea.vmem %s5, 144
        %v5984 = vld [vmem:[%s5983] sm:$0xff]
        %v5985 = vld [vmem:[%s5983 + $0x8] sm:$0xf]
        %5986 = vrot.lane.b32.xlu0 %v5114, 96
        %v5987 = vpop.permute.xlu0 %5986
        %5988 = vrot.lane.b32.xlu0 %v5115, 96
        %v5989 = vpop.permute.xlu0 %5988
        %5990 = vrot.lane.b32.xlu0 %v5116, 96
        %v5991 = vpop.permute.xlu0 %5990
        %v5992 = vsel %vm945, %v5987, %v5989
        %v5993 = vsel %vm945, %v5989, %v5991
        %v5995 = vsel %vm5133, %v5984, 0
        %v5998 = vsel %vm5133, %v5985, 0
        %v6000 = vsel %vm5140, %v5992, 0
        %v6002 = vsel %vm5140, %v5993, 0
        %v6004 = vsel %vm5140, %v5991, 0
        %6006 = vmatpush.msra.mxu0 0.0
        %6007 = vmatpush.msra.mxu0 0.0
        %6008 = vmatpush.msra.mxu0 0.0
        %6009 = vmatpush.msra.mxu0 0.0
        %6010 = vmatpush.msra.mxu0 0.0
        %6011 = vmatpush.msra.mxu0 0.0
        %6012 = vmatpush.msra.mxu0 0.0
        %6013 = vmatpush.msra.mxu0 0.0
        %6014 = vmatpush.msra.mxu0 0.0
        %6015 = vmatpush.msra.mxu0 0.0
        %6016 = vmatpush.msra.mxu0 0.0
        %6017 = vmatpush.msra.mxu0 0.0
        %6018 = vmatpush.msra.mxu0 0.0
        %6019 = vmatpush.msra.mxu0 0.0
        %6020 = vmatpush.msra.mxu0 0.0
        %6021 = vmatpush.msra.mxu0 %v6000
        %6022 = vmatmul.f32.gmra.mxu0 %v5995
        %v6023 = vpop.f32.mrf.mxu0
        %v6024 = vadd.f32 0.0, %v6023
        %6025 = vmatmul.f32.gmra.mxu0 %v5998
        %v6026 = vpop.f32.mrf.mxu0
        %v6027 = vadd.f32 0.0, %v6026
        %6028 = vdwg.mxu0
        %6029 = vmatpush.msra.mxu0 0.0
        %6030 = vmatpush.msra.mxu0 0.0
        %6031 = vmatpush.msra.mxu0 0.0
        %6032 = vmatpush.msra.mxu0 0.0
        %6033 = vmatpush.msra.mxu0 0.0
        %6034 = vmatpush.msra.mxu0 0.0
        %6035 = vmatpush.msra.mxu0 0.0
        %6036 = vmatpush.msra.mxu0 0.0
        %6037 = vmatpush.msra.mxu0 0.0
        %6038 = vmatpush.msra.mxu0 0.0
        %6039 = vmatpush.msra.mxu0 0.0
        %6040 = vmatpush.msra.mxu0 0.0
        %6041 = vmatpush.msra.mxu0 0.0
        %6042 = vmatpush.msra.mxu0 0.0
        %6043 = vmatpush.msra.mxu0 0.0
        %6044 = vmatpush.msra.mxu0 %v6002
        %6045 = vmatmul.f32.gmra.mxu0 %v5995
        %v6046 = vpop.f32.mrf.mxu0
        %v6047 = vadd.f32 0.0, %v6046
        %6048 = vmatmul.f32.gmra.mxu0 %v5998
        %v6049 = vpop.f32.mrf.mxu0
        %v6050 = vadd.f32 0.0, %v6049
        %6051 = vdwg.mxu0
        %6052 = vmatpush.msra.mxu0 0.0
        %6053 = vmatpush.msra.mxu0 0.0
        %6054 = vmatpush.msra.mxu0 0.0
        %6055 = vmatpush.msra.mxu0 0.0
        %6056 = vmatpush.msra.mxu0 0.0
        %6057 = vmatpush.msra.mxu0 0.0
        %6058 = vmatpush.msra.mxu0 0.0
        %6059 = vmatpush.msra.mxu0 0.0
        %6060 = vmatpush.msra.mxu0 0.0
        %6061 = vmatpush.msra.mxu0 0.0
        %6062 = vmatpush.msra.mxu0 0.0
        %6063 = vmatpush.msra.mxu0 0.0
        %6064 = vmatpush.msra.mxu0 0.0
        %6065 = vmatpush.msra.mxu0 0.0
        %6066 = vmatpush.msra.mxu0 0.0
        %6067 = vmatpush.msra.mxu0 %v6004
        %6068 = vmatmul.f32.gmra.mxu0 %v5995
        %v6069 = vpop.f32.mrf.mxu0
        %v6070 = vadd.f32 0.0, %v6069
        %6071 = vmatmul.f32.gmra.mxu0 %v5998
        %v6072 = vpop.f32.mrf.mxu0
        %v6073 = vadd.f32 0.0, %v6072
        %6074 = vdwg.mxu0
        %v6075 = vadd.f32 %v5977, %v6024
        %v6076 = vadd.f32 %v5978, %v6047
        %v6077 = vadd.f32 %v5979, %v6070
        %v6078 = vadd.f32 %v5980, %v6027
        %v6079 = vadd.f32 %v5981, %v6050
        %v6080 = vadd.f32 %v5982, %v6073
        %s6081 = scalar_lea.vmem %s5, 160
        %v6082 = vld [vmem:[%s6081] sm:$0xff]
        %v6083 = vld [vmem:[%s6081 + $0x8] sm:$0xf]
        %6084 = vrot.lane.b32.xlu0 %v5114, 72
        %v6085 = vpop.permute.xlu0 %6084
        %6086 = vrot.lane.b32.xlu0 %v5115, 72
        %v6087 = vpop.permute.xlu0 %6086
        %6088 = vrot.lane.b32.xlu0 %v5116, 72
        %v6089 = vpop.permute.xlu0 %6088
        %v6090 = vsel %vm994, %v6085, %v6087
        %v6091 = vsel %vm994, %v6087, %v6089
        %v6093 = vsel %vm5133, %v6082, 0
        %v6096 = vsel %vm5133, %v6083, 0
        %v6098 = vsel %vm5140, %v6090, 0
        %v6100 = vsel %vm5140, %v6091, 0
        %v6102 = vsel %vm5140, %v6089, 0
        %6104 = vmatpush.msra.mxu0 0.0
        %6105 = vmatpush.msra.mxu0 0.0
        %6106 = vmatpush.msra.mxu0 0.0
        %6107 = vmatpush.msra.mxu0 0.0
        %6108 = vmatpush.msra.mxu0 0.0
        %6109 = vmatpush.msra.mxu0 0.0
        %6110 = vmatpush.msra.mxu0 0.0
        %6111 = vmatpush.msra.mxu0 0.0
        %6112 = vmatpush.msra.mxu0 0.0
        %6113 = vmatpush.msra.mxu0 0.0
        %6114 = vmatpush.msra.mxu0 0.0
        %6115 = vmatpush.msra.mxu0 0.0
        %6116 = vmatpush.msra.mxu0 0.0
        %6117 = vmatpush.msra.mxu0 0.0
        %6118 = vmatpush.msra.mxu0 0.0
        %6119 = vmatpush.msra.mxu0 %v6098
        %6120 = vmatmul.f32.gmra.mxu0 %v6093
        %v6121 = vpop.f32.mrf.mxu0
        %v6122 = vadd.f32 0.0, %v6121
        %6123 = vmatmul.f32.gmra.mxu0 %v6096
        %v6124 = vpop.f32.mrf.mxu0
        %v6125 = vadd.f32 0.0, %v6124
        %6126 = vdwg.mxu0
        %6127 = vmatpush.msra.mxu0 0.0
        %6128 = vmatpush.msra.mxu0 0.0
        %6129 = vmatpush.msra.mxu0 0.0
        %6130 = vmatpush.msra.mxu0 0.0
        %6131 = vmatpush.msra.mxu0 0.0
        %6132 = vmatpush.msra.mxu0 0.0
        %6133 = vmatpush.msra.mxu0 0.0
        %6134 = vmatpush.msra.mxu0 0.0
        %6135 = vmatpush.msra.mxu0 0.0
        %6136 = vmatpush.msra.mxu0 0.0
        %6137 = vmatpush.msra.mxu0 0.0
        %6138 = vmatpush.msra.mxu0 0.0
        %6139 = vmatpush.msra.mxu0 0.0
        %6140 = vmatpush.msra.mxu0 0.0
        %6141 = vmatpush.msra.mxu0 0.0
        %6142 = vmatpush.msra.mxu0 %v6100
        %6143 = vmatmul.f32.gmra.mxu0 %v6093
        %v6144 = vpop.f32.mrf.mxu0
        %v6145 = vadd.f32 0.0, %v6144
        %6146 = vmatmul.f32.gmra.mxu0 %v6096
        %v6147 = vpop.f32.mrf.mxu0
        %v6148 = vadd.f32 0.0, %v6147
        %6149 = vdwg.mxu0
        %6150 = vmatpush.msra.mxu0 0.0
        %6151 = vmatpush.msra.mxu0 0.0
        %6152 = vmatpush.msra.mxu0 0.0
        %6153 = vmatpush.msra.mxu0 0.0
        %6154 = vmatpush.msra.mxu0 0.0
        %6155 = vmatpush.msra.mxu0 0.0
        %6156 = vmatpush.msra.mxu0 0.0
        %6157 = vmatpush.msra.mxu0 0.0
        %6158 = vmatpush.msra.mxu0 0.0
        %6159 = vmatpush.msra.mxu0 0.0
        %6160 = vmatpush.msra.mxu0 0.0
        %6161 = vmatpush.msra.mxu0 0.0
        %6162 = vmatpush.msra.mxu0 0.0
        %6163 = vmatpush.msra.mxu0 0.0
        %6164 = vmatpush.msra.mxu0 0.0
        %6165 = vmatpush.msra.mxu0 %v6102
        %6166 = vmatmul.f32.gmra.mxu0 %v6093
        %v6167 = vpop.f32.mrf.mxu0
        %v6168 = vadd.f32 0.0, %v6167
        %6169 = vmatmul.f32.gmra.mxu0 %v6096
        %v6170 = vpop.f32.mrf.mxu0
        %v6171 = vadd.f32 0.0, %v6170
        %6172 = vdwg.mxu0
        %v6173 = vadd.f32 %v6075, %v6122
        %v6174 = vadd.f32 %v6076, %v6145
        %v6175 = vadd.f32 %v6077, %v6168
        %v6176 = vadd.f32 %v6078, %v6125
        %v6177 = vadd.f32 %v6079, %v6148
        %v6178 = vadd.f32 %v6080, %v6171
        %s6179 = scalar_lea.vmem %s5, 176
        %v6180 = vld [vmem:[%s6179] sm:$0xff]
        %v6181 = vld [vmem:[%s6179 + $0x8] sm:$0xf]
        %6182 = vrot.lane.b32.xlu0 %v5114, 71
        %v6183 = vpop.permute.xlu0 %6182
        %6184 = vrot.lane.b32.xlu0 %v5115, 71
        %v6185 = vpop.permute.xlu0 %6184
        %6186 = vrot.lane.b32.xlu0 %v5116, 71
        %v6187 = vpop.permute.xlu0 %6186
        %v6188 = vsel %vm1043, %v6183, %v6185
        %v6189 = vsel %vm1043, %v6185, %v6187
        %v6191 = vsel %vm5133, %v6180, 0
        %v6194 = vsel %vm5133, %v6181, 0
        %v6196 = vsel %vm5140, %v6188, 0
        %v6198 = vsel %vm5140, %v6189, 0
        %v6200 = vsel %vm5140, %v6187, 0
        %6202 = vmatpush.msra.mxu0 0.0
        %6203 = vmatpush.msra.mxu0 0.0
        %6204 = vmatpush.msra.mxu0 0.0
        %6205 = vmatpush.msra.mxu0 0.0
        %6206 = vmatpush.msra.mxu0 0.0
        %6207 = vmatpush.msra.mxu0 0.0
        %6208 = vmatpush.msra.mxu0 0.0
        %6209 = vmatpush.msra.mxu0 0.0
        %6210 = vmatpush.msra.mxu0 0.0
        %6211 = vmatpush.msra.mxu0 0.0
        %6212 = vmatpush.msra.mxu0 0.0
        %6213 = vmatpush.msra.mxu0 0.0
        %6214 = vmatpush.msra.mxu0 0.0
        %6215 = vmatpush.msra.mxu0 0.0
        %6216 = vmatpush.msra.mxu0 0.0
        %6217 = vmatpush.msra.mxu0 %v6196
        %6218 = vmatmul.f32.gmra.mxu0 %v6191
        %v6219 = vpop.f32.mrf.mxu0
        %v6220 = vadd.f32 0.0, %v6219
        %6221 = vmatmul.f32.gmra.mxu0 %v6194
        %v6222 = vpop.f32.mrf.mxu0
        %v6223 = vadd.f32 0.0, %v6222
        %6224 = vdwg.mxu0
        %6225 = vmatpush.msra.mxu0 0.0
        %6226 = vmatpush.msra.mxu0 0.0
        %6227 = vmatpush.msra.mxu0 0.0
        %6228 = vmatpush.msra.mxu0 0.0
        %6229 = vmatpush.msra.mxu0 0.0
        %6230 = vmatpush.msra.mxu0 0.0
        %6231 = vmatpush.msra.mxu0 0.0
        %6232 = vmatpush.msra.mxu0 0.0
        %6233 = vmatpush.msra.mxu0 0.0
        %6234 = vmatpush.msra.mxu0 0.0
        %6235 = vmatpush.msra.mxu0 0.0
        %6236 = vmatpush.msra.mxu0 0.0
        %6237 = vmatpush.msra.mxu0 0.0
        %6238 = vmatpush.msra.mxu0 0.0
        %6239 = vmatpush.msra.mxu0 0.0
        %6240 = vmatpush.msra.mxu0 %v6198
        %6241 = vmatmul.f32.gmra.mxu0 %v6191
        %v6242 = vpop.f32.mrf.mxu0
        %v6243 = vadd.f32 0.0, %v6242
        %6244 = vmatmul.f32.gmra.mxu0 %v6194
        %v6245 = vpop.f32.mrf.mxu0
        %v6246 = vadd.f32 0.0, %v6245
        %6247 = vdwg.mxu0
        %6248 = vmatpush.msra.mxu0 0.0
        %6249 = vmatpush.msra.mxu0 0.0
        %6250 = vmatpush.msra.mxu0 0.0
        %6251 = vmatpush.msra.mxu0 0.0
        %6252 = vmatpush.msra.mxu0 0.0
        %6253 = vmatpush.msra.mxu0 0.0
        %6254 = vmatpush.msra.mxu0 0.0
        %6255 = vmatpush.msra.mxu0 0.0
        %6256 = vmatpush.msra.mxu0 0.0
        %6257 = vmatpush.msra.mxu0 0.0
        %6258 = vmatpush.msra.mxu0 0.0
        %6259 = vmatpush.msra.mxu0 0.0
        %6260 = vmatpush.msra.mxu0 0.0
        %6261 = vmatpush.msra.mxu0 0.0
        %6262 = vmatpush.msra.mxu0 0.0
        %6263 = vmatpush.msra.mxu0 %v6200
        %6264 = vmatmul.f32.gmra.mxu0 %v6191
        %v6265 = vpop.f32.mrf.mxu0
        %v6266 = vadd.f32 0.0, %v6265
        %6267 = vmatmul.f32.gmra.mxu0 %v6194
        %v6268 = vpop.f32.mrf.mxu0
        %v6269 = vadd.f32 0.0, %v6268
        %6270 = vdwg.mxu0
        %v6271 = vadd.f32 %v6173, %v6220
        %v6272 = vadd.f32 %v6174, %v6243
        %v6273 = vadd.f32 %v6175, %v6266
        %v6274 = vadd.f32 %v6176, %v6223
        %v6275 = vadd.f32 %v6177, %v6246
        %v6276 = vadd.f32 %v6178, %v6269
        %s6277 = scalar_lea.vmem %s5, 192
        %v6278 = vld [vmem:[%s6277] sm:$0xff]
        %v6279 = vld [vmem:[%s6277 + $0x8] sm:$0xf]
        %6280 = vrot.lane.b32.xlu0 %v5114, 70
        %v6281 = vpop.permute.xlu0 %6280
        %6282 = vrot.lane.b32.xlu0 %v5115, 70
        %v6283 = vpop.permute.xlu0 %6282
        %6284 = vrot.lane.b32.xlu0 %v5116, 70
        %v6285 = vpop.permute.xlu0 %6284
        %v6286 = vsel %vm1092, %v6281, %v6283
        %v6287 = vsel %vm1092, %v6283, %v6285
        %v6289 = vsel %vm5133, %v6278, 0
        %v6292 = vsel %vm5133, %v6279, 0
        %v6294 = vsel %vm5140, %v6286, 0
        %v6296 = vsel %vm5140, %v6287, 0
        %v6298 = vsel %vm5140, %v6285, 0
        %6300 = vmatpush.msra.mxu0 0.0
        %6301 = vmatpush.msra.mxu0 0.0
        %6302 = vmatpush.msra.mxu0 0.0
        %6303 = vmatpush.msra.mxu0 0.0
        %6304 = vmatpush.msra.mxu0 0.0
        %6305 = vmatpush.msra.mxu0 0.0
        %6306 = vmatpush.msra.mxu0 0.0
        %6307 = vmatpush.msra.mxu0 0.0
        %6308 = vmatpush.msra.mxu0 0.0
        %6309 = vmatpush.msra.mxu0 0.0
        %6310 = vmatpush.msra.mxu0 0.0
        %6311 = vmatpush.msra.mxu0 0.0
        %6312 = vmatpush.msra.mxu0 0.0
        %6313 = vmatpush.msra.mxu0 0.0
        %6314 = vmatpush.msra.mxu0 0.0
        %6315 = vmatpush.msra.mxu0 %v6294
        %6316 = vmatmul.f32.gmra.mxu0 %v6289
        %v6317 = vpop.f32.mrf.mxu0
        %v6318 = vadd.f32 0.0, %v6317
        %6319 = vmatmul.f32.gmra.mxu0 %v6292
        %v6320 = vpop.f32.mrf.mxu0
        %v6321 = vadd.f32 0.0, %v6320
        %6322 = vdwg.mxu0
        %6323 = vmatpush.msra.mxu0 0.0
        %6324 = vmatpush.msra.mxu0 0.0
        %6325 = vmatpush.msra.mxu0 0.0
        %6326 = vmatpush.msra.mxu0 0.0
        %6327 = vmatpush.msra.mxu0 0.0
        %6328 = vmatpush.msra.mxu0 0.0
        %6329 = vmatpush.msra.mxu0 0.0
        %6330 = vmatpush.msra.mxu0 0.0
        %6331 = vmatpush.msra.mxu0 0.0
        %6332 = vmatpush.msra.mxu0 0.0
        %6333 = vmatpush.msra.mxu0 0.0
        %6334 = vmatpush.msra.mxu0 0.0
        %6335 = vmatpush.msra.mxu0 0.0
        %6336 = vmatpush.msra.mxu0 0.0
        %6337 = vmatpush.msra.mxu0 0.0
        %6338 = vmatpush.msra.mxu0 %v6296
        %6339 = vmatmul.f32.gmra.mxu0 %v6289
        %v6340 = vpop.f32.mrf.mxu0
        %v6341 = vadd.f32 0.0, %v6340
        %6342 = vmatmul.f32.gmra.mxu0 %v6292
        %v6343 = vpop.f32.mrf.mxu0
        %v6344 = vadd.f32 0.0, %v6343
        %6345 = vdwg.mxu0
        %6346 = vmatpush.msra.mxu0 0.0
        %6347 = vmatpush.msra.mxu0 0.0
        %6348 = vmatpush.msra.mxu0 0.0
        %6349 = vmatpush.msra.mxu0 0.0
        %6350 = vmatpush.msra.mxu0 0.0
        %6351 = vmatpush.msra.mxu0 0.0
        %6352 = vmatpush.msra.mxu0 0.0
        %6353 = vmatpush.msra.mxu0 0.0
        %6354 = vmatpush.msra.mxu0 0.0
        %6355 = vmatpush.msra.mxu0 0.0
        %6356 = vmatpush.msra.mxu0 0.0
        %6357 = vmatpush.msra.mxu0 0.0
        %6358 = vmatpush.msra.mxu0 0.0
        %6359 = vmatpush.msra.mxu0 0.0
        %6360 = vmatpush.msra.mxu0 0.0
        %6361 = vmatpush.msra.mxu0 %v6298
        %6362 = vmatmul.f32.gmra.mxu0 %v6289
        %v6363 = vpop.f32.mrf.mxu0
        %v6364 = vadd.f32 0.0, %v6363
        %6365 = vmatmul.f32.gmra.mxu0 %v6292
        %v6366 = vpop.f32.mrf.mxu0
        %v6367 = vadd.f32 0.0, %v6366
        %6368 = vdwg.mxu0
        %v6369 = vadd.f32 %v6271, %v6318
        %v6370 = vadd.f32 %v6272, %v6341
        %v6371 = vadd.f32 %v6273, %v6364
        %v6372 = vadd.f32 %v6274, %v6321
        %v6373 = vadd.f32 %v6275, %v6344
        %v6374 = vadd.f32 %v6276, %v6367
        %s6375 = scalar_lea.vmem %s5, 208
        %v6376 = vld [vmem:[%s6375] sm:$0xff]
        %v6377 = vld [vmem:[%s6375 + $0x8] sm:$0xf]
        %6378 = vrot.lane.b32.xlu0 %v5114, 69
        %v6379 = vpop.permute.xlu0 %6378
        %6380 = vrot.lane.b32.xlu0 %v5115, 69
        %v6381 = vpop.permute.xlu0 %6380
        %6382 = vrot.lane.b32.xlu0 %v5116, 69
        %v6383 = vpop.permute.xlu0 %6382
        %v6384 = vsel %vm1141, %v6379, %v6381
        %v6385 = vsel %vm1141, %v6381, %v6383
        %v6387 = vsel %vm5133, %v6376, 0
        %v6390 = vsel %vm5133, %v6377, 0
        %v6392 = vsel %vm5140, %v6384, 0
        %v6394 = vsel %vm5140, %v6385, 0
        %v6396 = vsel %vm5140, %v6383, 0
        %6398 = vmatpush.msra.mxu0 0.0
        %6399 = vmatpush.msra.mxu0 0.0
        %6400 = vmatpush.msra.mxu0 0.0
        %6401 = vmatpush.msra.mxu0 0.0
        %6402 = vmatpush.msra.mxu0 0.0
        %6403 = vmatpush.msra.mxu0 0.0
        %6404 = vmatpush.msra.mxu0 0.0
        %6405 = vmatpush.msra.mxu0 0.0
        %6406 = vmatpush.msra.mxu0 0.0
        %6407 = vmatpush.msra.mxu0 0.0
        %6408 = vmatpush.msra.mxu0 0.0
        %6409 = vmatpush.msra.mxu0 0.0
        %6410 = vmatpush.msra.mxu0 0.0
        %6411 = vmatpush.msra.mxu0 0.0
        %6412 = vmatpush.msra.mxu0 0.0
        %6413 = vmatpush.msra.mxu0 %v6392
        %6414 = vmatmul.f32.gmra.mxu0 %v6387
        %v6415 = vpop.f32.mrf.mxu0
        %v6416 = vadd.f32 0.0, %v6415
        %6417 = vmatmul.f32.gmra.mxu0 %v6390
        %v6418 = vpop.f32.mrf.mxu0
        %v6419 = vadd.f32 0.0, %v6418
        %6420 = vdwg.mxu0
        %6421 = vmatpush.msra.mxu0 0.0
        %6422 = vmatpush.msra.mxu0 0.0
        %6423 = vmatpush.msra.mxu0 0.0
        %6424 = vmatpush.msra.mxu0 0.0
        %6425 = vmatpush.msra.mxu0 0.0
        %6426 = vmatpush.msra.mxu0 0.0
        %6427 = vmatpush.msra.mxu0 0.0
        %6428 = vmatpush.msra.mxu0 0.0
        %6429 = vmatpush.msra.mxu0 0.0
        %6430 = vmatpush.msra.mxu0 0.0
        %6431 = vmatpush.msra.mxu0 0.0
        %6432 = vmatpush.msra.mxu0 0.0
        %6433 = vmatpush.msra.mxu0 0.0
        %6434 = vmatpush.msra.mxu0 0.0
        %6435 = vmatpush.msra.mxu0 0.0
        %6436 = vmatpush.msra.mxu0 %v6394
        %6437 = vmatmul.f32.gmra.mxu0 %v6387
        %v6438 = vpop.f32.mrf.mxu0
        %v6439 = vadd.f32 0.0, %v6438
        %6440 = vmatmul.f32.gmra.mxu0 %v6390
        %v6441 = vpop.f32.mrf.mxu0
        %v6442 = vadd.f32 0.0, %v6441
        %6443 = vdwg.mxu0
        %6444 = vmatpush.msra.mxu0 0.0
        %6445 = vmatpush.msra.mxu0 0.0
        %6446 = vmatpush.msra.mxu0 0.0
        %6447 = vmatpush.msra.mxu0 0.0
        %6448 = vmatpush.msra.mxu0 0.0
        %6449 = vmatpush.msra.mxu0 0.0
        %6450 = vmatpush.msra.mxu0 0.0
        %6451 = vmatpush.msra.mxu0 0.0
        %6452 = vmatpush.msra.mxu0 0.0
        %6453 = vmatpush.msra.mxu0 0.0
        %6454 = vmatpush.msra.mxu0 0.0
        %6455 = vmatpush.msra.mxu0 0.0
        %6456 = vmatpush.msra.mxu0 0.0
        %6457 = vmatpush.msra.mxu0 0.0
        %6458 = vmatpush.msra.mxu0 0.0
        %6459 = vmatpush.msra.mxu0 %v6396
        %6460 = vmatmul.f32.gmra.mxu0 %v6387
        %v6461 = vpop.f32.mrf.mxu0
        %v6462 = vadd.f32 0.0, %v6461
        %6463 = vmatmul.f32.gmra.mxu0 %v6390
        %v6464 = vpop.f32.mrf.mxu0
        %v6465 = vadd.f32 0.0, %v6464
        %6466 = vdwg.mxu0
        %v6467 = vadd.f32 %v6369, %v6416
        %v6468 = vadd.f32 %v6370, %v6439
        %v6469 = vadd.f32 %v6371, %v6462
        %v6470 = vadd.f32 %v6372, %v6419
        %v6471 = vadd.f32 %v6373, %v6442
        %v6472 = vadd.f32 %v6374, %v6465
        %s6473 = scalar_lea.vmem %s5, 224
        %v6474 = vld [vmem:[%s6473] sm:$0xff]
        %v6475 = vld [vmem:[%s6473 + $0x8] sm:$0xf]
        %6476 = vrot.lane.b32.xlu0 %v5114, 68
        %v6477 = vpop.permute.xlu0 %6476
        %6478 = vrot.lane.b32.xlu0 %v5115, 68
        %v6479 = vpop.permute.xlu0 %6478
        %6480 = vrot.lane.b32.xlu0 %v5116, 68
        %v6481 = vpop.permute.xlu0 %6480
        %v6482 = vsel %vm1190, %v6477, %v6479
        %v6483 = vsel %vm1190, %v6479, %v6481
        %v6485 = vsel %vm5133, %v6474, 0
        %v6488 = vsel %vm5133, %v6475, 0
        %v6490 = vsel %vm5140, %v6482, 0
        %v6492 = vsel %vm5140, %v6483, 0
        %v6494 = vsel %vm5140, %v6481, 0
        %6496 = vmatpush.msra.mxu0 0.0
        %6497 = vmatpush.msra.mxu0 0.0
        %6498 = vmatpush.msra.mxu0 0.0
        %6499 = vmatpush.msra.mxu0 0.0
        %6500 = vmatpush.msra.mxu0 0.0
        %6501 = vmatpush.msra.mxu0 0.0
        %6502 = vmatpush.msra.mxu0 0.0
        %6503 = vmatpush.msra.mxu0 0.0
        %6504 = vmatpush.msra.mxu0 0.0
        %6505 = vmatpush.msra.mxu0 0.0
        %6506 = vmatpush.msra.mxu0 0.0
        %6507 = vmatpush.msra.mxu0 0.0
        %6508 = vmatpush.msra.mxu0 0.0
        %6509 = vmatpush.msra.mxu0 0.0
        %6510 = vmatpush.msra.mxu0 0.0
        %6511 = vmatpush.msra.mxu0 %v6490
        %6512 = vmatmul.f32.gmra.mxu0 %v6485
        %v6513 = vpop.f32.mrf.mxu0
        %v6514 = vadd.f32 0.0, %v6513
        %6515 = vmatmul.f32.gmra.mxu0 %v6488
        %v6516 = vpop.f32.mrf.mxu0
        %v6517 = vadd.f32 0.0, %v6516
        %6518 = vdwg.mxu0
        %6519 = vmatpush.msra.mxu0 0.0
        %6520 = vmatpush.msra.mxu0 0.0
        %6521 = vmatpush.msra.mxu0 0.0
        %6522 = vmatpush.msra.mxu0 0.0
        %6523 = vmatpush.msra.mxu0 0.0
        %6524 = vmatpush.msra.mxu0 0.0
        %6525 = vmatpush.msra.mxu0 0.0
        %6526 = vmatpush.msra.mxu0 0.0
        %6527 = vmatpush.msra.mxu0 0.0
        %6528 = vmatpush.msra.mxu0 0.0
        %6529 = vmatpush.msra.mxu0 0.0
        %6530 = vmatpush.msra.mxu0 0.0
        %6531 = vmatpush.msra.mxu0 0.0
        %6532 = vmatpush.msra.mxu0 0.0
        %6533 = vmatpush.msra.mxu0 0.0
        %6534 = vmatpush.msra.mxu0 %v6492
        %6535 = vmatmul.f32.gmra.mxu0 %v6485
        %v6536 = vpop.f32.mrf.mxu0
        %v6537 = vadd.f32 0.0, %v6536
        %6538 = vmatmul.f32.gmra.mxu0 %v6488
        %v6539 = vpop.f32.mrf.mxu0
        %v6540 = vadd.f32 0.0, %v6539
        %6541 = vdwg.mxu0
        %6542 = vmatpush.msra.mxu0 0.0
        %6543 = vmatpush.msra.mxu0 0.0
        %6544 = vmatpush.msra.mxu0 0.0
        %6545 = vmatpush.msra.mxu0 0.0
        %6546 = vmatpush.msra.mxu0 0.0
        %6547 = vmatpush.msra.mxu0 0.0
        %6548 = vmatpush.msra.mxu0 0.0
        %6549 = vmatpush.msra.mxu0 0.0
        %6550 = vmatpush.msra.mxu0 0.0
        %6551 = vmatpush.msra.mxu0 0.0
        %6552 = vmatpush.msra.mxu0 0.0
        %6553 = vmatpush.msra.mxu0 0.0
        %6554 = vmatpush.msra.mxu0 0.0
        %6555 = vmatpush.msra.mxu0 0.0
        %6556 = vmatpush.msra.mxu0 0.0
        %6557 = vmatpush.msra.mxu0 %v6494
        %6558 = vmatmul.f32.gmra.mxu0 %v6485
        %v6559 = vpop.f32.mrf.mxu0
        %v6560 = vadd.f32 0.0, %v6559
        %6561 = vmatmul.f32.gmra.mxu0 %v6488
        %v6562 = vpop.f32.mrf.mxu0
        %v6563 = vadd.f32 0.0, %v6562
        %6564 = vdwg.mxu0
        %v6565 = vadd.f32 %v6467, %v6514
        %v6566 = vadd.f32 %v6468, %v6537
        %v6567 = vadd.f32 %v6469, %v6560
        %v6568 = vadd.f32 %v6470, %v6517
        %v6569 = vadd.f32 %v6471, %v6540
        %v6570 = vadd.f32 %v6472, %v6563
        %s6571 = scalar_lea.vmem %s5, 240
        %v6572 = vld [vmem:[%s6571] sm:$0xff]
        %v6573 = vld [vmem:[%s6571 + $0x8] sm:$0xf]
        %6574 = vrot.lane.b32.xlu0 %v5114, 44
        %v6575 = vpop.permute.xlu0 %6574
        %6576 = vrot.lane.b32.xlu0 %v5115, 44
        %v6577 = vpop.permute.xlu0 %6576
        %6578 = vrot.lane.b32.xlu0 %v5116, 44
        %v6579 = vpop.permute.xlu0 %6578
        %v6580 = vsel %vm1239, %v6575, %v6577
        %v6581 = vsel %vm1239, %v6577, %v6579
        %v6583 = vsel %vm5133, %v6572, 0
        %v6586 = vsel %vm5133, %v6573, 0
        %v6588 = vsel %vm5140, %v6580, 0
        %v6590 = vsel %vm5140, %v6581, 0
        %v6592 = vsel %vm5140, %v6579, 0
        %6594 = vmatpush.msra.mxu0 0.0
        %6595 = vmatpush.msra.mxu0 0.0
        %6596 = vmatpush.msra.mxu0 0.0
        %6597 = vmatpush.msra.mxu0 0.0
        %6598 = vmatpush.msra.mxu0 0.0
        %6599 = vmatpush.msra.mxu0 0.0
        %6600 = vmatpush.msra.mxu0 0.0
        %6601 = vmatpush.msra.mxu0 0.0
        %6602 = vmatpush.msra.mxu0 0.0
        %6603 = vmatpush.msra.mxu0 0.0
        %6604 = vmatpush.msra.mxu0 0.0
        %6605 = vmatpush.msra.mxu0 0.0
        %6606 = vmatpush.msra.mxu0 0.0
        %6607 = vmatpush.msra.mxu0 0.0
        %6608 = vmatpush.msra.mxu0 0.0
        %6609 = vmatpush.msra.mxu0 %v6588
        %6610 = vmatmul.f32.gmra.mxu0 %v6583
        %v6611 = vpop.f32.mrf.mxu0
        %v6612 = vadd.f32 0.0, %v6611
        %6613 = vmatmul.f32.gmra.mxu0 %v6586
        %v6614 = vpop.f32.mrf.mxu0
        %v6615 = vadd.f32 0.0, %v6614
        %6616 = vdwg.mxu0
        %6617 = vmatpush.msra.mxu0 0.0
        %6618 = vmatpush.msra.mxu0 0.0
        %6619 = vmatpush.msra.mxu0 0.0
        %6620 = vmatpush.msra.mxu0 0.0
        %6621 = vmatpush.msra.mxu0 0.0
        %6622 = vmatpush.msra.mxu0 0.0
        %6623 = vmatpush.msra.mxu0 0.0
        %6624 = vmatpush.msra.mxu0 0.0
        %6625 = vmatpush.msra.mxu0 0.0
        %6626 = vmatpush.msra.mxu0 0.0
        %6627 = vmatpush.msra.mxu0 0.0
        %6628 = vmatpush.msra.mxu0 0.0
        %6629 = vmatpush.msra.mxu0 0.0
        %6630 = vmatpush.msra.mxu0 0.0
        %6631 = vmatpush.msra.mxu0 0.0
        %6632 = vmatpush.msra.mxu0 %v6590
        %6633 = vmatmul.f32.gmra.mxu0 %v6583
        %v6634 = vpop.f32.mrf.mxu0
        %v6635 = vadd.f32 0.0, %v6634
        %6636 = vmatmul.f32.gmra.mxu0 %v6586
        %v6637 = vpop.f32.mrf.mxu0
        %v6638 = vadd.f32 0.0, %v6637
        %6639 = vdwg.mxu0
        %6640 = vmatpush.msra.mxu0 0.0
        %6641 = vmatpush.msra.mxu0 0.0
        %6642 = vmatpush.msra.mxu0 0.0
        %6643 = vmatpush.msra.mxu0 0.0
        %6644 = vmatpush.msra.mxu0 0.0
        %6645 = vmatpush.msra.mxu0 0.0
        %6646 = vmatpush.msra.mxu0 0.0
        %6647 = vmatpush.msra.mxu0 0.0
        %6648 = vmatpush.msra.mxu0 0.0
        %6649 = vmatpush.msra.mxu0 0.0
        %6650 = vmatpush.msra.mxu0 0.0
        %6651 = vmatpush.msra.mxu0 0.0
        %6652 = vmatpush.msra.mxu0 0.0
        %6653 = vmatpush.msra.mxu0 0.0
        %6654 = vmatpush.msra.mxu0 0.0
        %6655 = vmatpush.msra.mxu0 %v6592
        %6656 = vmatmul.f32.gmra.mxu0 %v6583
        %v6657 = vpop.f32.mrf.mxu0
        %v6658 = vadd.f32 0.0, %v6657
        %6659 = vmatmul.f32.gmra.mxu0 %v6586
        %v6660 = vpop.f32.mrf.mxu0
        %v6661 = vadd.f32 0.0, %v6660
        %6662 = vdwg.mxu0
        %v6663 = vadd.f32 %v6565, %v6612
        %v6664 = vadd.f32 %v6566, %v6635
        %v6665 = vadd.f32 %v6567, %v6658
        %v6666 = vadd.f32 %v6568, %v6615
        %v6667 = vadd.f32 %v6569, %v6638
        %v6668 = vadd.f32 %v6570, %v6661
        %s6669 = scalar_lea.vmem %s5, 256
        %v6670 = vld [vmem:[%s6669] sm:$0xff]
        %v6671 = vld [vmem:[%s6669 + $0x8] sm:$0xf]
        %6672 = vrot.lane.b32.xlu0 %v5114, 43
        %v6673 = vpop.permute.xlu0 %6672
        %6674 = vrot.lane.b32.xlu0 %v5115, 43
        %v6675 = vpop.permute.xlu0 %6674
        %6676 = vrot.lane.b32.xlu0 %v5116, 43
        %v6677 = vpop.permute.xlu0 %6676
        %v6678 = vsel %vm1288, %v6673, %v6675
        %v6679 = vsel %vm1288, %v6675, %v6677
        %v6681 = vsel %vm5133, %v6670, 0
        %v6684 = vsel %vm5133, %v6671, 0
        %v6686 = vsel %vm5140, %v6678, 0
        %v6688 = vsel %vm5140, %v6679, 0
        %v6690 = vsel %vm5140, %v6677, 0
        %6692 = vmatpush.msra.mxu0 0.0
        %6693 = vmatpush.msra.mxu0 0.0
        %6694 = vmatpush.msra.mxu0 0.0
        %6695 = vmatpush.msra.mxu0 0.0
        %6696 = vmatpush.msra.mxu0 0.0
        %6697 = vmatpush.msra.mxu0 0.0
        %6698 = vmatpush.msra.mxu0 0.0
        %6699 = vmatpush.msra.mxu0 0.0
        %6700 = vmatpush.msra.mxu0 0.0
        %6701 = vmatpush.msra.mxu0 0.0
        %6702 = vmatpush.msra.mxu0 0.0
        %6703 = vmatpush.msra.mxu0 0.0
        %6704 = vmatpush.msra.mxu0 0.0
        %6705 = vmatpush.msra.mxu0 0.0
        %6706 = vmatpush.msra.mxu0 0.0
        %6707 = vmatpush.msra.mxu0 %v6686
        %6708 = vmatmul.f32.gmra.mxu0 %v6681
        %v6709 = vpop.f32.mrf.mxu0
        %v6710 = vadd.f32 0.0, %v6709
        %6711 = vmatmul.f32.gmra.mxu0 %v6684
        %v6712 = vpop.f32.mrf.mxu0
        %v6713 = vadd.f32 0.0, %v6712
        %6714 = vdwg.mxu0
        %6715 = vmatpush.msra.mxu0 0.0
        %6716 = vmatpush.msra.mxu0 0.0
        %6717 = vmatpush.msra.mxu0 0.0
        %6718 = vmatpush.msra.mxu0 0.0
        %6719 = vmatpush.msra.mxu0 0.0
        %6720 = vmatpush.msra.mxu0 0.0
        %6721 = vmatpush.msra.mxu0 0.0
        %6722 = vmatpush.msra.mxu0 0.0
        %6723 = vmatpush.msra.mxu0 0.0
        %6724 = vmatpush.msra.mxu0 0.0
        %6725 = vmatpush.msra.mxu0 0.0
        %6726 = vmatpush.msra.mxu0 0.0
        %6727 = vmatpush.msra.mxu0 0.0
        %6728 = vmatpush.msra.mxu0 0.0
        %6729 = vmatpush.msra.mxu0 0.0
        %6730 = vmatpush.msra.mxu0 %v6688
        %6731 = vmatmul.f32.gmra.mxu0 %v6681
        %v6732 = vpop.f32.mrf.mxu0
        %v6733 = vadd.f32 0.0, %v6732
        %6734 = vmatmul.f32.gmra.mxu0 %v6684
        %v6735 = vpop.f32.mrf.mxu0
        %v6736 = vadd.f32 0.0, %v6735
        %6737 = vdwg.mxu0
        %6738 = vmatpush.msra.mxu0 0.0
        %6739 = vmatpush.msra.mxu0 0.0
        %6740 = vmatpush.msra.mxu0 0.0
        %6741 = vmatpush.msra.mxu0 0.0
        %6742 = vmatpush.msra.mxu0 0.0
        %6743 = vmatpush.msra.mxu0 0.0
        %6744 = vmatpush.msra.mxu0 0.0
        %6745 = vmatpush.msra.mxu0 0.0
        %6746 = vmatpush.msra.mxu0 0.0
        %6747 = vmatpush.msra.mxu0 0.0
        %6748 = vmatpush.msra.mxu0 0.0
        %6749 = vmatpush.msra.mxu0 0.0
        %6750 = vmatpush.msra.mxu0 0.0
        %6751 = vmatpush.msra.mxu0 0.0
        %6752 = vmatpush.msra.mxu0 0.0
        %6753 = vmatpush.msra.mxu0 %v6690
        %6754 = vmatmul.f32.gmra.mxu0 %v6681
        %v6755 = vpop.f32.mrf.mxu0
        %v6756 = vadd.f32 0.0, %v6755
        %6757 = vmatmul.f32.gmra.mxu0 %v6684
        %v6758 = vpop.f32.mrf.mxu0
        %v6759 = vadd.f32 0.0, %v6758
        %6760 = vdwg.mxu0
        %v6761 = vadd.f32 %v6663, %v6710
        %v6762 = vadd.f32 %v6664, %v6733
        %v6763 = vadd.f32 %v6665, %v6756
        %v6764 = vadd.f32 %v6666, %v6713
        %v6765 = vadd.f32 %v6667, %v6736
        %v6766 = vadd.f32 %v6668, %v6759
        %s6767 = scalar_lea.vmem %s5, 272
        %v6768 = vld [vmem:[%s6767] sm:$0xff]
        %v6769 = vld [vmem:[%s6767 + $0x8] sm:$0xf]
        %6770 = vrot.lane.b32.xlu0 %v5114, 42
        %v6771 = vpop.permute.xlu0 %6770
        %6772 = vrot.lane.b32.xlu0 %v5115, 42
        %v6773 = vpop.permute.xlu0 %6772
        %6774 = vrot.lane.b32.xlu0 %v5116, 42
        %v6775 = vpop.permute.xlu0 %6774
        %v6776 = vsel %vm1337, %v6771, %v6773
        %v6777 = vsel %vm1337, %v6773, %v6775
        %v6779 = vsel %vm5133, %v6768, 0
        %v6782 = vsel %vm5133, %v6769, 0
        %v6784 = vsel %vm5140, %v6776, 0
        %v6786 = vsel %vm5140, %v6777, 0
        %v6788 = vsel %vm5140, %v6775, 0
        %6790 = vmatpush.msra.mxu0 0.0
        %6791 = vmatpush.msra.mxu0 0.0
        %6792 = vmatpush.msra.mxu0 0.0
        %6793 = vmatpush.msra.mxu0 0.0
        %6794 = vmatpush.msra.mxu0 0.0
        %6795 = vmatpush.msra.mxu0 0.0
        %6796 = vmatpush.msra.mxu0 0.0
        %6797 = vmatpush.msra.mxu0 0.0
        %6798 = vmatpush.msra.mxu0 0.0
        %6799 = vmatpush.msra.mxu0 0.0
        %6800 = vmatpush.msra.mxu0 0.0
        %6801 = vmatpush.msra.mxu0 0.0
        %6802 = vmatpush.msra.mxu0 0.0
        %6803 = vmatpush.msra.mxu0 0.0
        %6804 = vmatpush.msra.mxu0 0.0
        %6805 = vmatpush.msra.mxu0 %v6784
        %6806 = vmatmul.f32.gmra.mxu0 %v6779
        %v6807 = vpop.f32.mrf.mxu0
        %v6808 = vadd.f32 0.0, %v6807
        %6809 = vmatmul.f32.gmra.mxu0 %v6782
        %v6810 = vpop.f32.mrf.mxu0
        %v6811 = vadd.f32 0.0, %v6810
        %6812 = vdwg.mxu0
        %6813 = vmatpush.msra.mxu0 0.0
        %6814 = vmatpush.msra.mxu0 0.0
        %6815 = vmatpush.msra.mxu0 0.0
        %6816 = vmatpush.msra.mxu0 0.0
        %6817 = vmatpush.msra.mxu0 0.0
        %6818 = vmatpush.msra.mxu0 0.0
        %6819 = vmatpush.msra.mxu0 0.0
        %6820 = vmatpush.msra.mxu0 0.0
        %6821 = vmatpush.msra.mxu0 0.0
        %6822 = vmatpush.msra.mxu0 0.0
        %6823 = vmatpush.msra.mxu0 0.0
        %6824 = vmatpush.msra.mxu0 0.0
        %6825 = vmatpush.msra.mxu0 0.0
        %6826 = vmatpush.msra.mxu0 0.0
        %6827 = vmatpush.msra.mxu0 0.0
        %6828 = vmatpush.msra.mxu0 %v6786
        %6829 = vmatmul.f32.gmra.mxu0 %v6779
        %v6830 = vpop.f32.mrf.mxu0
        %v6831 = vadd.f32 0.0, %v6830
        %6832 = vmatmul.f32.gmra.mxu0 %v6782
        %v6833 = vpop.f32.mrf.mxu0
        %v6834 = vadd.f32 0.0, %v6833
        %6835 = vdwg.mxu0
        %6836 = vmatpush.msra.mxu0 0.0
        %6837 = vmatpush.msra.mxu0 0.0
        %6838 = vmatpush.msra.mxu0 0.0
        %6839 = vmatpush.msra.mxu0 0.0
        %6840 = vmatpush.msra.mxu0 0.0
        %6841 = vmatpush.msra.mxu0 0.0
        %6842 = vmatpush.msra.mxu0 0.0
        %6843 = vmatpush.msra.mxu0 0.0
        %6844 = vmatpush.msra.mxu0 0.0
        %6845 = vmatpush.msra.mxu0 0.0
        %6846 = vmatpush.msra.mxu0 0.0
        %6847 = vmatpush.msra.mxu0 0.0
        %6848 = vmatpush.msra.mxu0 0.0
        %6849 = vmatpush.msra.mxu0 0.0
        %6850 = vmatpush.msra.mxu0 0.0
        %6851 = vmatpush.msra.mxu0 %v6788
        %6852 = vmatmul.f32.gmra.mxu0 %v6779
        %v6853 = vpop.f32.mrf.mxu0
        %v6854 = vadd.f32 0.0, %v6853
        %6855 = vmatmul.f32.gmra.mxu0 %v6782
        %v6856 = vpop.f32.mrf.mxu0
        %v6857 = vadd.f32 0.0, %v6856
        %6858 = vdwg.mxu0
        %v6859 = vadd.f32 %v6761, %v6808
        %v6860 = vadd.f32 %v6762, %v6831
        %v6861 = vadd.f32 %v6763, %v6854
        %v6862 = vadd.f32 %v6764, %v6811
        %v6863 = vadd.f32 %v6765, %v6834
        %v6864 = vadd.f32 %v6766, %v6857
        %s6865 = scalar_lea.vmem %s5, 288
        %v6866 = vld [vmem:[%s6865] sm:$0xff]
        %v6867 = vld [vmem:[%s6865 + $0x8] sm:$0xf]
        %6868 = vrot.lane.b32.xlu0 %v5114, 41
        %v6869 = vpop.permute.xlu0 %6868
        %6870 = vrot.lane.b32.xlu0 %v5115, 41
        %v6871 = vpop.permute.xlu0 %6870
        %6872 = vrot.lane.b32.xlu0 %v5116, 41
        %v6873 = vpop.permute.xlu0 %6872
        %v6874 = vsel %vm1386, %v6869, %v6871
        %v6875 = vsel %vm1386, %v6871, %v6873
        %v6877 = vsel %vm5133, %v6866, 0
        %v6880 = vsel %vm5133, %v6867, 0
        %v6882 = vsel %vm5140, %v6874, 0
        %v6884 = vsel %vm5140, %v6875, 0
        %v6886 = vsel %vm5140, %v6873, 0
        %6888 = vmatpush.msra.mxu0 0.0
        %6889 = vmatpush.msra.mxu0 0.0
        %6890 = vmatpush.msra.mxu0 0.0
        %6891 = vmatpush.msra.mxu0 0.0
        %6892 = vmatpush.msra.mxu0 0.0
        %6893 = vmatpush.msra.mxu0 0.0
        %6894 = vmatpush.msra.mxu0 0.0
        %6895 = vmatpush.msra.mxu0 0.0
        %6896 = vmatpush.msra.mxu0 0.0
        %6897 = vmatpush.msra.mxu0 0.0
        %6898 = vmatpush.msra.mxu0 0.0
        %6899 = vmatpush.msra.mxu0 0.0
        %6900 = vmatpush.msra.mxu0 0.0
        %6901 = vmatpush.msra.mxu0 0.0
        %6902 = vmatpush.msra.mxu0 0.0
        %6903 = vmatpush.msra.mxu0 %v6882
        %6904 = vmatmul.f32.gmra.mxu0 %v6877
        %v6905 = vpop.f32.mrf.mxu0
        %v6906 = vadd.f32 0.0, %v6905
        %6907 = vmatmul.f32.gmra.mxu0 %v6880
        %v6908 = vpop.f32.mrf.mxu0
        %v6909 = vadd.f32 0.0, %v6908
        %6910 = vdwg.mxu0
        %6911 = vmatpush.msra.mxu0 0.0
        %6912 = vmatpush.msra.mxu0 0.0
        %6913 = vmatpush.msra.mxu0 0.0
        %6914 = vmatpush.msra.mxu0 0.0
        %6915 = vmatpush.msra.mxu0 0.0
        %6916 = vmatpush.msra.mxu0 0.0
        %6917 = vmatpush.msra.mxu0 0.0
        %6918 = vmatpush.msra.mxu0 0.0
        %6919 = vmatpush.msra.mxu0 0.0
        %6920 = vmatpush.msra.mxu0 0.0
        %6921 = vmatpush.msra.mxu0 0.0
        %6922 = vmatpush.msra.mxu0 0.0
        %6923 = vmatpush.msra.mxu0 0.0
        %6924 = vmatpush.msra.mxu0 0.0
        %6925 = vmatpush.msra.mxu0 0.0
        %6926 = vmatpush.msra.mxu0 %v6884
        %6927 = vmatmul.f32.gmra.mxu0 %v6877
        %v6928 = vpop.f32.mrf.mxu0
        %v6929 = vadd.f32 0.0, %v6928
        %6930 = vmatmul.f32.gmra.mxu0 %v6880
        %v6931 = vpop.f32.mrf.mxu0
        %v6932 = vadd.f32 0.0, %v6931
        %6933 = vdwg.mxu0
        %6934 = vmatpush.msra.mxu0 0.0
        %6935 = vmatpush.msra.mxu0 0.0
        %6936 = vmatpush.msra.mxu0 0.0
        %6937 = vmatpush.msra.mxu0 0.0
        %6938 = vmatpush.msra.mxu0 0.0
        %6939 = vmatpush.msra.mxu0 0.0
        %6940 = vmatpush.msra.mxu0 0.0
        %6941 = vmatpush.msra.mxu0 0.0
        %6942 = vmatpush.msra.mxu0 0.0
        %6943 = vmatpush.msra.mxu0 0.0
        %6944 = vmatpush.msra.mxu0 0.0
        %6945 = vmatpush.msra.mxu0 0.0
        %6946 = vmatpush.msra.mxu0 0.0
        %6947 = vmatpush.msra.mxu0 0.0
        %6948 = vmatpush.msra.mxu0 0.0
        %6949 = vmatpush.msra.mxu0 %v6886
        %6950 = vmatmul.f32.gmra.mxu0 %v6877
        %v6951 = vpop.f32.mrf.mxu0
        %v6952 = vadd.f32 0.0, %v6951
        %6953 = vmatmul.f32.gmra.mxu0 %v6880
        %v6954 = vpop.f32.mrf.mxu0
        %v6955 = vadd.f32 0.0, %v6954
        %6956 = vdwg.mxu0
        %v6957 = vadd.f32 %v6859, %v6906
        %v6958 = vadd.f32 %v6860, %v6929
        %v6959 = vadd.f32 %v6861, %v6952
        %v6960 = vadd.f32 %v6862, %v6909
        %v6961 = vadd.f32 %v6863, %v6932
        %v6962 = vadd.f32 %v6864, %v6955
        %s6963 = scalar_lea.vmem %s5, 304
        %v6964 = vld [vmem:[%s6963] sm:$0xff]
        %v6965 = vld [vmem:[%s6963 + $0x8] sm:$0xf]
        %6966 = vrot.lane.b32.xlu0 %v5114, 40
        %v6967 = vpop.permute.xlu0 %6966
        %6968 = vrot.lane.b32.xlu0 %v5115, 40
        %v6969 = vpop.permute.xlu0 %6968
        %6970 = vrot.lane.b32.xlu0 %v5116, 40
        %v6971 = vpop.permute.xlu0 %6970
        %v6972 = vsel %vm1435, %v6967, %v6969
        %v6973 = vsel %vm1435, %v6969, %v6971
        %v6975 = vsel %vm5133, %v6964, 0
        %v6978 = vsel %vm5133, %v6965, 0
        %v6980 = vsel %vm5140, %v6972, 0
        %v6982 = vsel %vm5140, %v6973, 0
        %v6984 = vsel %vm5140, %v6971, 0
        %6986 = vmatpush.msra.mxu0 0.0
        %6987 = vmatpush.msra.mxu0 0.0
        %6988 = vmatpush.msra.mxu0 0.0
        %6989 = vmatpush.msra.mxu0 0.0
        %6990 = vmatpush.msra.mxu0 0.0
        %6991 = vmatpush.msra.mxu0 0.0
        %6992 = vmatpush.msra.mxu0 0.0
        %6993 = vmatpush.msra.mxu0 0.0
        %6994 = vmatpush.msra.mxu0 0.0
        %6995 = vmatpush.msra.mxu0 0.0
        %6996 = vmatpush.msra.mxu0 0.0
        %6997 = vmatpush.msra.mxu0 0.0
        %6998 = vmatpush.msra.mxu0 0.0
        %6999 = vmatpush.msra.mxu0 0.0
        %7000 = vmatpush.msra.mxu0 0.0
        %7001 = vmatpush.msra.mxu0 %v6980
        %7002 = vmatmul.f32.gmra.mxu0 %v6975
        %v7003 = vpop.f32.mrf.mxu0
        %v7004 = vadd.f32 0.0, %v7003
        %7005 = vmatmul.f32.gmra.mxu0 %v6978
        %v7006 = vpop.f32.mrf.mxu0
        %v7007 = vadd.f32 0.0, %v7006
        %7008 = vdwg.mxu0
        %7009 = vmatpush.msra.mxu0 0.0
        %7010 = vmatpush.msra.mxu0 0.0
        %7011 = vmatpush.msra.mxu0 0.0
        %7012 = vmatpush.msra.mxu0 0.0
        %7013 = vmatpush.msra.mxu0 0.0
        %7014 = vmatpush.msra.mxu0 0.0
        %7015 = vmatpush.msra.mxu0 0.0
        %7016 = vmatpush.msra.mxu0 0.0
        %7017 = vmatpush.msra.mxu0 0.0
        %7018 = vmatpush.msra.mxu0 0.0
        %7019 = vmatpush.msra.mxu0 0.0
        %7020 = vmatpush.msra.mxu0 0.0
        %7021 = vmatpush.msra.mxu0 0.0
        %7022 = vmatpush.msra.mxu0 0.0
        %7023 = vmatpush.msra.mxu0 0.0
        %7024 = vmatpush.msra.mxu0 %v6982
        %7025 = vmatmul.f32.gmra.mxu0 %v6975
        %v7026 = vpop.f32.mrf.mxu0
        %v7027 = vadd.f32 0.0, %v7026
        %7028 = vmatmul.f32.gmra.mxu0 %v6978
        %v7029 = vpop.f32.mrf.mxu0
        %v7030 = vadd.f32 0.0, %v7029
        %7031 = vdwg.mxu0
        %7032 = vmatpush.msra.mxu0 0.0
        %7033 = vmatpush.msra.mxu0 0.0
        %7034 = vmatpush.msra.mxu0 0.0
        %7035 = vmatpush.msra.mxu0 0.0
        %7036 = vmatpush.msra.mxu0 0.0
        %7037 = vmatpush.msra.mxu0 0.0
        %7038 = vmatpush.msra.mxu0 0.0
        %7039 = vmatpush.msra.mxu0 0.0
        %7040 = vmatpush.msra.mxu0 0.0
        %7041 = vmatpush.msra.mxu0 0.0
        %7042 = vmatpush.msra.mxu0 0.0
        %7043 = vmatpush.msra.mxu0 0.0
        %7044 = vmatpush.msra.mxu0 0.0
        %7045 = vmatpush.msra.mxu0 0.0
        %7046 = vmatpush.msra.mxu0 0.0
        %7047 = vmatpush.msra.mxu0 %v6984
        %7048 = vmatmul.f32.gmra.mxu0 %v6975
        %v7049 = vpop.f32.mrf.mxu0
        %v7050 = vadd.f32 0.0, %v7049
        %7051 = vmatmul.f32.gmra.mxu0 %v6978
        %v7052 = vpop.f32.mrf.mxu0
        %v7053 = vadd.f32 0.0, %v7052
        %7054 = vdwg.mxu0
        %v7055 = vadd.f32 %v6957, %v7004
        %v7056 = vadd.f32 %v6958, %v7027
        %v7057 = vadd.f32 %v6959, %v7050
        %v7058 = vadd.f32 %v6960, %v7007
        %v7059 = vadd.f32 %v6961, %v7030
        %v7060 = vadd.f32 %v6962, %v7053
        %s7061 = scalar_lea.vmem %s5, 320
        %v7062 = vld [vmem:[%s7061] sm:$0xff]
        %v7063 = vld [vmem:[%s7061 + $0x8] sm:$0xf]
        %7064 = vrot.lane.b32.xlu0 %v5114, 16
        %v7065 = vpop.permute.xlu0 %7064
        %7066 = vrot.lane.b32.xlu0 %v5115, 16
        %v7067 = vpop.permute.xlu0 %7066
        %7068 = vrot.lane.b32.xlu0 %v5116, 16
        %v7069 = vpop.permute.xlu0 %7068
        %v7070 = vsel %vm1490, %v7065, %v7067
        %v7071 = vsel %vm1490, %v7067, %v7069
        %v7073 = vsel %vm5133, %v7062, 0
        %v7076 = vsel %vm5133, %v7063, 0
        %v7078 = vsel %vm5140, %v7070, 0
        %v7080 = vsel %vm5140, %v7071, 0
        %v7082 = vsel %vm5140, %v7069, 0
        %7084 = vmatpush.msra.mxu0 0.0
        %7085 = vmatpush.msra.mxu0 0.0
        %7086 = vmatpush.msra.mxu0 0.0
        %7087 = vmatpush.msra.mxu0 0.0
        %7088 = vmatpush.msra.mxu0 0.0
        %7089 = vmatpush.msra.mxu0 0.0
        %7090 = vmatpush.msra.mxu0 0.0
        %7091 = vmatpush.msra.mxu0 0.0
        %7092 = vmatpush.msra.mxu0 0.0
        %7093 = vmatpush.msra.mxu0 0.0
        %7094 = vmatpush.msra.mxu0 0.0
        %7095 = vmatpush.msra.mxu0 0.0
        %7096 = vmatpush.msra.mxu0 0.0
        %7097 = vmatpush.msra.mxu0 0.0
        %7098 = vmatpush.msra.mxu0 0.0
        %7099 = vmatpush.msra.mxu0 %v7078
        %7100 = vmatmul.f32.gmra.mxu0 %v7073
        %v7101 = vpop.f32.mrf.mxu0
        %v7102 = vadd.f32 0.0, %v7101
        %7103 = vmatmul.f32.gmra.mxu0 %v7076
        %v7104 = vpop.f32.mrf.mxu0
        %v7105 = vadd.f32 0.0, %v7104
        %7106 = vdwg.mxu0
        %7107 = vmatpush.msra.mxu0 0.0
        %7108 = vmatpush.msra.mxu0 0.0
        %7109 = vmatpush.msra.mxu0 0.0
        %7110 = vmatpush.msra.mxu0 0.0
        %7111 = vmatpush.msra.mxu0 0.0
        %7112 = vmatpush.msra.mxu0 0.0
        %7113 = vmatpush.msra.mxu0 0.0
        %7114 = vmatpush.msra.mxu0 0.0
        %7115 = vmatpush.msra.mxu0 0.0
        %7116 = vmatpush.msra.mxu0 0.0
        %7117 = vmatpush.msra.mxu0 0.0
        %7118 = vmatpush.msra.mxu0 0.0
        %7119 = vmatpush.msra.mxu0 0.0
        %7120 = vmatpush.msra.mxu0 0.0
        %7121 = vmatpush.msra.mxu0 0.0
        %7122 = vmatpush.msra.mxu0 %v7080
        %7123 = vmatmul.f32.gmra.mxu0 %v7073
        %v7124 = vpop.f32.mrf.mxu0
        %v7125 = vadd.f32 0.0, %v7124
        %7126 = vmatmul.f32.gmra.mxu0 %v7076
        %v7127 = vpop.f32.mrf.mxu0
        %v7128 = vadd.f32 0.0, %v7127
        %7129 = vdwg.mxu0
        %7130 = vmatpush.msra.mxu0 0.0
        %7131 = vmatpush.msra.mxu0 0.0
        %7132 = vmatpush.msra.mxu0 0.0
        %7133 = vmatpush.msra.mxu0 0.0
        %7134 = vmatpush.msra.mxu0 0.0
        %7135 = vmatpush.msra.mxu0 0.0
        %7136 = vmatpush.msra.mxu0 0.0
        %7137 = vmatpush.msra.mxu0 0.0
        %7138 = vmatpush.msra.mxu0 0.0
        %7139 = vmatpush.msra.mxu0 0.0
        %7140 = vmatpush.msra.mxu0 0.0
        %7141 = vmatpush.msra.mxu0 0.0
        %7142 = vmatpush.msra.mxu0 0.0
        %7143 = vmatpush.msra.mxu0 0.0
        %7144 = vmatpush.msra.mxu0 0.0
        %7145 = vmatpush.msra.mxu0 %v7082
        %7146 = vmatmul.f32.gmra.mxu0 %v7073
        %v7147 = vpop.f32.mrf.mxu0
        %v7148 = vadd.f32 0.0, %v7147
        %7149 = vmatmul.f32.gmra.mxu0 %v7076
        %v7150 = vpop.f32.mrf.mxu0
        %v7151 = vadd.f32 0.0, %v7150
        %7152 = vdwg.mxu0
        %v7153 = vadd.f32 %v7055, %v7102
        %v7154 = vadd.f32 %v7056, %v7125
        %v7155 = vadd.f32 %v7057, %v7148
        %v7156 = vadd.f32 %v7058, %v7105
        %v7157 = vadd.f32 %v7059, %v7128
        %v7158 = vadd.f32 %v7060, %v7151
        %s7159 = scalar_lea.vmem %s5, 336
        %v7160 = vld [vmem:[%s7159] sm:$0xff]
        %v7161 = vld [vmem:[%s7159 + $0x8] sm:$0xf]
        %7162 = vrot.lane.b32.xlu0 %v5114, 15
        %v7163 = vpop.permute.xlu0 %7162
        %7164 = vrot.lane.b32.xlu0 %v5115, 15
        %v7165 = vpop.permute.xlu0 %7164
        %7166 = vrot.lane.b32.xlu0 %v5116, 15
        %v7167 = vpop.permute.xlu0 %7166
        %v7168 = vsel %vm1544, %v7163, %v7165
        %v7169 = vsel %vm1544, %v7165, %v7167
        %v7171 = vsel %vm5133, %v7160, 0
        %v7174 = vsel %vm5133, %v7161, 0
        %v7176 = vsel %vm5140, %v7168, 0
        %v7178 = vsel %vm5140, %v7169, 0
        %v7180 = vsel %vm5140, %v7167, 0
        %7182 = vmatpush.msra.mxu0 0.0
        %7183 = vmatpush.msra.mxu0 0.0
        %7184 = vmatpush.msra.mxu0 0.0
        %7185 = vmatpush.msra.mxu0 0.0
        %7186 = vmatpush.msra.mxu0 0.0
        %7187 = vmatpush.msra.mxu0 0.0
        %7188 = vmatpush.msra.mxu0 0.0
        %7189 = vmatpush.msra.mxu0 0.0
        %7190 = vmatpush.msra.mxu0 0.0
        %7191 = vmatpush.msra.mxu0 0.0
        %7192 = vmatpush.msra.mxu0 0.0
        %7193 = vmatpush.msra.mxu0 0.0
        %7194 = vmatpush.msra.mxu0 0.0
        %7195 = vmatpush.msra.mxu0 0.0
        %7196 = vmatpush.msra.mxu0 0.0
        %7197 = vmatpush.msra.mxu0 %v7176
        %7198 = vmatmul.f32.gmra.mxu0 %v7171
        %v7199 = vpop.f32.mrf.mxu0
        %v7200 = vadd.f32 0.0, %v7199
        %7201 = vmatmul.f32.gmra.mxu0 %v7174
        %v7202 = vpop.f32.mrf.mxu0
        %v7203 = vadd.f32 0.0, %v7202
        %7204 = vdwg.mxu0
        %7205 = vmatpush.msra.mxu0 0.0
        %7206 = vmatpush.msra.mxu0 0.0
        %7207 = vmatpush.msra.mxu0 0.0
        %7208 = vmatpush.msra.mxu0 0.0
        %7209 = vmatpush.msra.mxu0 0.0
        %7210 = vmatpush.msra.mxu0 0.0
        %7211 = vmatpush.msra.mxu0 0.0
        %7212 = vmatpush.msra.mxu0 0.0
        %7213 = vmatpush.msra.mxu0 0.0
        %7214 = vmatpush.msra.mxu0 0.0
        %7215 = vmatpush.msra.mxu0 0.0
        %7216 = vmatpush.msra.mxu0 0.0
        %7217 = vmatpush.msra.mxu0 0.0
        %7218 = vmatpush.msra.mxu0 0.0
        %7219 = vmatpush.msra.mxu0 0.0
        %7220 = vmatpush.msra.mxu0 %v7178
        %7221 = vmatmul.f32.gmra.mxu0 %v7171
        %v7222 = vpop.f32.mrf.mxu0
        %v7223 = vadd.f32 0.0, %v7222
        %7224 = vmatmul.f32.gmra.mxu0 %v7174
        %v7225 = vpop.f32.mrf.mxu0
        %v7226 = vadd.f32 0.0, %v7225
        %7227 = vdwg.mxu0
        %7228 = vmatpush.msra.mxu0 0.0
        %7229 = vmatpush.msra.mxu0 0.0
        %7230 = vmatpush.msra.mxu0 0.0
        %7231 = vmatpush.msra.mxu0 0.0
        %7232 = vmatpush.msra.mxu0 0.0
        %7233 = vmatpush.msra.mxu0 0.0
        %7234 = vmatpush.msra.mxu0 0.0
        %7235 = vmatpush.msra.mxu0 0.0
        %7236 = vmatpush.msra.mxu0 0.0
        %7237 = vmatpush.msra.mxu0 0.0
        %7238 = vmatpush.msra.mxu0 0.0
        %7239 = vmatpush.msra.mxu0 0.0
        %7240 = vmatpush.msra.mxu0 0.0
        %7241 = vmatpush.msra.mxu0 0.0
        %7242 = vmatpush.msra.mxu0 0.0
        %7243 = vmatpush.msra.mxu0 %v7180
        %7244 = vmatmul.f32.gmra.mxu0 %v7171
        %v7245 = vpop.f32.mrf.mxu0
        %v7246 = vadd.f32 0.0, %v7245
        %7247 = vmatmul.f32.gmra.mxu0 %v7174
        %v7248 = vpop.f32.mrf.mxu0
        %v7249 = vadd.f32 0.0, %v7248
        %7250 = vdwg.mxu0
        %v7251 = vadd.f32 %v7153, %v7200
        %v7252 = vadd.f32 %v7154, %v7223
        %v7253 = vadd.f32 %v7155, %v7246
        %v7254 = vadd.f32 %v7156, %v7203
        %v7255 = vadd.f32 %v7157, %v7226
        %v7256 = vadd.f32 %v7158, %v7249
        %s7257 = scalar_lea.vmem %s5, 352
        %v7258 = vld [vmem:[%s7257] sm:$0xff]
        %v7259 = vld [vmem:[%s7257 + $0x8] sm:$0xf]
        %7260 = vrot.lane.b32.xlu0 %v5114, 14
        %v7261 = vpop.permute.xlu0 %7260
        %7262 = vrot.lane.b32.xlu0 %v5115, 14
        %v7263 = vpop.permute.xlu0 %7262
        %7264 = vrot.lane.b32.xlu0 %v5116, 14
        %v7265 = vpop.permute.xlu0 %7264
        %v7266 = vsel %vm1598, %v7261, %v7263
        %v7267 = vsel %vm1598, %v7263, %v7265
        %v7269 = vsel %vm5133, %v7258, 0
        %v7272 = vsel %vm5133, %v7259, 0
        %v7274 = vsel %vm5140, %v7266, 0
        %v7276 = vsel %vm5140, %v7267, 0
        %v7278 = vsel %vm5140, %v7265, 0
        %7280 = vmatpush.msra.mxu0 0.0
        %7281 = vmatpush.msra.mxu0 0.0
        %7282 = vmatpush.msra.mxu0 0.0
        %7283 = vmatpush.msra.mxu0 0.0
        %7284 = vmatpush.msra.mxu0 0.0
        %7285 = vmatpush.msra.mxu0 0.0
        %7286 = vmatpush.msra.mxu0 0.0
        %7287 = vmatpush.msra.mxu0 0.0
        %7288 = vmatpush.msra.mxu0 0.0
        %7289 = vmatpush.msra.mxu0 0.0
        %7290 = vmatpush.msra.mxu0 0.0
        %7291 = vmatpush.msra.mxu0 0.0
        %7292 = vmatpush.msra.mxu0 0.0
        %7293 = vmatpush.msra.mxu0 0.0
        %7294 = vmatpush.msra.mxu0 0.0
        %7295 = vmatpush.msra.mxu0 %v7274
        %7296 = vmatmul.f32.gmra.mxu0 %v7269
        %v7297 = vpop.f32.mrf.mxu0
        %v7298 = vadd.f32 0.0, %v7297
        %7299 = vmatmul.f32.gmra.mxu0 %v7272
        %v7300 = vpop.f32.mrf.mxu0
        %v7301 = vadd.f32 0.0, %v7300
        %7302 = vdwg.mxu0
        %7303 = vmatpush.msra.mxu0 0.0
        %7304 = vmatpush.msra.mxu0 0.0
        %7305 = vmatpush.msra.mxu0 0.0
        %7306 = vmatpush.msra.mxu0 0.0
        %7307 = vmatpush.msra.mxu0 0.0
        %7308 = vmatpush.msra.mxu0 0.0
        %7309 = vmatpush.msra.mxu0 0.0
        %7310 = vmatpush.msra.mxu0 0.0
        %7311 = vmatpush.msra.mxu0 0.0
        %7312 = vmatpush.msra.mxu0 0.0
        %7313 = vmatpush.msra.mxu0 0.0
        %7314 = vmatpush.msra.mxu0 0.0
        %7315 = vmatpush.msra.mxu0 0.0
        %7316 = vmatpush.msra.mxu0 0.0
        %7317 = vmatpush.msra.mxu0 0.0
        %7318 = vmatpush.msra.mxu0 %v7276
        %7319 = vmatmul.f32.gmra.mxu0 %v7269
        %v7320 = vpop.f32.mrf.mxu0
        %v7321 = vadd.f32 0.0, %v7320
        %7322 = vmatmul.f32.gmra.mxu0 %v7272
        %v7323 = vpop.f32.mrf.mxu0
        %v7324 = vadd.f32 0.0, %v7323
        %7325 = vdwg.mxu0
        %7326 = vmatpush.msra.mxu0 0.0
        %7327 = vmatpush.msra.mxu0 0.0
        %7328 = vmatpush.msra.mxu0 0.0
        %7329 = vmatpush.msra.mxu0 0.0
        %7330 = vmatpush.msra.mxu0 0.0
        %7331 = vmatpush.msra.mxu0 0.0
        %7332 = vmatpush.msra.mxu0 0.0
        %7333 = vmatpush.msra.mxu0 0.0
        %7334 = vmatpush.msra.mxu0 0.0
        %7335 = vmatpush.msra.mxu0 0.0
        %7336 = vmatpush.msra.mxu0 0.0
        %7337 = vmatpush.msra.mxu0 0.0
        %7338 = vmatpush.msra.mxu0 0.0
        %7339 = vmatpush.msra.mxu0 0.0
        %7340 = vmatpush.msra.mxu0 0.0
        %7341 = vmatpush.msra.mxu0 %v7278
        %7342 = vmatmul.f32.gmra.mxu0 %v7269
        %v7343 = vpop.f32.mrf.mxu0
        %v7344 = vadd.f32 0.0, %v7343
        %7345 = vmatmul.f32.gmra.mxu0 %v7272
        %v7346 = vpop.f32.mrf.mxu0
        %v7347 = vadd.f32 0.0, %v7346
        %7348 = vdwg.mxu0
        %v7349 = vadd.f32 %v7251, %v7298
        %v7350 = vadd.f32 %v7252, %v7321
        %v7351 = vadd.f32 %v7253, %v7344
        %v7352 = vadd.f32 %v7254, %v7301
        %v7353 = vadd.f32 %v7255, %v7324
        %v7354 = vadd.f32 %v7256, %v7347
        %s7355 = scalar_lea.vmem %s5, 368
        %v7356 = vld [vmem:[%s7355] sm:$0xff]
        %v7357 = vld [vmem:[%s7355 + $0x8] sm:$0xf]
        %7358 = vrot.lane.b32.xlu0 %v5114, 13
        %v7359 = vpop.permute.xlu0 %7358
        %7360 = vrot.lane.b32.xlu0 %v5115, 13
        %v7361 = vpop.permute.xlu0 %7360
        %7362 = vrot.lane.b32.xlu0 %v5116, 13
        %v7363 = vpop.permute.xlu0 %7362
        %v7364 = vsel %vm1652, %v7359, %v7361
        %v7365 = vsel %vm1652, %v7361, %v7363
        %v7367 = vsel %vm5133, %v7356, 0
        %v7370 = vsel %vm5133, %v7357, 0
        %v7372 = vsel %vm5140, %v7364, 0
        %v7374 = vsel %vm5140, %v7365, 0
        %v7376 = vsel %vm5140, %v7363, 0
        %7378 = vmatpush.msra.mxu0 0.0
        %7379 = vmatpush.msra.mxu0 0.0
        %7380 = vmatpush.msra.mxu0 0.0
        %7381 = vmatpush.msra.mxu0 0.0
        %7382 = vmatpush.msra.mxu0 0.0
        %7383 = vmatpush.msra.mxu0 0.0
        %7384 = vmatpush.msra.mxu0 0.0
        %7385 = vmatpush.msra.mxu0 0.0
        %7386 = vmatpush.msra.mxu0 0.0
        %7387 = vmatpush.msra.mxu0 0.0
        %7388 = vmatpush.msra.mxu0 0.0
        %7389 = vmatpush.msra.mxu0 0.0
        %7390 = vmatpush.msra.mxu0 0.0
        %7391 = vmatpush.msra.mxu0 0.0
        %7392 = vmatpush.msra.mxu0 0.0
        %7393 = vmatpush.msra.mxu0 %v7372
        %7394 = vmatmul.f32.gmra.mxu0 %v7367
        %v7395 = vpop.f32.mrf.mxu0
        %v7396 = vadd.f32 0.0, %v7395
        %7397 = vmatmul.f32.gmra.mxu0 %v7370
        %v7398 = vpop.f32.mrf.mxu0
        %v7399 = vadd.f32 0.0, %v7398
        %7400 = vdwg.mxu0
        %7401 = vmatpush.msra.mxu0 0.0
        %7402 = vmatpush.msra.mxu0 0.0
        %7403 = vmatpush.msra.mxu0 0.0
        %7404 = vmatpush.msra.mxu0 0.0
        %7405 = vmatpush.msra.mxu0 0.0
        %7406 = vmatpush.msra.mxu0 0.0
        %7407 = vmatpush.msra.mxu0 0.0
        %7408 = vmatpush.msra.mxu0 0.0
        %7409 = vmatpush.msra.mxu0 0.0
        %7410 = vmatpush.msra.mxu0 0.0
        %7411 = vmatpush.msra.mxu0 0.0
        %7412 = vmatpush.msra.mxu0 0.0
        %7413 = vmatpush.msra.mxu0 0.0
        %7414 = vmatpush.msra.mxu0 0.0
        %7415 = vmatpush.msra.mxu0 0.0
        %7416 = vmatpush.msra.mxu0 %v7374
        %7417 = vmatmul.f32.gmra.mxu0 %v7367
        %v7418 = vpop.f32.mrf.mxu0
        %v7419 = vadd.f32 0.0, %v7418
        %7420 = vmatmul.f32.gmra.mxu0 %v7370
        %v7421 = vpop.f32.mrf.mxu0
        %v7422 = vadd.f32 0.0, %v7421
        %7423 = vdwg.mxu0
        %7424 = vmatpush.msra.mxu0 0.0
        %7425 = vmatpush.msra.mxu0 0.0
        %7426 = vmatpush.msra.mxu0 0.0
        %7427 = vmatpush.msra.mxu0 0.0
        %7428 = vmatpush.msra.mxu0 0.0
        %7429 = vmatpush.msra.mxu0 0.0
        %7430 = vmatpush.msra.mxu0 0.0
        %7431 = vmatpush.msra.mxu0 0.0
        %7432 = vmatpush.msra.mxu0 0.0
        %7433 = vmatpush.msra.mxu0 0.0
        %7434 = vmatpush.msra.mxu0 0.0
        %7435 = vmatpush.msra.mxu0 0.0
        %7436 = vmatpush.msra.mxu0 0.0
        %7437 = vmatpush.msra.mxu0 0.0
        %7438 = vmatpush.msra.mxu0 0.0
        %7439 = vmatpush.msra.mxu0 %v7376
        %7440 = vmatmul.f32.gmra.mxu0 %v7367
        %v7441 = vpop.f32.mrf.mxu0
        %v7442 = vadd.f32 0.0, %v7441
        %7443 = vmatmul.f32.gmra.mxu0 %v7370
        %v7444 = vpop.f32.mrf.mxu0
        %v7445 = vadd.f32 0.0, %v7444
        %7446 = vdwg.mxu0
        %v7447 = vadd.f32 %v7349, %v7396
        %v7448 = vadd.f32 %v7350, %v7419
        %v7449 = vadd.f32 %v7351, %v7442
        %v7450 = vadd.f32 %v7352, %v7399
        %v7451 = vadd.f32 %v7353, %v7422
        %v7452 = vadd.f32 %v7354, %v7445
        %s7453 = scalar_lea.vmem %s5, 384
        %v7454 = vld [vmem:[%s7453] sm:$0xff]
        %v7455 = vld [vmem:[%s7453 + $0x8] sm:$0xf]
        %7456 = vrot.lane.b32.xlu0 %v5114, 12
        %v7457 = vpop.permute.xlu0 %7456
        %7458 = vrot.lane.b32.xlu0 %v5115, 12
        %v7459 = vpop.permute.xlu0 %7458
        %7460 = vrot.lane.b32.xlu0 %v5116, 12
        %v7461 = vpop.permute.xlu0 %7460
        %v7462 = vsel %vm1706, %v7457, %v7459
        %v7463 = vsel %vm1706, %v7459, %v7461
        %v7465 = vsel %vm5133, %v7454, 0
        %v7468 = vsel %vm5133, %v7455, 0
        %v7470 = vsel %vm5140, %v7462, 0
        %v7472 = vsel %vm5140, %v7463, 0
        %v7474 = vsel %vm5140, %v7461, 0
        %7476 = vmatpush.msra.mxu0 0.0
        %7477 = vmatpush.msra.mxu0 0.0
        %7478 = vmatpush.msra.mxu0 0.0
        %7479 = vmatpush.msra.mxu0 0.0
        %7480 = vmatpush.msra.mxu0 0.0
        %7481 = vmatpush.msra.mxu0 0.0
        %7482 = vmatpush.msra.mxu0 0.0
        %7483 = vmatpush.msra.mxu0 0.0
        %7484 = vmatpush.msra.mxu0 0.0
        %7485 = vmatpush.msra.mxu0 0.0
        %7486 = vmatpush.msra.mxu0 0.0
        %7487 = vmatpush.msra.mxu0 0.0
        %7488 = vmatpush.msra.mxu0 0.0
        %7489 = vmatpush.msra.mxu0 0.0
        %7490 = vmatpush.msra.mxu0 0.0
        %7491 = vmatpush.msra.mxu0 %v7470
        %7492 = vmatmul.f32.gmra.mxu0 %v7465
        %v7493 = vpop.f32.mrf.mxu0
        %v7494 = vadd.f32 0.0, %v7493
        %7495 = vmatmul.f32.gmra.mxu0 %v7468
        %v7496 = vpop.f32.mrf.mxu0
        %v7497 = vadd.f32 0.0, %v7496
        %7498 = vdwg.mxu0
        %7499 = vmatpush.msra.mxu0 0.0
        %7500 = vmatpush.msra.mxu0 0.0
        %7501 = vmatpush.msra.mxu0 0.0
        %7502 = vmatpush.msra.mxu0 0.0
        %7503 = vmatpush.msra.mxu0 0.0
        %7504 = vmatpush.msra.mxu0 0.0
        %7505 = vmatpush.msra.mxu0 0.0
        %7506 = vmatpush.msra.mxu0 0.0
        %7507 = vmatpush.msra.mxu0 0.0
        %7508 = vmatpush.msra.mxu0 0.0
        %7509 = vmatpush.msra.mxu0 0.0
        %7510 = vmatpush.msra.mxu0 0.0
        %7511 = vmatpush.msra.mxu0 0.0
        %7512 = vmatpush.msra.mxu0 0.0
        %7513 = vmatpush.msra.mxu0 0.0
        %7514 = vmatpush.msra.mxu0 %v7472
        %7515 = vmatmul.f32.gmra.mxu0 %v7465
        %v7516 = vpop.f32.mrf.mxu0
        %v7517 = vadd.f32 0.0, %v7516
        %7518 = vmatmul.f32.gmra.mxu0 %v7468
        %v7519 = vpop.f32.mrf.mxu0
        %v7520 = vadd.f32 0.0, %v7519
        %7521 = vdwg.mxu0
        %7522 = vmatpush.msra.mxu0 0.0
        %7523 = vmatpush.msra.mxu0 0.0
        %7524 = vmatpush.msra.mxu0 0.0
        %7525 = vmatpush.msra.mxu0 0.0
        %7526 = vmatpush.msra.mxu0 0.0
        %7527 = vmatpush.msra.mxu0 0.0
        %7528 = vmatpush.msra.mxu0 0.0
        %7529 = vmatpush.msra.mxu0 0.0
        %7530 = vmatpush.msra.mxu0 0.0
        %7531 = vmatpush.msra.mxu0 0.0
        %7532 = vmatpush.msra.mxu0 0.0
        %7533 = vmatpush.msra.mxu0 0.0
        %7534 = vmatpush.msra.mxu0 0.0
        %7535 = vmatpush.msra.mxu0 0.0
        %7536 = vmatpush.msra.mxu0 0.0
        %7537 = vmatpush.msra.mxu0 %v7474
        %7538 = vmatmul.f32.gmra.mxu0 %v7465
        %v7539 = vpop.f32.mrf.mxu0
        %v7540 = vadd.f32 0.0, %v7539
        %7541 = vmatmul.f32.gmra.mxu0 %v7468
        %v7542 = vpop.f32.mrf.mxu0
        %v7543 = vadd.f32 0.0, %v7542
        %7544 = vdwg.mxu0
        %v7545 = vadd.f32 %v7447, %v7494
        %v7546 = vadd.f32 %v7448, %v7517
        %v7547 = vadd.f32 %v7449, %v7540
        %v7548 = vadd.f32 %v7450, %v7497
        %v7549 = vadd.f32 %v7451, %v7520
        %v7550 = vadd.f32 %v7452, %v7543
        %v7551 = vld [vmem:[%s6] sm:$0xff]
        %v7552 = vld [vmem:[%s6 + $0x8] sm:$0xf]
        %7554 = vset.pattern.permute.xlu0 0
        %7555 = vperm.xlu0 %7554, %v7551
        %v7556 = vpop.permute.xlu0 %7555
        %7559 = vset.pattern.permute.xlu0 0
        %7560 = vperm.xlu0 %7559, %v7552
        %v7561 = vpop.permute.xlu0 %7560
        %v7563 = vadd.f32 %v7545, %v7556
        %v7564 = vadd.f32 %v7546, %v7556
        %v7565 = vadd.f32 %v7547, %v7556
        %v7566 = vadd.f32 %v7548, %v7561
        %v7567 = vadd.f32 %v7549, %v7561
        %v7568 = vadd.f32 %v7550, %v7561
        %v7569 = vmax.f32 %v7563, 0.0
        %v7570 = vmax.f32 %v7564, 0.0
        %v7571 = vmax.f32 %v7565, 0.0
        %v7572 = vmax.f32 %v7566, 0.0
        %v7573 = vmax.f32 %v7567, 0.0
        %v7574 = vmax.f32 %v7568, 0.0
        %7579 = vrot.lane.b32.xlu0 %v7569, 127
        %v7580 = vpop.permute.xlu0 %7579
        %7581 = vrot.lane.b32.xlu0 %v7570, 127
        %v7582 = vpop.permute.xlu0 %7581
        %7583 = vrot.lane.b32.xlu0 %v7572, 127
        %v7584 = vpop.permute.xlu0 %7583
        %7585 = vrot.lane.b32.xlu0 %v7573, 127
        %v7586 = vpop.permute.xlu0 %7585
        %v7587 = vsel %vm553, %v7580, %v7582
        %v7588 = vsel %vm553, %v7584, %v7586
        %v7593 = vmax.f32 %v7569, %v7587
        %v7594 = vmax.f32 %v7570, %v7582
        %v7595 = vmax.f32 %v7572, %v7588
        %v7596 = vmax.f32 %v7573, %v7586
        %7597 = vrot.lane.b32.xlu0 %v7569, 126
        %v7598 = vpop.permute.xlu0 %7597
        %7599 = vrot.lane.b32.xlu0 %v7570, 126
        %v7600 = vpop.permute.xlu0 %7599
        %7601 = vrot.lane.b32.xlu0 %v7572, 126
        %v7602 = vpop.permute.xlu0 %7601
        %7603 = vrot.lane.b32.xlu0 %v7573, 126
        %v7604 = vpop.permute.xlu0 %7603
        %v7605 = vsel %vm602, %v7598, %v7600
        %v7606 = vsel %vm602, %v7602, %v7604
        %v7611 = vmax.f32 %v7593, %v7605
        %v7612 = vmax.f32 %v7594, %v7600
        %v7613 = vmax.f32 %v7595, %v7606
        %v7614 = vmax.f32 %v7596, %v7604
        %7615 = vrot.lane.b32.xlu0 %v7569, 125
        %v7616 = vpop.permute.xlu0 %7615
        %7617 = vrot.lane.b32.xlu0 %v7570, 125
        %v7618 = vpop.permute.xlu0 %7617
        %7619 = vrot.lane.b32.xlu0 %v7572, 125
        %v7620 = vpop.permute.xlu0 %7619
        %7621 = vrot.lane.b32.xlu0 %v7573, 125
        %v7622 = vpop.permute.xlu0 %7621
        %v7623 = vsel %vm651, %v7616, %v7618
        %v7624 = vsel %vm651, %v7620, %v7622
        %v7629 = vmax.f32 %v7611, %v7623
        %v7630 = vmax.f32 %v7612, %v7618
        %v7631 = vmax.f32 %v7613, %v7624
        %v7632 = vmax.f32 %v7614, %v7622
        %7633 = vrot.lane.b32.xlu0 %v7569, 100
        %v7634 = vpop.permute.xlu0 %7633
        %7635 = vrot.lane.b32.xlu0 %v7570, 100
        %v7636 = vpop.permute.xlu0 %7635
        %7637 = vrot.lane.b32.xlu0 %v7572, 100
        %v7638 = vpop.permute.xlu0 %7637
        %7639 = vrot.lane.b32.xlu0 %v7573, 100
        %v7640 = vpop.permute.xlu0 %7639
        %v7641 = vsel %vm749, %v7634, %v7636
        %v7642 = vsel %vm749, %v7638, %v7640
        %v7647 = vmax.f32 %v7629, %v7641
        %v7648 = vmax.f32 %v7630, %v7636
        %v7649 = vmax.f32 %v7631, %v7642
        %v7650 = vmax.f32 %v7632, %v7640
        %7651 = vrot.lane.b32.xlu0 %v7569, 99
        %v7652 = vpop.permute.xlu0 %7651
        %7653 = vrot.lane.b32.xlu0 %v7570, 99
        %v7654 = vpop.permute.xlu0 %7653
        %7655 = vrot.lane.b32.xlu0 %v7572, 99
        %v7656 = vpop.permute.xlu0 %7655
        %7657 = vrot.lane.b32.xlu0 %v7573, 99
        %v7658 = vpop.permute.xlu0 %7657
        %v7659 = vsel %vm798, %v7652, %v7654
        %v7660 = vsel %vm798, %v7656, %v7658
        %v7665 = vmax.f32 %v7647, %v7659
        %v7666 = vmax.f32 %v7648, %v7654
        %v7667 = vmax.f32 %v7649, %v7660
        %v7668 = vmax.f32 %v7650, %v7658
        %7669 = vrot.lane.b32.xlu0 %v7569, 98
        %v7670 = vpop.permute.xlu0 %7669
        %7671 = vrot.lane.b32.xlu0 %v7570, 98
        %v7672 = vpop.permute.xlu0 %7671
        %7673 = vrot.lane.b32.xlu0 %v7572, 98
        %v7674 = vpop.permute.xlu0 %7673
        %7675 = vrot.lane.b32.xlu0 %v7573, 98
        %v7676 = vpop.permute.xlu0 %7675
        %v7677 = vsel %vm847, %v7670, %v7672
        %v7678 = vsel %vm847, %v7674, %v7676
        %v7683 = vmax.f32 %v7665, %v7677
        %v7684 = vmax.f32 %v7666, %v7672
        %v7685 = vmax.f32 %v7667, %v7678
        %v7686 = vmax.f32 %v7668, %v7676
        %7687 = vrot.lane.b32.xlu0 %v7569, 97
        %v7688 = vpop.permute.xlu0 %7687
        %7689 = vrot.lane.b32.xlu0 %v7570, 97
        %v7690 = vpop.permute.xlu0 %7689
        %7691 = vrot.lane.b32.xlu0 %v7572, 97
        %v7692 = vpop.permute.xlu0 %7691
        %7693 = vrot.lane.b32.xlu0 %v7573, 97
        %v7694 = vpop.permute.xlu0 %7693
        %v7695 = vsel %vm896, %v7688, %v7690
        %v7696 = vsel %vm896, %v7692, %v7694
        %v7701 = vmax.f32 %v7683, %v7695
        %v7702 = vmax.f32 %v7684, %v7690
        %v7703 = vmax.f32 %v7685, %v7696
        %v7704 = vmax.f32 %v7686, %v7694
        %7705 = vrot.lane.b32.xlu0 %v7569, 72
        %v7706 = vpop.permute.xlu0 %7705
        %7707 = vrot.lane.b32.xlu0 %v7570, 72
        %v7708 = vpop.permute.xlu0 %7707
        %7709 = vrot.lane.b32.xlu0 %v7572, 72
        %v7710 = vpop.permute.xlu0 %7709
        %7711 = vrot.lane.b32.xlu0 %v7573, 72
        %v7712 = vpop.permute.xlu0 %7711
        %v7713 = vsel %vm994, %v7706, %v7708
        %v7714 = vsel %vm994, %v7710, %v7712
        %v7719 = vmax.f32 %v7701, %v7713
        %v7720 = vmax.f32 %v7702, %v7708
        %v7721 = vmax.f32 %v7703, %v7714
        %v7722 = vmax.f32 %v7704, %v7712
        %7723 = vrot.lane.b32.xlu0 %v7569, 71
        %v7724 = vpop.permute.xlu0 %7723
        %7725 = vrot.lane.b32.xlu0 %v7570, 71
        %v7726 = vpop.permute.xlu0 %7725
        %7727 = vrot.lane.b32.xlu0 %v7572, 71
        %v7728 = vpop.permute.xlu0 %7727
        %7729 = vrot.lane.b32.xlu0 %v7573, 71
        %v7730 = vpop.permute.xlu0 %7729
        %v7731 = vsel %vm1043, %v7724, %v7726
        %v7732 = vsel %vm1043, %v7728, %v7730
        %v7737 = vmax.f32 %v7719, %v7731
        %v7738 = vmax.f32 %v7720, %v7726
        %v7739 = vmax.f32 %v7721, %v7732
        %v7740 = vmax.f32 %v7722, %v7730
        %7741 = vrot.lane.b32.xlu0 %v7569, 70
        %v7742 = vpop.permute.xlu0 %7741
        %7743 = vrot.lane.b32.xlu0 %v7570, 70
        %v7744 = vpop.permute.xlu0 %7743
        %7745 = vrot.lane.b32.xlu0 %v7572, 70
        %v7746 = vpop.permute.xlu0 %7745
        %7747 = vrot.lane.b32.xlu0 %v7573, 70
        %v7748 = vpop.permute.xlu0 %7747
        %v7749 = vsel %vm1092, %v7742, %v7744
        %v7750 = vsel %vm1092, %v7746, %v7748
        %v7755 = vmax.f32 %v7737, %v7749
        %v7756 = vmax.f32 %v7738, %v7744
        %v7757 = vmax.f32 %v7739, %v7750
        %v7758 = vmax.f32 %v7740, %v7748
        %7759 = vrot.lane.b32.xlu0 %v7569, 69
        %v7760 = vpop.permute.xlu0 %7759
        %7761 = vrot.lane.b32.xlu0 %v7570, 69
        %v7762 = vpop.permute.xlu0 %7761
        %7763 = vrot.lane.b32.xlu0 %v7572, 69
        %v7764 = vpop.permute.xlu0 %7763
        %7765 = vrot.lane.b32.xlu0 %v7573, 69
        %v7766 = vpop.permute.xlu0 %7765
        %v7767 = vsel %vm1141, %v7760, %v7762
        %v7768 = vsel %vm1141, %v7764, %v7766
        %v7773 = vmax.f32 %v7755, %v7767
        %v7774 = vmax.f32 %v7756, %v7762
        %v7775 = vmax.f32 %v7757, %v7768
        %v7776 = vmax.f32 %v7758, %v7766
        %7779 = vrot.lane.b32.xlu0 %v7569, 44
        %v7780 = vpop.permute.xlu0 %7779
        %7781 = vrot.lane.b32.xlu0 %v7570, 44
        %v7782 = vpop.permute.xlu0 %7781
        %7783 = vrot.lane.b32.xlu0 %v7571, 44
        %v7784 = vpop.permute.xlu0 %7783
        %7785 = vrot.lane.b32.xlu0 %v7572, 44
        %v7786 = vpop.permute.xlu0 %7785
        %7787 = vrot.lane.b32.xlu0 %v7573, 44
        %v7788 = vpop.permute.xlu0 %7787
        %7789 = vrot.lane.b32.xlu0 %v7574, 44
        %v7790 = vpop.permute.xlu0 %7789
        %v7791 = vsel %vm1239, %v7780, %v7782
        %v7792 = vsel %vm1239, %v7782, %v7784
        %v7793 = vsel %vm1239, %v7786, %v7788
        %v7794 = vsel %vm1239, %v7788, %v7790
        %v7799 = vmax.f32 %v7773, %v7791
        %v7800 = vmax.f32 %v7774, %v7792
        %v7801 = vmax.f32 %v7775, %v7793
        %v7802 = vmax.f32 %v7776, %v7794
        %7803 = vrot.lane.b32.xlu0 %v7569, 43
        %v7804 = vpop.permute.xlu0 %7803
        %7805 = vrot.lane.b32.xlu0 %v7570, 43
        %v7806 = vpop.permute.xlu0 %7805
        %7807 = vrot.lane.b32.xlu0 %v7571, 43
        %v7808 = vpop.permute.xlu0 %7807
        %7809 = vrot.lane.b32.xlu0 %v7572, 43
        %v7810 = vpop.permute.xlu0 %7809
        %7811 = vrot.lane.b32.xlu0 %v7573, 43
        %v7812 = vpop.permute.xlu0 %7811
        %7813 = vrot.lane.b32.xlu0 %v7574, 43
        %v7814 = vpop.permute.xlu0 %7813
        %v7815 = vsel %vm1288, %v7804, %v7806
        %v7816 = vsel %vm1288, %v7806, %v7808
        %v7817 = vsel %vm1288, %v7810, %v7812
        %v7818 = vsel %vm1288, %v7812, %v7814
        %v7823 = vmax.f32 %v7799, %v7815
        %v7824 = vmax.f32 %v7800, %v7816
        %v7825 = vmax.f32 %v7801, %v7817
        %v7826 = vmax.f32 %v7802, %v7818
        %7827 = vrot.lane.b32.xlu0 %v7569, 42
        %v7828 = vpop.permute.xlu0 %7827
        %7829 = vrot.lane.b32.xlu0 %v7570, 42
        %v7830 = vpop.permute.xlu0 %7829
        %7831 = vrot.lane.b32.xlu0 %v7571, 42
        %v7832 = vpop.permute.xlu0 %7831
        %7833 = vrot.lane.b32.xlu0 %v7572, 42
        %v7834 = vpop.permute.xlu0 %7833
        %7835 = vrot.lane.b32.xlu0 %v7573, 42
        %v7836 = vpop.permute.xlu0 %7835
        %7837 = vrot.lane.b32.xlu0 %v7574, 42
        %v7838 = vpop.permute.xlu0 %7837
        %v7839 = vsel %vm1337, %v7828, %v7830
        %v7840 = vsel %vm1337, %v7830, %v7832
        %v7841 = vsel %vm1337, %v7834, %v7836
        %v7842 = vsel %vm1337, %v7836, %v7838
        %v7847 = vmax.f32 %v7823, %v7839
        %v7848 = vmax.f32 %v7824, %v7840
        %v7849 = vmax.f32 %v7825, %v7841
        %v7850 = vmax.f32 %v7826, %v7842
        %7851 = vrot.lane.b32.xlu0 %v7569, 41
        %v7852 = vpop.permute.xlu0 %7851
        %7853 = vrot.lane.b32.xlu0 %v7570, 41
        %v7854 = vpop.permute.xlu0 %7853
        %7855 = vrot.lane.b32.xlu0 %v7571, 41
        %v7856 = vpop.permute.xlu0 %7855
        %7857 = vrot.lane.b32.xlu0 %v7572, 41
        %v7858 = vpop.permute.xlu0 %7857
        %7859 = vrot.lane.b32.xlu0 %v7573, 41
        %v7860 = vpop.permute.xlu0 %7859
        %7861 = vrot.lane.b32.xlu0 %v7574, 41
        %v7862 = vpop.permute.xlu0 %7861
        %v7863 = vsel %vm1386, %v7852, %v7854
        %v7864 = vsel %vm1386, %v7854, %v7856
        %v7865 = vsel %vm1386, %v7858, %v7860
        %v7866 = vsel %vm1386, %v7860, %v7862
        %v7871 = vmax.f32 %v7847, %v7863
        %v7872 = vmax.f32 %v7848, %v7864
        %v7873 = vmax.f32 %v7849, %v7865
        %v7874 = vmax.f32 %v7850, %v7866
        %v7875 = vld [vmem:[#allocation2] sm:$0xff]
        %v7876 = vld [vmem:[#allocation2 + $0x8] sm:$0xff]
        %v7877 = vld [vmem:[#allocation2 + $0x10] sm:$0xff]
        %v7878 = vld [vmem:[#allocation2 + $0x18] sm:$0xff]
        %v7879 = vld [vmem:[#allocation2 + $0x20] sm:$0xff]
        %v7880 = vld [vmem:[#allocation2 + $0x28] sm:$0xff]
        %v7881 = vld [vmem:[#allocation2 + $0x30] sm:$0xff]
        %v7882 = vld [vmem:[#allocation2 + $0x38] sm:$0xff]
        %v7883 = vld [vmem:[#allocation2 + $0x40] sm:$0xff]
        %v7884 = vld [vmem:[#allocation2 + $0x48] sm:$0xff]
        %v7885 = vld [vmem:[#allocation2 + $0x50] sm:$0xff]
        %v7886 = vld [vmem:[#allocation2 + $0x58] sm:$0xff]
        %v7887 = vld [vmem:[#allocation2 + $0x60] sm:$0xff]
        %v7888 = vld [vmem:[#allocation2 + $0x68] sm:$0xff]
        %v7889 = vld [vmem:[#allocation2 + $0x70] sm:$0xff]
        %v7890 = vld [vmem:[#allocation2 + $0x78] sm:$0xff]
        %v7891 = vld [vmem:[#allocation2 + $0x80] sm:$0xff]
        %v7892 = vld [vmem:[#allocation2 + $0x88] sm:$0xff]
        %v7893 = vld [vmem:[#allocation2 + $0x90] sm:$0xff]
        %v7894 = vld [vmem:[#allocation2 + $0x98] sm:$0xff]
        %v7895 = vld [vmem:[#allocation2 + $0xa0] sm:$0xff]
        %v7896 = vld [vmem:[#allocation2 + $0xa8] sm:$0x7f]
        %s7897 = scalar_lea.vmem [#allocation2], 176
        %v7898 = vld [vmem:[%s7897] sm:$0xff]
        %v7899 = vld [vmem:[%s7897 + $0x8] sm:$0xff]
        %v7900 = vld [vmem:[%s7897 + $0x10] sm:$0xff]
        %v7901 = vld [vmem:[%s7897 + $0x18] sm:$0xff]
        %v7902 = vld [vmem:[%s7897 + $0x20] sm:$0xff]
        %v7903 = vld [vmem:[%s7897 + $0x28] sm:$0xff]
        %v7904 = vld [vmem:[%s7897 + $0x30] sm:$0xff]
        %v7905 = vld [vmem:[%s7897 + $0x38] sm:$0xff]
        %v7906 = vld [vmem:[%s7897 + $0x40] sm:$0xff]
        %v7907 = vld [vmem:[%s7897 + $0x48] sm:$0xff]
        %v7908 = vld [vmem:[%s7897 + $0x50] sm:$0xff]
        %v7909 = vld [vmem:[%s7897 + $0x58] sm:$0xff]
        %v7910 = vld [vmem:[%s7897 + $0x60] sm:$0xff]
        %v7911 = vld [vmem:[%s7897 + $0x68] sm:$0xff]
        %v7912 = vld [vmem:[%s7897 + $0x70] sm:$0xff]
        %v7913 = vld [vmem:[%s7897 + $0x78] sm:$0xff]
        %v7914 = vld [vmem:[%s7897 + $0x80] sm:$0xff]
        %v7915 = vld [vmem:[%s7897 + $0x88] sm:$0xff]
        %v7916 = vld [vmem:[%s7897 + $0x90] sm:$0xff]
        %v7917 = vld [vmem:[%s7897 + $0x98] sm:$0xff]
        %v7918 = vld [vmem:[%s7897 + $0xa0] sm:$0xff]
        %v7919 = vld [vmem:[%s7897 + $0xa8] sm:$0x7f]
        %v7922 = vrot.slane %v7871, 1
        %v7923 = vrot.slane %v7872, 1
        %vm7925 = vcmask 384000
        %v7926 = vsel %vm7925, %v7923, 0
        %vm7928 = vcmask 1046528
        %v7930 = vsel %vm7928, %v7919, 0
        %7932 = vmatpush.msra.mxu0 %v7913
        %7933 = vmatpush.msra.mxu0 %v7912
        %7934 = vmatpush.msra.mxu0 %v7911
        %7935 = vmatpush.msra.mxu0 %v7910
        %7936 = vmatpush.msra.mxu0 %v7909
        %7937 = vmatpush.msra.mxu0 %v7908
        %7938 = vmatpush.msra.mxu0 %v7907
        %7939 = vmatpush.msra.mxu0 %v7906
        %7940 = vmatpush.msra.mxu0 %v7905
        %7941 = vmatpush.msra.mxu0 %v7904
        %7942 = vmatpush.msra.mxu0 %v7903
        %7943 = vmatpush.msra.mxu0 %v7902
        %7944 = vmatpush.msra.mxu0 %v7901
        %7945 = vmatpush.msra.mxu0 %v7900
        %7946 = vmatpush.msra.mxu0 %v7899
        %7947 = vmatpush.msra.mxu0 %v7898
        %7948 = vmatmul.f32.gmra.mxu0 %v7922
        %v7949 = vpop.f32.mrf.mxu0
        %v7950 = vadd.f32 0.0, %v7949
        %7951 = vdwg.mxu0
        %7952 = vmatpush.msra.mxu0 0.0
        %7953 = vmatpush.msra.mxu0 0.0
        %7954 = vmatpush.msra.mxu0 0.0
        %7955 = vmatpush.msra.mxu0 0.0
        %7956 = vmatpush.msra.mxu0 0.0
        %7957 = vmatpush.msra.mxu0 0.0
        %7958 = vmatpush.msra.mxu0 0.0
        %7959 = vmatpush.msra.mxu0 0.0
        %7960 = vmatpush.msra.mxu0 0.0
        %7961 = vmatpush.msra.mxu0 0.0
        %7962 = vmatpush.msra.mxu0 %v7930
        %7963 = vmatpush.msra.mxu0 %v7918
        %7964 = vmatpush.msra.mxu0 %v7917
        %7965 = vmatpush.msra.mxu0 %v7916
        %7966 = vmatpush.msra.mxu0 %v7915
        %7967 = vmatpush.msra.mxu0 %v7914
        %7968 = vmatmul.f32.gmra.mxu0 %v7926
        %v7969 = vpop.f32.mrf.mxu0
        %v7970 = vadd.f32 %v7950, %v7969
        %7971 = vdwg.mxu0
        %v7972 = vsel %vm7925, %v7872, 0
        %v7975 = vsel %vm7928, %v7896, 0
        %7977 = vmatpush.msra.mxu0 %v7890
        %7978 = vmatpush.msra.mxu0 %v7889
        %7979 = vmatpush.msra.mxu0 %v7888
        %7980 = vmatpush.msra.mxu0 %v7887
        %7981 = vmatpush.msra.mxu0 %v7886
        %7982 = vmatpush.msra.mxu0 %v7885
        %7983 = vmatpush.msra.mxu0 %v7884
        %7984 = vmatpush.msra.mxu0 %v7883
        %7985 = vmatpush.msra.mxu0 %v7882
        %7986 = vmatpush.msra.mxu0 %v7881
        %7987 = vmatpush.msra.mxu0 %v7880
        %7988 = vmatpush.msra.mxu0 %v7879
        %7989 = vmatpush.msra.mxu0 %v7878
        %7990 = vmatpush.msra.mxu0 %v7877
        %7991 = vmatpush.msra.mxu0 %v7876
        %7992 = vmatpush.msra.mxu0 %v7875
        %7993 = vmatmul.f32.gmra.mxu0 %v7871
        %v7994 = vpop.f32.mrf.mxu0
        %v7995 = vadd.f32 %v7970, %v7994
        %7996 = vdwg.mxu0
        %7997 = vmatpush.msra.mxu0 0.0
        %7998 = vmatpush.msra.mxu0 0.0
        %7999 = vmatpush.msra.mxu0 0.0
        %8000 = vmatpush.msra.mxu0 0.0
        %8001 = vmatpush.msra.mxu0 0.0
        %8002 = vmatpush.msra.mxu0 0.0
        %8003 = vmatpush.msra.mxu0 0.0
        %8004 = vmatpush.msra.mxu0 0.0
        %8005 = vmatpush.msra.mxu0 0.0
        %8006 = vmatpush.msra.mxu0 0.0
        %8007 = vmatpush.msra.mxu0 %v7975
        %8008 = vmatpush.msra.mxu0 %v7895
        %8009 = vmatpush.msra.mxu0 %v7894
        %8010 = vmatpush.msra.mxu0 %v7893
        %8011 = vmatpush.msra.mxu0 %v7892
        %8012 = vmatpush.msra.mxu0 %v7891
        %8013 = vmatmul.f32.gmra.mxu0 %v7972
        %v8014 = vpop.f32.mrf.mxu0
        %v8015 = vadd.f32 %v7995, %v8014
        %8016 = vdwg.mxu0
        %s8017 = scalar_lea.vmem [#allocation2], 352
        %v8018 = vld [vmem:[%s8017] sm:$0xff]
        %v8019 = vld [vmem:[%s8017 + $0x8] sm:$0xff]
        %v8020 = vld [vmem:[%s8017 + $0x10] sm:$0xff]
        %v8021 = vld [vmem:[%s8017 + $0x18] sm:$0xff]
        %v8022 = vld [vmem:[%s8017 + $0x20] sm:$0xff]
        %v8023 = vld [vmem:[%s8017 + $0x28] sm:$0xff]
        %v8024 = vld [vmem:[%s8017 + $0x30] sm:$0xff]
        %v8025 = vld [vmem:[%s8017 + $0x38] sm:$0xff]
        %v8026 = vld [vmem:[%s8017 + $0x40] sm:$0xff]
        %v8027 = vld [vmem:[%s8017 + $0x48] sm:$0xff]
        %v8028 = vld [vmem:[%s8017 + $0x50] sm:$0xff]
        %v8029 = vld [vmem:[%s8017 + $0x58] sm:$0xff]
        %v8030 = vld [vmem:[%s8017 + $0x60] sm:$0xff]
        %v8031 = vld [vmem:[%s8017 + $0x68] sm:$0xff]
        %v8032 = vld [vmem:[%s8017 + $0x70] sm:$0xff]
        %v8033 = vld [vmem:[%s8017 + $0x78] sm:$0xff]
        %v8034 = vld [vmem:[%s8017 + $0x80] sm:$0xff]
        %v8035 = vld [vmem:[%s8017 + $0x88] sm:$0xff]
        %v8036 = vld [vmem:[%s8017 + $0x90] sm:$0xff]
        %v8037 = vld [vmem:[%s8017 + $0x98] sm:$0xff]
        %v8038 = vld [vmem:[%s8017 + $0xa0] sm:$0xff]
        %v8039 = vld [vmem:[%s8017 + $0xa8] sm:$0x7f]
        %v8040 = vrot.slane %v7871, 2
        %v8041 = vrot.slane %v7872, 2
        %v8043 = vsel %vm7925, %v8041, 0
        %v8046 = vsel %vm7928, %v8039, 0
        %8048 = vmatpush.msra.mxu0 %v8033
        %8049 = vmatpush.msra.mxu0 %v8032
        %8050 = vmatpush.msra.mxu0 %v8031
        %8051 = vmatpush.msra.mxu0 %v8030
        %8052 = vmatpush.msra.mxu0 %v8029
        %8053 = vmatpush.msra.mxu0 %v8028
        %8054 = vmatpush.msra.mxu0 %v8027
        %8055 = vmatpush.msra.mxu0 %v8026
        %8056 = vmatpush.msra.mxu0 %v8025
        %8057 = vmatpush.msra.mxu0 %v8024
        %8058 = vmatpush.msra.mxu0 %v8023
        %8059 = vmatpush.msra.mxu0 %v8022
        %8060 = vmatpush.msra.mxu0 %v8021
        %8061 = vmatpush.msra.mxu0 %v8020
        %8062 = vmatpush.msra.mxu0 %v8019
        %8063 = vmatpush.msra.mxu0 %v8018
        %8064 = vmatmul.f32.gmra.mxu0 %v8040
        %v8065 = vpop.f32.mrf.mxu0
        %v8066 = vadd.f32 0.0, %v8065
        %8067 = vdwg.mxu0
        %8068 = vmatpush.msra.mxu0 0.0
        %8069 = vmatpush.msra.mxu0 0.0
        %8070 = vmatpush.msra.mxu0 0.0
        %8071 = vmatpush.msra.mxu0 0.0
        %8072 = vmatpush.msra.mxu0 0.0
        %8073 = vmatpush.msra.mxu0 0.0
        %8074 = vmatpush.msra.mxu0 0.0
        %8075 = vmatpush.msra.mxu0 0.0
        %8076 = vmatpush.msra.mxu0 0.0
        %8077 = vmatpush.msra.mxu0 0.0
        %8078 = vmatpush.msra.mxu0 %v8046
        %8079 = vmatpush.msra.mxu0 %v8038
        %8080 = vmatpush.msra.mxu0 %v8037
        %8081 = vmatpush.msra.mxu0 %v8036
        %8082 = vmatpush.msra.mxu0 %v8035
        %8083 = vmatpush.msra.mxu0 %v8034
        %8084 = vmatmul.f32.gmra.mxu0 %v8043
        %v8085 = vpop.f32.mrf.mxu0
        %v8086 = vadd.f32 %v8066, %v8085
        %8087 = vdwg.mxu0
        %v8088 = vadd.f32 %v8015, %v8086
        %s8089 = scalar_lea.vmem [#allocation2], 528
        %v8090 = vld [vmem:[%s8089] sm:$0xff]
        %v8091 = vld [vmem:[%s8089 + $0x8] sm:$0xff]
        %v8092 = vld [vmem:[%s8089 + $0x10] sm:$0xff]
        %v8093 = vld [vmem:[%s8089 + $0x18] sm:$0xff]
        %v8094 = vld [vmem:[%s8089 + $0x20] sm:$0xff]
        %v8095 = vld [vmem:[%s8089 + $0x28] sm:$0xff]
        %v8096 = vld [vmem:[%s8089 + $0x30] sm:$0xff]
        %v8097 = vld [vmem:[%s8089 + $0x38] sm:$0xff]
        %v8098 = vld [vmem:[%s8089 + $0x40] sm:$0xff]
        %v8099 = vld [vmem:[%s8089 + $0x48] sm:$0xff]
        %v8100 = vld [vmem:[%s8089 + $0x50] sm:$0xff]
        %v8101 = vld [vmem:[%s8089 + $0x58] sm:$0xff]
        %v8102 = vld [vmem:[%s8089 + $0x60] sm:$0xff]
        %v8103 = vld [vmem:[%s8089 + $0x68] sm:$0xff]
        %v8104 = vld [vmem:[%s8089 + $0x70] sm:$0xff]
        %v8105 = vld [vmem:[%s8089 + $0x78] sm:$0xff]
        %v8106 = vld [vmem:[%s8089 + $0x80] sm:$0xff]
        %v8107 = vld [vmem:[%s8089 + $0x88] sm:$0xff]
        %v8108 = vld [vmem:[%s8089 + $0x90] sm:$0xff]
        %v8109 = vld [vmem:[%s8089 + $0x98] sm:$0xff]
        %v8110 = vld [vmem:[%s8089 + $0xa0] sm:$0xff]
        %v8111 = vld [vmem:[%s8089 + $0xa8] sm:$0x7f]
        %v8112 = vrot.slane %v7871, 3
        %v8113 = vrot.slane %v7872, 3
        %v8115 = vsel %vm7925, %v8113, 0
        %v8118 = vsel %vm7928, %v8111, 0
        %8120 = vmatpush.msra.mxu0 %v8105
        %8121 = vmatpush.msra.mxu0 %v8104
        %8122 = vmatpush.msra.mxu0 %v8103
        %8123 = vmatpush.msra.mxu0 %v8102
        %8124 = vmatpush.msra.mxu0 %v8101
        %8125 = vmatpush.msra.mxu0 %v8100
        %8126 = vmatpush.msra.mxu0 %v8099
        %8127 = vmatpush.msra.mxu0 %v8098
        %8128 = vmatpush.msra.mxu0 %v8097
        %8129 = vmatpush.msra.mxu0 %v8096
        %8130 = vmatpush.msra.mxu0 %v8095
        %8131 = vmatpush.msra.mxu0 %v8094
        %8132 = vmatpush.msra.mxu0 %v8093
        %8133 = vmatpush.msra.mxu0 %v8092
        %8134 = vmatpush.msra.mxu0 %v8091
        %8135 = vmatpush.msra.mxu0 %v8090
        %8136 = vmatmul.f32.gmra.mxu0 %v8112
        %v8137 = vpop.f32.mrf.mxu0
        %v8138 = vadd.f32 0.0, %v8137
        %8139 = vdwg.mxu0
        %8140 = vmatpush.msra.mxu0 0.0
        %8141 = vmatpush.msra.mxu0 0.0
        %8142 = vmatpush.msra.mxu0 0.0
        %8143 = vmatpush.msra.mxu0 0.0
        %8144 = vmatpush.msra.mxu0 0.0
        %8145 = vmatpush.msra.mxu0 0.0
        %8146 = vmatpush.msra.mxu0 0.0
        %8147 = vmatpush.msra.mxu0 0.0
        %8148 = vmatpush.msra.mxu0 0.0
        %8149 = vmatpush.msra.mxu0 0.0
        %8150 = vmatpush.msra.mxu0 %v8118
        %8151 = vmatpush.msra.mxu0 %v8110
        %8152 = vmatpush.msra.mxu0 %v8109
        %8153 = vmatpush.msra.mxu0 %v8108
        %8154 = vmatpush.msra.mxu0 %v8107
        %8155 = vmatpush.msra.mxu0 %v8106
        %8156 = vmatmul.f32.gmra.mxu0 %v8115
        %v8157 = vpop.f32.mrf.mxu0
        %v8158 = vadd.f32 %v8138, %v8157
        %8159 = vdwg.mxu0
        %v8160 = vadd.f32 %v8088, %v8158
        %s8161 = scalar_lea.vmem [#allocation2], 704
        %v8162 = vld [vmem:[%s8161] sm:$0xff]
        %v8163 = vld [vmem:[%s8161 + $0x8] sm:$0xff]
        %v8164 = vld [vmem:[%s8161 + $0x10] sm:$0xff]
        %v8165 = vld [vmem:[%s8161 + $0x18] sm:$0xff]
        %v8166 = vld [vmem:[%s8161 + $0x20] sm:$0xff]
        %v8167 = vld [vmem:[%s8161 + $0x28] sm:$0xff]
        %v8168 = vld [vmem:[%s8161 + $0x30] sm:$0xff]
        %v8169 = vld [vmem:[%s8161 + $0x38] sm:$0xff]
        %v8170 = vld [vmem:[%s8161 + $0x40] sm:$0xff]
        %v8171 = vld [vmem:[%s8161 + $0x48] sm:$0xff]
        %v8172 = vld [vmem:[%s8161 + $0x50] sm:$0xff]
        %v8173 = vld [vmem:[%s8161 + $0x58] sm:$0xff]
        %v8174 = vld [vmem:[%s8161 + $0x60] sm:$0xff]
        %v8175 = vld [vmem:[%s8161 + $0x68] sm:$0xff]
        %v8176 = vld [vmem:[%s8161 + $0x70] sm:$0xff]
        %v8177 = vld [vmem:[%s8161 + $0x78] sm:$0xff]
        %v8178 = vld [vmem:[%s8161 + $0x80] sm:$0xff]
        %v8179 = vld [vmem:[%s8161 + $0x88] sm:$0xff]
        %v8180 = vld [vmem:[%s8161 + $0x90] sm:$0xff]
        %v8181 = vld [vmem:[%s8161 + $0x98] sm:$0xff]
        %v8182 = vld [vmem:[%s8161 + $0xa0] sm:$0xff]
        %v8183 = vld [vmem:[%s8161 + $0xa8] sm:$0x7f]
        %v8184 = vrot.slane %v7871, 4
        %v8185 = vrot.slane %v7872, 4
        %v8187 = vsel %vm7925, %v8185, 0
        %v8190 = vsel %vm7928, %v8183, 0
        %8192 = vmatpush.msra.mxu0 %v8177
        %8193 = vmatpush.msra.mxu0 %v8176
        %8194 = vmatpush.msra.mxu0 %v8175
        %8195 = vmatpush.msra.mxu0 %v8174
        %8196 = vmatpush.msra.mxu0 %v8173
        %8197 = vmatpush.msra.mxu0 %v8172
        %8198 = vmatpush.msra.mxu0 %v8171
        %8199 = vmatpush.msra.mxu0 %v8170
        %8200 = vmatpush.msra.mxu0 %v8169
        %8201 = vmatpush.msra.mxu0 %v8168
        %8202 = vmatpush.msra.mxu0 %v8167
        %8203 = vmatpush.msra.mxu0 %v8166
        %8204 = vmatpush.msra.mxu0 %v8165
        %8205 = vmatpush.msra.mxu0 %v8164
        %8206 = vmatpush.msra.mxu0 %v8163
        %8207 = vmatpush.msra.mxu0 %v8162
        %8208 = vmatmul.f32.gmra.mxu0 %v8184
        %v8209 = vpop.f32.mrf.mxu0
        %v8210 = vadd.f32 0.0, %v8209
        %8211 = vdwg.mxu0
        %8212 = vmatpush.msra.mxu0 0.0
        %8213 = vmatpush.msra.mxu0 0.0
        %8214 = vmatpush.msra.mxu0 0.0
        %8215 = vmatpush.msra.mxu0 0.0
        %8216 = vmatpush.msra.mxu0 0.0
        %8217 = vmatpush.msra.mxu0 0.0
        %8218 = vmatpush.msra.mxu0 0.0
        %8219 = vmatpush.msra.mxu0 0.0
        %8220 = vmatpush.msra.mxu0 0.0
        %8221 = vmatpush.msra.mxu0 0.0
        %8222 = vmatpush.msra.mxu0 %v8190
        %8223 = vmatpush.msra.mxu0 %v8182
        %8224 = vmatpush.msra.mxu0 %v8181
        %8225 = vmatpush.msra.mxu0 %v8180
        %8226 = vmatpush.msra.mxu0 %v8179
        %8227 = vmatpush.msra.mxu0 %v8178
        %8228 = vmatmul.f32.gmra.mxu0 %v8187
        %v8229 = vpop.f32.mrf.mxu0
        %v8230 = vadd.f32 %v8210, %v8229
        %8231 = vdwg.mxu0
        %v8232 = vadd.f32 %v8160, %v8230
        %s8233 = scalar_lea.vmem [#allocation2], 880
        %v8234 = vld [vmem:[%s8233] sm:$0xff]
        %v8235 = vld [vmem:[%s8233 + $0x8] sm:$0xff]
        %v8236 = vld [vmem:[%s8233 + $0x10] sm:$0xff]
        %v8237 = vld [vmem:[%s8233 + $0x18] sm:$0xff]
        %v8238 = vld [vmem:[%s8233 + $0x20] sm:$0xff]
        %v8239 = vld [vmem:[%s8233 + $0x28] sm:$0xff]
        %v8240 = vld [vmem:[%s8233 + $0x30] sm:$0xff]
        %v8241 = vld [vmem:[%s8233 + $0x38] sm:$0xff]
        %v8242 = vld [vmem:[%s8233 + $0x40] sm:$0xff]
        %v8243 = vld [vmem:[%s8233 + $0x48] sm:$0xff]
        %v8244 = vld [vmem:[%s8233 + $0x50] sm:$0xff]
        %v8245 = vld [vmem:[%s8233 + $0x58] sm:$0xff]
        %v8246 = vld [vmem:[%s8233 + $0x60] sm:$0xff]
        %v8247 = vld [vmem:[%s8233 + $0x68] sm:$0xff]
        %v8248 = vld [vmem:[%s8233 + $0x70] sm:$0xff]
        %v8249 = vld [vmem:[%s8233 + $0x78] sm:$0xff]
        %v8250 = vld [vmem:[%s8233 + $0x80] sm:$0xff]
        %v8251 = vld [vmem:[%s8233 + $0x88] sm:$0xff]
        %v8252 = vld [vmem:[%s8233 + $0x90] sm:$0xff]
        %v8253 = vld [vmem:[%s8233 + $0x98] sm:$0xff]
        %v8254 = vld [vmem:[%s8233 + $0xa0] sm:$0xff]
        %v8255 = vld [vmem:[%s8233 + $0xa8] sm:$0x7f]
        %v8256 = vrot.slane %v7871, 5
        %v8257 = vrot.slane %v7872, 5
        %v8259 = vsel %vm7925, %v8257, 0
        %v8262 = vsel %vm7928, %v8255, 0
        %8264 = vmatpush.msra.mxu0 %v8249
        %8265 = vmatpush.msra.mxu0 %v8248
        %8266 = vmatpush.msra.mxu0 %v8247
        %8267 = vmatpush.msra.mxu0 %v8246
        %8268 = vmatpush.msra.mxu0 %v8245
        %8269 = vmatpush.msra.mxu0 %v8244
        %8270 = vmatpush.msra.mxu0 %v8243
        %8271 = vmatpush.msra.mxu0 %v8242
        %8272 = vmatpush.msra.mxu0 %v8241
        %8273 = vmatpush.msra.mxu0 %v8240
        %8274 = vmatpush.msra.mxu0 %v8239
        %8275 = vmatpush.msra.mxu0 %v8238
        %8276 = vmatpush.msra.mxu0 %v8237
        %8277 = vmatpush.msra.mxu0 %v8236
        %8278 = vmatpush.msra.mxu0 %v8235
        %8279 = vmatpush.msra.mxu0 %v8234
        %8280 = vmatmul.f32.gmra.mxu0 %v8256
        %v8281 = vpop.f32.mrf.mxu0
        %v8282 = vadd.f32 0.0, %v8281
        %8283 = vdwg.mxu0
        %8284 = vmatpush.msra.mxu0 0.0
        %8285 = vmatpush.msra.mxu0 0.0
        %8286 = vmatpush.msra.mxu0 0.0
        %8287 = vmatpush.msra.mxu0 0.0
        %8288 = vmatpush.msra.mxu0 0.0
        %8289 = vmatpush.msra.mxu0 0.0
        %8290 = vmatpush.msra.mxu0 0.0
        %8291 = vmatpush.msra.mxu0 0.0
        %8292 = vmatpush.msra.mxu0 0.0
        %8293 = vmatpush.msra.mxu0 0.0
        %8294 = vmatpush.msra.mxu0 %v8262
        %8295 = vmatpush.msra.mxu0 %v8254
        %8296 = vmatpush.msra.mxu0 %v8253
        %8297 = vmatpush.msra.mxu0 %v8252
        %8298 = vmatpush.msra.mxu0 %v8251
        %8299 = vmatpush.msra.mxu0 %v8250
        %8300 = vmatmul.f32.gmra.mxu0 %v8259
        %v8301 = vpop.f32.mrf.mxu0
        %v8302 = vadd.f32 %v8282, %v8301
        %8303 = vdwg.mxu0
        %v8304 = vadd.f32 %v8232, %v8302
        %s8305 = scalar_lea.vmem [#allocation2], 1056
        %v8306 = vld [vmem:[%s8305] sm:$0xff]
        %v8307 = vld [vmem:[%s8305 + $0x8] sm:$0xff]
        %v8308 = vld [vmem:[%s8305 + $0x10] sm:$0xff]
        %v8309 = vld [vmem:[%s8305 + $0x18] sm:$0xff]
        %v8310 = vld [vmem:[%s8305 + $0x20] sm:$0xff]
        %v8311 = vld [vmem:[%s8305 + $0x28] sm:$0xff]
        %v8312 = vld [vmem:[%s8305 + $0x30] sm:$0xff]
        %v8313 = vld [vmem:[%s8305 + $0x38] sm:$0xff]
        %v8314 = vld [vmem:[%s8305 + $0x40] sm:$0xff]
        %v8315 = vld [vmem:[%s8305 + $0x48] sm:$0xff]
        %v8316 = vld [vmem:[%s8305 + $0x50] sm:$0xff]
        %v8317 = vld [vmem:[%s8305 + $0x58] sm:$0xff]
        %v8318 = vld [vmem:[%s8305 + $0x60] sm:$0xff]
        %v8319 = vld [vmem:[%s8305 + $0x68] sm:$0xff]
        %v8320 = vld [vmem:[%s8305 + $0x70] sm:$0xff]
        %v8321 = vld [vmem:[%s8305 + $0x78] sm:$0xff]
        %v8322 = vld [vmem:[%s8305 + $0x80] sm:$0xff]
        %v8323 = vld [vmem:[%s8305 + $0x88] sm:$0xff]
        %v8324 = vld [vmem:[%s8305 + $0x90] sm:$0xff]
        %v8325 = vld [vmem:[%s8305 + $0x98] sm:$0xff]
        %v8326 = vld [vmem:[%s8305 + $0xa0] sm:$0xff]
        %v8327 = vld [vmem:[%s8305 + $0xa8] sm:$0x7f]
        %v8328 = vrot.slane %v7871, 6
        %v8329 = vrot.slane %v7872, 6
        %v8331 = vsel %vm7925, %v8329, 0
        %v8334 = vsel %vm7928, %v8327, 0
        %8336 = vmatpush.msra.mxu0 %v8321
        %8337 = vmatpush.msra.mxu0 %v8320
        %8338 = vmatpush.msra.mxu0 %v8319
        %8339 = vmatpush.msra.mxu0 %v8318
        %8340 = vmatpush.msra.mxu0 %v8317
        %8341 = vmatpush.msra.mxu0 %v8316
        %8342 = vmatpush.msra.mxu0 %v8315
        %8343 = vmatpush.msra.mxu0 %v8314
        %8344 = vmatpush.msra.mxu0 %v8313
        %8345 = vmatpush.msra.mxu0 %v8312
        %8346 = vmatpush.msra.mxu0 %v8311
        %8347 = vmatpush.msra.mxu0 %v8310
        %8348 = vmatpush.msra.mxu0 %v8309
        %8349 = vmatpush.msra.mxu0 %v8308
        %8350 = vmatpush.msra.mxu0 %v8307
        %8351 = vmatpush.msra.mxu0 %v8306
        %8352 = vmatmul.f32.gmra.mxu0 %v8328
        %v8353 = vpop.f32.mrf.mxu0
        %v8354 = vadd.f32 0.0, %v8353
        %8355 = vdwg.mxu0
        %8356 = vmatpush.msra.mxu0 0.0
        %8357 = vmatpush.msra.mxu0 0.0
        %8358 = vmatpush.msra.mxu0 0.0
        %8359 = vmatpush.msra.mxu0 0.0
        %8360 = vmatpush.msra.mxu0 0.0
        %8361 = vmatpush.msra.mxu0 0.0
        %8362 = vmatpush.msra.mxu0 0.0
        %8363 = vmatpush.msra.mxu0 0.0
        %8364 = vmatpush.msra.mxu0 0.0
        %8365 = vmatpush.msra.mxu0 0.0
        %8366 = vmatpush.msra.mxu0 %v8334
        %8367 = vmatpush.msra.mxu0 %v8326
        %8368 = vmatpush.msra.mxu0 %v8325
        %8369 = vmatpush.msra.mxu0 %v8324
        %8370 = vmatpush.msra.mxu0 %v8323
        %8371 = vmatpush.msra.mxu0 %v8322
        %8372 = vmatmul.f32.gmra.mxu0 %v8331
        %v8373 = vpop.f32.mrf.mxu0
        %v8374 = vadd.f32 %v8354, %v8373
        %8375 = vdwg.mxu0
        %v8376 = vadd.f32 %v8304, %v8374
        %s8377 = scalar_lea.vmem [#allocation2], 1232
        %v8378 = vld [vmem:[%s8377] sm:$0xff]
        %v8379 = vld [vmem:[%s8377 + $0x8] sm:$0xff]
        %v8380 = vld [vmem:[%s8377 + $0x10] sm:$0xff]
        %v8381 = vld [vmem:[%s8377 + $0x18] sm:$0xff]
        %v8382 = vld [vmem:[%s8377 + $0x20] sm:$0xff]
        %v8383 = vld [vmem:[%s8377 + $0x28] sm:$0xff]
        %v8384 = vld [vmem:[%s8377 + $0x30] sm:$0xff]
        %v8385 = vld [vmem:[%s8377 + $0x38] sm:$0xff]
        %v8386 = vld [vmem:[%s8377 + $0x40] sm:$0xff]
        %v8387 = vld [vmem:[%s8377 + $0x48] sm:$0xff]
        %v8388 = vld [vmem:[%s8377 + $0x50] sm:$0xff]
        %v8389 = vld [vmem:[%s8377 + $0x58] sm:$0xff]
        %v8390 = vld [vmem:[%s8377 + $0x60] sm:$0xff]
        %v8391 = vld [vmem:[%s8377 + $0x68] sm:$0xff]
        %v8392 = vld [vmem:[%s8377 + $0x70] sm:$0xff]
        %v8393 = vld [vmem:[%s8377 + $0x78] sm:$0xff]
        %v8394 = vld [vmem:[%s8377 + $0x80] sm:$0xff]
        %v8395 = vld [vmem:[%s8377 + $0x88] sm:$0xff]
        %v8396 = vld [vmem:[%s8377 + $0x90] sm:$0xff]
        %v8397 = vld [vmem:[%s8377 + $0x98] sm:$0xff]
        %v8398 = vld [vmem:[%s8377 + $0xa0] sm:$0xff]
        %v8399 = vld [vmem:[%s8377 + $0xa8] sm:$0x7f]
        %v8400 = vrot.slane %v7871, 7
        %v8401 = vrot.slane %v7872, 7
        %v8403 = vsel %vm7925, %v8401, 0
        %v8406 = vsel %vm7928, %v8399, 0
        %8408 = vmatpush.msra.mxu0 %v8393
        %8409 = vmatpush.msra.mxu0 %v8392
        %8410 = vmatpush.msra.mxu0 %v8391
        %8411 = vmatpush.msra.mxu0 %v8390
        %8412 = vmatpush.msra.mxu0 %v8389
        %8413 = vmatpush.msra.mxu0 %v8388
        %8414 = vmatpush.msra.mxu0 %v8387
        %8415 = vmatpush.msra.mxu0 %v8386
        %8416 = vmatpush.msra.mxu0 %v8385
        %8417 = vmatpush.msra.mxu0 %v8384
        %8418 = vmatpush.msra.mxu0 %v8383
        %8419 = vmatpush.msra.mxu0 %v8382
        %8420 = vmatpush.msra.mxu0 %v8381
        %8421 = vmatpush.msra.mxu0 %v8380
        %8422 = vmatpush.msra.mxu0 %v8379
        %8423 = vmatpush.msra.mxu0 %v8378
        %8424 = vmatmul.f32.gmra.mxu0 %v8400
        %v8425 = vpop.f32.mrf.mxu0
        %v8426 = vadd.f32 0.0, %v8425
        %8427 = vdwg.mxu0
        %8428 = vmatpush.msra.mxu0 0.0
        %8429 = vmatpush.msra.mxu0 0.0
        %8430 = vmatpush.msra.mxu0 0.0
        %8431 = vmatpush.msra.mxu0 0.0
        %8432 = vmatpush.msra.mxu0 0.0
        %8433 = vmatpush.msra.mxu0 0.0
        %8434 = vmatpush.msra.mxu0 0.0
        %8435 = vmatpush.msra.mxu0 0.0
        %8436 = vmatpush.msra.mxu0 0.0
        %8437 = vmatpush.msra.mxu0 0.0
        %8438 = vmatpush.msra.mxu0 %v8406
        %8439 = vmatpush.msra.mxu0 %v8398
        %8440 = vmatpush.msra.mxu0 %v8397
        %8441 = vmatpush.msra.mxu0 %v8396
        %8442 = vmatpush.msra.mxu0 %v8395
        %8443 = vmatpush.msra.mxu0 %v8394
        %8444 = vmatmul.f32.gmra.mxu0 %v8403
        %v8445 = vpop.f32.mrf.mxu0
        %v8446 = vadd.f32 %v8426, %v8445
        %8447 = vdwg.mxu0
        %v8448 = vadd.f32 %v8376, %v8446
        %s8449 = scalar_lea.vmem [#allocation2], 1408
        %v8450 = vld [vmem:[%s8449] sm:$0xff]
        %v8451 = vld [vmem:[%s8449 + $0x8] sm:$0xff]
        %v8452 = vld [vmem:[%s8449 + $0x10] sm:$0xff]
        %v8453 = vld [vmem:[%s8449 + $0x18] sm:$0xff]
        %v8454 = vld [vmem:[%s8449 + $0x20] sm:$0xff]
        %v8455 = vld [vmem:[%s8449 + $0x28] sm:$0xff]
        %v8456 = vld [vmem:[%s8449 + $0x30] sm:$0xff]
        %v8457 = vld [vmem:[%s8449 + $0x38] sm:$0xff]
        %v8458 = vld [vmem:[%s8449 + $0x40] sm:$0xff]
        %v8459 = vld [vmem:[%s8449 + $0x48] sm:$0xff]
        %v8460 = vld [vmem:[%s8449 + $0x50] sm:$0xff]
        %v8461 = vld [vmem:[%s8449 + $0x58] sm:$0xff]
        %v8462 = vld [vmem:[%s8449 + $0x60] sm:$0xff]
        %v8463 = vld [vmem:[%s8449 + $0x68] sm:$0xff]
        %v8464 = vld [vmem:[%s8449 + $0x70] sm:$0xff]
        %v8465 = vld [vmem:[%s8449 + $0x78] sm:$0xff]
        %v8466 = vld [vmem:[%s8449 + $0x80] sm:$0xff]
        %v8467 = vld [vmem:[%s8449 + $0x88] sm:$0xff]
        %v8468 = vld [vmem:[%s8449 + $0x90] sm:$0xff]
        %v8469 = vld [vmem:[%s8449 + $0x98] sm:$0xff]
        %v8470 = vld [vmem:[%s8449 + $0xa0] sm:$0xff]
        %v8471 = vld [vmem:[%s8449 + $0xa8] sm:$0x7f]
        %v8473 = vsel %vm7925, %v7874, 0
        %v8476 = vsel %vm7928, %v8471, 0
        %8478 = vmatpush.msra.mxu0 %v8465
        %8479 = vmatpush.msra.mxu0 %v8464
        %8480 = vmatpush.msra.mxu0 %v8463
        %8481 = vmatpush.msra.mxu0 %v8462
        %8482 = vmatpush.msra.mxu0 %v8461
        %8483 = vmatpush.msra.mxu0 %v8460
        %8484 = vmatpush.msra.mxu0 %v8459
        %8485 = vmatpush.msra.mxu0 %v8458
        %8486 = vmatpush.msra.mxu0 %v8457
        %8487 = vmatpush.msra.mxu0 %v8456
        %8488 = vmatpush.msra.mxu0 %v8455
        %8489 = vmatpush.msra.mxu0 %v8454
        %8490 = vmatpush.msra.mxu0 %v8453
        %8491 = vmatpush.msra.mxu0 %v8452
        %8492 = vmatpush.msra.mxu0 %v8451
        %8493 = vmatpush.msra.mxu0 %v8450
        %8494 = vmatmul.f32.gmra.mxu0 %v7873
        %v8495 = vpop.f32.mrf.mxu0
        %v8496 = vadd.f32 0.0, %v8495
        %8497 = vdwg.mxu0
        %8498 = vmatpush.msra.mxu0 0.0
        %8499 = vmatpush.msra.mxu0 0.0
        %8500 = vmatpush.msra.mxu0 0.0
        %8501 = vmatpush.msra.mxu0 0.0
        %8502 = vmatpush.msra.mxu0 0.0
        %8503 = vmatpush.msra.mxu0 0.0
        %8504 = vmatpush.msra.mxu0 0.0
        %8505 = vmatpush.msra.mxu0 0.0
        %8506 = vmatpush.msra.mxu0 0.0
        %8507 = vmatpush.msra.mxu0 0.0
        %8508 = vmatpush.msra.mxu0 %v8476
        %8509 = vmatpush.msra.mxu0 %v8470
        %8510 = vmatpush.msra.mxu0 %v8469
        %8511 = vmatpush.msra.mxu0 %v8468
        %8512 = vmatpush.msra.mxu0 %v8467
        %8513 = vmatpush.msra.mxu0 %v8466
        %8514 = vmatmul.f32.gmra.mxu0 %v8473
        %v8515 = vpop.f32.mrf.mxu0
        %v8516 = vadd.f32 %v8496, %v8515
        %8517 = vdwg.mxu0
        %v8518 = vadd.f32 %v8448, %v8516
        %s8519 = scalar_lea.vmem [#allocation2], 1584
        %v8520 = vld [vmem:[%s8519] sm:$0xff]
        %v8521 = vld [vmem:[%s8519 + $0x8] sm:$0xff]
        %v8522 = vld [vmem:[%s8519 + $0x10] sm:$0xff]
        %v8523 = vld [vmem:[%s8519 + $0x18] sm:$0xff]
        %v8524 = vld [vmem:[%s8519 + $0x20] sm:$0xff]
        %v8525 = vld [vmem:[%s8519 + $0x28] sm:$0xff]
        %v8526 = vld [vmem:[%s8519 + $0x30] sm:$0xff]
        %v8527 = vld [vmem:[%s8519 + $0x38] sm:$0xff]
        %v8528 = vld [vmem:[%s8519 + $0x40] sm:$0xff]
        %v8529 = vld [vmem:[%s8519 + $0x48] sm:$0xff]
        %v8530 = vld [vmem:[%s8519 + $0x50] sm:$0xff]
        %v8531 = vld [vmem:[%s8519 + $0x58] sm:$0xff]
        %v8532 = vld [vmem:[%s8519 + $0x60] sm:$0xff]
        %v8533 = vld [vmem:[%s8519 + $0x68] sm:$0xff]
        %v8534 = vld [vmem:[%s8519 + $0x70] sm:$0xff]
        %v8535 = vld [vmem:[%s8519 + $0x78] sm:$0xff]
        %v8536 = vld [vmem:[%s8519 + $0x80] sm:$0xff]
        %v8537 = vld [vmem:[%s8519 + $0x88] sm:$0xff]
        %v8538 = vld [vmem:[%s8519 + $0x90] sm:$0xff]
        %v8539 = vld [vmem:[%s8519 + $0x98] sm:$0xff]
        %v8540 = vld [vmem:[%s8519 + $0xa0] sm:$0xff]
        %v8541 = vld [vmem:[%s8519 + $0xa8] sm:$0x7f]
        %v8543 = vrot.slane %v7873, 1
        %v8544 = vrot.slane %v7874, 1
        %v8546 = vsel %vm7925, %v8544, 0
        %v8549 = vsel %vm7928, %v8541, 0
        %8551 = vmatpush.msra.mxu0 %v8535
        %8552 = vmatpush.msra.mxu0 %v8534
        %8553 = vmatpush.msra.mxu0 %v8533
        %8554 = vmatpush.msra.mxu0 %v8532
        %8555 = vmatpush.msra.mxu0 %v8531
        %8556 = vmatpush.msra.mxu0 %v8530
        %8557 = vmatpush.msra.mxu0 %v8529
        %8558 = vmatpush.msra.mxu0 %v8528
        %8559 = vmatpush.msra.mxu0 %v8527
        %8560 = vmatpush.msra.mxu0 %v8526
        %8561 = vmatpush.msra.mxu0 %v8525
        %8562 = vmatpush.msra.mxu0 %v8524
        %8563 = vmatpush.msra.mxu0 %v8523
        %8564 = vmatpush.msra.mxu0 %v8522
        %8565 = vmatpush.msra.mxu0 %v8521
        %8566 = vmatpush.msra.mxu0 %v8520
        %8567 = vmatmul.f32.gmra.mxu0 %v8543
        %v8568 = vpop.f32.mrf.mxu0
        %v8569 = vadd.f32 0.0, %v8568
        %8570 = vdwg.mxu0
        %8571 = vmatpush.msra.mxu0 0.0
        %8572 = vmatpush.msra.mxu0 0.0
        %8573 = vmatpush.msra.mxu0 0.0
        %8574 = vmatpush.msra.mxu0 0.0
        %8575 = vmatpush.msra.mxu0 0.0
        %8576 = vmatpush.msra.mxu0 0.0
        %8577 = vmatpush.msra.mxu0 0.0
        %8578 = vmatpush.msra.mxu0 0.0
        %8579 = vmatpush.msra.mxu0 0.0
        %8580 = vmatpush.msra.mxu0 0.0
        %8581 = vmatpush.msra.mxu0 %v8549
        %8582 = vmatpush.msra.mxu0 %v8540
        %8583 = vmatpush.msra.mxu0 %v8539
        %8584 = vmatpush.msra.mxu0 %v8538
        %8585 = vmatpush.msra.mxu0 %v8537
        %8586 = vmatpush.msra.mxu0 %v8536
        %8587 = vmatmul.f32.gmra.mxu0 %v8546
        %v8588 = vpop.f32.mrf.mxu0
        %v8589 = vadd.f32 %v8569, %v8588
        %8590 = vdwg.mxu0
        %v8591 = vadd.f32 %v8518, %v8589
        %s8592 = scalar_lea.vmem [#allocation2], 1760
        %v8593 = vld [vmem:[%s8592] sm:$0xff]
        %v8594 = vld [vmem:[%s8592 + $0x8] sm:$0xff]
        %v8595 = vld [vmem:[%s8592 + $0x10] sm:$0xff]
        %v8596 = vld [vmem:[%s8592 + $0x18] sm:$0xff]
        %v8597 = vld [vmem:[%s8592 + $0x20] sm:$0xff]
        %v8598 = vld [vmem:[%s8592 + $0x28] sm:$0xff]
        %v8599 = vld [vmem:[%s8592 + $0x30] sm:$0xff]
        %v8600 = vld [vmem:[%s8592 + $0x38] sm:$0xff]
        %v8601 = vld [vmem:[%s8592 + $0x40] sm:$0xff]
        %v8602 = vld [vmem:[%s8592 + $0x48] sm:$0xff]
        %v8603 = vld [vmem:[%s8592 + $0x50] sm:$0xff]
        %v8604 = vld [vmem:[%s8592 + $0x58] sm:$0xff]
        %v8605 = vld [vmem:[%s8592 + $0x60] sm:$0xff]
        %v8606 = vld [vmem:[%s8592 + $0x68] sm:$0xff]
        %v8607 = vld [vmem:[%s8592 + $0x70] sm:$0xff]
        %v8608 = vld [vmem:[%s8592 + $0x78] sm:$0xff]
        %v8609 = vld [vmem:[%s8592 + $0x80] sm:$0xff]
        %v8610 = vld [vmem:[%s8592 + $0x88] sm:$0xff]
        %v8611 = vld [vmem:[%s8592 + $0x90] sm:$0xff]
        %v8612 = vld [vmem:[%s8592 + $0x98] sm:$0xff]
        %v8613 = vld [vmem:[%s8592 + $0xa0] sm:$0xff]
        %v8614 = vld [vmem:[%s8592 + $0xa8] sm:$0x7f]
        %v8615 = vrot.slane %v7873, 2
        %v8616 = vrot.slane %v7874, 2
        %v8618 = vsel %vm7925, %v8616, 0
        %v8621 = vsel %vm7928, %v8614, 0
        %8623 = vmatpush.msra.mxu0 %v8608
        %8624 = vmatpush.msra.mxu0 %v8607
        %8625 = vmatpush.msra.mxu0 %v8606
        %8626 = vmatpush.msra.mxu0 %v8605
        %8627 = vmatpush.msra.mxu0 %v8604
        %8628 = vmatpush.msra.mxu0 %v8603
        %8629 = vmatpush.msra.mxu0 %v8602
        %8630 = vmatpush.msra.mxu0 %v8601
        %8631 = vmatpush.msra.mxu0 %v8600
        %8632 = vmatpush.msra.mxu0 %v8599
        %8633 = vmatpush.msra.mxu0 %v8598
        %8634 = vmatpush.msra.mxu0 %v8597
        %8635 = vmatpush.msra.mxu0 %v8596
        %8636 = vmatpush.msra.mxu0 %v8595
        %8637 = vmatpush.msra.mxu0 %v8594
        %8638 = vmatpush.msra.mxu0 %v8593
        %8639 = vmatmul.f32.gmra.mxu0 %v8615
        %v8640 = vpop.f32.mrf.mxu0
        %v8641 = vadd.f32 0.0, %v8640
        %8642 = vdwg.mxu0
        %8643 = vmatpush.msra.mxu0 0.0
        %8644 = vmatpush.msra.mxu0 0.0
        %8645 = vmatpush.msra.mxu0 0.0
        %8646 = vmatpush.msra.mxu0 0.0
        %8647 = vmatpush.msra.mxu0 0.0
        %8648 = vmatpush.msra.mxu0 0.0
        %8649 = vmatpush.msra.mxu0 0.0
        %8650 = vmatpush.msra.mxu0 0.0
        %8651 = vmatpush.msra.mxu0 0.0
        %8652 = vmatpush.msra.mxu0 0.0
        %8653 = vmatpush.msra.mxu0 %v8621
        %8654 = vmatpush.msra.mxu0 %v8613
        %8655 = vmatpush.msra.mxu0 %v8612
        %8656 = vmatpush.msra.mxu0 %v8611
        %8657 = vmatpush.msra.mxu0 %v8610
        %8658 = vmatpush.msra.mxu0 %v8609
        %8659 = vmatmul.f32.gmra.mxu0 %v8618
        %v8660 = vpop.f32.mrf.mxu0
        %v8661 = vadd.f32 %v8641, %v8660
        %8662 = vdwg.mxu0
        %v8663 = vadd.f32 %v8591, %v8661
        %s8664 = scalar_lea.vmem [#allocation2], 1936
        %v8665 = vld [vmem:[%s8664] sm:$0xff]
        %v8666 = vld [vmem:[%s8664 + $0x8] sm:$0xff]
        %v8667 = vld [vmem:[%s8664 + $0x10] sm:$0xff]
        %v8668 = vld [vmem:[%s8664 + $0x18] sm:$0xff]
        %v8669 = vld [vmem:[%s8664 + $0x20] sm:$0xff]
        %v8670 = vld [vmem:[%s8664 + $0x28] sm:$0xff]
        %v8671 = vld [vmem:[%s8664 + $0x30] sm:$0xff]
        %v8672 = vld [vmem:[%s8664 + $0x38] sm:$0xff]
        %v8673 = vld [vmem:[%s8664 + $0x40] sm:$0xff]
        %v8674 = vld [vmem:[%s8664 + $0x48] sm:$0xff]
        %v8675 = vld [vmem:[%s8664 + $0x50] sm:$0xff]
        %v8676 = vld [vmem:[%s8664 + $0x58] sm:$0xff]
        %v8677 = vld [vmem:[%s8664 + $0x60] sm:$0xff]
        %v8678 = vld [vmem:[%s8664 + $0x68] sm:$0xff]
        %v8679 = vld [vmem:[%s8664 + $0x70] sm:$0xff]
        %v8680 = vld [vmem:[%s8664 + $0x78] sm:$0xff]
        %v8681 = vld [vmem:[%s8664 + $0x80] sm:$0xff]
        %v8682 = vld [vmem:[%s8664 + $0x88] sm:$0xff]
        %v8683 = vld [vmem:[%s8664 + $0x90] sm:$0xff]
        %v8684 = vld [vmem:[%s8664 + $0x98] sm:$0xff]
        %v8685 = vld [vmem:[%s8664 + $0xa0] sm:$0xff]
        %v8686 = vld [vmem:[%s8664 + $0xa8] sm:$0x7f]
        %v8687 = vrot.slane %v7873, 3
        %v8688 = vrot.slane %v7874, 3
        %v8690 = vsel %vm7925, %v8688, 0
        %v8693 = vsel %vm7928, %v8686, 0
        %8695 = vmatpush.msra.mxu0 %v8680
        %8696 = vmatpush.msra.mxu0 %v8679
        %8697 = vmatpush.msra.mxu0 %v8678
        %8698 = vmatpush.msra.mxu0 %v8677
        %8699 = vmatpush.msra.mxu0 %v8676
        %8700 = vmatpush.msra.mxu0 %v8675
        %8701 = vmatpush.msra.mxu0 %v8674
        %8702 = vmatpush.msra.mxu0 %v8673
        %8703 = vmatpush.msra.mxu0 %v8672
        %8704 = vmatpush.msra.mxu0 %v8671
        %8705 = vmatpush.msra.mxu0 %v8670
        %8706 = vmatpush.msra.mxu0 %v8669
        %8707 = vmatpush.msra.mxu0 %v8668
        %8708 = vmatpush.msra.mxu0 %v8667
        %8709 = vmatpush.msra.mxu0 %v8666
        %8710 = vmatpush.msra.mxu0 %v8665
        %8711 = vmatmul.f32.gmra.mxu0 %v8687
        %v8712 = vpop.f32.mrf.mxu0
        %v8713 = vadd.f32 0.0, %v8712
        %8714 = vdwg.mxu0
        %8715 = vmatpush.msra.mxu0 0.0
        %8716 = vmatpush.msra.mxu0 0.0
        %8717 = vmatpush.msra.mxu0 0.0
        %8718 = vmatpush.msra.mxu0 0.0
        %8719 = vmatpush.msra.mxu0 0.0
        %8720 = vmatpush.msra.mxu0 0.0
        %8721 = vmatpush.msra.mxu0 0.0
        %8722 = vmatpush.msra.mxu0 0.0
        %8723 = vmatpush.msra.mxu0 0.0
        %8724 = vmatpush.msra.mxu0 0.0
        %8725 = vmatpush.msra.mxu0 %v8693
        %8726 = vmatpush.msra.mxu0 %v8685
        %8727 = vmatpush.msra.mxu0 %v8684
        %8728 = vmatpush.msra.mxu0 %v8683
        %8729 = vmatpush.msra.mxu0 %v8682
        %8730 = vmatpush.msra.mxu0 %v8681
        %8731 = vmatmul.f32.gmra.mxu0 %v8690
        %v8732 = vpop.f32.mrf.mxu0
        %v8733 = vadd.f32 %v8713, %v8732
        %8734 = vdwg.mxu0
        %v8735 = vadd.f32 %v8663, %v8733
        %v8736 = vld [vmem:[#allocation5] sm:$0x1]
        %v8737 = vadd.f32 %v8735, %v8736
        %v8738 = vmax.f32 %v8737, 0.0
        %v8739 = vld [vmem:[%s9] sm:$0xff]
        %v8740 = vld [vmem:[%s9 + $0x8] sm:$0xff]
        %v8741 = vld [vmem:[%s9 + $0x10] sm:$0xff]
        %v8742 = vld [vmem:[%s9 + $0x18] sm:$0xff]
        %v8743 = vld [vmem:[%s9 + $0x20] sm:$0xff]
        %v8744 = vld [vmem:[%s9 + $0x28] sm:$0xff]
        %v8745 = vld [vmem:[%s9 + $0x30] sm:$0xff]
        %v8746 = vld [vmem:[%s9 + $0x38] sm:$0xff]
        %v8747 = vld [vmem:[%s9 + $0x40] sm:$0xff]
        %v8748 = vld [vmem:[%s9 + $0x48] sm:$0xff]
        %v8749 = vld [vmem:[%s9 + $0x50] sm:$0xff]
        %v8750 = vld [vmem:[%s9 + $0x58] sm:$0xff]
        %v8751 = vld [vmem:[%s9 + $0x60] sm:$0xf]
        %v8752 = vld [vmem:[#allocation7] sm:$0x1]
        %v8754 = vsel %vm749, %v8738, 0
        %vm8756 = vcmask 1043456
        %v8758 = vsel %vm8756, %v8751, 0
        %8760 = vmatpush.msra.mxu0 0.0
        %8761 = vmatpush.msra.mxu0 0.0
        %8762 = vmatpush.msra.mxu0 0.0
        %8763 = vmatpush.msra.mxu0 %v8758
        %8764 = vmatpush.msra.mxu0 %v8750
        %8765 = vmatpush.msra.mxu0 %v8749
        %8766 = vmatpush.msra.mxu0 %v8748
        %8767 = vmatpush.msra.mxu0 %v8747
        %8768 = vmatpush.msra.mxu0 %v8746
        %8769 = vmatpush.msra.mxu0 %v8745
        %8770 = vmatpush.msra.mxu0 %v8744
        %8771 = vmatpush.msra.mxu0 %v8743
        %8772 = vmatpush.msra.mxu0 %v8742
        %8773 = vmatpush.msra.mxu0 %v8741
        %8774 = vmatpush.msra.mxu0 %v8740
        %8775 = vmatpush.msra.mxu0 %v8739
        %8776 = vmatmul.f32.gmra.mxu0 %v8754
        %v8777 = vpop.f32.mrf.mxu0
        %v8778 = vadd.f32 %v8752, %v8777
        %8779 = vdwg.mxu0
        %v8780 = vmax.f32 %v8778, 0.0
        %v8781 = vld [vmem:[%s11] sm:$0xff]
        %v8782 = vld [vmem:[%s11 + $0x8] sm:$0xff]
        %v8783 = vld [vmem:[%s11 + $0x10] sm:$0xff]
        %v8784 = vld [vmem:[%s11 + $0x18] sm:$0xff]
        %v8785 = vld [vmem:[%s11 + $0x20] sm:$0xff]
        %v8786 = vld [vmem:[%s11 + $0x28] sm:$0xff]
        %v8787 = vld [vmem:[%s11 + $0x30] sm:$0x3]
        %v8788 = vld [vmem:[#allocation8] sm:$0x1]
        %vm8789 = vcmask 408576
        %v8791 = vsel %vm8789, %v8780, 0
        %vm8793 = vcmask 1041408
        %v8795 = vsel %vm8793, %v8787, 0
        %8797 = vmatpush.msra.mxu0 0.0
        %8798 = vmatpush.msra.mxu0 0.0
        %8799 = vmatpush.msra.mxu0 0.0
        %8800 = vmatpush.msra.mxu0 0.0
        %8801 = vmatpush.msra.mxu0 0.0
        %8802 = vmatpush.msra.mxu0 0.0
        %8803 = vmatpush.msra.mxu0 0.0
        %8804 = vmatpush.msra.mxu0 0.0
        %8805 = vmatpush.msra.mxu0 0.0
        %8806 = vmatpush.msra.mxu0 %v8795
        %8807 = vmatpush.msra.mxu0 %v8786
        %8808 = vmatpush.msra.mxu0 %v8785
        %8809 = vmatpush.msra.mxu0 %v8784
        %8810 = vmatpush.msra.mxu0 %v8783
        %8811 = vmatpush.msra.mxu0 %v8782
        %8812 = vmatpush.msra.mxu0 %v8781
        %8813 = vmatmul.f32.gmra.mxu0 %v8791
        %v8814 = vpop.f32.mrf.mxu0
        %v8815 = vadd.f32 %v8788, %v8814
        %8816 = vdwg.mxu0
        %vm8817 = vcmask 73728
        %v8818 = vsel %vm8817, %v8815, -inf
        %8819 = vmax.xlane.f32.xlu0 %v8818
        %v8820 = vpop.xlane.xlu0 %8819
        %v8821 = vsub.f32 %v8815, %v8820
        %v8822 = vmul.f32 %v8821, 1.442695
        %v8823 = vpow.pop %v8822
        %v8824 = vsel %vm8817, %v8823, 0.0
        %8825 = vadd.xlane.f32.xlu0 %v8824
        %v8826 = vpop.xlane.xlu0 %8825
        %v8827 = vrcp.pop %v8826
        %v8828 = vmul.f32 %v8826, %v8827
        %v8829 = vsub.f32 1.0, %v8828
        %v8830 = vmul.f32 %v8827, %v8829
        %v8831 = vadd.f32 %v8827, %v8830
        %vm8832 = vweird.f32 %v8826
        %vm8833 = vweird.f32 %v8827
        %vm8834 = vmor %vm8832, %vm8833
        %v8835 = vsel %vm8834, %v8827, %v8831
        %v8836 = vand.u32 2147483647, %v8826
        %vm8837 = vcmp.eq.f32.partialorder %v8836, 8.507059e+37
        %v8838 = vand.u32 %v8826, 2147483648
        %v8839 = vor.u32 1.1754944e-38, %v8838
        %v8840 = vsel %vm8837, %v8839, %v8835
        %v8841 = vmul.f32 %v8823, %v8840
        %8842 = vst.msk [vmem:[%s491] sm:$0x1] %vm8817, %v8841
        %s8843 = sand.u32 %s316, 1
        %s8844 = scalar_lea.sflag [#allocation4], %s8843
        %s8845 = sand.u32 %s316, 1
        %s8846 = scalar_lea.vmem [#allocation10], %s8845
        // Predicated region
        $region89: #{convnet_forward.1} parent=71 // pred_check
          %p8847 = pneg %p326
        $region90: #{convnet_forward.1} parent=71 // pred_check_branch
          %8849 = sbr.rel (%p8847) target = $region92
        $region91: #{convnet_forward.1} parent=71 // pred_region
          %8851 = vsyncadd %s8844, 0
          %s8852 = scalar_lea.hbm %s13, %s30
          %s8854 = sshll.u32 %s8846, 4
          %s8855 = int_to_ptr.vmem [resolvable:$true] %s8854
          %s8856 = sshll.u32 %s8852, 4
          %s8857 = int_to_ptr.hbm [resolvable:$true] %s8856
          %8859 = dma.vmem_to_hbm [thread:$0]  %s8855, 16, %s8857, %s8844
        $region92: #{convnet_forward.1} parent=71 // pred_fallthru
          _
      $region72: #{convnet_forward.1} parent=5 // pred_fallthru
        _
      %p8860 = scmp.le.s32.totalorder 2, %s25
      // Predicated region
      $region93: #{convnet_forward.1} parent=5 // pred_check
        %p8861 = pneg %p8860
      $region94: #{convnet_forward.1} parent=5 // pred_check_branch
        %8863 = sbr.rel (%p8861) target = $region96
      $region95: #{convnet_forward.1} parent=5 // pred_region
        %s8864 = ssub.s32 %s25, 2
        // Predicated region
        $region97: #{convnet_forward.1} parent=95 // pred_check
          %p8865 = pneg %p332
        $region98: #{convnet_forward.1} parent=95 // pred_check_branch
          %8867 = sbr.rel (%p8865) target = $region100
        $region99: #{convnet_forward.1} parent=95 // pred_region
          %s8868 = sand.u32 %s317, 1
          %s8869 = scalar_lea.sflag [#allocation4], %s8868
          %s8870 = sand.u32 %s317, 1
          %s8871 = scalar_lea.vmem [#allocation10], %s8870
          %8873 = dma.done %s8869, 16
        $region100: #{convnet_forward.1} parent=95 // pred_fallthru
          _
      $region96: #{convnet_forward.1} parent=5 // pred_fallthru
        _
    $region6: #{convnet_forward.1} parent=1 // loop_footer
      %s29 = sadd.s32 1, %s25
    $region7: #{convnet_forward.1} parent=1 // loop_footer_branch
      %24 = sbr.rel target = $region3
    $region8: #{convnet_forward.1} parent=1 // loop_exit
      _
    %8874 = vsyncpa [#allocation3], 1
    %s8875 = scalar_lea.sflag [#allocation3], 1
    %8876 = vsyncpa %s8875, 1
    %8877 = vsyncpa [#allocation6], 1
    %8878 = vsyncpa [#allocation9], 1
    %8879 = vsyncpa [#allocation4], 1
    %s8880 = scalar_lea.sflag [#allocation4], 1
    %8881 = vsyncpa %s8880, 1

</llo_original>
